<compile_context>
chip_gen: v7x
topology: tpu7x:2x2x1
jax: 0.10.0
libtpu: 0.0.40
codegen_flags: <defaults>
</compile_context>

<pallas_src>
import numpy as np
import jax
import jax.numpy as jnp
from jax.experimental import pallas as pl
from jax.experimental.pallas import tpu as pltpu

EPS = 1e-5
GROUPS = 8
LANE = 128


def _round_up(x, m):
    return (x + m - 1) // m * m


# ---------------------------------------------------------------------------
# Host-side (trace-time) constant builders.
# ---------------------------------------------------------------------------
def _tap_masks(D, H, W):
    """(27, S) f32: validity of each 3x3x3 tap at every flattened output position."""
    n = np.arange(D * H * W)
    d, h, w = n // (H * W), (n // W) % H, n % W
    masks = np.zeros((27, D * H * W), np.float32)
    for t in range(27):
        kd, kh, kw = t // 9, (t // 3) % 3, t % 3
        od, oh, ow = kd - 1, kh - 1, kw - 1
        ok = ((d + od >= 0) & (d + od < D) & (h + oh >= 0) & (h + oh < H) &
              (w + ow >= 0) & (w + ow < W))
        masks[t] = ok.astype(np.float32)
    return jnp.asarray(masks)


def _depth_mask(D, H, W):
    """(1, S) f32: 0 on the d==0 plane, 1 elsewhere (also kills roll wraparound)."""
    n = np.arange(D * H * W)
    return jnp.asarray(((n // (H * W)) > 0).astype(np.float32)[None, :])


def _group_mean_matrix(C, groups, S):
    """(C, C) f32 with 1/(Cg*S) on same-group entries: M @ x then lane-sum = group mean."""
    Cg = C // groups
    g = np.arange(C) // Cg
    return jnp.asarray((g[:, None] == g[None, :]).astype(np.float32) / float(Cg * S))


def _stack_weights(w):
    """(Cout, Cin, 3, 3, 3) -> (Cout, 27*Cin) bf16, column index = tap*Cin + cin."""
    Cout, Cin = w.shape[0], w.shape[1]
    return w.transpose(0, 2, 3, 4, 1).reshape(Cout, 27 * Cin).astype(jnp.bfloat16)


# ---------------------------------------------------------------------------
# Fully fused forward: one pallas_call, grid=(B,).
# ---------------------------------------------------------------------------
def conresatt_forward(x1, x2, p):
    """first_layer=False, weight_std=False, in_planes != out_planes branch."""
    B, Cin, D, H, W = x1.shape
    Cout = p["w_seg"].shape[0]
    S = D * H * W
    HW = H * W
    pad = _round_up(HW + W + 1, LANE)         # halo >= max |tap offset|, lane aligned
    Sp = S + 2 * pad

    x1f = x1.reshape(B, Cin, S)
    x2f = x2.reshape(B, Cin, S)

    mask27 = _tap_masks(D, H, W)              # (27, S) f32
    dmask = _depth_mask(D, H, W)              # (1, S)  f32
    m_in = _group_mean_matrix(Cin, GROUPS, S)
    m_out = _group_mean_matrix(Cout, GROUPS, S)

    w_seg = _stack_weights(p["w_seg"])        # (Cout, 27*Cin)  bf16
    w_mp = _stack_weights(p["w_mp"])          # (Cout, 27*Cin)  bf16
    w_res1 = _stack_weights(p["w_res1"])      # (Cout, 27*Cout) bf16
    w_res = p["w_res"].reshape(Cout, Cout).astype(jnp.float32)   # 1x1x1, f32 for accuracy

    gseg = p["gamma_seg"].reshape(Cin, 1).astype(jnp.float32)
    bseg = p["beta_seg"].reshape(Cin, 1).astype(jnp.float32)
    gmp = p["gamma_mp"].reshape(Cin, 1).astype(jnp.float32)
    bmp = p["beta_mp"].reshape(Cin, 1).astype(jnp.float32)
    gr1 = p["gamma_res1"].reshape(Cout, 1).astype(jnp.float32)
    br1 = p["beta_res1"].reshape(Cout, 1).astype(jnp.float32)

    tap_off = [(kd - 1) * HW + (kh - 1) * W + (kw - 1)
               for kd in range(3) for kh in range(3) for kw in range(3)]

    def kernel(x1_ref, x2_ref, mask_ref, dmask_ref, mgi_ref, mgo_ref,
               gseg_ref, bseg_ref, gmp_ref, bmp_ref, gr1_ref, br1_ref,
               wseg_ref, wmp_ref, wres1_ref, wres_ref,
               x1o_ref, x2o_ref,
               apad_ref, cpad_ref, stkin_ref, stkout_ref, x1c_ref):

        def gn_relu_pad(x, g_ref, b_ref, mg_ref, out_ref, C):
            # GroupNorm (f32 stats, biased var) + affine + ReLU, written into the
            # zero-padded f32 row that the conv taps slice from.
            gx = jnp.dot(mg_ref[...], x, preferred_element_type=jnp.float32)
            gx2 = jnp.dot(mg_ref[...], x * x, preferred_element_type=jnp.float32)
            mean = jnp.sum(gx, axis=1, keepdims=True)          # (C, 1) group mean
            ex2 = jnp.sum(gx2, axis=1, keepdims=True)          # (C, 1) group E[x^2]
            var = ex2 - mean * mean
            y = (x - mean) * jax.lax.rsqrt(var + EPS)
            y = jnp.maximum(y * g_ref[...] + b_ref[...], 0.0)
            out_ref[:, 0:pad] = jnp.zeros((C, pad), jnp.float32)
            out_ref[:, pad + S:] = jnp.zeros((C, pad), jnp.float32)
            out_ref[:, pad:pad + S] = y

        def conv3(pad_ref, stk_ref, w_ref, C):
            # 3x3x3 conv (pad=1) as ONE MXU matmul: stack 27 shifted+masked taps
            # into (27*C, S) bf16, weights pre-packed as (Cout, 27*C) bf16.
            for t in range(27):
                start = pad + tap_off[t]
                sl = pad_ref[:, start:start + S]               # (C, S) f32
                mt = mask_ref[t:t + 1, :]                      # (1, S) f32
                stk_ref[t * C:(t + 1) * C, :] = (sl * mt).astype(jnp.bfloat16)
            return jnp.dot(w_ref[...], stk_ref[...],
                           preferred_element_type=jnp.float32)  # (Cout, S) f32

        # --- x1 branch: gn_seg -> relu -> conv_seg --------------------------
        gn_relu_pad(x1_ref[...], gseg_ref, bseg_ref, mgi_ref, apad_ref, Cin)
        x1c = conv3(apad_ref, stkin_ref, wseg_ref, Cin)
        x1c_ref[...] = x1c

        # --- depth residual (_res) + 1x1x1 conv_res (f32) -------------------
        s = jax.nn.sigmoid(x1c)
        s_prev = pltpu.roll(s, HW, axis=1)                     # s_prev[:, j] = s[:, j-HW]
        r = jnp.abs(s - s_prev) * dmask_ref[...]               # zero the d==0 plane / wrap
        res = jnp.dot(wres_ref[...], r, preferred_element_type=jnp.float32)

        # --- x2 branch: gn_mp -> relu -> conv_mp, fused "+ res" -------------
        gn_relu_pad(x2_ref[...], gmp_ref, bmp_ref, mgi_ref, apad_ref, Cin)
        x2s = conv3(apad_ref, stkin_ref, wmp_ref, Cin) + res

        # --- gn_res1 -> relu -> conv_res1, then gate x1*(1+sigmoid(x2)) -----
        gn_relu_pad(x2s, gr1_ref, br1_ref, mgo_ref, cpad_ref, Cout)
        x2o = conv3(cpad_ref, stkout_ref, wres1_ref, Cout)
        x2o_ref[...] = x2o
        x1o_ref[...] = x1c_ref[...] * (1.0 + jax.nn.sigmoid(x2o))

    def batch_spec(C):
        return pl.BlockSpec((None, C, S), lambda b: (b, 0, 0))

    def full_spec(r, c):
        return pl.BlockSpec((r, c), lambda b: (0, 0))

    # TODO(synk): for production volumes, add an S-tile grid axis (halo blocks)
    # so each v7x TensorCore gets >1 step and DMAs overlap; re-derive the tile
    # size against v7x's 64 MiB VMEM.
    x1o, x2o = pl.pallas_call(
        kernel,
        out_shape=(jax.ShapeDtypeStruct((B, Cout, S), jnp.float32),
                   jax.ShapeDtypeStruct((B, Cout, S), jnp.float32)),
        grid=(B,),
        in_specs=[batch_spec(Cin), batch_spec(Cin),
                  full_spec(27, S), full_spec(1, S),
                  full_spec(Cin, Cin), full_spec(Cout, Cout),
                  full_spec(Cin, 1), full_spec(Cin, 1),
                  full_spec(Cin, 1), full_spec(Cin, 1),
                  full_spec(Cout, 1), full_spec(Cout, 1),
                  full_spec(Cout, 27 * Cin), full_spec(Cout, 27 * Cin),
                  full_spec(Cout, 27 * Cout), full_spec(Cout, Cout)],
        out_specs=(batch_spec(Cout), batch_spec(Cout)),
        scratch_shapes=[pltpu.VMEM((Cin, Sp), jnp.float32),        # padded GN row (in)
                        pltpu.VMEM((Cout, Sp), jnp.float32),       # padded GN row (out ch)
                        pltpu.VMEM((27 * Cin, S), jnp.bfloat16),   # stacked conv operand
                        pltpu.VMEM((27 * Cout, S), jnp.bfloat16),  # stacked conv operand
                        pltpu.VMEM((Cout, S), jnp.float32)],       # x1c kept for the gate
        compiler_params=pltpu.CompilerParams(
            dimension_semantics=("parallel",),
            vmem_limit_bytes=32 * 1024 * 1024),
    )(x1f, x2f, mask27, dmask, m_in, m_out,
      gseg, bseg, gmp, bmp, gr1, br1, w_seg, w_mp, w_res1, w_res)

    return (x1o.reshape(B, Cout, D, H, W), x2o.reshape(B, Cout, D, H, W))


# ---------------------------------------------------------------------------
# Pure-JAX reference (for correctness check).
# ---------------------------------------------------------------------------
def ref_forward(x1, x2, p):
    def gn(x, g, b, groups=GROUPS, eps=EPS):
        B, C = x.shape[:2]
        xr = x.reshape(B, groups, -1)
        m = xr.mean(-1, keepdims=True)
        v = ((xr - m) ** 2).mean(-1, keepdims=True)
        y = ((xr - m) / jnp.sqrt(v + eps)).reshape(x.shape)
        return y * g.reshape(1, C, 1, 1, 1) + b.reshape(1, C, 1, 1, 1)

    def conv(x, w, padn):
        return jax.lax.conv_general_dilated(
            x, w, window_strides=(1, 1, 1), padding=[(padn, padn)] * 3,
            dimension_numbers=("NCDHW", "OIDHW", "NCDHW"))

    relu = lambda t: jnp.maximum(t, 0.0)
    a = relu(gn(x1, p["gamma_seg"], p["beta_seg"]))
    x1c = conv(a, p["w_seg"], 1)
    s = jax.nn.sigmoid(x1c)
    shifted = jnp.concatenate([jnp.zeros_like(s[:, :, :1]), s[:, :, :-1]], axis=2)
    r = jnp.abs(s - shifted)
    r = r.at[:, :, 0].set(0.0)
    res = conv(r, p["w_res"], 0)
    b2 = relu(gn(x2, p["gamma_mp"], p["beta_mp"]))
    x2c = conv(b2, p["w_mp"], 1)
    x2s = x2c + res
    c = relu(gn(x2s, p["gamma_res1"], p["beta_res1"]))
    x2o = conv(c, p["w_res1"], 1)
    x1o = x1c * (1.0 + jax.nn.sigmoid(x2o))
    return x1o, x2o


def make_params(key, in_planes, out_planes):
    ks = jax.random.split(key, 10)

    def w(k, shape):
        fan_in = int(np.prod(shape[1:]))
        return (jax.random.normal(k, shape, jnp.float32) / np.sqrt(fan_in)).astype(jnp.float32)

    return {
        "gamma_seg": 1.0 + 0.1 * jax.random.normal(ks[0], (in_planes,), jnp.float32),
        "beta_seg": 0.05 * jax.random.normal(ks[1], (in_planes,), jnp.float32),
        "w_seg": w(ks[2], (out_planes, in_planes, 3, 3, 3)),
        "w_res": w(ks[3], (out_planes, out_planes, 1, 1, 1)),
        "gamma_mp": 1.0 + 0.1 * jax.random.normal(ks[4], (in_planes,), jnp.float32),
        "beta_mp": 0.05 * jax.random.normal(ks[5], (in_planes,), jnp.float32),
        "w_mp": w(ks[6], (out_planes, in_planes, 3, 3, 3)),
        "gamma_res1": 1.0 + 0.1 * jax.random.normal(ks[7], (out_planes,), jnp.float32),
        "beta_res1": 0.05 * jax.random.normal(ks[8], (out_planes,), jnp.float32),
        "w_res1": w(ks[9], (out_planes, out_planes, 3, 3, 3)),
    }


if __name__ == "__main__":
    B, Cin, Cout, D, H, W = 2, 8, 16, 8, 8, 8
    key = jax.random.PRNGKey(0)
    k1, k2, kp = jax.random.split(key, 3)
    x1 = jax.random.normal(k1, (B, Cin, D, H, W), jnp.float32)
    x2 = jax.random.normal(k2, (B, Cin, D, H, W), jnp.float32)
    params = make_params(kp, Cin, Cout)

    fwd = jax.jit(conresatt_forward)
    x1_out, x2_out = fwd(x1, x2, params)
    jax.block_until_ready((x1_out, x2_out))

    x1_ref, x2_ref = ref_forward(x1, x2, params)
    # bf16 MXU operands with f32 accumulation -> slightly looser tolerance.
    np.testing.assert_allclose(np.asarray(x2_out), np.asarray(x2_ref), rtol=3e-2, atol=3e-2)
    np.testing.assert_allclose(np.asarray(x1_out), np.asarray(x1_ref), rtol=3e-2, atol=3e-2)

    assert x1_out.shape == (B, Cout, D, H, W) and x2_out.shape == (B, Cout, D, H, W)
    print("KERNEL_OK")
</pallas_src>

<mosaic_0001>
module attributes {stable_mosaic.version = 11 : i64} {
  func.func @kernel(%arg0: i32, %arg1: memref<1x8x512xf32, #tpu.memory_space<vmem>>, %arg2: memref<1x8x512xf32, #tpu.memory_space<vmem>>, %arg3: memref<27x512xf32, #tpu.memory_space<vmem>>, %arg4: memref<1x512xf32, #tpu.memory_space<vmem>>, %arg5: memref<8x8xf32, #tpu.memory_space<vmem>>, %arg6: memref<16x16xf32, #tpu.memory_space<vmem>>, %arg7: memref<8x1xf32, #tpu.memory_space<vmem>>, %arg8: memref<8x1xf32, #tpu.memory_space<vmem>>, %arg9: memref<8x1xf32, #tpu.memory_space<vmem>>, %arg10: memref<8x1xf32, #tpu.memory_space<vmem>>, %arg11: memref<16x1xf32, #tpu.memory_space<vmem>>, %arg12: memref<16x1xf32, #tpu.memory_space<vmem>>, %arg13: memref<16x216xbf16, #tpu.memory_space<vmem>>, %arg14: memref<16x216xbf16, #tpu.memory_space<vmem>>, %arg15: memref<16x432xbf16, #tpu.memory_space<vmem>>, %arg16: memref<16x16xf32, #tpu.memory_space<vmem>>, %arg17: memref<1x16x512xf32, #tpu.memory_space<vmem>>, %arg18: memref<1x16x512xf32, #tpu.memory_space<vmem>>, %arg19: memref<8x768xf32, #tpu.memory_space<vmem>>, %arg20: memref<16x768xf32, #tpu.memory_space<vmem>>, %arg21: memref<216x512xbf16, #tpu.memory_space<vmem>>, %arg22: memref<432x512xbf16, #tpu.memory_space<vmem>>, %arg23: memref<16x512xf32, #tpu.memory_space<vmem>>) attributes {dimension_semantics = [#tpu.dimension_semantics<parallel>], iteration_bounds = array<i64: 2>, scalar_prefetch = 0 : i64, scratch_operands = 5 : i64, tpu.core_type = #tpu.core_type<tc>, window_params = [{transform_indices = @transform_0, window_bounds = array<i64: 1, 8, 512>}, {transform_indices = @transform_1, window_bounds = array<i64: 1, 8, 512>}, {pipeline_mode = #tpu.pipeline_mode<synchronous>, transform_indices = @transform_2, window_bounds = array<i64: 27, 512>}, {pipeline_mode = #tpu.pipeline_mode<synchronous>, transform_indices = @transform_3, window_bounds = array<i64: 1, 512>}, {pipeline_mode = #tpu.pipeline_mode<synchronous>, transform_indices = @transform_4, window_bounds = array<i64: 8, 8>}, {pipeline_mode = #tpu.pipeline_mode<synchronous>, transform_indices = @transform_5, window_bounds = array<i64: 16, 16>}, {pipeline_mode = #tpu.pipeline_mode<synchronous>, transform_indices = @transform_6, window_bounds = array<i64: 8, 1>}, {pipeline_mode = #tpu.pipeline_mode<synchronous>, transform_indices = @transform_7, window_bounds = array<i64: 8, 1>}, {pipeline_mode = #tpu.pipeline_mode<synchronous>, transform_indices = @transform_8, window_bounds = array<i64: 8, 1>}, {pipeline_mode = #tpu.pipeline_mode<synchronous>, transform_indices = @transform_9, window_bounds = array<i64: 8, 1>}, {pipeline_mode = #tpu.pipeline_mode<synchronous>, transform_indices = @transform_10, window_bounds = array<i64: 16, 1>}, {pipeline_mode = #tpu.pipeline_mode<synchronous>, transform_indices = @transform_11, window_bounds = array<i64: 16, 1>}, {pipeline_mode = #tpu.pipeline_mode<synchronous>, transform_indices = @transform_12, window_bounds = array<i64: 16, 216>}, {pipeline_mode = #tpu.pipeline_mode<synchronous>, transform_indices = @transform_13, window_bounds = array<i64: 16, 216>}, {pipeline_mode = #tpu.pipeline_mode<synchronous>, transform_indices = @transform_14, window_bounds = array<i64: 16, 432>}, {pipeline_mode = #tpu.pipeline_mode<synchronous>, transform_indices = @transform_15, window_bounds = array<i64: 16, 16>}, {transform_indices = @transform_16, window_bounds = array<i64: 1, 16, 512>}, {transform_indices = @transform_17, window_bounds = array<i64: 1, 16, 512>}]} {
    %c0 = arith.constant 0 : index
    %c0_0 = arith.constant 0 : index
    %c0_1 = arith.constant 0 : index
    %0 = vector.load %arg1[%c0, %c0_0, %c0_1] : memref<1x8x512xf32, #tpu.memory_space<vmem>>, vector<1x8x512xf32>
    %1 = vector.shape_cast %0 : vector<1x8x512xf32> to vector<8x512xf32>
    %c0_2 = arith.constant 0 : index
    %c0_3 = arith.constant 0 : index
    %2 = vector.load %arg5[%c0_2, %c0_3] : memref<8x8xf32, #tpu.memory_space<vmem>>, vector<8x8xf32>
    %cst = arith.constant dense<0.000000e+00> : vector<8x512xf32>
    %3 = tpu.matmul %2, %1, %cst {dimension_numbers = #tpu.dot_dimension_numbers<[1], [0], [0], [1], [0, 0, 1, 1], [], []>} : vector<8x8xf32>, vector<8x512xf32>, vector<8x512xf32> -> vector<8x512xf32>
    %c0_4 = arith.constant 0 : index
    %c0_5 = arith.constant 0 : index
    %4 = vector.load %arg5[%c0_4, %c0_5] : memref<8x8xf32, #tpu.memory_space<vmem>>, vector<8x8xf32>
    %5 = arith.mulf %1, %1 : vector<8x512xf32>
    %cst_6 = arith.constant dense<0.000000e+00> : vector<8x512xf32>
    %6 = tpu.matmul %4, %5, %cst_6 {dimension_numbers = #tpu.dot_dimension_numbers<[1], [0], [0], [1], [0, 0, 1, 1], [], []>} : vector<8x8xf32>, vector<8x512xf32>, vector<8x512xf32> -> vector<8x512xf32>
    %cst_7 = arith.constant dense<0.000000e+00> : vector<8xf32>
    %7 = vector.multi_reduction <add>, %3, %cst_7 [1] : vector<8x512xf32> to vector<8xf32>
    %8 = vector.shape_cast %7 : vector<8xf32> to vector<8x1xf32>
    %cst_8 = arith.constant dense<0.000000e+00> : vector<8xf32>
    %9 = vector.multi_reduction <add>, %6, %cst_8 [1] : vector<8x512xf32> to vector<8xf32>
    %10 = vector.shape_cast %9 : vector<8xf32> to vector<8x1xf32>
    %11 = arith.mulf %8, %8 : vector<8x1xf32>
    %12 = arith.subf %10, %11 : vector<8x1xf32>
    %13 = vector.broadcast %8 : vector<8x1xf32> to vector<8x512xf32>
    %14 = arith.subf %1, %13 : vector<8x512xf32>
    %cst_9 = arith.constant 9.99999974E-6 : f32
    %15 = vector.broadcast %cst_9 : f32 to vector<8x1xf32>
    %16 = arith.addf %12, %15 : vector<8x1xf32>
    %17 = math.rsqrt %16 : vector<8x1xf32>
    %18 = vector.broadcast %17 : vector<8x1xf32> to vector<8x512xf32>
    %19 = arith.mulf %14, %18 : vector<8x512xf32>
    %c0_10 = arith.constant 0 : index
    %c0_11 = arith.constant 0 : index
    %20 = vector.load %arg7[%c0_10, %c0_11] : memref<8x1xf32, #tpu.memory_space<vmem>>, vector<8x1xf32>
    %21 = vector.broadcast %20 : vector<8x1xf32> to vector<8x512xf32>
    %22 = arith.mulf %19, %21 : vector<8x512xf32>
    %c0_12 = arith.constant 0 : index
    %c0_13 = arith.constant 0 : index
    %23 = vector.load %arg8[%c0_12, %c0_13] : memref<8x1xf32, #tpu.memory_space<vmem>>, vector<8x1xf32>
    %24 = vector.broadcast %23 : vector<8x1xf32> to vector<8x512xf32>
    %25 = arith.addf %22, %24 : vector<8x512xf32>
    %cst_14 = arith.constant 0.000000e+00 : f32
    %26 = vector.broadcast %cst_14 : f32 to vector<8x512xf32>
    %27 = arith.maximumf %25, %26 : vector<8x512xf32>
    %cst_15 = arith.constant 0.000000e+00 : f32
    %28 = vector.broadcast %cst_15 : f32 to vector<8x128xf32>
    %c0_16 = arith.constant 0 : index
    %c0_17 = arith.constant 0 : index
    %29 = vector.load %arg19[%c0_16, %c0_17] : memref<8x768xf32, #tpu.memory_space<vmem>>, vector<8x128xf32>
    tpu.vector_store %arg19[%c0_16, %c0_17], %28 {strides = array<i32>} : memref<8x768xf32, #tpu.memory_space<vmem>>, vector<8x128xf32>,
    %cst_18 = arith.constant 0.000000e+00 : f32
    %30 = vector.broadcast %cst_18 : f32 to vector<8x128xf32>
    %c0_19 = arith.constant 0 : index
    %c640 = arith.constant 640 : index
    %31 = vector.load %arg19[%c0_19, %c640] : memref<8x768xf32, #tpu.memory_space<vmem>>, vector<8x128xf32>
    tpu.vector_store %arg19[%c0_19, %c640], %30 {strides = array<i32>} : memref<8x768xf32, #tpu.memory_space<vmem>>, vector<8x128xf32>,
    %c0_20 = arith.constant 0 : index
    %c128 = arith.constant 128 : index
    %32 = vector.load %arg19[%c0_20, %c128] : memref<8x768xf32, #tpu.memory_space<vmem>>, vector<8x512xf32>
    tpu.vector_store %arg19[%c0_20, %c128], %27 {strides = array<i32>} : memref<8x768xf32, #tpu.memory_space<vmem>>, vector<8x512xf32>,
    %c0_21 = arith.constant 0 : index
    %c55 = arith.constant 55 : index
    %33 = vector.load %arg19[%c0_21, %c55] : memref<8x768xf32, #tpu.memory_space<vmem>>, vector<8x512xf32>
    %c0_22 = arith.constant 0 : index
    %c0_23 = arith.constant 0 : index
    %34 = vector.load %arg3[%c0_22, %c0_23] : memref<27x512xf32, #tpu.memory_space<vmem>>, vector<1x512xf32>
    %35 = vector.broadcast %34 : vector<1x512xf32> to vector<8x512xf32>
    %36 = arith.mulf %33, %35 : vector<8x512xf32>
    %37 = arith.truncf %36 : vector<8x512xf32> to vector<8x512xbf16>
    %c0_24 = arith.constant 0 : index
    %c0_25 = arith.constant 0 : index
    %38 = vector.load %arg21[%c0_24, %c0_25] : memref<216x512xbf16, #tpu.memory_space<vmem>>, vector<8x512xbf16>
    tpu.vector_store %arg21[%c0_24, %c0_25], %37 {strides = array<i32>} : memref<216x512xbf16, #tpu.memory_space<vmem>>, vector<8x512xbf16>,
    %c0_26 = arith.constant 0 : index
    %c56 = arith.constant 56 : index
    %39 = vector.load %arg19[%c0_26, %c56] : memref<8x768xf32, #tpu.memory_space<vmem>>, vector<8x512xf32>
    %c1 = arith.constant 1 : index
    %c0_27 = arith.constant 0 : index
    %40 = vector.load %arg3[%c1, %c0_27] : memref<27x512xf32, #tpu.memory_space<vmem>>, vector<1x512xf32>
    %41 = vector.broadcast %40 : vector<1x512xf32> to vector<8x512xf32>
    %42 = arith.mulf %39, %41 : vector<8x512xf32>
    %43 = arith.truncf %42 : vector<8x512xf32> to vector<8x512xbf16>
    %c8 = arith.constant 8 : index
    %c0_28 = arith.constant 0 : index
    %44 = vector.load %arg21[%c8, %c0_28] : memref<216x512xbf16, #tpu.memory_space<vmem>>, vector<8x512xbf16>
    tpu.vector_store %arg21[%c8, %c0_28], %43 {strides = array<i32>} : memref<216x512xbf16, #tpu.memory_space<vmem>>, vector<8x512xbf16>,
    %c0_29 = arith.constant 0 : index
    %c57 = arith.constant 57 : index
    %45 = vector.load %arg19[%c0_29, %c57] : memref<8x768xf32, #tpu.memory_space<vmem>>, vector<8x512xf32>
    %c2 = arith.constant 2 : index
    %c0_30 = arith.constant 0 : index
    %46 = vector.load %arg3[%c2, %c0_30] : memref<27x512xf32, #tpu.memory_space<vmem>>, vector<1x512xf32>
    %47 = vector.broadcast %46 : vector<1x512xf32> to vector<8x512xf32>
    %48 = arith.mulf %45, %47 : vector<8x512xf32>
    %49 = arith.truncf %48 : vector<8x512xf32> to vector<8x512xbf16>
    %c16 = arith.constant 16 : index
    %c0_31 = arith.constant 0 : index
    %50 = vector.load %arg21[%c16, %c0_31] : memref<216x512xbf16, #tpu.memory_space<vmem>>, vector<8x512xbf16>
    tpu.vector_store %arg21[%c16, %c0_31], %49 {strides = array<i32>} : memref<216x512xbf16, #tpu.memory_space<vmem>>, vector<8x512xbf16>,
    %c0_32 = arith.constant 0 : index
    %c63 = arith.constant 63 : index
    %51 = vector.load %arg19[%c0_32, %c63] : memref<8x768xf32, #tpu.memory_space<vmem>>, vector<8x512xf32>
    %c3 = arith.constant 3 : index
    %c0_33 = arith.constant 0 : index
    %52 = vector.load %arg3[%c3, %c0_33] : memref<27x512xf32, #tpu.memory_space<vmem>>, vector<1x512xf32>
    %53 = vector.broadcast %52 : vector<1x512xf32> to vector<8x512xf32>
    %54 = arith.mulf %51, %53 : vector<8x512xf32>
    %55 = arith.truncf %54 : vector<8x512xf32> to vector<8x512xbf16>
    %c24 = arith.constant 24 : index
    %c0_34 = arith.constant 0 : index
    %56 = vector.load %arg21[%c24, %c0_34] : memref<216x512xbf16, #tpu.memory_space<vmem>>, vector<8x512xbf16>
    tpu.vector_store %arg21[%c24, %c0_34], %55 {strides = array<i32>} : memref<216x512xbf16, #tpu.memory_space<vmem>>, vector<8x512xbf16>,
    %c0_35 = arith.constant 0 : index
    %c64 = arith.constant 64 : index
    %57 = vector.load %arg19[%c0_35, %c64] : memref<8x768xf32, #tpu.memory_space<vmem>>, vector<8x512xf32>
    %c4 = arith.constant 4 : index
    %c0_36 = arith.constant 0 : index
    %58 = vector.load %arg3[%c4, %c0_36] : memref<27x512xf32, #tpu.memory_space<vmem>>, vector<1x512xf32>
    %59 = vector.broadcast %58 : vector<1x512xf32> to vector<8x512xf32>
    %60 = arith.mulf %57, %59 : vector<8x512xf32>
    %61 = arith.truncf %60 : vector<8x512xf32> to vector<8x512xbf16>
    %c32 = arith.constant 32 : index
    %c0_37 = arith.constant 0 : index
    %62 = vector.load %arg21[%c32, %c0_37] : memref<216x512xbf16, #tpu.memory_space<vmem>>, vector<8x512xbf16>
    tpu.vector_store %arg21[%c32, %c0_37], %61 {strides = array<i32>} : memref<216x512xbf16, #tpu.memory_space<vmem>>, vector<8x512xbf16>,
    %c0_38 = arith.constant 0 : index
    %c65 = arith.constant 65 : index
    %63 = vector.load %arg19[%c0_38, %c65] : memref<8x768xf32, #tpu.memory_space<vmem>>, vector<8x512xf32>
    %c5 = arith.constant 5 : index
    %c0_39 = arith.constant 0 : index
    %64 = vector.load %arg3[%c5, %c0_39] : memref<27x512xf32, #tpu.memory_space<vmem>>, vector<1x512xf32>
    %65 = vector.broadcast %64 : vector<1x512xf32> to vector<8x512xf32>
    %66 = arith.mulf %63, %65 : vector<8x512xf32>
    %67 = arith.truncf %66 : vector<8x512xf32> to vector<8x512xbf16>
    %c40 = arith.constant 40 : index
    %c0_40 = arith.constant 0 : index
    %68 = vector.load %arg21[%c40, %c0_40] : memref<216x512xbf16, #tpu.memory_space<vmem>>, vector<8x512xbf16>
    tpu.vector_store %arg21[%c40, %c0_40], %67 {strides = array<i32>} : memref<216x512xbf16, #tpu.memory_space<vmem>>, vector<8x512xbf16>,
    %c0_41 = arith.constant 0 : index
    %c71 = arith.constant 71 : index
    %69 = vector.load %arg19[%c0_41, %c71] : memref<8x768xf32, #tpu.memory_space<vmem>>, vector<8x512xf32>
    %c6 = arith.constant 6 : index
    %c0_42 = arith.constant 0 : index
    %70 = vector.load %arg3[%c6, %c0_42] : memref<27x512xf32, #tpu.memory_space<vmem>>, vector<1x512xf32>
    %71 = vector.broadcast %70 : vector<1x512xf32> to vector<8x512xf32>
    %72 = arith.mulf %69, %71 : vector<8x512xf32>
    %73 = arith.truncf %72 : vector<8x512xf32> to vector<8x512xbf16>
    %c48 = arith.constant 48 : index
    %c0_43 = arith.constant 0 : index
    %74 = vector.load %arg21[%c48, %c0_43] : memref<216x512xbf16, #tpu.memory_space<vmem>>, vector<8x512xbf16>
    tpu.vector_store %arg21[%c48, %c0_43], %73 {strides = array<i32>} : memref<216x512xbf16, #tpu.memory_space<vmem>>, vector<8x512xbf16>,
    %c0_44 = arith.constant 0 : index
    %c72 = arith.constant 72 : index
    %75 = vector.load %arg19[%c0_44, %c72] : memref<8x768xf32, #tpu.memory_space<vmem>>, vector<8x512xf32>
    %c7 = arith.constant 7 : index
    %c0_45 = arith.constant 0 : index
    %76 = vector.load %arg3[%c7, %c0_45] : memref<27x512xf32, #tpu.memory_space<vmem>>, vector<1x512xf32>
    %77 = vector.broadcast %76 : vector<1x512xf32> to vector<8x512xf32>
    %78 = arith.mulf %75, %77 : vector<8x512xf32>
    %79 = arith.truncf %78 : vector<8x512xf32> to vector<8x512xbf16>
    %c56_46 = arith.constant 56 : index
    %c0_47 = arith.constant 0 : index
    %80 = vector.load %arg21[%c56_46, %c0_47] : memref<216x512xbf16, #tpu.memory_space<vmem>>, vector<8x512xbf16>
    tpu.vector_store %arg21[%c56_46, %c0_47], %79 {strides = array<i32>} : memref<216x512xbf16, #tpu.memory_space<vmem>>, vector<8x512xbf16>,
    %c0_48 = arith.constant 0 : index
    %c73 = arith.constant 73 : index
    %81 = vector.load %arg19[%c0_48, %c73] : memref<8x768xf32, #tpu.memory_space<vmem>>, vector<8x512xf32>
    %c8_49 = arith.constant 8 : index
    %c0_50 = arith.constant 0 : index
    %82 = vector.load %arg3[%c8_49, %c0_50] : memref<27x512xf32, #tpu.memory_space<vmem>>, vector<1x512xf32>
    %83 = vector.broadcast %82 : vector<1x512xf32> to vector<8x512xf32>
    %84 = arith.mulf %81, %83 : vector<8x512xf32>
    %85 = arith.truncf %84 : vector<8x512xf32> to vector<8x512xbf16>
    %c64_51 = arith.constant 64 : index
    %c0_52 = arith.constant 0 : index
    %86 = vector.load %arg21[%c64_51, %c0_52] : memref<216x512xbf16, #tpu.memory_space<vmem>>, vector<8x512xbf16>
    tpu.vector_store %arg21[%c64_51, %c0_52], %85 {strides = array<i32>} : memref<216x512xbf16, #tpu.memory_space<vmem>>, vector<8x512xbf16>,
    %c0_53 = arith.constant 0 : index
    %c119 = arith.constant 119 : index
    %87 = vector.load %arg19[%c0_53, %c119] : memref<8x768xf32, #tpu.memory_space<vmem>>, vector<8x512xf32>
    %c9 = arith.constant 9 : index
    %c0_54 = arith.constant 0 : index
    %88 = vector.load %arg3[%c9, %c0_54] : memref<27x512xf32, #tpu.memory_space<vmem>>, vector<1x512xf32>
    %89 = vector.broadcast %88 : vector<1x512xf32> to vector<8x512xf32>
    %90 = arith.mulf %87, %89 : vector<8x512xf32>
    %91 = arith.truncf %90 : vector<8x512xf32> to vector<8x512xbf16>
    %c72_55 = arith.constant 72 : index
    %c0_56 = arith.constant 0 : index
    %92 = vector.load %arg21[%c72_55, %c0_56] : memref<216x512xbf16, #tpu.memory_space<vmem>>, vector<8x512xbf16>
    tpu.vector_store %arg21[%c72_55, %c0_56], %91 {strides = array<i32>} : memref<216x512xbf16, #tpu.memory_space<vmem>>, vector<8x512xbf16>,
    %c0_57 = arith.constant 0 : index
    %c120 = arith.constant 120 : index
    %93 = vector.load %arg19[%c0_57, %c120] : memref<8x768xf32, #tpu.memory_space<vmem>>, vector<8x512xf32>
    %c10 = arith.constant 10 : index
    %c0_58 = arith.constant 0 : index
    %94 = vector.load %arg3[%c10, %c0_58] : memref<27x512xf32, #tpu.memory_space<vmem>>, vector<1x512xf32>
    %95 = vector.broadcast %94 : vector<1x512xf32> to vector<8x512xf32>
    %96 = arith.mulf %93, %95 : vector<8x512xf32>
    %97 = arith.truncf %96 : vector<8x512xf32> to vector<8x512xbf16>
    %c80 = arith.constant 80 : index
    %c0_59 = arith.constant 0 : index
    %98 = vector.load %arg21[%c80, %c0_59] : memref<216x512xbf16, #tpu.memory_space<vmem>>, vector<8x512xbf16>
    tpu.vector_store %arg21[%c80, %c0_59], %97 {strides = array<i32>} : memref<216x512xbf16, #tpu.memory_space<vmem>>, vector<8x512xbf16>,
    %c0_60 = arith.constant 0 : index
    %c121 = arith.constant 121 : index
    %99 = vector.load %arg19[%c0_60, %c121] : memref<8x768xf32, #tpu.memory_space<vmem>>, vector<8x512xf32>
    %c11 = arith.constant 11 : index
    %c0_61 = arith.constant 0 : index
    %100 = vector.load %arg3[%c11, %c0_61] : memref<27x512xf32, #tpu.memory_space<vmem>>, vector<1x512xf32>
    %101 = vector.broadcast %100 : vector<1x512xf32> to vector<8x512xf32>
    %102 = arith.mulf %99, %101 : vector<8x512xf32>
    %103 = arith.truncf %102 : vector<8x512xf32> to vector<8x512xbf16>
    %c88 = arith.constant 88 : index
    %c0_62 = arith.constant 0 : index
    %104 = vector.load %arg21[%c88, %c0_62] : memref<216x512xbf16, #tpu.memory_space<vmem>>, vector<8x512xbf16>
    tpu.vector_store %arg21[%c88, %c0_62], %103 {strides = array<i32>} : memref<216x512xbf16, #tpu.memory_space<vmem>>, vector<8x512xbf16>,
    %c0_63 = arith.constant 0 : index
    %c127 = arith.constant 127 : index
    %105 = vector.load %arg19[%c0_63, %c127] : memref<8x768xf32, #tpu.memory_space<vmem>>, vector<8x512xf32>
    %c12 = arith.constant 12 : index
    %c0_64 = arith.constant 0 : index
    %106 = vector.load %arg3[%c12, %c0_64] : memref<27x512xf32, #tpu.memory_space<vmem>>, vector<1x512xf32>
    %107 = vector.broadcast %106 : vector<1x512xf32> to vector<8x512xf32>
    %108 = arith.mulf %105, %107 : vector<8x512xf32>
    %109 = arith.truncf %108 : vector<8x512xf32> to vector<8x512xbf16>
    %c96 = arith.constant 96 : index
    %c0_65 = arith.constant 0 : index
    %110 = vector.load %arg21[%c96, %c0_65] : memref<216x512xbf16, #tpu.memory_space<vmem>>, vector<8x512xbf16>
    tpu.vector_store %arg21[%c96, %c0_65], %109 {strides = array<i32>} : memref<216x512xbf16, #tpu.memory_space<vmem>>, vector<8x512xbf16>,
    %c0_66 = arith.constant 0 : index
    %c128_67 = arith.constant 128 : index
    %111 = vector.load %arg19[%c0_66, %c128_67] : memref<8x768xf32, #tpu.memory_space<vmem>>, vector<8x512xf32>
    %c13 = arith.constant 13 : index
    %c0_68 = arith.constant 0 : index
    %112 = vector.load %arg3[%c13, %c0_68] : memref<27x512xf32, #tpu.memory_space<vmem>>, vector<1x512xf32>
    %113 = vector.broadcast %112 : vector<1x512xf32> to vector<8x512xf32>
    %114 = arith.mulf %111, %113 : vector<8x512xf32>
    %115 = arith.truncf %114 : vector<8x512xf32> to vector<8x512xbf16>
    %c104 = arith.constant 104 : index
    %c0_69 = arith.constant 0 : index
    %116 = vector.load %arg21[%c104, %c0_69] : memref<216x512xbf16, #tpu.memory_space<vmem>>, vector<8x512xbf16>
    tpu.vector_store %arg21[%c104, %c0_69], %115 {strides = array<i32>} : memref<216x512xbf16, #tpu.memory_space<vmem>>, vector<8x512xbf16>,
    %c0_70 = arith.constant 0 : index
    %c129 = arith.constant 129 : index
    %117 = vector.load %arg19[%c0_70, %c129] : memref<8x768xf32, #tpu.memory_space<vmem>>, vector<8x512xf32>
    %c14 = arith.constant 14 : index
    %c0_71 = arith.constant 0 : index
    %118 = vector.load %arg3[%c14, %c0_71] : memref<27x512xf32, #tpu.memory_space<vmem>>, vector<1x512xf32>
    %119 = vector.broadcast %118 : vector<1x512xf32> to vector<8x512xf32>
    %120 = arith.mulf %117, %119 : vector<8x512xf32>
    %121 = arith.truncf %120 : vector<8x512xf32> to vector<8x512xbf16>
    %c112 = arith.constant 112 : index
    %c0_72 = arith.constant 0 : index
    %122 = vector.load %arg21[%c112, %c0_72] : memref<216x512xbf16, #tpu.memory_space<vmem>>, vector<8x512xbf16>
    tpu.vector_store %arg21[%c112, %c0_72], %121 {strides = array<i32>} : memref<216x512xbf16, #tpu.memory_space<vmem>>, vector<8x512xbf16>,
    %c0_73 = arith.constant 0 : index
    %c135 = arith.constant 135 : index
    %123 = vector.load %arg19[%c0_73, %c135] : memref<8x768xf32, #tpu.memory_space<vmem>>, vector<8x512xf32>
    %c15 = arith.constant 15 : index
    %c0_74 = arith.constant 0 : index
    %124 = vector.load %arg3[%c15, %c0_74] : memref<27x512xf32, #tpu.memory_space<vmem>>, vector<1x512xf32>
    %125 = vector.broadcast %124 : vector<1x512xf32> to vector<8x512xf32>
    %126 = arith.mulf %123, %125 : vector<8x512xf32>
    %127 = arith.truncf %126 : vector<8x512xf32> to vector<8x512xbf16>
    %c120_75 = arith.constant 120 : index
    %c0_76 = arith.constant 0 : index
    %128 = vector.load %arg21[%c120_75, %c0_76] : memref<216x512xbf16, #tpu.memory_space<vmem>>, vector<8x512xbf16>
    tpu.vector_store %arg21[%c120_75, %c0_76], %127 {strides = array<i32>} : memref<216x512xbf16, #tpu.memory_space<vmem>>, vector<8x512xbf16>,
    %c0_77 = arith.constant 0 : index
    %c136 = arith.constant 136 : index
    %129 = vector.load %arg19[%c0_77, %c136] : memref<8x768xf32, #tpu.memory_space<vmem>>, vector<8x512xf32>
    %c16_78 = arith.constant 16 : index
    %c0_79 = arith.constant 0 : index
    %130 = vector.load %arg3[%c16_78, %c0_79] : memref<27x512xf32, #tpu.memory_space<vmem>>, vector<1x512xf32>
    %131 = vector.broadcast %130 : vector<1x512xf32> to vector<8x512xf32>
    %132 = arith.mulf %129, %131 : vector<8x512xf32>
    %133 = arith.truncf %132 : vector<8x512xf32> to vector<8x512xbf16>
    %c128_80 = arith.constant 128 : index
    %c0_81 = arith.constant 0 : index
    %134 = vector.load %arg21[%c128_80, %c0_81] : memref<216x512xbf16, #tpu.memory_space<vmem>>, vector<8x512xbf16>
    tpu.vector_store %arg21[%c128_80, %c0_81], %133 {strides = array<i32>} : memref<216x512xbf16, #tpu.memory_space<vmem>>, vector<8x512xbf16>,
    %c0_82 = arith.constant 0 : index
    %c137 = arith.constant 137 : index
    %135 = vector.load %arg19[%c0_82, %c137] : memref<8x768xf32, #tpu.memory_space<vmem>>, vector<8x512xf32>
    %c17 = arith.constant 17 : index
    %c0_83 = arith.constant 0 : index
    %136 = vector.load %arg3[%c17, %c0_83] : memref<27x512xf32, #tpu.memory_space<vmem>>, vector<1x512xf32>
    %137 = vector.broadcast %136 : vector<1x512xf32> to vector<8x512xf32>
    %138 = arith.mulf %135, %137 : vector<8x512xf32>
    %139 = arith.truncf %138 : vector<8x512xf32> to vector<8x512xbf16>
    %c136_84 = arith.constant 136 : index
    %c0_85 = arith.constant 0 : index
    %140 = vector.load %arg21[%c136_84, %c0_85] : memref<216x512xbf16, #tpu.memory_space<vmem>>, vector<8x512xbf16>
    tpu.vector_store %arg21[%c136_84, %c0_85], %139 {strides = array<i32>} : memref<216x512xbf16, #tpu.memory_space<vmem>>, vector<8x512xbf16>,
    %c0_86 = arith.constant 0 : index
    %c183 = arith.constant 183 : index
    %141 = vector.load %arg19[%c0_86, %c183] : memref<8x768xf32, #tpu.memory_space<vmem>>, vector<8x512xf32>
    %c18 = arith.constant 18 : index
    %c0_87 = arith.constant 0 : index
    %142 = vector.load %arg3[%c18, %c0_87] : memref<27x512xf32, #tpu.memory_space<vmem>>, vector<1x512xf32>
    %143 = vector.broadcast %142 : vector<1x512xf32> to vector<8x512xf32>
    %144 = arith.mulf %141, %143 : vector<8x512xf32>
    %145 = arith.truncf %144 : vector<8x512xf32> to vector<8x512xbf16>
    %c144 = arith.constant 144 : index
    %c0_88 = arith.constant 0 : index
    %146 = vector.load %arg21[%c144, %c0_88] : memref<216x512xbf16, #tpu.memory_space<vmem>>, vector<8x512xbf16>
    tpu.vector_store %arg21[%c144, %c0_88], %145 {strides = array<i32>} : memref<216x512xbf16, #tpu.memory_space<vmem>>, vector<8x512xbf16>,
    %c0_89 = arith.constant 0 : index
    %c184 = arith.constant 184 : index
    %147 = vector.load %arg19[%c0_89, %c184] : memref<8x768xf32, #tpu.memory_space<vmem>>, vector<8x512xf32>
    %c19 = arith.constant 19 : index
    %c0_90 = arith.constant 0 : index
    %148 = vector.load %arg3[%c19, %c0_90] : memref<27x512xf32, #tpu.memory_space<vmem>>, vector<1x512xf32>
    %149 = vector.broadcast %148 : vector<1x512xf32> to vector<8x512xf32>
    %150 = arith.mulf %147, %149 : vector<8x512xf32>
    %151 = arith.truncf %150 : vector<8x512xf32> to vector<8x512xbf16>
    %c152 = arith.constant 152 : index
    %c0_91 = arith.constant 0 : index
    %152 = vector.load %arg21[%c152, %c0_91] : memref<216x512xbf16, #tpu.memory_space<vmem>>, vector<8x512xbf16>
    tpu.vector_store %arg21[%c152, %c0_91], %151 {strides = array<i32>} : memref<216x512xbf16, #tpu.memory_space<vmem>>, vector<8x512xbf16>,
    %c0_92 = arith.constant 0 : index
    %c185 = arith.constant 185 : index
    %153 = vector.load %arg19[%c0_92, %c185] : memref<8x768xf32, #tpu.memory_space<vmem>>, vector<8x512xf32>
    %c20 = arith.constant 20 : index
    %c0_93 = arith.constant 0 : index
    %154 = vector.load %arg3[%c20, %c0_93] : memref<27x512xf32, #tpu.memory_space<vmem>>, vector<1x512xf32>
    %155 = vector.broadcast %154 : vector<1x512xf32> to vector<8x512xf32>
    %156 = arith.mulf %153, %155 : vector<8x512xf32>
    %157 = arith.truncf %156 : vector<8x512xf32> to vector<8x512xbf16>
    %c160 = arith.constant 160 : index
    %c0_94 = arith.constant 0 : index
    %158 = vector.load %arg21[%c160, %c0_94] : memref<216x512xbf16, #tpu.memory_space<vmem>>, vector<8x512xbf16>
    tpu.vector_store %arg21[%c160, %c0_94], %157 {strides = array<i32>} : memref<216x512xbf16, #tpu.memory_space<vmem>>, vector<8x512xbf16>,
    %c0_95 = arith.constant 0 : index
    %c191 = arith.constant 191 : index
    %159 = vector.load %arg19[%c0_95, %c191] : memref<8x768xf32, #tpu.memory_space<vmem>>, vector<8x512xf32>
    %c21 = arith.constant 21 : index
    %c0_96 = arith.constant 0 : index
    %160 = vector.load %arg3[%c21, %c0_96] : memref<27x512xf32, #tpu.memory_space<vmem>>, vector<1x512xf32>
    %161 = vector.broadcast %160 : vector<1x512xf32> to vector<8x512xf32>
    %162 = arith.mulf %159, %161 : vector<8x512xf32>
    %163 = arith.truncf %162 : vector<8x512xf32> to vector<8x512xbf16>
    %c168 = arith.constant 168 : index
    %c0_97 = arith.constant 0 : index
    %164 = vector.load %arg21[%c168, %c0_97] : memref<216x512xbf16, #tpu.memory_space<vmem>>, vector<8x512xbf16>
    tpu.vector_store %arg21[%c168, %c0_97], %163 {strides = array<i32>} : memref<216x512xbf16, #tpu.memory_space<vmem>>, vector<8x512xbf16>,
    %c0_98 = arith.constant 0 : index
    %c192 = arith.constant 192 : index
    %165 = vector.load %arg19[%c0_98, %c192] : memref<8x768xf32, #tpu.memory_space<vmem>>, vector<8x512xf32>
    %c22 = arith.constant 22 : index
    %c0_99 = arith.constant 0 : index
    %166 = vector.load %arg3[%c22, %c0_99] : memref<27x512xf32, #tpu.memory_space<vmem>>, vector<1x512xf32>
    %167 = vector.broadcast %166 : vector<1x512xf32> to vector<8x512xf32>
    %168 = arith.mulf %165, %167 : vector<8x512xf32>
    %169 = arith.truncf %168 : vector<8x512xf32> to vector<8x512xbf16>
    %c176 = arith.constant 176 : index
    %c0_100 = arith.constant 0 : index
    %170 = vector.load %arg21[%c176, %c0_100] : memref<216x512xbf16, #tpu.memory_space<vmem>>, vector<8x512xbf16>
    tpu.vector_store %arg21[%c176, %c0_100], %169 {strides = array<i32>} : memref<216x512xbf16, #tpu.memory_space<vmem>>, vector<8x512xbf16>,
    %c0_101 = arith.constant 0 : index
    %c193 = arith.constant 193 : index
    %171 = vector.load %arg19[%c0_101, %c193] : memref<8x768xf32, #tpu.memory_space<vmem>>, vector<8x512xf32>
    %c23 = arith.constant 23 : index
    %c0_102 = arith.constant 0 : index
    %172 = vector.load %arg3[%c23, %c0_102] : memref<27x512xf32, #tpu.memory_space<vmem>>, vector<1x512xf32>
    %173 = vector.broadcast %172 : vector<1x512xf32> to vector<8x512xf32>
    %174 = arith.mulf %171, %173 : vector<8x512xf32>
    %175 = arith.truncf %174 : vector<8x512xf32> to vector<8x512xbf16>
    %c184_103 = arith.constant 184 : index
    %c0_104 = arith.constant 0 : index
    %176 = vector.load %arg21[%c184_103, %c0_104] : memref<216x512xbf16, #tpu.memory_space<vmem>>, vector<8x512xbf16>
    tpu.vector_store %arg21[%c184_103, %c0_104], %175 {strides = array<i32>} : memref<216x512xbf16, #tpu.memory_space<vmem>>, vector<8x512xbf16>,
    %c0_105 = arith.constant 0 : index
    %c199 = arith.constant 199 : index
    %177 = vector.load %arg19[%c0_105, %c199] : memref<8x768xf32, #tpu.memory_space<vmem>>, vector<8x512xf32>
    %c24_106 = arith.constant 24 : index
    %c0_107 = arith.constant 0 : index
    %178 = vector.load %arg3[%c24_106, %c0_107] : memref<27x512xf32, #tpu.memory_space<vmem>>, vector<1x512xf32>
    %179 = vector.broadcast %178 : vector<1x512xf32> to vector<8x512xf32>
    %180 = arith.mulf %177, %179 : vector<8x512xf32>
    %181 = arith.truncf %180 : vector<8x512xf32> to vector<8x512xbf16>
    %c192_108 = arith.constant 192 : index
    %c0_109 = arith.constant 0 : index
    %182 = vector.load %arg21[%c192_108, %c0_109] : memref<216x512xbf16, #tpu.memory_space<vmem>>, vector<8x512xbf16>
    tpu.vector_store %arg21[%c192_108, %c0_109], %181 {strides = array<i32>} : memref<216x512xbf16, #tpu.memory_space<vmem>>, vector<8x512xbf16>,
    %c0_110 = arith.constant 0 : index
    %c200 = arith.constant 200 : index
    %183 = vector.load %arg19[%c0_110, %c200] : memref<8x768xf32, #tpu.memory_space<vmem>>, vector<8x512xf32>
    %c25 = arith.constant 25 : index
    %c0_111 = arith.constant 0 : index
    %184 = vector.load %arg3[%c25, %c0_111] : memref<27x512xf32, #tpu.memory_space<vmem>>, vector<1x512xf32>
    %185 = vector.broadcast %184 : vector<1x512xf32> to vector<8x512xf32>
    %186 = arith.mulf %183, %185 : vector<8x512xf32>
    %187 = arith.truncf %186 : vector<8x512xf32> to vector<8x512xbf16>
    %c200_112 = arith.constant 200 : index
    %c0_113 = arith.constant 0 : index
    %188 = vector.load %arg21[%c200_112, %c0_113] : memref<216x512xbf16, #tpu.memory_space<vmem>>, vector<8x512xbf16>
    tpu.vector_store %arg21[%c200_112, %c0_113], %187 {strides = array<i32>} : memref<216x512xbf16, #tpu.memory_space<vmem>>, vector<8x512xbf16>,
    %c0_114 = arith.constant 0 : index
    %c201 = arith.constant 201 : index
    %189 = vector.load %arg19[%c0_114, %c201] : memref<8x768xf32, #tpu.memory_space<vmem>>, vector<8x512xf32>
    %c26 = arith.constant 26 : index
    %c0_115 = arith.constant 0 : index
    %190 = vector.load %arg3[%c26, %c0_115] : memref<27x512xf32, #tpu.memory_space<vmem>>, vector<1x512xf32>
    %191 = vector.broadcast %190 : vector<1x512xf32> to vector<8x512xf32>
    %192 = arith.mulf %189, %191 : vector<8x512xf32>
    %193 = arith.truncf %192 : vector<8x512xf32> to vector<8x512xbf16>
    %c208 = arith.constant 208 : index
    %c0_116 = arith.constant 0 : index
    %194 = vector.load %arg21[%c208, %c0_116] : memref<216x512xbf16, #tpu.memory_space<vmem>>, vector<8x512xbf16>
    tpu.vector_store %arg21[%c208, %c0_116], %193 {strides = array<i32>} : memref<216x512xbf16, #tpu.memory_space<vmem>>, vector<8x512xbf16>,
    %c0_117 = arith.constant 0 : index
    %c0_118 = arith.constant 0 : index
    %195 = vector.load %arg13[%c0_117, %c0_118] : memref<16x216xbf16, #tpu.memory_space<vmem>>, vector<16x216xbf16>
    %c0_119 = arith.constant 0 : index
    %c0_120 = arith.constant 0 : index
    %196 = vector.load %arg21[%c0_119, %c0_120] : memref<216x512xbf16, #tpu.memory_space<vmem>>, vector<216x512xbf16>
    %cst_121 = arith.constant dense<0.000000e+00> : vector<16x512xf32>
    %197 = tpu.matmul %195, %196, %cst_121 {dimension_numbers = #tpu.dot_dimension_numbers<[1], [0], [0], [1], [0, 0, 1, 1], [], []>} : vector<16x216xbf16>, vector<216x512xbf16>, vector<16x512xf32> -> vector<16x512xf32>
    %c0_122 = arith.constant 0 : index
    %c0_123 = arith.constant 0 : index
    %198 = vector.load %arg23[%c0_122, %c0_123] : memref<16x512xf32, #tpu.memory_space<vmem>>, vector<16x512xf32>
    tpu.vector_store %arg23[%c0_122, %c0_123], %197 {strides = array<i32>} : memref<16x512xf32, #tpu.memory_space<vmem>>, vector<16x512xf32>,
    %199 = arith.negf %197 : vector<16x512xf32>
    %200 = math.exp %199 : vector<16x512xf32>
    %cst_124 = arith.constant 1.000000e+00 : f32
    %201 = vector.broadcast %cst_124 : f32 to vector<16x512xf32>
    %202 = arith.addf %201, %200 : vector<16x512xf32>
    %203 = arith.divf %201, %202 : vector<16x512xf32>
    %c64_i32 = arith.constant 64 : i32
    %204 = tpu.dynamic_rotate %203 by %c64_i32 dim 1 : vector<16x512xf32>, i32 -> vector<16x512xf32>
    %205 = arith.subf %203, %204 : vector<16x512xf32>
    %206 = math.absf %205 : vector<16x512xf32>
    %c0_125 = arith.constant 0 : index
    %c0_126 = arith.constant 0 : index
    %207 = vector.load %arg4[%c0_125, %c0_126] : memref<1x512xf32, #tpu.memory_space<vmem>>, vector<1x512xf32>
    %208 = vector.broadcast %207 : vector<1x512xf32> to vector<16x512xf32>
    %209 = arith.mulf %206, %208 : vector<16x512xf32>
    %c0_127 = arith.constant 0 : index
    %c0_128 = arith.constant 0 : index
    %210 = vector.load %arg16[%c0_127, %c0_128] : memref<16x16xf32, #tpu.memory_space<vmem>>, vector<16x16xf32>
    %cst_129 = arith.constant dense<0.000000e+00> : vector<16x512xf32>
    %211 = tpu.matmul %210, %209, %cst_129 {dimension_numbers = #tpu.dot_dimension_numbers<[1], [0], [0], [1], [0, 0, 1, 1], [], []>} : vector<16x16xf32>, vector<16x512xf32>, vector<16x512xf32> -> vector<16x512xf32>
    %c0_130 = arith.constant 0 : index
    %c0_131 = arith.constant 0 : index
    %c0_132 = arith.constant 0 : index
    %212 = vector.load %arg2[%c0_130, %c0_131, %c0_132] : memref<1x8x512xf32, #tpu.memory_space<vmem>>, vector<1x8x512xf32>
    %213 = vector.shape_cast %212 : vector<1x8x512xf32> to vector<8x512xf32>
    %c0_133 = arith.constant 0 : index
    %c0_134 = arith.constant 0 : index
    %214 = vector.load %arg5[%c0_133, %c0_134] : memref<8x8xf32, #tpu.memory_space<vmem>>, vector<8x8xf32>
    %cst_135 = arith.constant dense<0.000000e+00> : vector<8x512xf32>
    %215 = tpu.matmul %214, %213, %cst_135 {dimension_numbers = #tpu.dot_dimension_numbers<[1], [0], [0], [1], [0, 0, 1, 1], [], []>} : vector<8x8xf32>, vector<8x512xf32>, vector<8x512xf32> -> vector<8x512xf32>
    %c0_136 = arith.constant 0 : index
    %c0_137 = arith.constant 0 : index
    %216 = vector.load %arg5[%c0_136, %c0_137] : memref<8x8xf32, #tpu.memory_space<vmem>>, vector<8x8xf32>
    %217 = arith.mulf %213, %213 : vector<8x512xf32>
    %cst_138 = arith.constant dense<0.000000e+00> : vector<8x512xf32>
    %218 = tpu.matmul %216, %217, %cst_138 {dimension_numbers = #tpu.dot_dimension_numbers<[1], [0], [0], [1], [0, 0, 1, 1], [], []>} : vector<8x8xf32>, vector<8x512xf32>, vector<8x512xf32> -> vector<8x512xf32>
    %cst_139 = arith.constant dense<0.000000e+00> : vector<8xf32>
    %219 = vector.multi_reduction <add>, %215, %cst_139 [1] : vector<8x512xf32> to vector<8xf32>
    %220 = vector.shape_cast %219 : vector<8xf32> to vector<8x1xf32>
    %cst_140 = arith.constant dense<0.000000e+00> : vector<8xf32>
    %221 = vector.multi_reduction <add>, %218, %cst_140 [1] : vector<8x512xf32> to vector<8xf32>
    %222 = vector.shape_cast %221 : vector<8xf32> to vector<8x1xf32>
    %223 = arith.mulf %220, %220 : vector<8x1xf32>
    %224 = arith.subf %222, %223 : vector<8x1xf32>
    %225 = vector.broadcast %220 : vector<8x1xf32> to vector<8x512xf32>
    %226 = arith.subf %213, %225 : vector<8x512xf32>
    %cst_141 = arith.constant 9.99999974E-6 : f32
    %227 = vector.broadcast %cst_141 : f32 to vector<8x1xf32>
    %228 = arith.addf %224, %227 : vector<8x1xf32>
    %229 = math.rsqrt %228 : vector<8x1xf32>
    %230 = vector.broadcast %229 : vector<8x1xf32> to vector<8x512xf32>
    %231 = arith.mulf %226, %230 : vector<8x512xf32>
    %c0_142 = arith.constant 0 : index
    %c0_143 = arith.constant 0 : index
    %232 = vector.load %arg9[%c0_142, %c0_143] : memref<8x1xf32, #tpu.memory_space<vmem>>, vector<8x1xf32>
    %233 = vector.broadcast %232 : vector<8x1xf32> to vector<8x512xf32>
    %234 = arith.mulf %231, %233 : vector<8x512xf32>
    %c0_144 = arith.constant 0 : index
    %c0_145 = arith.constant 0 : index
    %235 = vector.load %arg10[%c0_144, %c0_145] : memref<8x1xf32, #tpu.memory_space<vmem>>, vector<8x1xf32>
    %236 = vector.broadcast %235 : vector<8x1xf32> to vector<8x512xf32>
    %237 = arith.addf %234, %236 : vector<8x512xf32>
    %cst_146 = arith.constant 0.000000e+00 : f32
    %238 = vector.broadcast %cst_146 : f32 to vector<8x512xf32>
    %239 = arith.maximumf %237, %238 : vector<8x512xf32>
    %cst_147 = arith.constant 0.000000e+00 : f32
    %240 = vector.broadcast %cst_147 : f32 to vector<8x128xf32>
    %c0_148 = arith.constant 0 : index
    %c0_149 = arith.constant 0 : index
    %241 = vector.load %arg19[%c0_148, %c0_149] : memref<8x768xf32, #tpu.memory_space<vmem>>, vector<8x128xf32>
    tpu.vector_store %arg19[%c0_148, %c0_149], %240 {strides = array<i32>} : memref<8x768xf32, #tpu.memory_space<vmem>>, vector<8x128xf32>,
    %cst_150 = arith.constant 0.000000e+00 : f32
    %242 = vector.broadcast %cst_150 : f32 to vector<8x128xf32>
    %c0_151 = arith.constant 0 : index
    %c640_152 = arith.constant 640 : index
    %243 = vector.load %arg19[%c0_151, %c640_152] : memref<8x768xf32, #tpu.memory_space<vmem>>, vector<8x128xf32>
    tpu.vector_store %arg19[%c0_151, %c640_152], %242 {strides = array<i32>} : memref<8x768xf32, #tpu.memory_space<vmem>>, vector<8x128xf32>,
    %c0_153 = arith.constant 0 : index
    %c128_154 = arith.constant 128 : index
    %244 = vector.load %arg19[%c0_153, %c128_154] : memref<8x768xf32, #tpu.memory_space<vmem>>, vector<8x512xf32>
    tpu.vector_store %arg19[%c0_153, %c128_154], %239 {strides = array<i32>} : memref<8x768xf32, #tpu.memory_space<vmem>>, vector<8x512xf32>,
    %c0_155 = arith.constant 0 : index
    %c55_156 = arith.constant 55 : index
    %245 = vector.load %arg19[%c0_155, %c55_156] : memref<8x768xf32, #tpu.memory_space<vmem>>, vector<8x512xf32>
    %c0_157 = arith.constant 0 : index
    %c0_158 = arith.constant 0 : index
    %246 = vector.load %arg3[%c0_157, %c0_158] : memref<27x512xf32, #tpu.memory_space<vmem>>, vector<1x512xf32>
    %247 = vector.broadcast %246 : vector<1x512xf32> to vector<8x512xf32>
    %248 = arith.mulf %245, %247 : vector<8x512xf32>
    %249 = arith.truncf %248 : vector<8x512xf32> to vector<8x512xbf16>
    %c0_159 = arith.constant 0 : index
    %c0_160 = arith.constant 0 : index
    %250 = vector.load %arg21[%c0_159, %c0_160] : memref<216x512xbf16, #tpu.memory_space<vmem>>, vector<8x512xbf16>
    tpu.vector_store %arg21[%c0_159, %c0_160], %249 {strides = array<i32>} : memref<216x512xbf16, #tpu.memory_space<vmem>>, vector<8x512xbf16>,
    %c0_161 = arith.constant 0 : index
    %c56_162 = arith.constant 56 : index
    %251 = vector.load %arg19[%c0_161, %c56_162] : memref<8x768xf32, #tpu.memory_space<vmem>>, vector<8x512xf32>
    %c1_163 = arith.constant 1 : index
    %c0_164 = arith.constant 0 : index
    %252 = vector.load %arg3[%c1_163, %c0_164] : memref<27x512xf32, #tpu.memory_space<vmem>>, vector<1x512xf32>
    %253 = vector.broadcast %252 : vector<1x512xf32> to vector<8x512xf32>
    %254 = arith.mulf %251, %253 : vector<8x512xf32>
    %255 = arith.truncf %254 : vector<8x512xf32> to vector<8x512xbf16>
    %c8_165 = arith.constant 8 : index
    %c0_166 = arith.constant 0 : index
    %256 = vector.load %arg21[%c8_165, %c0_166] : memref<216x512xbf16, #tpu.memory_space<vmem>>, vector<8x512xbf16>
    tpu.vector_store %arg21[%c8_165, %c0_166], %255 {strides = array<i32>} : memref<216x512xbf16, #tpu.memory_space<vmem>>, vector<8x512xbf16>,
    %c0_167 = arith.constant 0 : index
    %c57_168 = arith.constant 57 : index
    %257 = vector.load %arg19[%c0_167, %c57_168] : memref<8x768xf32, #tpu.memory_space<vmem>>, vector<8x512xf32>
    %c2_169 = arith.constant 2 : index
    %c0_170 = arith.constant 0 : index
    %258 = vector.load %arg3[%c2_169, %c0_170] : memref<27x512xf32, #tpu.memory_space<vmem>>, vector<1x512xf32>
    %259 = vector.broadcast %258 : vector<1x512xf32> to vector<8x512xf32>
    %260 = arith.mulf %257, %259 : vector<8x512xf32>
    %261 = arith.truncf %260 : vector<8x512xf32> to vector<8x512xbf16>
    %c16_171 = arith.constant 16 : index
    %c0_172 = arith.constant 0 : index
    %262 = vector.load %arg21[%c16_171, %c0_172] : memref<216x512xbf16, #tpu.memory_space<vmem>>, vector<8x512xbf16>
    tpu.vector_store %arg21[%c16_171, %c0_172], %261 {strides = array<i32>} : memref<216x512xbf16, #tpu.memory_space<vmem>>, vector<8x512xbf16>,
    %c0_173 = arith.constant 0 : index
    %c63_174 = arith.constant 63 : index
    %263 = vector.load %arg19[%c0_173, %c63_174] : memref<8x768xf32, #tpu.memory_space<vmem>>, vector<8x512xf32>
    %c3_175 = arith.constant 3 : index
    %c0_176 = arith.constant 0 : index
    %264 = vector.load %arg3[%c3_175, %c0_176] : memref<27x512xf32, #tpu.memory_space<vmem>>, vector<1x512xf32>
    %265 = vector.broadcast %264 : vector<1x512xf32> to vector<8x512xf32>
    %266 = arith.mulf %263, %265 : vector<8x512xf32>
    %267 = arith.truncf %266 : vector<8x512xf32> to vector<8x512xbf16>
    %c24_177 = arith.constant 24 : index
    %c0_178 = arith.constant 0 : index
    %268 = vector.load %arg21[%c24_177, %c0_178] : memref<216x512xbf16, #tpu.memory_space<vmem>>, vector<8x512xbf16>
    tpu.vector_store %arg21[%c24_177, %c0_178], %267 {strides = array<i32>} : memref<216x512xbf16, #tpu.memory_space<vmem>>, vector<8x512xbf16>,
    %c0_179 = arith.constant 0 : index
    %c64_180 = arith.constant 64 : index
    %269 = vector.load %arg19[%c0_179, %c64_180] : memref<8x768xf32, #tpu.memory_space<vmem>>, vector<8x512xf32>
    %c4_181 = arith.constant 4 : index
    %c0_182 = arith.constant 0 : index
    %270 = vector.load %arg3[%c4_181, %c0_182] : memref<27x512xf32, #tpu.memory_space<vmem>>, vector<1x512xf32>
    %271 = vector.broadcast %270 : vector<1x512xf32> to vector<8x512xf32>
    %272 = arith.mulf %269, %271 : vector<8x512xf32>
    %273 = arith.truncf %272 : vector<8x512xf32> to vector<8x512xbf16>
    %c32_183 = arith.constant 32 : index
    %c0_184 = arith.constant 0 : index
    %274 = vector.load %arg21[%c32_183, %c0_184] : memref<216x512xbf16, #tpu.memory_space<vmem>>, vector<8x512xbf16>
    tpu.vector_store %arg21[%c32_183, %c0_184], %273 {strides = array<i32>} : memref<216x512xbf16, #tpu.memory_space<vmem>>, vector<8x512xbf16>,
    %c0_185 = arith.constant 0 : index
    %c65_186 = arith.constant 65 : index
    %275 = vector.load %arg19[%c0_185, %c65_186] : memref<8x768xf32, #tpu.memory_space<vmem>>, vector<8x512xf32>
    %c5_187 = arith.constant 5 : index
    %c0_188 = arith.constant 0 : index
    %276 = vector.load %arg3[%c5_187, %c0_188] : memref<27x512xf32, #tpu.memory_space<vmem>>, vector<1x512xf32>
    %277 = vector.broadcast %276 : vector<1x512xf32> to vector<8x512xf32>
    %278 = arith.mulf %275, %277 : vector<8x512xf32>
    %279 = arith.truncf %278 : vector<8x512xf32> to vector<8x512xbf16>
    %c40_189 = arith.constant 40 : index
    %c0_190 = arith.constant 0 : index
    %280 = vector.load %arg21[%c40_189, %c0_190] : memref<216x512xbf16, #tpu.memory_space<vmem>>, vector<8x512xbf16>
    tpu.vector_store %arg21[%c40_189, %c0_190], %279 {strides = array<i32>} : memref<216x512xbf16, #tpu.memory_space<vmem>>, vector<8x512xbf16>,
    %c0_191 = arith.constant 0 : index
    %c71_192 = arith.constant 71 : index
    %281 = vector.load %arg19[%c0_191, %c71_192] : memref<8x768xf32, #tpu.memory_space<vmem>>, vector<8x512xf32>
    %c6_193 = arith.constant 6 : index
    %c0_194 = arith.constant 0 : index
    %282 = vector.load %arg3[%c6_193, %c0_194] : memref<27x512xf32, #tpu.memory_space<vmem>>, vector<1x512xf32>
    %283 = vector.broadcast %282 : vector<1x512xf32> to vector<8x512xf32>
    %284 = arith.mulf %281, %283 : vector<8x512xf32>
    %285 = arith.truncf %284 : vector<8x512xf32> to vector<8x512xbf16>
    %c48_195 = arith.constant 48 : index
    %c0_196 = arith.constant 0 : index
    %286 = vector.load %arg21[%c48_195, %c0_196] : memref<216x512xbf16, #tpu.memory_space<vmem>>, vector<8x512xbf16>
    tpu.vector_store %arg21[%c48_195, %c0_196], %285 {strides = array<i32>} : memref<216x512xbf16, #tpu.memory_space<vmem>>, vector<8x512xbf16>,
    %c0_197 = arith.constant 0 : index
    %c72_198 = arith.constant 72 : index
    %287 = vector.load %arg19[%c0_197, %c72_198] : memref<8x768xf32, #tpu.memory_space<vmem>>, vector<8x512xf32>
    %c7_199 = arith.constant 7 : index
    %c0_200 = arith.constant 0 : index
    %288 = vector.load %arg3[%c7_199, %c0_200] : memref<27x512xf32, #tpu.memory_space<vmem>>, vector<1x512xf32>
    %289 = vector.broadcast %288 : vector<1x512xf32> to vector<8x512xf32>
    %290 = arith.mulf %287, %289 : vector<8x512xf32>
    %291 = arith.truncf %290 : vector<8x512xf32> to vector<8x512xbf16>
    %c56_201 = arith.constant 56 : index
    %c0_202 = arith.constant 0 : index
    %292 = vector.load %arg21[%c56_201, %c0_202] : memref<216x512xbf16, #tpu.memory_space<vmem>>, vector<8x512xbf16>
    tpu.vector_store %arg21[%c56_201, %c0_202], %291 {strides = array<i32>} : memref<216x512xbf16, #tpu.memory_space<vmem>>, vector<8x512xbf16>,
    %c0_203 = arith.constant 0 : index
    %c73_204 = arith.constant 73 : index
    %293 = vector.load %arg19[%c0_203, %c73_204] : memref<8x768xf32, #tpu.memory_space<vmem>>, vector<8x512xf32>
    %c8_205 = arith.constant 8 : index
    %c0_206 = arith.constant 0 : index
    %294 = vector.load %arg3[%c8_205, %c0_206] : memref<27x512xf32, #tpu.memory_space<vmem>>, vector<1x512xf32>
    %295 = vector.broadcast %294 : vector<1x512xf32> to vector<8x512xf32>
    %296 = arith.mulf %293, %295 : vector<8x512xf32>
    %297 = arith.truncf %296 : vector<8x512xf32> to vector<8x512xbf16>
    %c64_207 = arith.constant 64 : index
    %c0_208 = arith.constant 0 : index
    %298 = vector.load %arg21[%c64_207, %c0_208] : memref<216x512xbf16, #tpu.memory_space<vmem>>, vector<8x512xbf16>
    tpu.vector_store %arg21[%c64_207, %c0_208], %297 {strides = array<i32>} : memref<216x512xbf16, #tpu.memory_space<vmem>>, vector<8x512xbf16>,
    %c0_209 = arith.constant 0 : index
    %c119_210 = arith.constant 119 : index
    %299 = vector.load %arg19[%c0_209, %c119_210] : memref<8x768xf32, #tpu.memory_space<vmem>>, vector<8x512xf32>
    %c9_211 = arith.constant 9 : index
    %c0_212 = arith.constant 0 : index
    %300 = vector.load %arg3[%c9_211, %c0_212] : memref<27x512xf32, #tpu.memory_space<vmem>>, vector<1x512xf32>
    %301 = vector.broadcast %300 : vector<1x512xf32> to vector<8x512xf32>
    %302 = arith.mulf %299, %301 : vector<8x512xf32>
    %303 = arith.truncf %302 : vector<8x512xf32> to vector<8x512xbf16>
    %c72_213 = arith.constant 72 : index
    %c0_214 = arith.constant 0 : index
    %304 = vector.load %arg21[%c72_213, %c0_214] : memref<216x512xbf16, #tpu.memory_space<vmem>>, vector<8x512xbf16>
    tpu.vector_store %arg21[%c72_213, %c0_214], %303 {strides = array<i32>} : memref<216x512xbf16, #tpu.memory_space<vmem>>, vector<8x512xbf16>,
    %c0_215 = arith.constant 0 : index
    %c120_216 = arith.constant 120 : index
    %305 = vector.load %arg19[%c0_215, %c120_216] : memref<8x768xf32, #tpu.memory_space<vmem>>, vector<8x512xf32>
    %c10_217 = arith.constant 10 : index
    %c0_218 = arith.constant 0 : index
    %306 = vector.load %arg3[%c10_217, %c0_218] : memref<27x512xf32, #tpu.memory_space<vmem>>, vector<1x512xf32>
    %307 = vector.broadcast %306 : vector<1x512xf32> to vector<8x512xf32>
    %308 = arith.mulf %305, %307 : vector<8x512xf32>
    %309 = arith.truncf %308 : vector<8x512xf32> to vector<8x512xbf16>
    %c80_219 = arith.constant 80 : index
    %c0_220 = arith.constant 0 : index
    %310 = vector.load %arg21[%c80_219, %c0_220] : memref<216x512xbf16, #tpu.memory_space<vmem>>, vector<8x512xbf16>
    tpu.vector_store %arg21[%c80_219, %c0_220], %309 {strides = array<i32>} : memref<216x512xbf16, #tpu.memory_space<vmem>>, vector<8x512xbf16>,
    %c0_221 = arith.constant 0 : index
    %c121_222 = arith.constant 121 : index
    %311 = vector.load %arg19[%c0_221, %c121_222] : memref<8x768xf32, #tpu.memory_space<vmem>>, vector<8x512xf32>
    %c11_223 = arith.constant 11 : index
    %c0_224 = arith.constant 0 : index
    %312 = vector.load %arg3[%c11_223, %c0_224] : memref<27x512xf32, #tpu.memory_space<vmem>>, vector<1x512xf32>
    %313 = vector.broadcast %312 : vector<1x512xf32> to vector<8x512xf32>
    %314 = arith.mulf %311, %313 : vector<8x512xf32>
    %315 = arith.truncf %314 : vector<8x512xf32> to vector<8x512xbf16>
    %c88_225 = arith.constant 88 : index
    %c0_226 = arith.constant 0 : index
    %316 = vector.load %arg21[%c88_225, %c0_226] : memref<216x512xbf16, #tpu.memory_space<vmem>>, vector<8x512xbf16>
    tpu.vector_store %arg21[%c88_225, %c0_226], %315 {strides = array<i32>} : memref<216x512xbf16, #tpu.memory_space<vmem>>, vector<8x512xbf16>,
    %c0_227 = arith.constant 0 : index
    %c127_228 = arith.constant 127 : index
    %317 = vector.load %arg19[%c0_227, %c127_228] : memref<8x768xf32, #tpu.memory_space<vmem>>, vector<8x512xf32>
    %c12_229 = arith.constant 12 : index
    %c0_230 = arith.constant 0 : index
    %318 = vector.load %arg3[%c12_229, %c0_230] : memref<27x512xf32, #tpu.memory_space<vmem>>, vector<1x512xf32>
    %319 = vector.broadcast %318 : vector<1x512xf32> to vector<8x512xf32>
    %320 = arith.mulf %317, %319 : vector<8x512xf32>
    %321 = arith.truncf %320 : vector<8x512xf32> to vector<8x512xbf16>
    %c96_231 = arith.constant 96 : index
    %c0_232 = arith.constant 0 : index
    %322 = vector.load %arg21[%c96_231, %c0_232] : memref<216x512xbf16, #tpu.memory_space<vmem>>, vector<8x512xbf16>
    tpu.vector_store %arg21[%c96_231, %c0_232], %321 {strides = array<i32>} : memref<216x512xbf16, #tpu.memory_space<vmem>>, vector<8x512xbf16>,
    %c0_233 = arith.constant 0 : index
    %c128_234 = arith.constant 128 : index
    %323 = vector.load %arg19[%c0_233, %c128_234] : memref<8x768xf32, #tpu.memory_space<vmem>>, vector<8x512xf32>
    %c13_235 = arith.constant 13 : index
    %c0_236 = arith.constant 0 : index
    %324 = vector.load %arg3[%c13_235, %c0_236] : memref<27x512xf32, #tpu.memory_space<vmem>>, vector<1x512xf32>
    %325 = vector.broadcast %324 : vector<1x512xf32> to vector<8x512xf32>
    %326 = arith.mulf %323, %325 : vector<8x512xf32>
    %327 = arith.truncf %326 : vector<8x512xf32> to vector<8x512xbf16>
    %c104_237 = arith.constant 104 : index
    %c0_238 = arith.constant 0 : index
    %328 = vector.load %arg21[%c104_237, %c0_238] : memref<216x512xbf16, #tpu.memory_space<vmem>>, vector<8x512xbf16>
    tpu.vector_store %arg21[%c104_237, %c0_238], %327 {strides = array<i32>} : memref<216x512xbf16, #tpu.memory_space<vmem>>, vector<8x512xbf16>,
    %c0_239 = arith.constant 0 : index
    %c129_240 = arith.constant 129 : index
    %329 = vector.load %arg19[%c0_239, %c129_240] : memref<8x768xf32, #tpu.memory_space<vmem>>, vector<8x512xf32>
    %c14_241 = arith.constant 14 : index
    %c0_242 = arith.constant 0 : index
    %330 = vector.load %arg3[%c14_241, %c0_242] : memref<27x512xf32, #tpu.memory_space<vmem>>, vector<1x512xf32>
    %331 = vector.broadcast %330 : vector<1x512xf32> to vector<8x512xf32>
    %332 = arith.mulf %329, %331 : vector<8x512xf32>
    %333 = arith.truncf %332 : vector<8x512xf32> to vector<8x512xbf16>
    %c112_243 = arith.constant 112 : index
    %c0_244 = arith.constant 0 : index
    %334 = vector.load %arg21[%c112_243, %c0_244] : memref<216x512xbf16, #tpu.memory_space<vmem>>, vector<8x512xbf16>
    tpu.vector_store %arg21[%c112_243, %c0_244], %333 {strides = array<i32>} : memref<216x512xbf16, #tpu.memory_space<vmem>>, vector<8x512xbf16>,
    %c0_245 = arith.constant 0 : index
    %c135_246 = arith.constant 135 : index
    %335 = vector.load %arg19[%c0_245, %c135_246] : memref<8x768xf32, #tpu.memory_space<vmem>>, vector<8x512xf32>
    %c15_247 = arith.constant 15 : index
    %c0_248 = arith.constant 0 : index
    %336 = vector.load %arg3[%c15_247, %c0_248] : memref<27x512xf32, #tpu.memory_space<vmem>>, vector<1x512xf32>
    %337 = vector.broadcast %336 : vector<1x512xf32> to vector<8x512xf32>
    %338 = arith.mulf %335, %337 : vector<8x512xf32>
    %339 = arith.truncf %338 : vector<8x512xf32> to vector<8x512xbf16>
    %c120_249 = arith.constant 120 : index
    %c0_250 = arith.constant 0 : index
    %340 = vector.load %arg21[%c120_249, %c0_250] : memref<216x512xbf16, #tpu.memory_space<vmem>>, vector<8x512xbf16>
    tpu.vector_store %arg21[%c120_249, %c0_250], %339 {strides = array<i32>} : memref<216x512xbf16, #tpu.memory_space<vmem>>, vector<8x512xbf16>,
    %c0_251 = arith.constant 0 : index
    %c136_252 = arith.constant 136 : index
    %341 = vector.load %arg19[%c0_251, %c136_252] : memref<8x768xf32, #tpu.memory_space<vmem>>, vector<8x512xf32>
    %c16_253 = arith.constant 16 : index
    %c0_254 = arith.constant 0 : index
    %342 = vector.load %arg3[%c16_253, %c0_254] : memref<27x512xf32, #tpu.memory_space<vmem>>, vector<1x512xf32>
    %343 = vector.broadcast %342 : vector<1x512xf32> to vector<8x512xf32>
    %344 = arith.mulf %341, %343 : vector<8x512xf32>
    %345 = arith.truncf %344 : vector<8x512xf32> to vector<8x512xbf16>
    %c128_255 = arith.constant 128 : index
    %c0_256 = arith.constant 0 : index
    %346 = vector.load %arg21[%c128_255, %c0_256] : memref<216x512xbf16, #tpu.memory_space<vmem>>, vector<8x512xbf16>
    tpu.vector_store %arg21[%c128_255, %c0_256], %345 {strides = array<i32>} : memref<216x512xbf16, #tpu.memory_space<vmem>>, vector<8x512xbf16>,
    %c0_257 = arith.constant 0 : index
    %c137_258 = arith.constant 137 : index
    %347 = vector.load %arg19[%c0_257, %c137_258] : memref<8x768xf32, #tpu.memory_space<vmem>>, vector<8x512xf32>
    %c17_259 = arith.constant 17 : index
    %c0_260 = arith.constant 0 : index
    %348 = vector.load %arg3[%c17_259, %c0_260] : memref<27x512xf32, #tpu.memory_space<vmem>>, vector<1x512xf32>
    %349 = vector.broadcast %348 : vector<1x512xf32> to vector<8x512xf32>
    %350 = arith.mulf %347, %349 : vector<8x512xf32>
    %351 = arith.truncf %350 : vector<8x512xf32> to vector<8x512xbf16>
    %c136_261 = arith.constant 136 : index
    %c0_262 = arith.constant 0 : index
    %352 = vector.load %arg21[%c136_261, %c0_262] : memref<216x512xbf16, #tpu.memory_space<vmem>>, vector<8x512xbf16>
    tpu.vector_store %arg21[%c136_261, %c0_262], %351 {strides = array<i32>} : memref<216x512xbf16, #tpu.memory_space<vmem>>, vector<8x512xbf16>,
    %c0_263 = arith.constant 0 : index
    %c183_264 = arith.constant 183 : index
    %353 = vector.load %arg19[%c0_263, %c183_264] : memref<8x768xf32, #tpu.memory_space<vmem>>, vector<8x512xf32>
    %c18_265 = arith.constant 18 : index
    %c0_266 = arith.constant 0 : index
    %354 = vector.load %arg3[%c18_265, %c0_266] : memref<27x512xf32, #tpu.memory_space<vmem>>, vector<1x512xf32>
    %355 = vector.broadcast %354 : vector<1x512xf32> to vector<8x512xf32>
    %356 = arith.mulf %353, %355 : vector<8x512xf32>
    %357 = arith.truncf %356 : vector<8x512xf32> to vector<8x512xbf16>
    %c144_267 = arith.constant 144 : index
    %c0_268 = arith.constant 0 : index
    %358 = vector.load %arg21[%c144_267, %c0_268] : memref<216x512xbf16, #tpu.memory_space<vmem>>, vector<8x512xbf16>
    tpu.vector_store %arg21[%c144_267, %c0_268], %357 {strides = array<i32>} : memref<216x512xbf16, #tpu.memory_space<vmem>>, vector<8x512xbf16>,
    %c0_269 = arith.constant 0 : index
    %c184_270 = arith.constant 184 : index
    %359 = vector.load %arg19[%c0_269, %c184_270] : memref<8x768xf32, #tpu.memory_space<vmem>>, vector<8x512xf32>
    %c19_271 = arith.constant 19 : index
    %c0_272 = arith.constant 0 : index
    %360 = vector.load %arg3[%c19_271, %c0_272] : memref<27x512xf32, #tpu.memory_space<vmem>>, vector<1x512xf32>
    %361 = vector.broadcast %360 : vector<1x512xf32> to vector<8x512xf32>
    %362 = arith.mulf %359, %361 : vector<8x512xf32>
    %363 = arith.truncf %362 : vector<8x512xf32> to vector<8x512xbf16>
    %c152_273 = arith.constant 152 : index
    %c0_274 = arith.constant 0 : index
    %364 = vector.load %arg21[%c152_273, %c0_274] : memref<216x512xbf16, #tpu.memory_space<vmem>>, vector<8x512xbf16>
    tpu.vector_store %arg21[%c152_273, %c0_274], %363 {strides = array<i32>} : memref<216x512xbf16, #tpu.memory_space<vmem>>, vector<8x512xbf16>,
    %c0_275 = arith.constant 0 : index
    %c185_276 = arith.constant 185 : index
    %365 = vector.load %arg19[%c0_275, %c185_276] : memref<8x768xf32, #tpu.memory_space<vmem>>, vector<8x512xf32>
    %c20_277 = arith.constant 20 : index
    %c0_278 = arith.constant 0 : index
    %366 = vector.load %arg3[%c20_277, %c0_278] : memref<27x512xf32, #tpu.memory_space<vmem>>, vector<1x512xf32>
    %367 = vector.broadcast %366 : vector<1x512xf32> to vector<8x512xf32>
    %368 = arith.mulf %365, %367 : vector<8x512xf32>
    %369 = arith.truncf %368 : vector<8x512xf32> to vector<8x512xbf16>
    %c160_279 = arith.constant 160 : index
    %c0_280 = arith.constant 0 : index
    %370 = vector.load %arg21[%c160_279, %c0_280] : memref<216x512xbf16, #tpu.memory_space<vmem>>, vector<8x512xbf16>
    tpu.vector_store %arg21[%c160_279, %c0_280], %369 {strides = array<i32>} : memref<216x512xbf16, #tpu.memory_space<vmem>>, vector<8x512xbf16>,
    %c0_281 = arith.constant 0 : index
    %c191_282 = arith.constant 191 : index
    %371 = vector.load %arg19[%c0_281, %c191_282] : memref<8x768xf32, #tpu.memory_space<vmem>>, vector<8x512xf32>
    %c21_283 = arith.constant 21 : index
    %c0_284 = arith.constant 0 : index
    %372 = vector.load %arg3[%c21_283, %c0_284] : memref<27x512xf32, #tpu.memory_space<vmem>>, vector<1x512xf32>
    %373 = vector.broadcast %372 : vector<1x512xf32> to vector<8x512xf32>
    %374 = arith.mulf %371, %373 : vector<8x512xf32>
    %375 = arith.truncf %374 : vector<8x512xf32> to vector<8x512xbf16>
    %c168_285 = arith.constant 168 : index
    %c0_286 = arith.constant 0 : index
    %376 = vector.load %arg21[%c168_285, %c0_286] : memref<216x512xbf16, #tpu.memory_space<vmem>>, vector<8x512xbf16>
    tpu.vector_store %arg21[%c168_285, %c0_286], %375 {strides = array<i32>} : memref<216x512xbf16, #tpu.memory_space<vmem>>, vector<8x512xbf16>,
    %c0_287 = arith.constant 0 : index
    %c192_288 = arith.constant 192 : index
    %377 = vector.load %arg19[%c0_287, %c192_288] : memref<8x768xf32, #tpu.memory_space<vmem>>, vector<8x512xf32>
    %c22_289 = arith.constant 22 : index
    %c0_290 = arith.constant 0 : index
    %378 = vector.load %arg3[%c22_289, %c0_290] : memref<27x512xf32, #tpu.memory_space<vmem>>, vector<1x512xf32>
    %379 = vector.broadcast %378 : vector<1x512xf32> to vector<8x512xf32>
    %380 = arith.mulf %377, %379 : vector<8x512xf32>
    %381 = arith.truncf %380 : vector<8x512xf32> to vector<8x512xbf16>
    %c176_291 = arith.constant 176 : index
    %c0_292 = arith.constant 0 : index
    %382 = vector.load %arg21[%c176_291, %c0_292] : memref<216x512xbf16, #tpu.memory_space<vmem>>, vector<8x512xbf16>
    tpu.vector_store %arg21[%c176_291, %c0_292], %381 {strides = array<i32>} : memref<216x512xbf16, #tpu.memory_space<vmem>>, vector<8x512xbf16>,
    %c0_293 = arith.constant 0 : index
    %c193_294 = arith.constant 193 : index
    %383 = vector.load %arg19[%c0_293, %c193_294] : memref<8x768xf32, #tpu.memory_space<vmem>>, vector<8x512xf32>
    %c23_295 = arith.constant 23 : index
    %c0_296 = arith.constant 0 : index
    %384 = vector.load %arg3[%c23_295, %c0_296] : memref<27x512xf32, #tpu.memory_space<vmem>>, vector<1x512xf32>
    %385 = vector.broadcast %384 : vector<1x512xf32> to vector<8x512xf32>
    %386 = arith.mulf %383, %385 : vector<8x512xf32>
    %387 = arith.truncf %386 : vector<8x512xf32> to vector<8x512xbf16>
    %c184_297 = arith.constant 184 : index
    %c0_298 = arith.constant 0 : index
    %388 = vector.load %arg21[%c184_297, %c0_298] : memref<216x512xbf16, #tpu.memory_space<vmem>>, vector<8x512xbf16>
    tpu.vector_store %arg21[%c184_297, %c0_298], %387 {strides = array<i32>} : memref<216x512xbf16, #tpu.memory_space<vmem>>, vector<8x512xbf16>,
    %c0_299 = arith.constant 0 : index
    %c199_300 = arith.constant 199 : index
    %389 = vector.load %arg19[%c0_299, %c199_300] : memref<8x768xf32, #tpu.memory_space<vmem>>, vector<8x512xf32>
    %c24_301 = arith.constant 24 : index
    %c0_302 = arith.constant 0 : index
    %390 = vector.load %arg3[%c24_301, %c0_302] : memref<27x512xf32, #tpu.memory_space<vmem>>, vector<1x512xf32>
    %391 = vector.broadcast %390 : vector<1x512xf32> to vector<8x512xf32>
    %392 = arith.mulf %389, %391 : vector<8x512xf32>
    %393 = arith.truncf %392 : vector<8x512xf32> to vector<8x512xbf16>
    %c192_303 = arith.constant 192 : index
    %c0_304 = arith.constant 0 : index
    %394 = vector.load %arg21[%c192_303, %c0_304] : memref<216x512xbf16, #tpu.memory_space<vmem>>, vector<8x512xbf16>
    tpu.vector_store %arg21[%c192_303, %c0_304], %393 {strides = array<i32>} : memref<216x512xbf16, #tpu.memory_space<vmem>>, vector<8x512xbf16>,
    %c0_305 = arith.constant 0 : index
    %c200_306 = arith.constant 200 : index
    %395 = vector.load %arg19[%c0_305, %c200_306] : memref<8x768xf32, #tpu.memory_space<vmem>>, vector<8x512xf32>
    %c25_307 = arith.constant 25 : index
    %c0_308 = arith.constant 0 : index
    %396 = vector.load %arg3[%c25_307, %c0_308] : memref<27x512xf32, #tpu.memory_space<vmem>>, vector<1x512xf32>
    %397 = vector.broadcast %396 : vector<1x512xf32> to vector<8x512xf32>
    %398 = arith.mulf %395, %397 : vector<8x512xf32>
    %399 = arith.truncf %398 : vector<8x512xf32> to vector<8x512xbf16>
    %c200_309 = arith.constant 200 : index
    %c0_310 = arith.constant 0 : index
    %400 = vector.load %arg21[%c200_309, %c0_310] : memref<216x512xbf16, #tpu.memory_space<vmem>>, vector<8x512xbf16>
    tpu.vector_store %arg21[%c200_309, %c0_310], %399 {strides = array<i32>} : memref<216x512xbf16, #tpu.memory_space<vmem>>, vector<8x512xbf16>,
    %c0_311 = arith.constant 0 : index
    %c201_312 = arith.constant 201 : index
    %401 = vector.load %arg19[%c0_311, %c201_312] : memref<8x768xf32, #tpu.memory_space<vmem>>, vector<8x512xf32>
    %c26_313 = arith.constant 26 : index
    %c0_314 = arith.constant 0 : index
    %402 = vector.load %arg3[%c26_313, %c0_314] : memref<27x512xf32, #tpu.memory_space<vmem>>, vector<1x512xf32>
    %403 = vector.broadcast %402 : vector<1x512xf32> to vector<8x512xf32>
    %404 = arith.mulf %401, %403 : vector<8x512xf32>
    %405 = arith.truncf %404 : vector<8x512xf32> to vector<8x512xbf16>
    %c208_315 = arith.constant 208 : index
    %c0_316 = arith.constant 0 : index
    %406 = vector.load %arg21[%c208_315, %c0_316] : memref<216x512xbf16, #tpu.memory_space<vmem>>, vector<8x512xbf16>
    tpu.vector_store %arg21[%c208_315, %c0_316], %405 {strides = array<i32>} : memref<216x512xbf16, #tpu.memory_space<vmem>>, vector<8x512xbf16>,
    %c0_317 = arith.constant 0 : index
    %c0_318 = arith.constant 0 : index
    %407 = vector.load %arg14[%c0_317, %c0_318] : memref<16x216xbf16, #tpu.memory_space<vmem>>, vector<16x216xbf16>
    %c0_319 = arith.constant 0 : index
    %c0_320 = arith.constant 0 : index
    %408 = vector.load %arg21[%c0_319, %c0_320] : memref<216x512xbf16, #tpu.memory_space<vmem>>, vector<216x512xbf16>
    %cst_321 = arith.constant dense<0.000000e+00> : vector<16x512xf32>
    %409 = tpu.matmul %407, %408, %cst_321 {dimension_numbers = #tpu.dot_dimension_numbers<[1], [0], [0], [1], [0, 0, 1, 1], [], []>} : vector<16x216xbf16>, vector<216x512xbf16>, vector<16x512xf32> -> vector<16x512xf32>
    %410 = arith.addf %409, %211 : vector<16x512xf32>
    %c0_322 = arith.constant 0 : index
    %c0_323 = arith.constant 0 : index
    %411 = vector.load %arg6[%c0_322, %c0_323] : memref<16x16xf32, #tpu.memory_space<vmem>>, vector<16x16xf32>
    %cst_324 = arith.constant dense<0.000000e+00> : vector<16x512xf32>
    %412 = tpu.matmul %411, %410, %cst_324 {dimension_numbers = #tpu.dot_dimension_numbers<[1], [0], [0], [1], [0, 0, 1, 1], [], []>} : vector<16x16xf32>, vector<16x512xf32>, vector<16x512xf32> -> vector<16x512xf32>
    %c0_325 = arith.constant 0 : index
    %c0_326 = arith.constant 0 : index
    %413 = vector.load %arg6[%c0_325, %c0_326] : memref<16x16xf32, #tpu.memory_space<vmem>>, vector<16x16xf32>
    %414 = arith.mulf %410, %410 : vector<16x512xf32>
    %cst_327 = arith.constant dense<0.000000e+00> : vector<16x512xf32>
    %415 = tpu.matmul %413, %414, %cst_327 {dimension_numbers = #tpu.dot_dimension_numbers<[1], [0], [0], [1], [0, 0, 1, 1], [], []>} : vector<16x16xf32>, vector<16x512xf32>, vector<16x512xf32> -> vector<16x512xf32>
    %cst_328 = arith.constant dense<0.000000e+00> : vector<16xf32>
    %416 = vector.multi_reduction <add>, %412, %cst_328 [1] : vector<16x512xf32> to vector<16xf32>
    %417 = vector.shape_cast %416 : vector<16xf32> to vector<16x1xf32>
    %cst_329 = arith.constant dense<0.000000e+00> : vector<16xf32>
    %418 = vector.multi_reduction <add>, %415, %cst_329 [1] : vector<16x512xf32> to vector<16xf32>
    %419 = vector.shape_cast %418 : vector<16xf32> to vector<16x1xf32>
    %420 = arith.mulf %417, %417 : vector<16x1xf32>
    %421 = arith.subf %419, %420 : vector<16x1xf32>
    %422 = vector.broadcast %417 : vector<16x1xf32> to vector<16x512xf32>
    %423 = arith.subf %410, %422 : vector<16x512xf32>
    %cst_330 = arith.constant 9.99999974E-6 : f32
    %424 = vector.broadcast %cst_330 : f32 to vector<16x1xf32>
    %425 = arith.addf %421, %424 : vector<16x1xf32>
    %426 = math.rsqrt %425 : vector<16x1xf32>
    %427 = vector.broadcast %426 : vector<16x1xf32> to vector<16x512xf32>
    %428 = arith.mulf %423, %427 : vector<16x512xf32>
    %c0_331 = arith.constant 0 : index
    %c0_332 = arith.constant 0 : index
    %429 = vector.load %arg11[%c0_331, %c0_332] : memref<16x1xf32, #tpu.memory_space<vmem>>, vector<16x1xf32>
    %430 = vector.broadcast %429 : vector<16x1xf32> to vector<16x512xf32>
    %431 = arith.mulf %428, %430 : vector<16x512xf32>
    %c0_333 = arith.constant 0 : index
    %c0_334 = arith.constant 0 : index
    %432 = vector.load %arg12[%c0_333, %c0_334] : memref<16x1xf32, #tpu.memory_space<vmem>>, vector<16x1xf32>
    %433 = vector.broadcast %432 : vector<16x1xf32> to vector<16x512xf32>
    %434 = arith.addf %431, %433 : vector<16x512xf32>
    %cst_335 = arith.constant 0.000000e+00 : f32
    %435 = vector.broadcast %cst_335 : f32 to vector<16x512xf32>
    %436 = arith.maximumf %434, %435 : vector<16x512xf32>
    %cst_336 = arith.constant 0.000000e+00 : f32
    %437 = vector.broadcast %cst_336 : f32 to vector<16x128xf32>
    %c0_337 = arith.constant 0 : index
    %c0_338 = arith.constant 0 : index
    %438 = vector.load %arg20[%c0_337, %c0_338] : memref<16x768xf32, #tpu.memory_space<vmem>>, vector<16x128xf32>
    tpu.vector_store %arg20[%c0_337, %c0_338], %437 {strides = array<i32>} : memref<16x768xf32, #tpu.memory_space<vmem>>, vector<16x128xf32>,
    %cst_339 = arith.constant 0.000000e+00 : f32
    %439 = vector.broadcast %cst_339 : f32 to vector<16x128xf32>
    %c0_340 = arith.constant 0 : index
    %c640_341 = arith.constant 640 : index
    %440 = vector.load %arg20[%c0_340, %c640_341] : memref<16x768xf32, #tpu.memory_space<vmem>>, vector<16x128xf32>
    tpu.vector_store %arg20[%c0_340, %c640_341], %439 {strides = array<i32>} : memref<16x768xf32, #tpu.memory_space<vmem>>, vector<16x128xf32>,
    %c0_342 = arith.constant 0 : index
    %c128_343 = arith.constant 128 : index
    %441 = vector.load %arg20[%c0_342, %c128_343] : memref<16x768xf32, #tpu.memory_space<vmem>>, vector<16x512xf32>
    tpu.vector_store %arg20[%c0_342, %c128_343], %436 {strides = array<i32>} : memref<16x768xf32, #tpu.memory_space<vmem>>, vector<16x512xf32>,
    %c0_344 = arith.constant 0 : index
    %c55_345 = arith.constant 55 : index
    %442 = vector.load %arg20[%c0_344, %c55_345] : memref<16x768xf32, #tpu.memory_space<vmem>>, vector<16x512xf32>
    %c0_346 = arith.constant 0 : index
    %c0_347 = arith.constant 0 : index
    %443 = vector.load %arg3[%c0_346, %c0_347] : memref<27x512xf32, #tpu.memory_space<vmem>>, vector<1x512xf32>
    %444 = vector.broadcast %443 : vector<1x512xf32> to vector<16x512xf32>
    %445 = arith.mulf %442, %444 : vector<16x512xf32>
    %446 = arith.truncf %445 : vector<16x512xf32> to vector<16x512xbf16>
    %c0_348 = arith.constant 0 : index
    %c0_349 = arith.constant 0 : index
    %447 = vector.load %arg22[%c0_348, %c0_349] : memref<432x512xbf16, #tpu.memory_space<vmem>>, vector<16x512xbf16>
    tpu.vector_store %arg22[%c0_348, %c0_349], %446 {strides = array<i32>} : memref<432x512xbf16, #tpu.memory_space<vmem>>, vector<16x512xbf16>,
    %c0_350 = arith.constant 0 : index
    %c56_351 = arith.constant 56 : index
    %448 = vector.load %arg20[%c0_350, %c56_351] : memref<16x768xf32, #tpu.memory_space<vmem>>, vector<16x512xf32>
    %c1_352 = arith.constant 1 : index
    %c0_353 = arith.constant 0 : index
    %449 = vector.load %arg3[%c1_352, %c0_353] : memref<27x512xf32, #tpu.memory_space<vmem>>, vector<1x512xf32>
    %450 = vector.broadcast %449 : vector<1x512xf32> to vector<16x512xf32>
    %451 = arith.mulf %448, %450 : vector<16x512xf32>
    %452 = arith.truncf %451 : vector<16x512xf32> to vector<16x512xbf16>
    %c16_354 = arith.constant 16 : index
    %c0_355 = arith.constant 0 : index
    %453 = vector.load %arg22[%c16_354, %c0_355] : memref<432x512xbf16, #tpu.memory_space<vmem>>, vector<16x512xbf16>
    tpu.vector_store %arg22[%c16_354, %c0_355], %452 {strides = array<i32>} : memref<432x512xbf16, #tpu.memory_space<vmem>>, vector<16x512xbf16>,
    %c0_356 = arith.constant 0 : index
    %c57_357 = arith.constant 57 : index
    %454 = vector.load %arg20[%c0_356, %c57_357] : memref<16x768xf32, #tpu.memory_space<vmem>>, vector<16x512xf32>
    %c2_358 = arith.constant 2 : index
    %c0_359 = arith.constant 0 : index
    %455 = vector.load %arg3[%c2_358, %c0_359] : memref<27x512xf32, #tpu.memory_space<vmem>>, vector<1x512xf32>
    %456 = vector.broadcast %455 : vector<1x512xf32> to vector<16x512xf32>
    %457 = arith.mulf %454, %456 : vector<16x512xf32>
    %458 = arith.truncf %457 : vector<16x512xf32> to vector<16x512xbf16>
    %c32_360 = arith.constant 32 : index
    %c0_361 = arith.constant 0 : index
    %459 = vector.load %arg22[%c32_360, %c0_361] : memref<432x512xbf16, #tpu.memory_space<vmem>>, vector<16x512xbf16>
    tpu.vector_store %arg22[%c32_360, %c0_361], %458 {strides = array<i32>} : memref<432x512xbf16, #tpu.memory_space<vmem>>, vector<16x512xbf16>,
    %c0_362 = arith.constant 0 : index
    %c63_363 = arith.constant 63 : index
    %460 = vector.load %arg20[%c0_362, %c63_363] : memref<16x768xf32, #tpu.memory_space<vmem>>, vector<16x512xf32>
    %c3_364 = arith.constant 3 : index
    %c0_365 = arith.constant 0 : index
    %461 = vector.load %arg3[%c3_364, %c0_365] : memref<27x512xf32, #tpu.memory_space<vmem>>, vector<1x512xf32>
    %462 = vector.broadcast %461 : vector<1x512xf32> to vector<16x512xf32>
    %463 = arith.mulf %460, %462 : vector<16x512xf32>
    %464 = arith.truncf %463 : vector<16x512xf32> to vector<16x512xbf16>
    %c48_366 = arith.constant 48 : index
    %c0_367 = arith.constant 0 : index
    %465 = vector.load %arg22[%c48_366, %c0_367] : memref<432x512xbf16, #tpu.memory_space<vmem>>, vector<16x512xbf16>
    tpu.vector_store %arg22[%c48_366, %c0_367], %464 {strides = array<i32>} : memref<432x512xbf16, #tpu.memory_space<vmem>>, vector<16x512xbf16>,
    %c0_368 = arith.constant 0 : index
    %c64_369 = arith.constant 64 : index
    %466 = vector.load %arg20[%c0_368, %c64_369] : memref<16x768xf32, #tpu.memory_space<vmem>>, vector<16x512xf32>
    %c4_370 = arith.constant 4 : index
    %c0_371 = arith.constant 0 : index
    %467 = vector.load %arg3[%c4_370, %c0_371] : memref<27x512xf32, #tpu.memory_space<vmem>>, vector<1x512xf32>
    %468 = vector.broadcast %467 : vector<1x512xf32> to vector<16x512xf32>
    %469 = arith.mulf %466, %468 : vector<16x512xf32>
    %470 = arith.truncf %469 : vector<16x512xf32> to vector<16x512xbf16>
    %c64_372 = arith.constant 64 : index
    %c0_373 = arith.constant 0 : index
    %471 = vector.load %arg22[%c64_372, %c0_373] : memref<432x512xbf16, #tpu.memory_space<vmem>>, vector<16x512xbf16>
    tpu.vector_store %arg22[%c64_372, %c0_373], %470 {strides = array<i32>} : memref<432x512xbf16, #tpu.memory_space<vmem>>, vector<16x512xbf16>,
    %c0_374 = arith.constant 0 : index
    %c65_375 = arith.constant 65 : index
    %472 = vector.load %arg20[%c0_374, %c65_375] : memref<16x768xf32, #tpu.memory_space<vmem>>, vector<16x512xf32>
    %c5_376 = arith.constant 5 : index
    %c0_377 = arith.constant 0 : index
    %473 = vector.load %arg3[%c5_376, %c0_377] : memref<27x512xf32, #tpu.memory_space<vmem>>, vector<1x512xf32>
    %474 = vector.broadcast %473 : vector<1x512xf32> to vector<16x512xf32>
    %475 = arith.mulf %472, %474 : vector<16x512xf32>
    %476 = arith.truncf %475 : vector<16x512xf32> to vector<16x512xbf16>
    %c80_378 = arith.constant 80 : index
    %c0_379 = arith.constant 0 : index
    %477 = vector.load %arg22[%c80_378, %c0_379] : memref<432x512xbf16, #tpu.memory_space<vmem>>, vector<16x512xbf16>
    tpu.vector_store %arg22[%c80_378, %c0_379], %476 {strides = array<i32>} : memref<432x512xbf16, #tpu.memory_space<vmem>>, vector<16x512xbf16>,
    %c0_380 = arith.constant 0 : index
    %c71_381 = arith.constant 71 : index
    %478 = vector.load %arg20[%c0_380, %c71_381] : memref<16x768xf32, #tpu.memory_space<vmem>>, vector<16x512xf32>
    %c6_382 = arith.constant 6 : index
    %c0_383 = arith.constant 0 : index
    %479 = vector.load %arg3[%c6_382, %c0_383] : memref<27x512xf32, #tpu.memory_space<vmem>>, vector<1x512xf32>
    %480 = vector.broadcast %479 : vector<1x512xf32> to vector<16x512xf32>
    %481 = arith.mulf %478, %480 : vector<16x512xf32>
    %482 = arith.truncf %481 : vector<16x512xf32> to vector<16x512xbf16>
    %c96_384 = arith.constant 96 : index
    %c0_385 = arith.constant 0 : index
    %483 = vector.load %arg22[%c96_384, %c0_385] : memref<432x512xbf16, #tpu.memory_space<vmem>>, vector<16x512xbf16>
    tpu.vector_store %arg22[%c96_384, %c0_385], %482 {strides = array<i32>} : memref<432x512xbf16, #tpu.memory_space<vmem>>, vector<16x512xbf16>,
    %c0_386 = arith.constant 0 : index
    %c72_387 = arith.constant 72 : index
    %484 = vector.load %arg20[%c0_386, %c72_387] : memref<16x768xf32, #tpu.memory_space<vmem>>, vector<16x512xf32>
    %c7_388 = arith.constant 7 : index
    %c0_389 = arith.constant 0 : index
    %485 = vector.load %arg3[%c7_388, %c0_389] : memref<27x512xf32, #tpu.memory_space<vmem>>, vector<1x512xf32>
    %486 = vector.broadcast %485 : vector<1x512xf32> to vector<16x512xf32>
    %487 = arith.mulf %484, %486 : vector<16x512xf32>
    %488 = arith.truncf %487 : vector<16x512xf32> to vector<16x512xbf16>
    %c112_390 = arith.constant 112 : index
    %c0_391 = arith.constant 0 : index
    %489 = vector.load %arg22[%c112_390, %c0_391] : memref<432x512xbf16, #tpu.memory_space<vmem>>, vector<16x512xbf16>
    tpu.vector_store %arg22[%c112_390, %c0_391], %488 {strides = array<i32>} : memref<432x512xbf16, #tpu.memory_space<vmem>>, vector<16x512xbf16>,
    %c0_392 = arith.constant 0 : index
    %c73_393 = arith.constant 73 : index
    %490 = vector.load %arg20[%c0_392, %c73_393] : memref<16x768xf32, #tpu.memory_space<vmem>>, vector<16x512xf32>
    %c8_394 = arith.constant 8 : index
    %c0_395 = arith.constant 0 : index
    %491 = vector.load %arg3[%c8_394, %c0_395] : memref<27x512xf32, #tpu.memory_space<vmem>>, vector<1x512xf32>
    %492 = vector.broadcast %491 : vector<1x512xf32> to vector<16x512xf32>
    %493 = arith.mulf %490, %492 : vector<16x512xf32>
    %494 = arith.truncf %493 : vector<16x512xf32> to vector<16x512xbf16>
    %c128_396 = arith.constant 128 : index
    %c0_397 = arith.constant 0 : index
    %495 = vector.load %arg22[%c128_396, %c0_397] : memref<432x512xbf16, #tpu.memory_space<vmem>>, vector<16x512xbf16>
    tpu.vector_store %arg22[%c128_396, %c0_397], %494 {strides = array<i32>} : memref<432x512xbf16, #tpu.memory_space<vmem>>, vector<16x512xbf16>,
    %c0_398 = arith.constant 0 : index
    %c119_399 = arith.constant 119 : index
    %496 = vector.load %arg20[%c0_398, %c119_399] : memref<16x768xf32, #tpu.memory_space<vmem>>, vector<16x512xf32>
    %c9_400 = arith.constant 9 : index
    %c0_401 = arith.constant 0 : index
    %497 = vector.load %arg3[%c9_400, %c0_401] : memref<27x512xf32, #tpu.memory_space<vmem>>, vector<1x512xf32>
    %498 = vector.broadcast %497 : vector<1x512xf32> to vector<16x512xf32>
    %499 = arith.mulf %496, %498 : vector<16x512xf32>
    %500 = arith.truncf %499 : vector<16x512xf32> to vector<16x512xbf16>
    %c144_402 = arith.constant 144 : index
    %c0_403 = arith.constant 0 : index
    %501 = vector.load %arg22[%c144_402, %c0_403] : memref<432x512xbf16, #tpu.memory_space<vmem>>, vector<16x512xbf16>
    tpu.vector_store %arg22[%c144_402, %c0_403], %500 {strides = array<i32>} : memref<432x512xbf16, #tpu.memory_space<vmem>>, vector<16x512xbf16>,
    %c0_404 = arith.constant 0 : index
    %c120_405 = arith.constant 120 : index
    %502 = vector.load %arg20[%c0_404, %c120_405] : memref<16x768xf32, #tpu.memory_space<vmem>>, vector<16x512xf32>
    %c10_406 = arith.constant 10 : index
    %c0_407 = arith.constant 0 : index
    %503 = vector.load %arg3[%c10_406, %c0_407] : memref<27x512xf32, #tpu.memory_space<vmem>>, vector<1x512xf32>
    %504 = vector.broadcast %503 : vector<1x512xf32> to vector<16x512xf32>
    %505 = arith.mulf %502, %504 : vector<16x512xf32>
    %506 = arith.truncf %505 : vector<16x512xf32> to vector<16x512xbf16>
    %c160_408 = arith.constant 160 : index
    %c0_409 = arith.constant 0 : index
    %507 = vector.load %arg22[%c160_408, %c0_409] : memref<432x512xbf16, #tpu.memory_space<vmem>>, vector<16x512xbf16>
    tpu.vector_store %arg22[%c160_408, %c0_409], %506 {strides = array<i32>} : memref<432x512xbf16, #tpu.memory_space<vmem>>, vector<16x512xbf16>,
    %c0_410 = arith.constant 0 : index
    %c121_411 = arith.constant 121 : index
    %508 = vector.load %arg20[%c0_410, %c121_411] : memref<16x768xf32, #tpu.memory_space<vmem>>, vector<16x512xf32>
    %c11_412 = arith.constant 11 : index
    %c0_413 = arith.constant 0 : index
    %509 = vector.load %arg3[%c11_412, %c0_413] : memref<27x512xf32, #tpu.memory_space<vmem>>, vector<1x512xf32>
    %510 = vector.broadcast %509 : vector<1x512xf32> to vector<16x512xf32>
    %511 = arith.mulf %508, %510 : vector<16x512xf32>
    %512 = arith.truncf %511 : vector<16x512xf32> to vector<16x512xbf16>
    %c176_414 = arith.constant 176 : index
    %c0_415 = arith.constant 0 : index
    %513 = vector.load %arg22[%c176_414, %c0_415] : memref<432x512xbf16, #tpu.memory_space<vmem>>, vector<16x512xbf16>
    tpu.vector_store %arg22[%c176_414, %c0_415], %512 {strides = array<i32>} : memref<432x512xbf16, #tpu.memory_space<vmem>>, vector<16x512xbf16>,
    %c0_416 = arith.constant 0 : index
    %c127_417 = arith.constant 127 : index
    %514 = vector.load %arg20[%c0_416, %c127_417] : memref<16x768xf32, #tpu.memory_space<vmem>>, vector<16x512xf32>
    %c12_418 = arith.constant 12 : index
    %c0_419 = arith.constant 0 : index
    %515 = vector.load %arg3[%c12_418, %c0_419] : memref<27x512xf32, #tpu.memory_space<vmem>>, vector<1x512xf32>
    %516 = vector.broadcast %515 : vector<1x512xf32> to vector<16x512xf32>
    %517 = arith.mulf %514, %516 : vector<16x512xf32>
    %518 = arith.truncf %517 : vector<16x512xf32> to vector<16x512xbf16>
    %c192_420 = arith.constant 192 : index
    %c0_421 = arith.constant 0 : index
    %519 = vector.load %arg22[%c192_420, %c0_421] : memref<432x512xbf16, #tpu.memory_space<vmem>>, vector<16x512xbf16>
    tpu.vector_store %arg22[%c192_420, %c0_421], %518 {strides = array<i32>} : memref<432x512xbf16, #tpu.memory_space<vmem>>, vector<16x512xbf16>,
    %c0_422 = arith.constant 0 : index
    %c128_423 = arith.constant 128 : index
    %520 = vector.load %arg20[%c0_422, %c128_423] : memref<16x768xf32, #tpu.memory_space<vmem>>, vector<16x512xf32>
    %c13_424 = arith.constant 13 : index
    %c0_425 = arith.constant 0 : index
    %521 = vector.load %arg3[%c13_424, %c0_425] : memref<27x512xf32, #tpu.memory_space<vmem>>, vector<1x512xf32>
    %522 = vector.broadcast %521 : vector<1x512xf32> to vector<16x512xf32>
    %523 = arith.mulf %520, %522 : vector<16x512xf32>
    %524 = arith.truncf %523 : vector<16x512xf32> to vector<16x512xbf16>
    %c208_426 = arith.constant 208 : index
    %c0_427 = arith.constant 0 : index
    %525 = vector.load %arg22[%c208_426, %c0_427] : memref<432x512xbf16, #tpu.memory_space<vmem>>, vector<16x512xbf16>
    tpu.vector_store %arg22[%c208_426, %c0_427], %524 {strides = array<i32>} : memref<432x512xbf16, #tpu.memory_space<vmem>>, vector<16x512xbf16>,
    %c0_428 = arith.constant 0 : index
    %c129_429 = arith.constant 129 : index
    %526 = vector.load %arg20[%c0_428, %c129_429] : memref<16x768xf32, #tpu.memory_space<vmem>>, vector<16x512xf32>
    %c14_430 = arith.constant 14 : index
    %c0_431 = arith.constant 0 : index
    %527 = vector.load %arg3[%c14_430, %c0_431] : memref<27x512xf32, #tpu.memory_space<vmem>>, vector<1x512xf32>
    %528 = vector.broadcast %527 : vector<1x512xf32> to vector<16x512xf32>
    %529 = arith.mulf %526, %528 : vector<16x512xf32>
    %530 = arith.truncf %529 : vector<16x512xf32> to vector<16x512xbf16>
    %c224 = arith.constant 224 : index
    %c0_432 = arith.constant 0 : index
    %531 = vector.load %arg22[%c224, %c0_432] : memref<432x512xbf16, #tpu.memory_space<vmem>>, vector<16x512xbf16>
    tpu.vector_store %arg22[%c224, %c0_432], %530 {strides = array<i32>} : memref<432x512xbf16, #tpu.memory_space<vmem>>, vector<16x512xbf16>,
    %c0_433 = arith.constant 0 : index
    %c135_434 = arith.constant 135 : index
    %532 = vector.load %arg20[%c0_433, %c135_434] : memref<16x768xf32, #tpu.memory_space<vmem>>, vector<16x512xf32>
    %c15_435 = arith.constant 15 : index
    %c0_436 = arith.constant 0 : index
    %533 = vector.load %arg3[%c15_435, %c0_436] : memref<27x512xf32, #tpu.memory_space<vmem>>, vector<1x512xf32>
    %534 = vector.broadcast %533 : vector<1x512xf32> to vector<16x512xf32>
    %535 = arith.mulf %532, %534 : vector<16x512xf32>
    %536 = arith.truncf %535 : vector<16x512xf32> to vector<16x512xbf16>
    %c240 = arith.constant 240 : index
    %c0_437 = arith.constant 0 : index
    %537 = vector.load %arg22[%c240, %c0_437] : memref<432x512xbf16, #tpu.memory_space<vmem>>, vector<16x512xbf16>
    tpu.vector_store %arg22[%c240, %c0_437], %536 {strides = array<i32>} : memref<432x512xbf16, #tpu.memory_space<vmem>>, vector<16x512xbf16>,
    %c0_438 = arith.constant 0 : index
    %c136_439 = arith.constant 136 : index
    %538 = vector.load %arg20[%c0_438, %c136_439] : memref<16x768xf32, #tpu.memory_space<vmem>>, vector<16x512xf32>
    %c16_440 = arith.constant 16 : index
    %c0_441 = arith.constant 0 : index
    %539 = vector.load %arg3[%c16_440, %c0_441] : memref<27x512xf32, #tpu.memory_space<vmem>>, vector<1x512xf32>
    %540 = vector.broadcast %539 : vector<1x512xf32> to vector<16x512xf32>
    %541 = arith.mulf %538, %540 : vector<16x512xf32>
    %542 = arith.truncf %541 : vector<16x512xf32> to vector<16x512xbf16>
    %c256 = arith.constant 256 : index
    %c0_442 = arith.constant 0 : index
    %543 = vector.load %arg22[%c256, %c0_442] : memref<432x512xbf16, #tpu.memory_space<vmem>>, vector<16x512xbf16>
    tpu.vector_store %arg22[%c256, %c0_442], %542 {strides = array<i32>} : memref<432x512xbf16, #tpu.memory_space<vmem>>, vector<16x512xbf16>,
    %c0_443 = arith.constant 0 : index
    %c137_444 = arith.constant 137 : index
    %544 = vector.load %arg20[%c0_443, %c137_444] : memref<16x768xf32, #tpu.memory_space<vmem>>, vector<16x512xf32>
    %c17_445 = arith.constant 17 : index
    %c0_446 = arith.constant 0 : index
    %545 = vector.load %arg3[%c17_445, %c0_446] : memref<27x512xf32, #tpu.memory_space<vmem>>, vector<1x512xf32>
    %546 = vector.broadcast %545 : vector<1x512xf32> to vector<16x512xf32>
    %547 = arith.mulf %544, %546 : vector<16x512xf32>
    %548 = arith.truncf %547 : vector<16x512xf32> to vector<16x512xbf16>
    %c272 = arith.constant 272 : index
    %c0_447 = arith.constant 0 : index
    %549 = vector.load %arg22[%c272, %c0_447] : memref<432x512xbf16, #tpu.memory_space<vmem>>, vector<16x512xbf16>
    tpu.vector_store %arg22[%c272, %c0_447], %548 {strides = array<i32>} : memref<432x512xbf16, #tpu.memory_space<vmem>>, vector<16x512xbf16>,
    %c0_448 = arith.constant 0 : index
    %c183_449 = arith.constant 183 : index
    %550 = vector.load %arg20[%c0_448, %c183_449] : memref<16x768xf32, #tpu.memory_space<vmem>>, vector<16x512xf32>
    %c18_450 = arith.constant 18 : index
    %c0_451 = arith.constant 0 : index
    %551 = vector.load %arg3[%c18_450, %c0_451] : memref<27x512xf32, #tpu.memory_space<vmem>>, vector<1x512xf32>
    %552 = vector.broadcast %551 : vector<1x512xf32> to vector<16x512xf32>
    %553 = arith.mulf %550, %552 : vector<16x512xf32>
    %554 = arith.truncf %553 : vector<16x512xf32> to vector<16x512xbf16>
    %c288 = arith.constant 288 : index
    %c0_452 = arith.constant 0 : index
    %555 = vector.load %arg22[%c288, %c0_452] : memref<432x512xbf16, #tpu.memory_space<vmem>>, vector<16x512xbf16>
    tpu.vector_store %arg22[%c288, %c0_452], %554 {strides = array<i32>} : memref<432x512xbf16, #tpu.memory_space<vmem>>, vector<16x512xbf16>,
    %c0_453 = arith.constant 0 : index
    %c184_454 = arith.constant 184 : index
    %556 = vector.load %arg20[%c0_453, %c184_454] : memref<16x768xf32, #tpu.memory_space<vmem>>, vector<16x512xf32>
    %c19_455 = arith.constant 19 : index
    %c0_456 = arith.constant 0 : index
    %557 = vector.load %arg3[%c19_455, %c0_456] : memref<27x512xf32, #tpu.memory_space<vmem>>, vector<1x512xf32>
    %558 = vector.broadcast %557 : vector<1x512xf32> to vector<16x512xf32>
    %559 = arith.mulf %556, %558 : vector<16x512xf32>
    %560 = arith.truncf %559 : vector<16x512xf32> to vector<16x512xbf16>
    %c304 = arith.constant 304 : index
    %c0_457 = arith.constant 0 : index
    %561 = vector.load %arg22[%c304, %c0_457] : memref<432x512xbf16, #tpu.memory_space<vmem>>, vector<16x512xbf16>
    tpu.vector_store %arg22[%c304, %c0_457], %560 {strides = array<i32>} : memref<432x512xbf16, #tpu.memory_space<vmem>>, vector<16x512xbf16>,
    %c0_458 = arith.constant 0 : index
    %c185_459 = arith.constant 185 : index
    %562 = vector.load %arg20[%c0_458, %c185_459] : memref<16x768xf32, #tpu.memory_space<vmem>>, vector<16x512xf32>
    %c20_460 = arith.constant 20 : index
    %c0_461 = arith.constant 0 : index
    %563 = vector.load %arg3[%c20_460, %c0_461] : memref<27x512xf32, #tpu.memory_space<vmem>>, vector<1x512xf32>
    %564 = vector.broadcast %563 : vector<1x512xf32> to vector<16x512xf32>
    %565 = arith.mulf %562, %564 : vector<16x512xf32>
    %566 = arith.truncf %565 : vector<16x512xf32> to vector<16x512xbf16>
    %c320 = arith.constant 320 : index
    %c0_462 = arith.constant 0 : index
    %567 = vector.load %arg22[%c320, %c0_462] : memref<432x512xbf16, #tpu.memory_space<vmem>>, vector<16x512xbf16>
    tpu.vector_store %arg22[%c320, %c0_462], %566 {strides = array<i32>} : memref<432x512xbf16, #tpu.memory_space<vmem>>, vector<16x512xbf16>,
    %c0_463 = arith.constant 0 : index
    %c191_464 = arith.constant 191 : index
    %568 = vector.load %arg20[%c0_463, %c191_464] : memref<16x768xf32, #tpu.memory_space<vmem>>, vector<16x512xf32>
    %c21_465 = arith.constant 21 : index
    %c0_466 = arith.constant 0 : index
    %569 = vector.load %arg3[%c21_465, %c0_466] : memref<27x512xf32, #tpu.memory_space<vmem>>, vector<1x512xf32>
    %570 = vector.broadcast %569 : vector<1x512xf32> to vector<16x512xf32>
    %571 = arith.mulf %568, %570 : vector<16x512xf32>
    %572 = arith.truncf %571 : vector<16x512xf32> to vector<16x512xbf16>
    %c336 = arith.constant 336 : index
    %c0_467 = arith.constant 0 : index
    %573 = vector.load %arg22[%c336, %c0_467] : memref<432x512xbf16, #tpu.memory_space<vmem>>, vector<16x512xbf16>
    tpu.vector_store %arg22[%c336, %c0_467], %572 {strides = array<i32>} : memref<432x512xbf16, #tpu.memory_space<vmem>>, vector<16x512xbf16>,
    %c0_468 = arith.constant 0 : index
    %c192_469 = arith.constant 192 : index
    %574 = vector.load %arg20[%c0_468, %c192_469] : memref<16x768xf32, #tpu.memory_space<vmem>>, vector<16x512xf32>
    %c22_470 = arith.constant 22 : index
    %c0_471 = arith.constant 0 : index
    %575 = vector.load %arg3[%c22_470, %c0_471] : memref<27x512xf32, #tpu.memory_space<vmem>>, vector<1x512xf32>
    %576 = vector.broadcast %575 : vector<1x512xf32> to vector<16x512xf32>
    %577 = arith.mulf %574, %576 : vector<16x512xf32>
    %578 = arith.truncf %577 : vector<16x512xf32> to vector<16x512xbf16>
    %c352 = arith.constant 352 : index
    %c0_472 = arith.constant 0 : index
    %579 = vector.load %arg22[%c352, %c0_472] : memref<432x512xbf16, #tpu.memory_space<vmem>>, vector<16x512xbf16>
    tpu.vector_store %arg22[%c352, %c0_472], %578 {strides = array<i32>} : memref<432x512xbf16, #tpu.memory_space<vmem>>, vector<16x512xbf16>,
    %c0_473 = arith.constant 0 : index
    %c193_474 = arith.constant 193 : index
    %580 = vector.load %arg20[%c0_473, %c193_474] : memref<16x768xf32, #tpu.memory_space<vmem>>, vector<16x512xf32>
    %c23_475 = arith.constant 23 : index
    %c0_476 = arith.constant 0 : index
    %581 = vector.load %arg3[%c23_475, %c0_476] : memref<27x512xf32, #tpu.memory_space<vmem>>, vector<1x512xf32>
    %582 = vector.broadcast %581 : vector<1x512xf32> to vector<16x512xf32>
    %583 = arith.mulf %580, %582 : vector<16x512xf32>
    %584 = arith.truncf %583 : vector<16x512xf32> to vector<16x512xbf16>
    %c368 = arith.constant 368 : index
    %c0_477 = arith.constant 0 : index
    %585 = vector.load %arg22[%c368, %c0_477] : memref<432x512xbf16, #tpu.memory_space<vmem>>, vector<16x512xbf16>
    tpu.vector_store %arg22[%c368, %c0_477], %584 {strides = array<i32>} : memref<432x512xbf16, #tpu.memory_space<vmem>>, vector<16x512xbf16>,
    %c0_478 = arith.constant 0 : index
    %c199_479 = arith.constant 199 : index
    %586 = vector.load %arg20[%c0_478, %c199_479] : memref<16x768xf32, #tpu.memory_space<vmem>>, vector<16x512xf32>
    %c24_480 = arith.constant 24 : index
    %c0_481 = arith.constant 0 : index
    %587 = vector.load %arg3[%c24_480, %c0_481] : memref<27x512xf32, #tpu.memory_space<vmem>>, vector<1x512xf32>
    %588 = vector.broadcast %587 : vector<1x512xf32> to vector<16x512xf32>
    %589 = arith.mulf %586, %588 : vector<16x512xf32>
    %590 = arith.truncf %589 : vector<16x512xf32> to vector<16x512xbf16>
    %c384 = arith.constant 384 : index
    %c0_482 = arith.constant 0 : index
    %591 = vector.load %arg22[%c384, %c0_482] : memref<432x512xbf16, #tpu.memory_space<vmem>>, vector<16x512xbf16>
    tpu.vector_store %arg22[%c384, %c0_482], %590 {strides = array<i32>} : memref<432x512xbf16, #tpu.memory_space<vmem>>, vector<16x512xbf16>,
    %c0_483 = arith.constant 0 : index
    %c200_484 = arith.constant 200 : index
    %592 = vector.load %arg20[%c0_483, %c200_484] : memref<16x768xf32, #tpu.memory_space<vmem>>, vector<16x512xf32>
    %c25_485 = arith.constant 25 : index
    %c0_486 = arith.constant 0 : index
    %593 = vector.load %arg3[%c25_485, %c0_486] : memref<27x512xf32, #tpu.memory_space<vmem>>, vector<1x512xf32>
    %594 = vector.broadcast %593 : vector<1x512xf32> to vector<16x512xf32>
    %595 = arith.mulf %592, %594 : vector<16x512xf32>
    %596 = arith.truncf %595 : vector<16x512xf32> to vector<16x512xbf16>
    %c400 = arith.constant 400 : index
    %c0_487 = arith.constant 0 : index
    %597 = vector.load %arg22[%c400, %c0_487] : memref<432x512xbf16, #tpu.memory_space<vmem>>, vector<16x512xbf16>
    tpu.vector_store %arg22[%c400, %c0_487], %596 {strides = array<i32>} : memref<432x512xbf16, #tpu.memory_space<vmem>>, vector<16x512xbf16>,
    %c0_488 = arith.constant 0 : index
    %c201_489 = arith.constant 201 : index
    %598 = vector.load %arg20[%c0_488, %c201_489] : memref<16x768xf32, #tpu.memory_space<vmem>>, vector<16x512xf32>
    %c26_490 = arith.constant 26 : index
    %c0_491 = arith.constant 0 : index
    %599 = vector.load %arg3[%c26_490, %c0_491] : memref<27x512xf32, #tpu.memory_space<vmem>>, vector<1x512xf32>
    %600 = vector.broadcast %599 : vector<1x512xf32> to vector<16x512xf32>
    %601 = arith.mulf %598, %600 : vector<16x512xf32>
    %602 = arith.truncf %601 : vector<16x512xf32> to vector<16x512xbf16>
    %c416 = arith.constant 416 : index
    %c0_492 = arith.constant 0 : index
    %603 = vector.load %arg22[%c416, %c0_492] : memref<432x512xbf16, #tpu.memory_space<vmem>>, vector<16x512xbf16>
    tpu.vector_store %arg22[%c416, %c0_492], %602 {strides = array<i32>} : memref<432x512xbf16, #tpu.memory_space<vmem>>, vector<16x512xbf16>,
    %c0_493 = arith.constant 0 : index
    %c0_494 = arith.constant 0 : index
    %604 = vector.load %arg15[%c0_493, %c0_494] : memref<16x432xbf16, #tpu.memory_space<vmem>>, vector<16x432xbf16>
    %c0_495 = arith.constant 0 : index
    %c0_496 = arith.constant 0 : index
    %605 = vector.load %arg22[%c0_495, %c0_496] : memref<432x512xbf16, #tpu.memory_space<vmem>>, vector<432x512xbf16>
    %cst_497 = arith.constant dense<0.000000e+00> : vector<16x512xf32>
    %606 = tpu.matmul %604, %605, %cst_497 {dimension_numbers = #tpu.dot_dimension_numbers<[1], [0], [0], [1], [0, 0, 1, 1], [], []>} : vector<16x432xbf16>, vector<432x512xbf16>, vector<16x512xf32> -> vector<16x512xf32>
    %c0_498 = arith.constant 0 : index
    %c0_499 = arith.constant 0 : index
    %c0_500 = arith.constant 0 : index
    %607 = vector.load %arg18[%c0_498, %c0_499, %c0_500] : memref<1x16x512xf32, #tpu.memory_space<vmem>>, vector<1x16x512xf32>
    %608 = vector.shape_cast %607 : vector<1x16x512xf32> to vector<16x512xf32>
    %609 = vector.shape_cast %606 : vector<16x512xf32> to vector<1x16x512xf32>
    tpu.vector_store %arg18[%c0_498, %c0_499, %c0_500], %609 {strides = array<i32>} : memref<1x16x512xf32, #tpu.memory_space<vmem>>, vector<1x16x512xf32>,
    %c0_501 = arith.constant 0 : index
    %c0_502 = arith.constant 0 : index
    %610 = vector.load %arg23[%c0_501, %c0_502] : memref<16x512xf32, #tpu.memory_space<vmem>>, vector<16x512xf32>
    %611 = arith.negf %606 : vector<16x512xf32>
    %612 = math.exp %611 : vector<16x512xf32>
    %cst_503 = arith.constant 1.000000e+00 : f32
    %613 = vector.broadcast %cst_503 : f32 to vector<16x512xf32>
    %614 = arith.addf %613, %612 : vector<16x512xf32>
    %615 = arith.divf %613, %614 : vector<16x512xf32>
    %cst_504 = arith.constant 1.000000e+00 : f32
    %616 = vector.broadcast %cst_504 : f32 to vector<16x512xf32>
    %617 = arith.addf %616, %615 : vector<16x512xf32>
    %618 = arith.mulf %610, %617 : vector<16x512xf32>
    %c0_505 = arith.constant 0 : index
    %c0_506 = arith.constant 0 : index
    %c0_507 = arith.constant 0 : index
    %619 = vector.load %arg17[%c0_505, %c0_506, %c0_507] : memref<1x16x512xf32, #tpu.memory_space<vmem>>, vector<1x16x512xf32>
    %620 = vector.shape_cast %619 : vector<1x16x512xf32> to vector<16x512xf32>
    %621 = vector.shape_cast %618 : vector<16x512xf32> to vector<1x16x512xf32>
    tpu.vector_store %arg17[%c0_505, %c0_506, %c0_507], %621 {strides = array<i32>} : memref<1x16x512xf32, #tpu.memory_space<vmem>>, vector<1x16x512xf32>,
    return
  }
  func.func @transform_0(%arg0: i32) -> (i32, i32, i32) {
    %c0_i32 = arith.constant 0 : i32
    %c0_i32_0 = arith.constant 0 : i32
    %c0_i32_1 = arith.constant 0 : i32
    return %arg0, %c0_i32, %c0_i32_0 : i32, i32, i32
  }
  func.func @transform_1(%arg0: i32) -> (i32, i32, i32) {
    %c0_i32 = arith.constant 0 : i32
    %c0_i32_0 = arith.constant 0 : i32
    %c0_i32_1 = arith.constant 0 : i32
    return %arg0, %c0_i32, %c0_i32_0 : i32, i32, i32
  }
  func.func @transform_2(%arg0: i32) -> (i32, i32) {
    %c0_i32 = arith.constant 0 : i32
    %c0_i32_0 = arith.constant 0 : i32
    %c0_i32_1 = arith.constant 0 : i32
    return %c0_i32, %c0_i32_0 : i32, i32
  }
  func.func @transform_3(%arg0: i32) -> (i32, i32) {
    %c0_i32 = arith.constant 0 : i32
    %c0_i32_0 = arith.constant 0 : i32
    %c0_i32_1 = arith.constant 0 : i32
    return %c0_i32, %c0_i32_0 : i32, i32
  }
  func.func @transform_4(%arg0: i32) -> (i32, i32) {
    %c0_i32 = arith.constant 0 : i32
    %c0_i32_0 = arith.constant 0 : i32
    %c0_i32_1 = arith.constant 0 : i32
    return %c0_i32, %c0_i32_0 : i32, i32
  }
  func.func @transform_5(%arg0: i32) -> (i32, i32) {
    %c0_i32 = arith.constant 0 : i32
    %c0_i32_0 = arith.constant 0 : i32
    %c0_i32_1 = arith.constant 0 : i32
    return %c0_i32, %c0_i32_0 : i32, i32
  }
  func.func @transform_6(%arg0: i32) -> (i32, i32) {
    %c0_i32 = arith.constant 0 : i32
    %c0_i32_0 = arith.constant 0 : i32
    %c0_i32_1 = arith.constant 0 : i32
    return %c0_i32, %c0_i32_0 : i32, i32
  }
  func.func @transform_7(%arg0: i32) -> (i32, i32) {
    %c0_i32 = arith.constant 0 : i32
    %c0_i32_0 = arith.constant 0 : i32
    %c0_i32_1 = arith.constant 0 : i32
    return %c0_i32, %c0_i32_0 : i32, i32
  }
  func.func @transform_8(%arg0: i32) -> (i32, i32) {
    %c0_i32 = arith.constant 0 : i32
    %c0_i32_0 = arith.constant 0 : i32
    %c0_i32_1 = arith.constant 0 : i32
    return %c0_i32, %c0_i32_0 : i32, i32
  }
  func.func @transform_9(%arg0: i32) -> (i32, i32) {
    %c0_i32 = arith.constant 0 : i32
    %c0_i32_0 = arith.constant 0 : i32
    %c0_i32_1 = arith.constant 0 : i32
    return %c0_i32, %c0_i32_0 : i32, i32
  }
  func.func @transform_10(%arg0: i32) -> (i32, i32) {
    %c0_i32 = arith.constant 0 : i32
    %c0_i32_0 = arith.constant 0 : i32
    %c0_i32_1 = arith.constant 0 : i32
    return %c0_i32, %c0_i32_0 : i32, i32
  }
  func.func @transform_11(%arg0: i32) -> (i32, i32) {
    %c0_i32 = arith.constant 0 : i32
    %c0_i32_0 = arith.constant 0 : i32
    %c0_i32_1 = arith.constant 0 : i32
    return %c0_i32, %c0_i32_0 : i32, i32
  }
  func.func @transform_12(%arg0: i32) -> (i32, i32) {
    %c0_i32 = arith.constant 0 : i32
    %c0_i32_0 = arith.constant 0 : i32
    %c0_i32_1 = arith.constant 0 : i32
    return %c0_i32, %c0_i32_0 : i32, i32
  }
  func.func @transform_13(%arg0: i32) -> (i32, i32) {
    %c0_i32 = arith.constant 0 : i32
    %c0_i32_0 = arith.constant 0 : i32
    %c0_i32_1 = arith.constant 0 : i32
    return %c0_i32, %c0_i32_0 : i32, i32
  }
  func.func @transform_14(%arg0: i32) -> (i32, i32) {
    %c0_i32 = arith.constant 0 : i32
    %c0_i32_0 = arith.constant 0 : i32
    %c0_i32_1 = arith.constant 0 : i32
    return %c0_i32, %c0_i32_0 : i32, i32
  }
  func.func @transform_15(%arg0: i32) -> (i32, i32) {
    %c0_i32 = arith.constant 0 : i32
    %c0_i32_0 = arith.constant 0 : i32
    %c0_i32_1 = arith.constant 0 : i32
    return %c0_i32, %c0_i32_0 : i32, i32
  }
  func.func @transform_16(%arg0: i32) -> (i32, i32, i32) {
    %c0_i32 = arith.constant 0 : i32
    %c0_i32_0 = arith.constant 0 : i32
    %c0_i32_1 = arith.constant 0 : i32
    return %arg0, %c0_i32, %c0_i32_0 : i32, i32, i32
  }
  func.func @transform_17(%arg0: i32) -> (i32, i32, i32) {
    %c0_i32 = arith.constant 0 : i32
    %c0_i32_0 = arith.constant 0 : i32
    %c0_i32_1 = arith.constant 0 : i32
    return %arg0, %c0_i32, %c0_i32_0 : i32, i32, i32
  }
}

</mosaic_0001>

<llo_original>
// kernel: conresatt_forward.1
$region0: #{conresatt_forward.1}
  #allocation0 [shape = 'u32[]', space=smem, size = 0x4, offset = 0x4, fixed_abs, tag = 'smem constant byte address 0x4 - core index']
  #allocation1 [shape = 'u32[144,128]{1,0:T(1,128)}', space=vmem, size = 0x12000, scoped, tag = 'internal scratch']
  #allocation2 [shape = 'f32[8,768]{1,0:T(8,128)}', space=vmem, size = 0x6000, scoped, tag = 'scratch operand']
  #allocation3 [shape = 'f32[16,768]{1,0:T(8,128)}', space=vmem, size = 0xc000, scoped, tag = 'scratch operand']
  #allocation4 [shape = 'bf16[216,512]{1,0:T(8,128)(2,1)}', space=vmem, size = 0x36000, scoped, tag = 'scratch operand']
  #allocation5 [shape = 'bf16[432,512]{1,0:T(16,128)(2,1)}', space=vmem, size = 0x6c000, scoped, tag = 'scratch operand']
  #allocation6 [shape = 'f32[16,512]{1,0:T(8,128)}', space=vmem, size = 0x8000, scoped, tag = 'scratch operand']
  %s0 = inlined_call_operand.vmem [shape: f32[2,8,512], index: 0, kind: input, shape index: {}]
  %s1 = inlined_call_operand.vmem [shape: f32[2,8,512], index: 1, kind: input, shape index: {}]
  %s2 = inlined_call_operand.vmem [shape: f32[27,512], index: 2, kind: input, shape index: {}]
  %s3 = inlined_call_operand.vmem [shape: f32[1,512], index: 3, kind: input, shape index: {}]
  %s4 = inlined_call_operand.vmem [shape: f32[8,8], index: 4, kind: input, shape index: {}]
  %s5 = inlined_call_operand.vmem [shape: f32[16,16], index: 5, kind: input, shape index: {}]
  %s6 = inlined_call_operand.vmem [shape: f32[8,1], index: 6, kind: input, shape index: {}]
  %s7 = inlined_call_operand.vmem [shape: f32[8,1], index: 7, kind: input, shape index: {}]
  %s8 = inlined_call_operand.vmem [shape: f32[8,1], index: 8, kind: input, shape index: {}]
  %s9 = inlined_call_operand.vmem [shape: f32[8,1], index: 9, kind: input, shape index: {}]
  %s10 = inlined_call_operand.vmem [shape: f32[16,1], index: 10, kind: input, shape index: {}]
  %s11 = inlined_call_operand.vmem [shape: f32[16,1], index: 11, kind: input, shape index: {}]
  %s12 = inlined_call_operand.vmem [shape: bf16[16,216], index: 12, kind: input, shape index: {}]
  %s13 = inlined_call_operand.vmem [shape: bf16[16,216], index: 13, kind: input, shape index: {}]
  %s14 = inlined_call_operand.vmem [shape: bf16[16,432], index: 14, kind: input, shape index: {}]
  %s15 = inlined_call_operand.vmem [shape: f32[16,16], index: 15, kind: input, shape index: {}]
  %s16 = inlined_call_operand.vmem [shape: f32[2,16,512], index: 16, kind: output, shape index: {0}]
  %s17 = inlined_call_operand.vmem [shape: f32[2,16,512], index: 17, kind: output, shape index: {1}]
  %18 = xla_tuple %s16, %s17
  %s19 = sld [smem:[#allocation0]]
  $region105: #{conresatt_forward.1} parent=0
    _
  %s21 = ssub.s32 1, %s19
  %s22 = scalar_select 0, %s21, %s19
  loop: start=0, step=1, limit=4
  $region2: #{conresatt_forward.1} parent=0 // loop_pre_header
    _
  $region3: #{conresatt_forward.1} parent=0 // loop_header
    %s24 = sphi 0, %s28
    %p25 = scmp.ge.s32.totalorder %s24, 4
    %s34 = sphi 0, %s36
    %s37 = sphi 0, %s34
    %s38 = sphi 0, %s37
    %s54 = sphi 0, %s38
    %s60 = sphi 0, %s62
    %s63 = sphi 0, %s60
    %s64 = sphi 0, %s63
    %s80 = sphi 0, %s64
    %s84 = sphi 0, %s84
    %s86 = sphi 0, %s84
    %s87 = sphi 0, %s86
    %s101 = sphi 0, %s87
    %s105 = sphi 0, %s105
    %s107 = sphi 0, %s105
    %s108 = sphi 0, %s107
    %s122 = sphi 0, %s108
    %s126 = sphi 0, %s126
    %s128 = sphi 0, %s126
    %s129 = sphi 0, %s128
    %s143 = sphi 0, %s129
    %s147 = sphi 0, %s147
    %s149 = sphi 0, %s147
    %s150 = sphi 0, %s149
    %s164 = sphi 0, %s150
    %s168 = sphi 0, %s168
    %s170 = sphi 0, %s168
    %s171 = sphi 0, %s170
    %s185 = sphi 0, %s171
    %s189 = sphi 0, %s189
    %s191 = sphi 0, %s189
    %s192 = sphi 0, %s191
    %s206 = sphi 0, %s192
    %s210 = sphi 0, %s210
    %s212 = sphi 0, %s210
    %s213 = sphi 0, %s212
    %s227 = sphi 0, %s213
    %s231 = sphi 0, %s231
    %s233 = sphi 0, %s231
    %s234 = sphi 0, %s233
    %s248 = sphi 0, %s234
    %s252 = sphi 0, %s252
    %s254 = sphi 0, %s252
    %s255 = sphi 0, %s254
    %s269 = sphi 0, %s255
    %s273 = sphi 0, %s273
    %s275 = sphi 0, %s273
    %s276 = sphi 0, %s275
    %s290 = sphi 0, %s276
    %s294 = sphi 0, %s294
    %s296 = sphi 0, %s294
    %s297 = sphi 0, %s296
    %s311 = sphi 0, %s297
    %s315 = sphi 0, %s315
    %s317 = sphi 0, %s315
    %s318 = sphi 0, %s317
    %s332 = sphi 0, %s318
    %s336 = sphi 0, %s336
    %s338 = sphi 0, %s336
    %s339 = sphi 0, %s338
    %s353 = sphi 0, %s339
    %s357 = sphi 0, %s357
    %s359 = sphi 0, %s357
    %s360 = sphi 0, %s359
    %s374 = sphi 0, %s360
    %s380 = sphi 0, %s382
    %s383 = sphi 0, %s380
    %s384 = sphi 0, %s383
    %s400 = sphi 0, %s384
    %s406 = sphi 0, %s408
    %s409 = sphi 0, %s406
    %s410 = sphi 0, %s409
    %s426 = sphi 0, %s410
  $region4: #{conresatt_forward.1} parent=0 // loop_header_branch
    %27 = sbr.rel (%p25) target = $region8
  $region5: #{conresatt_forward.1} parent=0 // loop_body
    %s29 = ssub.s32 %s24, 1
    %s30 = ssub.s32 %s24, 2
    %s31 = sadd.s32 %s24, 1
    %s32 = ssub.s32 %s24, %s31
    %p33 = scmp.eq.s32.totalorder %s32, 0
    %s35 = sadd.s32 %s34, 1
    %s36 = scalar_select %p33, %s34, %s35
    %p39 = pneg %p33
    %p40 = scmp.eq.s32.totalorder %s24, 1
    %p41 = por %p39, %p40
    %p42 = scmp.ne.s32.totalorder %s34, %s37
    %p43 = scmp.eq.s32.totalorder %s24, 0
    %p44 = por %p42, %p43
    %p45 = scmp.ne.s32.totalorder %s34, %s37
    %p46 = scmp.eq.s32.totalorder %s29, 1
    %p47 = por %p45, %p46
    %p48 = scmp.ne.s32.totalorder %s37, %s38
    %p49 = scmp.eq.s32.totalorder %s29, 0
    %p50 = por %p48, %p49
    %p51 = scmp.ne.s32.totalorder %s37, %s38
    %p52 = scmp.eq.s32.totalorder %s30, 1
    %p53 = por %p51, %p52
    %p55 = scmp.ne.s32.totalorder %s38, %s54
    %p56 = scmp.eq.s32.totalorder %s30, 0
    %p57 = por %p55, %p56
    %s58 = ssub.s32 %s24, %s31
    %p59 = scmp.eq.s32.totalorder %s58, 0
    %s61 = sadd.s32 %s60, 1
    %s62 = scalar_select %p59, %s60, %s61
    %p65 = pneg %p59
    %p66 = scmp.eq.s32.totalorder %s24, 1
    %p67 = por %p65, %p66
    %p68 = scmp.ne.s32.totalorder %s60, %s63
    %p69 = scmp.eq.s32.totalorder %s24, 0
    %p70 = por %p68, %p69
    %p71 = scmp.ne.s32.totalorder %s60, %s63
    %p72 = scmp.eq.s32.totalorder %s29, 1
    %p73 = por %p71, %p72
    %p74 = scmp.ne.s32.totalorder %s63, %s64
    %p75 = scmp.eq.s32.totalorder %s29, 0
    %p76 = por %p74, %p75
    %p77 = scmp.ne.s32.totalorder %s63, %s64
    %p78 = scmp.eq.s32.totalorder %s30, 1
    %p79 = por %p77, %p78
    %p81 = scmp.ne.s32.totalorder %s64, %s80
    %p82 = scmp.eq.s32.totalorder %s30, 0
    %p83 = por %p81, %p82
    %s85 = sadd.s32 %s84, 1
    %p88 = scmp.eq.s32.totalorder %s24, 1
    %p89 = scmp.ne.s32.totalorder %s84, %s86
    %p90 = scmp.eq.s32.totalorder %s24, 0
    %p91 = por %p89, %p90
    %p92 = scmp.ne.s32.totalorder %s84, %s86
    %p93 = scmp.eq.s32.totalorder %s29, 1
    %p94 = por %p92, %p93
    %p95 = scmp.ne.s32.totalorder %s86, %s87
    %p96 = scmp.eq.s32.totalorder %s29, 0
    %p97 = por %p95, %p96
    %p98 = scmp.ne.s32.totalorder %s86, %s87
    %p99 = scmp.eq.s32.totalorder %s30, 1
    %p100 = por %p98, %p99
    %p102 = scmp.ne.s32.totalorder %s87, %s101
    %p103 = scmp.eq.s32.totalorder %s30, 0
    %p104 = por %p102, %p103
    %s106 = sadd.s32 %s105, 1
    %p109 = scmp.eq.s32.totalorder %s24, 1
    %p110 = scmp.ne.s32.totalorder %s105, %s107
    %p111 = scmp.eq.s32.totalorder %s24, 0
    %p112 = por %p110, %p111
    %p113 = scmp.ne.s32.totalorder %s105, %s107
    %p114 = scmp.eq.s32.totalorder %s29, 1
    %p115 = por %p113, %p114
    %p116 = scmp.ne.s32.totalorder %s107, %s108
    %p117 = scmp.eq.s32.totalorder %s29, 0
    %p118 = por %p116, %p117
    %p119 = scmp.ne.s32.totalorder %s107, %s108
    %p120 = scmp.eq.s32.totalorder %s30, 1
    %p121 = por %p119, %p120
    %p123 = scmp.ne.s32.totalorder %s108, %s122
    %p124 = scmp.eq.s32.totalorder %s30, 0
    %p125 = por %p123, %p124
    %s127 = sadd.s32 %s126, 1
    %p130 = scmp.eq.s32.totalorder %s24, 1
    %p131 = scmp.ne.s32.totalorder %s126, %s128
    %p132 = scmp.eq.s32.totalorder %s24, 0
    %p133 = por %p131, %p132
    %p134 = scmp.ne.s32.totalorder %s126, %s128
    %p135 = scmp.eq.s32.totalorder %s29, 1
    %p136 = por %p134, %p135
    %p137 = scmp.ne.s32.totalorder %s128, %s129
    %p138 = scmp.eq.s32.totalorder %s29, 0
    %p139 = por %p137, %p138
    %p140 = scmp.ne.s32.totalorder %s128, %s129
    %p141 = scmp.eq.s32.totalorder %s30, 1
    %p142 = por %p140, %p141
    %p144 = scmp.ne.s32.totalorder %s129, %s143
    %p145 = scmp.eq.s32.totalorder %s30, 0
    %p146 = por %p144, %p145
    %s148 = sadd.s32 %s147, 1
    %p151 = scmp.eq.s32.totalorder %s24, 1
    %p152 = scmp.ne.s32.totalorder %s147, %s149
    %p153 = scmp.eq.s32.totalorder %s24, 0
    %p154 = por %p152, %p153
    %p155 = scmp.ne.s32.totalorder %s147, %s149
    %p156 = scmp.eq.s32.totalorder %s29, 1
    %p157 = por %p155, %p156
    %p158 = scmp.ne.s32.totalorder %s149, %s150
    %p159 = scmp.eq.s32.totalorder %s29, 0
    %p160 = por %p158, %p159
    %p161 = scmp.ne.s32.totalorder %s149, %s150
    %p162 = scmp.eq.s32.totalorder %s30, 1
    %p163 = por %p161, %p162
    %p165 = scmp.ne.s32.totalorder %s150, %s164
    %p166 = scmp.eq.s32.totalorder %s30, 0
    %p167 = por %p165, %p166
    %s169 = sadd.s32 %s168, 1
    %p172 = scmp.eq.s32.totalorder %s24, 1
    %p173 = scmp.ne.s32.totalorder %s168, %s170
    %p174 = scmp.eq.s32.totalorder %s24, 0
    %p175 = por %p173, %p174
    %p176 = scmp.ne.s32.totalorder %s168, %s170
    %p177 = scmp.eq.s32.totalorder %s29, 1
    %p178 = por %p176, %p177
    %p179 = scmp.ne.s32.totalorder %s170, %s171
    %p180 = scmp.eq.s32.totalorder %s29, 0
    %p181 = por %p179, %p180
    %p182 = scmp.ne.s32.totalorder %s170, %s171
    %p183 = scmp.eq.s32.totalorder %s30, 1
    %p184 = por %p182, %p183
    %p186 = scmp.ne.s32.totalorder %s171, %s185
    %p187 = scmp.eq.s32.totalorder %s30, 0
    %p188 = por %p186, %p187
    %s190 = sadd.s32 %s189, 1
    %p193 = scmp.eq.s32.totalorder %s24, 1
    %p194 = scmp.ne.s32.totalorder %s189, %s191
    %p195 = scmp.eq.s32.totalorder %s24, 0
    %p196 = por %p194, %p195
    %p197 = scmp.ne.s32.totalorder %s189, %s191
    %p198 = scmp.eq.s32.totalorder %s29, 1
    %p199 = por %p197, %p198
    %p200 = scmp.ne.s32.totalorder %s191, %s192
    %p201 = scmp.eq.s32.totalorder %s29, 0
    %p202 = por %p200, %p201
    %p203 = scmp.ne.s32.totalorder %s191, %s192
    %p204 = scmp.eq.s32.totalorder %s30, 1
    %p205 = por %p203, %p204
    %p207 = scmp.ne.s32.totalorder %s192, %s206
    %p208 = scmp.eq.s32.totalorder %s30, 0
    %p209 = por %p207, %p208
    %s211 = sadd.s32 %s210, 1
    %p214 = scmp.eq.s32.totalorder %s24, 1
    %p215 = scmp.ne.s32.totalorder %s210, %s212
    %p216 = scmp.eq.s32.totalorder %s24, 0
    %p217 = por %p215, %p216
    %p218 = scmp.ne.s32.totalorder %s210, %s212
    %p219 = scmp.eq.s32.totalorder %s29, 1
    %p220 = por %p218, %p219
    %p221 = scmp.ne.s32.totalorder %s212, %s213
    %p222 = scmp.eq.s32.totalorder %s29, 0
    %p223 = por %p221, %p222
    %p224 = scmp.ne.s32.totalorder %s212, %s213
    %p225 = scmp.eq.s32.totalorder %s30, 1
    %p226 = por %p224, %p225
    %p228 = scmp.ne.s32.totalorder %s213, %s227
    %p229 = scmp.eq.s32.totalorder %s30, 0
    %p230 = por %p228, %p229
    %s232 = sadd.s32 %s231, 1
    %p235 = scmp.eq.s32.totalorder %s24, 1
    %p236 = scmp.ne.s32.totalorder %s231, %s233
    %p237 = scmp.eq.s32.totalorder %s24, 0
    %p238 = por %p236, %p237
    %p239 = scmp.ne.s32.totalorder %s231, %s233
    %p240 = scmp.eq.s32.totalorder %s29, 1
    %p241 = por %p239, %p240
    %p242 = scmp.ne.s32.totalorder %s233, %s234
    %p243 = scmp.eq.s32.totalorder %s29, 0
    %p244 = por %p242, %p243
    %p245 = scmp.ne.s32.totalorder %s233, %s234
    %p246 = scmp.eq.s32.totalorder %s30, 1
    %p247 = por %p245, %p246
    %p249 = scmp.ne.s32.totalorder %s234, %s248
    %p250 = scmp.eq.s32.totalorder %s30, 0
    %p251 = por %p249, %p250
    %s253 = sadd.s32 %s252, 1
    %p256 = scmp.eq.s32.totalorder %s24, 1
    %p257 = scmp.ne.s32.totalorder %s252, %s254
    %p258 = scmp.eq.s32.totalorder %s24, 0
    %p259 = por %p257, %p258
    %p260 = scmp.ne.s32.totalorder %s252, %s254
    %p261 = scmp.eq.s32.totalorder %s29, 1
    %p262 = por %p260, %p261
    %p263 = scmp.ne.s32.totalorder %s254, %s255
    %p264 = scmp.eq.s32.totalorder %s29, 0
    %p265 = por %p263, %p264
    %p266 = scmp.ne.s32.totalorder %s254, %s255
    %p267 = scmp.eq.s32.totalorder %s30, 1
    %p268 = por %p266, %p267
    %p270 = scmp.ne.s32.totalorder %s255, %s269
    %p271 = scmp.eq.s32.totalorder %s30, 0
    %p272 = por %p270, %p271
    %s274 = sadd.s32 %s273, 1
    %p277 = scmp.eq.s32.totalorder %s24, 1
    %p278 = scmp.ne.s32.totalorder %s273, %s275
    %p279 = scmp.eq.s32.totalorder %s24, 0
    %p280 = por %p278, %p279
    %p281 = scmp.ne.s32.totalorder %s273, %s275
    %p282 = scmp.eq.s32.totalorder %s29, 1
    %p283 = por %p281, %p282
    %p284 = scmp.ne.s32.totalorder %s275, %s276
    %p285 = scmp.eq.s32.totalorder %s29, 0
    %p286 = por %p284, %p285
    %p287 = scmp.ne.s32.totalorder %s275, %s276
    %p288 = scmp.eq.s32.totalorder %s30, 1
    %p289 = por %p287, %p288
    %p291 = scmp.ne.s32.totalorder %s276, %s290
    %p292 = scmp.eq.s32.totalorder %s30, 0
    %p293 = por %p291, %p292
    %s295 = sadd.s32 %s294, 1
    %p298 = scmp.eq.s32.totalorder %s24, 1
    %p299 = scmp.ne.s32.totalorder %s294, %s296
    %p300 = scmp.eq.s32.totalorder %s24, 0
    %p301 = por %p299, %p300
    %p302 = scmp.ne.s32.totalorder %s294, %s296
    %p303 = scmp.eq.s32.totalorder %s29, 1
    %p304 = por %p302, %p303
    %p305 = scmp.ne.s32.totalorder %s296, %s297
    %p306 = scmp.eq.s32.totalorder %s29, 0
    %p307 = por %p305, %p306
    %p308 = scmp.ne.s32.totalorder %s296, %s297
    %p309 = scmp.eq.s32.totalorder %s30, 1
    %p310 = por %p308, %p309
    %p312 = scmp.ne.s32.totalorder %s297, %s311
    %p313 = scmp.eq.s32.totalorder %s30, 0
    %p314 = por %p312, %p313
    %s316 = sadd.s32 %s315, 1
    %p319 = scmp.eq.s32.totalorder %s24, 1
    %p320 = scmp.ne.s32.totalorder %s315, %s317
    %p321 = scmp.eq.s32.totalorder %s24, 0
    %p322 = por %p320, %p321
    %p323 = scmp.ne.s32.totalorder %s315, %s317
    %p324 = scmp.eq.s32.totalorder %s29, 1
    %p325 = por %p323, %p324
    %p326 = scmp.ne.s32.totalorder %s317, %s318
    %p327 = scmp.eq.s32.totalorder %s29, 0
    %p328 = por %p326, %p327
    %p329 = scmp.ne.s32.totalorder %s317, %s318
    %p330 = scmp.eq.s32.totalorder %s30, 1
    %p331 = por %p329, %p330
    %p333 = scmp.ne.s32.totalorder %s318, %s332
    %p334 = scmp.eq.s32.totalorder %s30, 0
    %p335 = por %p333, %p334
    %s337 = sadd.s32 %s336, 1
    %p340 = scmp.eq.s32.totalorder %s24, 1
    %p341 = scmp.ne.s32.totalorder %s336, %s338
    %p342 = scmp.eq.s32.totalorder %s24, 0
    %p343 = por %p341, %p342
    %p344 = scmp.ne.s32.totalorder %s336, %s338
    %p345 = scmp.eq.s32.totalorder %s29, 1
    %p346 = por %p344, %p345
    %p347 = scmp.ne.s32.totalorder %s338, %s339
    %p348 = scmp.eq.s32.totalorder %s29, 0
    %p349 = por %p347, %p348
    %p350 = scmp.ne.s32.totalorder %s338, %s339
    %p351 = scmp.eq.s32.totalorder %s30, 1
    %p352 = por %p350, %p351
    %p354 = scmp.ne.s32.totalorder %s339, %s353
    %p355 = scmp.eq.s32.totalorder %s30, 0
    %p356 = por %p354, %p355
    %s358 = sadd.s32 %s357, 1
    %p361 = scmp.eq.s32.totalorder %s24, 1
    %p362 = scmp.ne.s32.totalorder %s357, %s359
    %p363 = scmp.eq.s32.totalorder %s24, 0
    %p364 = por %p362, %p363
    %p365 = scmp.ne.s32.totalorder %s357, %s359
    %p366 = scmp.eq.s32.totalorder %s29, 1
    %p367 = por %p365, %p366
    %p368 = scmp.ne.s32.totalorder %s359, %s360
    %p369 = scmp.eq.s32.totalorder %s29, 0
    %p370 = por %p368, %p369
    %p371 = scmp.ne.s32.totalorder %s359, %s360
    %p372 = scmp.eq.s32.totalorder %s30, 1
    %p373 = por %p371, %p372
    %p375 = scmp.ne.s32.totalorder %s360, %s374
    %p376 = scmp.eq.s32.totalorder %s30, 0
    %p377 = por %p375, %p376
    %s378 = ssub.s32 %s24, %s31
    %p379 = scmp.eq.s32.totalorder %s378, 0
    %s381 = sadd.s32 %s380, 1
    %s382 = scalar_select %p379, %s380, %s381
    %p385 = pneg %p379
    %p386 = scmp.eq.s32.totalorder %s24, 1
    %p387 = por %p385, %p386
    %p388 = scmp.ne.s32.totalorder %s380, %s383
    %p389 = scmp.eq.s32.totalorder %s24, 0
    %p390 = por %p388, %p389
    %p391 = scmp.ne.s32.totalorder %s380, %s383
    %p392 = scmp.eq.s32.totalorder %s29, 1
    %p393 = por %p391, %p392
    %p394 = scmp.ne.s32.totalorder %s383, %s384
    %p395 = scmp.eq.s32.totalorder %s29, 0
    %p396 = por %p394, %p395
    %p397 = scmp.ne.s32.totalorder %s383, %s384
    %p398 = scmp.eq.s32.totalorder %s30, 1
    %p399 = por %p397, %p398
    %p401 = scmp.ne.s32.totalorder %s384, %s400
    %p402 = scmp.eq.s32.totalorder %s30, 0
    %p403 = por %p401, %p402
    %s404 = ssub.s32 %s24, %s31
    %p405 = scmp.eq.s32.totalorder %s404, 0
    %s407 = sadd.s32 %s406, 1
    %s408 = scalar_select %p405, %s406, %s407
    %p411 = pneg %p405
    %p412 = scmp.eq.s32.totalorder %s24, 1
    %p413 = por %p411, %p412
    %p414 = scmp.ne.s32.totalorder %s406, %s409
    %p415 = scmp.eq.s32.totalorder %s24, 0
    %p416 = por %p414, %p415
    %p417 = scmp.ne.s32.totalorder %s406, %s409
    %p418 = scmp.eq.s32.totalorder %s29, 1
    %p419 = por %p417, %p418
    %p420 = scmp.ne.s32.totalorder %s409, %s410
    %p421 = scmp.eq.s32.totalorder %s29, 0
    %p422 = por %p420, %p421
    %p423 = scmp.ne.s32.totalorder %s409, %s410
    %p424 = scmp.eq.s32.totalorder %s30, 1
    %p425 = por %p423, %p424
    %p427 = scmp.ne.s32.totalorder %s410, %s426
    %p428 = scmp.eq.s32.totalorder %s30, 0
    %p429 = por %p427, %p428
    %p430 = scmp.le.s32.totalorder 1, %s24
    %p431 = scmp.lt.s32.totalorder %s24, 3
    %p432 = pnand %p430, %p431
    %p433 = pneg %p432
    // Predicated region
    $region9: #{conresatt_forward.1} parent=5 // pred_check
      _
    $region10: #{conresatt_forward.1} parent=5 // pred_check_branch
      %435 = sbr.rel (%p432) target = $region12
    $region11: #{conresatt_forward.1} parent=5 // pred_region
      %s436 = ssub.s32 %s24, 1
      // Predicated region
      $region13: #{conresatt_forward.1} parent=11 // pred_check
        %p437 = pneg %p97
      $region14: #{conresatt_forward.1} parent=11 // pred_check_branch
        %439 = sbr.rel (%p437) target = $region16
      $region15: #{conresatt_forward.1} parent=11 // pred_region
        _
      $region16: #{conresatt_forward.1} parent=11 // pred_fallthru
        _
      // Predicated region
      $region17: #{conresatt_forward.1} parent=11 // pred_check
        %p440 = pneg %p118
      $region18: #{conresatt_forward.1} parent=11 // pred_check_branch
        %442 = sbr.rel (%p440) target = $region20
      $region19: #{conresatt_forward.1} parent=11 // pred_region
        _
      $region20: #{conresatt_forward.1} parent=11 // pred_fallthru
        _
      // Predicated region
      $region21: #{conresatt_forward.1} parent=11 // pred_check
        %p443 = pneg %p139
      $region22: #{conresatt_forward.1} parent=11 // pred_check_branch
        %445 = sbr.rel (%p443) target = $region24
      $region23: #{conresatt_forward.1} parent=11 // pred_region
        _
      $region24: #{conresatt_forward.1} parent=11 // pred_fallthru
        _
      // Predicated region
      $region25: #{conresatt_forward.1} parent=11 // pred_check
        %p446 = pneg %p160
      $region26: #{conresatt_forward.1} parent=11 // pred_check_branch
        %448 = sbr.rel (%p446) target = $region28
      $region27: #{conresatt_forward.1} parent=11 // pred_region
        _
      $region28: #{conresatt_forward.1} parent=11 // pred_fallthru
        _
      // Predicated region
      $region29: #{conresatt_forward.1} parent=11 // pred_check
        %p449 = pneg %p181
      $region30: #{conresatt_forward.1} parent=11 // pred_check_branch
        %451 = sbr.rel (%p449) target = $region32
      $region31: #{conresatt_forward.1} parent=11 // pred_region
        _
      $region32: #{conresatt_forward.1} parent=11 // pred_fallthru
        _
      // Predicated region
      $region33: #{conresatt_forward.1} parent=11 // pred_check
        %p452 = pneg %p202
      $region34: #{conresatt_forward.1} parent=11 // pred_check_branch
        %454 = sbr.rel (%p452) target = $region36
      $region35: #{conresatt_forward.1} parent=11 // pred_region
        _
      $region36: #{conresatt_forward.1} parent=11 // pred_fallthru
        _
      // Predicated region
      $region37: #{conresatt_forward.1} parent=11 // pred_check
        %p455 = pneg %p223
      $region38: #{conresatt_forward.1} parent=11 // pred_check_branch
        %457 = sbr.rel (%p455) target = $region40
      $region39: #{conresatt_forward.1} parent=11 // pred_region
        _
      $region40: #{conresatt_forward.1} parent=11 // pred_fallthru
        _
      // Predicated region
      $region41: #{conresatt_forward.1} parent=11 // pred_check
        %p458 = pneg %p244
      $region42: #{conresatt_forward.1} parent=11 // pred_check_branch
        %460 = sbr.rel (%p458) target = $region44
      $region43: #{conresatt_forward.1} parent=11 // pred_region
        _
      $region44: #{conresatt_forward.1} parent=11 // pred_fallthru
        _
      // Predicated region
      $region45: #{conresatt_forward.1} parent=11 // pred_check
        %p461 = pneg %p265
      $region46: #{conresatt_forward.1} parent=11 // pred_check_branch
        %463 = sbr.rel (%p461) target = $region48
      $region47: #{conresatt_forward.1} parent=11 // pred_region
        _
      $region48: #{conresatt_forward.1} parent=11 // pred_fallthru
        _
      // Predicated region
      $region49: #{conresatt_forward.1} parent=11 // pred_check
        %p464 = pneg %p286
      $region50: #{conresatt_forward.1} parent=11 // pred_check_branch
        %466 = sbr.rel (%p464) target = $region52
      $region51: #{conresatt_forward.1} parent=11 // pred_region
        _
      $region52: #{conresatt_forward.1} parent=11 // pred_fallthru
        _
      // Predicated region
      $region53: #{conresatt_forward.1} parent=11 // pred_check
        %p467 = pneg %p307
      $region54: #{conresatt_forward.1} parent=11 // pred_check_branch
        %469 = sbr.rel (%p467) target = $region56
      $region55: #{conresatt_forward.1} parent=11 // pred_region
        _
      $region56: #{conresatt_forward.1} parent=11 // pred_fallthru
        _
      // Predicated region
      $region57: #{conresatt_forward.1} parent=11 // pred_check
        %p470 = pneg %p328
      $region58: #{conresatt_forward.1} parent=11 // pred_check_branch
        %472 = sbr.rel (%p470) target = $region60
      $region59: #{conresatt_forward.1} parent=11 // pred_region
        _
      $region60: #{conresatt_forward.1} parent=11 // pred_fallthru
        _
      // Predicated region
      $region61: #{conresatt_forward.1} parent=11 // pred_check
        %p473 = pneg %p349
      $region62: #{conresatt_forward.1} parent=11 // pred_check_branch
        %475 = sbr.rel (%p473) target = $region64
      $region63: #{conresatt_forward.1} parent=11 // pred_region
        _
      $region64: #{conresatt_forward.1} parent=11 // pred_fallthru
        _
      // Predicated region
      $region65: #{conresatt_forward.1} parent=11 // pred_check
        %p476 = pneg %p370
      $region66: #{conresatt_forward.1} parent=11 // pred_check_branch
        %478 = sbr.rel (%p476) target = $region68
      $region67: #{conresatt_forward.1} parent=11 // pred_region
        _
      $region68: #{conresatt_forward.1} parent=11 // pred_fallthru
        _
    $region12: #{conresatt_forward.1} parent=5 // pred_fallthru
      _
    %p479 = scmp.lt.s32.totalorder %s24, 2
    // Predicated region
    $region69: #{conresatt_forward.1} parent=5 // pred_check
      %p480 = pneg %p479
    $region70: #{conresatt_forward.1} parent=5 // pred_check_branch
      %482 = sbr.rel (%p480) target = $region72
    $region71: #{conresatt_forward.1} parent=5 // pred_region
      // Predicated region
      $region73: #{conresatt_forward.1} parent=71 // pred_check
        %p483 = pneg %p44
      $region74: #{conresatt_forward.1} parent=71 // pred_check_branch
        %485 = sbr.rel (%p483) target = $region76
      $region75: #{conresatt_forward.1} parent=71 // pred_region
        %p486 = scmp.lt.s32.totalorder %s24, 1
        %s487 = scalar_select %p486, %s24, 1
        %s488 = smul.addr %s487, 4
        %s489 = smul.addr %s488, 8
        %s490 = scalar_lea.vmem %s0, %s489
      $region76: #{conresatt_forward.1} parent=71 // pred_fallthru
        _
      // Predicated region
      $region77: #{conresatt_forward.1} parent=71 // pred_check
        %p491 = pneg %p70
      $region78: #{conresatt_forward.1} parent=71 // pred_check_branch
        %493 = sbr.rel (%p491) target = $region80
      $region79: #{conresatt_forward.1} parent=71 // pred_region
        %p494 = scmp.lt.s32.totalorder %s24, 1
        %s495 = scalar_select %p494, %s24, 1
        %s496 = smul.addr %s495, 4
        %s497 = smul.addr %s496, 8
        %s498 = scalar_lea.vmem %s1, %s497
      $region80: #{conresatt_forward.1} parent=71 // pred_fallthru
        _
    $region72: #{conresatt_forward.1} parent=5 // pred_fallthru
      _
    %p499 = scmp.le.s32.totalorder 1, %s24
    %p500 = scmp.lt.s32.totalorder %s24, 3
    %p501 = pnand %p499, %p500
    %p502 = pneg %p501
    // Predicated region
    $region81: #{conresatt_forward.1} parent=5 // pred_check
      _
    $region82: #{conresatt_forward.1} parent=5 // pred_check_branch
      %504 = sbr.rel (%p501) target = $region84
    $region83: #{conresatt_forward.1} parent=5 // pred_region
      %s505 = ssub.s32 %s24, 1
      %p506 = scmp.lt.s32.totalorder %s29, 1
      %s507 = scalar_select %p506, %s29, 1
      %s508 = smul.addr %s507, 4
      %s509 = smul.addr %s508, 8
      %s510 = scalar_lea.vmem %s0, %s509
      %p511 = pneg %p50
      %p512 = pneg %p47
      %p513 = scmp.lt.s32.totalorder %s29, 1
      %s514 = scalar_select %p513, %s29, 1
      %s515 = smul.addr %s514, 4
      %s516 = smul.addr %s515, 8
      %s517 = scalar_lea.vmem %s1, %s516
      %p518 = pneg %p76
      %p519 = pneg %p73
      %p520 = pneg %p97
      %p521 = pneg %p94
      %p522 = pneg %p118
      %p523 = pneg %p115
      %p524 = pneg %p139
      %p525 = pneg %p136
      %p526 = pneg %p160
      %p527 = pneg %p157
      %p528 = pneg %p181
      %p529 = pneg %p178
      %p530 = pneg %p202
      %p531 = pneg %p199
      %p532 = pneg %p223
      %p533 = pneg %p220
      %p534 = pneg %p244
      %p535 = pneg %p241
      %p536 = pneg %p265
      %p537 = pneg %p262
      %p538 = pneg %p286
      %p539 = pneg %p283
      %p540 = pneg %p307
      %p541 = pneg %p304
      %p542 = pneg %p328
      %p543 = pneg %p325
      %p544 = pneg %p349
      %p545 = pneg %p346
      %p546 = pneg %p370
      %p547 = pneg %p367
      %p548 = pneg %p396
      %p549 = pneg %p393
      %p550 = scmp.lt.s32.totalorder %s29, 1
      %s551 = scalar_select %p550, %s29, 1
      %s552 = smul.addr %s551, 8
      %s553 = smul.addr %s552, 8
      %s554 = scalar_lea.vmem %s16, %s553
      %p555 = pneg %p422
      %p556 = pneg %p419
      %p557 = scmp.lt.s32.totalorder %s29, 1
      %s558 = scalar_select %p557, %s29, 1
      %s559 = smul.addr %s558, 8
      %s560 = smul.addr %s559, 8
      %s561 = scalar_lea.vmem %s17, %s560
      %p562 = scmp.lt.s32.totalorder %s29, 1
      %s563 = scalar_select %p562, %s29, 1
      %s564 = smul.addr %s563, 4
      %s565 = smul.addr %s564, 8
      %s566 = scalar_lea.vmem %s0, %s565
      %p567 = scmp.lt.s32.totalorder %s29, 1
      %s568 = scalar_select %p567, %s29, 1
      %s569 = smul.addr %s568, 4
      %s570 = smul.addr %s569, 8
      %s571 = scalar_lea.vmem %s1, %s570
      %p572 = scmp.lt.s32.totalorder %s29, 1
      %s573 = scalar_select %p572, %s29, 1
      %s574 = smul.addr %s573, 8
      %s575 = smul.addr %s574, 8
      %s576 = scalar_lea.vmem %s16, %s575
      %p577 = scmp.lt.s32.totalorder %s29, 1
      %s578 = scalar_select %p577, %s29, 1
      %s579 = smul.addr %s578, 8
      %s580 = smul.addr %s579, 8
      %s581 = scalar_lea.vmem %s17, %s580
      %v583 = vld [vmem:[%s566] sm:$0xff]
      %v584 = vld [vmem:[%s566 + $0x8] sm:$0xff]
      %v585 = vld [vmem:[%s566 + $0x10] sm:$0xff]
      %v586 = vld [vmem:[%s566 + $0x18] sm:$0xff]
      %v587 = vld [vmem:[%s4] sm:$0xff]
      %vm588 = vcmask 64512
      %v590 = vsel %vm588, %v587, 0
      %592 = vmatprep.subr.mxu0 %v584
      %593 = vmatpush1.msra.mxu0 %v583
      %594 = vmatprep.subr.mxu0 0.0
      %595 = vmatpush1.msra.mxu0 0.0
      %596 = vmatprep.subr.mxu0 0.0
      %597 = vmatpush1.msra.mxu0 0.0
      %598 = vmatprep.subr.mxu0 0.0
      %599 = vmatpush1.msra.mxu0 0.0
      %600 = vmatprep.subr.mxu0 0.0
      %601 = vmatpush1.msra.mxu0 0.0
      %602 = vmatprep.subr.mxu0 0.0
      %603 = vmatpush1.msra.mxu0 0.0
      %604 = vmatprep.subr.mxu0 0.0
      %605 = vmatpush1.msra.mxu0 0.0
      %606 = vmatprep.subr.mxu0 0.0
      %607 = vmatpush1.msra.mxu0 0.0
      %608 = vmatprep.subr.mxu0 0.0
      %609 = vmatpush1.msra.mxu0 0.0
      %610 = vmatprep.subr.mxu0 0.0
      %611 = vmatpush1.msra.mxu0 0.0
      %612 = vmatprep.subr.mxu0 0.0
      %613 = vmatpush1.msra.mxu0 0.0
      %614 = vmatprep.subr.mxu0 0.0
      %615 = vmatpush1.msra.mxu0 0.0
      %616 = vmatprep.subr.mxu0 0.0
      %617 = vmatpush1.msra.mxu0 0.0
      %618 = vmatprep.subr.mxu0 0.0
      %619 = vmatpush1.msra.mxu0 0.0
      %620 = vmatprep.subr.mxu0 0.0
      %621 = vmatpush1.msra.mxu0 0.0
      %622 = vmatprep.subr.mxu0 0.0
      %623 = vmatpush1.msra.mxu0 0.0
      %624 = vmatprep.subr.mxu0 0.0
      %625 = vmatpush1.msra.mxu0 0.0
      %626 = vmatprep.subr.mxu0 0.0
      %627 = vmatpush1.msra.mxu0 0.0
      %628 = vmatprep.subr.mxu0 0.0
      %629 = vmatpush1.msra.mxu0 0.0
      %630 = vmatprep.subr.mxu0 0.0
      %631 = vmatpush1.msra.mxu0 0.0
      %632 = vmatprep.subr.mxu0 0.0
      %633 = vmatpush1.msra.mxu0 0.0
      %634 = vmatprep.subr.mxu0 0.0
      %635 = vmatpush1.msra.mxu0 0.0
      %636 = vmatprep.subr.mxu0 0.0
      %637 = vmatpush1.msra.mxu0 0.0
      %638 = vmatprep.subr.mxu0 0.0
      %639 = vmatpush1.msra.mxu0 0.0
      %640 = vmatprep.subr.mxu0 0.0
      %641 = vmatpush1.msra.mxu0 0.0
      %642 = vmatprep.subr.mxu0 0.0
      %643 = vmatpush1.msra.mxu0 0.0
      %644 = vmatprep.subr.mxu0 0.0
      %645 = vmatpush1.msra.mxu0 0.0
      %646 = vmatprep.subr.mxu0 0.0
      %647 = vmatpush1.msra.mxu0 0.0
      %648 = vmatprep.subr.mxu0 0.0
      %649 = vmatpush1.msra.mxu0 0.0
      %650 = vmatprep.subr.mxu0 0.0
      %651 = vmatpush1.msra.mxu0 0.0
      %652 = vmatprep.subr.mxu0 0.0
      %653 = vmatpush1.msra.mxu0 0.0
      %654 = vmatprep.subr.mxu0 0.0
      %655 = vmatpush1.msra.mxu0 0.0
      %656 = vmatprep.mubr.f32.mxu0 0.0
      %657 = vmatmul.mubr.f32.gmra.mrb[0].mxu0 %v590
      %v658 = vpop.f32.mrb[0].mxu0
      %v659 = vadd.f32 0.0, %v658
      %v660 = vpop.f32.mrb[0].mxu0
      %v661 = vadd.f32 0.0, %v660
      %662 = vdwg.mxu0
      %663 = vmatprep.subr.mxu0 %v586
      %664 = vmatpush1.msra.mxu0 %v585
      %665 = vmatprep.subr.mxu0 0.0
      %666 = vmatpush1.msra.mxu0 0.0
      %667 = vmatprep.subr.mxu0 0.0
      %668 = vmatpush1.msra.mxu0 0.0
      %669 = vmatprep.subr.mxu0 0.0
      %670 = vmatpush1.msra.mxu0 0.0
      %671 = vmatprep.subr.mxu0 0.0
      %672 = vmatpush1.msra.mxu0 0.0
      %673 = vmatprep.subr.mxu0 0.0
      %674 = vmatpush1.msra.mxu0 0.0
      %675 = vmatprep.subr.mxu0 0.0
      %676 = vmatpush1.msra.mxu0 0.0
      %677 = vmatprep.subr.mxu0 0.0
      %678 = vmatpush1.msra.mxu0 0.0
      %679 = vmatprep.subr.mxu0 0.0
      %680 = vmatpush1.msra.mxu0 0.0
      %681 = vmatprep.subr.mxu0 0.0
      %682 = vmatpush1.msra.mxu0 0.0
      %683 = vmatprep.subr.mxu0 0.0
      %684 = vmatpush1.msra.mxu0 0.0
      %685 = vmatprep.subr.mxu0 0.0
      %686 = vmatpush1.msra.mxu0 0.0
      %687 = vmatprep.subr.mxu0 0.0
      %688 = vmatpush1.msra.mxu0 0.0
      %689 = vmatprep.subr.mxu0 0.0
      %690 = vmatpush1.msra.mxu0 0.0
      %691 = vmatprep.subr.mxu0 0.0
      %692 = vmatpush1.msra.mxu0 0.0
      %693 = vmatprep.subr.mxu0 0.0
      %694 = vmatpush1.msra.mxu0 0.0
      %695 = vmatprep.subr.mxu0 0.0
      %696 = vmatpush1.msra.mxu0 0.0
      %697 = vmatprep.subr.mxu0 0.0
      %698 = vmatpush1.msra.mxu0 0.0
      %699 = vmatprep.subr.mxu0 0.0
      %700 = vmatpush1.msra.mxu0 0.0
      %701 = vmatprep.subr.mxu0 0.0
      %702 = vmatpush1.msra.mxu0 0.0
      %703 = vmatprep.subr.mxu0 0.0
      %704 = vmatpush1.msra.mxu0 0.0
      %705 = vmatprep.subr.mxu0 0.0
      %706 = vmatpush1.msra.mxu0 0.0
      %707 = vmatprep.subr.mxu0 0.0
      %708 = vmatpush1.msra.mxu0 0.0
      %709 = vmatprep.subr.mxu0 0.0
      %710 = vmatpush1.msra.mxu0 0.0
      %711 = vmatprep.subr.mxu0 0.0
      %712 = vmatpush1.msra.mxu0 0.0
      %713 = vmatprep.subr.mxu0 0.0
      %714 = vmatpush1.msra.mxu0 0.0
      %715 = vmatprep.subr.mxu0 0.0
      %716 = vmatpush1.msra.mxu0 0.0
      %717 = vmatprep.subr.mxu0 0.0
      %718 = vmatpush1.msra.mxu0 0.0
      %719 = vmatprep.subr.mxu0 0.0
      %720 = vmatpush1.msra.mxu0 0.0
      %721 = vmatprep.subr.mxu0 0.0
      %722 = vmatpush1.msra.mxu0 0.0
      %723 = vmatprep.subr.mxu0 0.0
      %724 = vmatpush1.msra.mxu0 0.0
      %725 = vmatprep.subr.mxu0 0.0
      %726 = vmatpush1.msra.mxu0 0.0
      %727 = vmatprep.mubr.f32.mxu0 0.0
      %728 = vmatmul.mubr.f32.gmra.mrb[0].mxu0 %v590
      %v729 = vpop.f32.mrb[0].mxu0
      %v730 = vadd.f32 0.0, %v729
      %v731 = vpop.f32.mrb[0].mxu0
      %v732 = vadd.f32 0.0, %v731
      %733 = vdwg.mxu0
      %v734 = vmul.f32 %v583, %v583
      %v735 = vmul.f32 %v584, %v584
      %v736 = vmul.f32 %v585, %v585
      %v737 = vmul.f32 %v586, %v586
      %738 = vmatprep.subr.mxu0 %v735
      %739 = vmatpush1.msra.mxu0 %v734
      %740 = vmatprep.subr.mxu0 0.0
      %741 = vmatpush1.msra.mxu0 0.0
      %742 = vmatprep.subr.mxu0 0.0
      %743 = vmatpush1.msra.mxu0 0.0
      %744 = vmatprep.subr.mxu0 0.0
      %745 = vmatpush1.msra.mxu0 0.0
      %746 = vmatprep.subr.mxu0 0.0
      %747 = vmatpush1.msra.mxu0 0.0
      %748 = vmatprep.subr.mxu0 0.0
      %749 = vmatpush1.msra.mxu0 0.0
      %750 = vmatprep.subr.mxu0 0.0
      %751 = vmatpush1.msra.mxu0 0.0
      %752 = vmatprep.subr.mxu0 0.0
      %753 = vmatpush1.msra.mxu0 0.0
      %754 = vmatprep.subr.mxu0 0.0
      %755 = vmatpush1.msra.mxu0 0.0
      %756 = vmatprep.subr.mxu0 0.0
      %757 = vmatpush1.msra.mxu0 0.0
      %758 = vmatprep.subr.mxu0 0.0
      %759 = vmatpush1.msra.mxu0 0.0
      %760 = vmatprep.subr.mxu0 0.0
      %761 = vmatpush1.msra.mxu0 0.0
      %762 = vmatprep.subr.mxu0 0.0
      %763 = vmatpush1.msra.mxu0 0.0
      %764 = vmatprep.subr.mxu0 0.0
      %765 = vmatpush1.msra.mxu0 0.0
      %766 = vmatprep.subr.mxu0 0.0
      %767 = vmatpush1.msra.mxu0 0.0
      %768 = vmatprep.subr.mxu0 0.0
      %769 = vmatpush1.msra.mxu0 0.0
      %770 = vmatprep.subr.mxu0 0.0
      %771 = vmatpush1.msra.mxu0 0.0
      %772 = vmatprep.subr.mxu0 0.0
      %773 = vmatpush1.msra.mxu0 0.0
      %774 = vmatprep.subr.mxu0 0.0
      %775 = vmatpush1.msra.mxu0 0.0
      %776 = vmatprep.subr.mxu0 0.0
      %777 = vmatpush1.msra.mxu0 0.0
      %778 = vmatprep.subr.mxu0 0.0
      %779 = vmatpush1.msra.mxu0 0.0
      %780 = vmatprep.subr.mxu0 0.0
      %781 = vmatpush1.msra.mxu0 0.0
      %782 = vmatprep.subr.mxu0 0.0
      %783 = vmatpush1.msra.mxu0 0.0
      %784 = vmatprep.subr.mxu0 0.0
      %785 = vmatpush1.msra.mxu0 0.0
      %786 = vmatprep.subr.mxu0 0.0
      %787 = vmatpush1.msra.mxu0 0.0
      %788 = vmatprep.subr.mxu0 0.0
      %789 = vmatpush1.msra.mxu0 0.0
      %790 = vmatprep.subr.mxu0 0.0
      %791 = vmatpush1.msra.mxu0 0.0
      %792 = vmatprep.subr.mxu0 0.0
      %793 = vmatpush1.msra.mxu0 0.0
      %794 = vmatprep.subr.mxu0 0.0
      %795 = vmatpush1.msra.mxu0 0.0
      %796 = vmatprep.subr.mxu0 0.0
      %797 = vmatpush1.msra.mxu0 0.0
      %798 = vmatprep.subr.mxu0 0.0
      %799 = vmatpush1.msra.mxu0 0.0
      %800 = vmatprep.subr.mxu0 0.0
      %801 = vmatpush1.msra.mxu0 0.0
      %802 = vmatprep.mubr.f32.mxu0 0.0
      %803 = vmatmul.mubr.f32.gmra.mrb[0].mxu0 %v590
      %v804 = vpop.f32.mrb[0].mxu0
      %v805 = vadd.f32 0.0, %v804
      %v806 = vpop.f32.mrb[0].mxu0
      %v807 = vadd.f32 0.0, %v806
      %808 = vdwg.mxu0
      %809 = vmatprep.subr.mxu0 %v737
      %810 = vmatpush1.msra.mxu0 %v736
      %811 = vmatprep.subr.mxu0 0.0
      %812 = vmatpush1.msra.mxu0 0.0
      %813 = vmatprep.subr.mxu0 0.0
      %814 = vmatpush1.msra.mxu0 0.0
      %815 = vmatprep.subr.mxu0 0.0
      %816 = vmatpush1.msra.mxu0 0.0
      %817 = vmatprep.subr.mxu0 0.0
      %818 = vmatpush1.msra.mxu0 0.0
      %819 = vmatprep.subr.mxu0 0.0
      %820 = vmatpush1.msra.mxu0 0.0
      %821 = vmatprep.subr.mxu0 0.0
      %822 = vmatpush1.msra.mxu0 0.0
      %823 = vmatprep.subr.mxu0 0.0
      %824 = vmatpush1.msra.mxu0 0.0
      %825 = vmatprep.subr.mxu0 0.0
      %826 = vmatpush1.msra.mxu0 0.0
      %827 = vmatprep.subr.mxu0 0.0
      %828 = vmatpush1.msra.mxu0 0.0
      %829 = vmatprep.subr.mxu0 0.0
      %830 = vmatpush1.msra.mxu0 0.0
      %831 = vmatprep.subr.mxu0 0.0
      %832 = vmatpush1.msra.mxu0 0.0
      %833 = vmatprep.subr.mxu0 0.0
      %834 = vmatpush1.msra.mxu0 0.0
      %835 = vmatprep.subr.mxu0 0.0
      %836 = vmatpush1.msra.mxu0 0.0
      %837 = vmatprep.subr.mxu0 0.0
      %838 = vmatpush1.msra.mxu0 0.0
      %839 = vmatprep.subr.mxu0 0.0
      %840 = vmatpush1.msra.mxu0 0.0
      %841 = vmatprep.subr.mxu0 0.0
      %842 = vmatpush1.msra.mxu0 0.0
      %843 = vmatprep.subr.mxu0 0.0
      %844 = vmatpush1.msra.mxu0 0.0
      %845 = vmatprep.subr.mxu0 0.0
      %846 = vmatpush1.msra.mxu0 0.0
      %847 = vmatprep.subr.mxu0 0.0
      %848 = vmatpush1.msra.mxu0 0.0
      %849 = vmatprep.subr.mxu0 0.0
      %850 = vmatpush1.msra.mxu0 0.0
      %851 = vmatprep.subr.mxu0 0.0
      %852 = vmatpush1.msra.mxu0 0.0
      %853 = vmatprep.subr.mxu0 0.0
      %854 = vmatpush1.msra.mxu0 0.0
      %855 = vmatprep.subr.mxu0 0.0
      %856 = vmatpush1.msra.mxu0 0.0
      %857 = vmatprep.subr.mxu0 0.0
      %858 = vmatpush1.msra.mxu0 0.0
      %859 = vmatprep.subr.mxu0 0.0
      %860 = vmatpush1.msra.mxu0 0.0
      %861 = vmatprep.subr.mxu0 0.0
      %862 = vmatpush1.msra.mxu0 0.0
      %863 = vmatprep.subr.mxu0 0.0
      %864 = vmatpush1.msra.mxu0 0.0
      %865 = vmatprep.subr.mxu0 0.0
      %866 = vmatpush1.msra.mxu0 0.0
      %867 = vmatprep.subr.mxu0 0.0
      %868 = vmatpush1.msra.mxu0 0.0
      %869 = vmatprep.subr.mxu0 0.0
      %870 = vmatpush1.msra.mxu0 0.0
      %871 = vmatprep.subr.mxu0 0.0
      %872 = vmatpush1.msra.mxu0 0.0
      %873 = vmatprep.mubr.f32.mxu0 0.0
      %874 = vmatmul.mubr.f32.gmra.mrb[0].mxu0 %v590
      %v875 = vpop.f32.mrb[0].mxu0
      %v876 = vadd.f32 0.0, %v875
      %v877 = vpop.f32.mrb[0].mxu0
      %v878 = vadd.f32 0.0, %v877
      %879 = vdwg.mxu0
      %v880 = vadd.f32 %v659, %v661
      %v881 = vadd.f32 %v880, %v730
      %v882 = vadd.f32 %v881, %v732
      %883 = vadd.xlane.f32.xlu0 %v882
      %v884 = vpop.xlane.xlu0 %883
      %v885 = vadd.f32 %v805, %v807
      %v886 = vadd.f32 %v885, %v876
      %v887 = vadd.f32 %v886, %v878
      %888 = vadd.xlane.f32.xlu0 %v887
      %v889 = vpop.xlane.xlu0 %888
      %v890 = vmul.f32 %v884, %v884
      %v891 = vsub.f32 %v889, %v890
      %v892 = vsub.f32 %v583, %v884
      %v893 = vsub.f32 %v584, %v884
      %v894 = vsub.f32 %v585, %v884
      %v895 = vsub.f32 %v586, %v884
      %v896 = vadd.f32 %v891, 1e-05
      %v897 = vrsqrt.pop %v896
      %v898 = vmul.f32 %v892, %v897
      %v899 = vmul.f32 %v893, %v897
      %v900 = vmul.f32 %v894, %v897
      %v901 = vmul.f32 %v895, %v897
      %v902 = vld [vmem:[%s6] sm:$0xff]
      %904 = vset.pattern.permute.xlu0 0
      %905 = vperm.xlu0 %904, %v902
      %v906 = vpop.permute.xlu0 %905
      %v908 = vmul.f32 %v898, %v906
      %v909 = vmul.f32 %v899, %v906
      %v910 = vmul.f32 %v900, %v906
      %v911 = vmul.f32 %v901, %v906
      %v912 = vld [vmem:[%s7] sm:$0xff]
      %914 = vset.pattern.permute.xlu0 0
      %915 = vperm.xlu0 %914, %v912
      %v916 = vpop.permute.xlu0 %915
      %v918 = vadd.f32 %v908, %v916
      %v919 = vadd.f32 %v909, %v916
      %v920 = vadd.f32 %v910, %v916
      %v921 = vadd.f32 %v911, %v916
      %v922 = vmax.f32 %v918, 0.0
      %v923 = vmax.f32 %v919, 0.0
      %v924 = vmax.f32 %v920, 0.0
      %v925 = vmax.f32 %v921, 0.0
      %926 = vst [vmem:[#allocation2] sm:$0xff] 0.0
      %927 = vst [vmem:[#allocation2 + $0x28] sm:$0xff] 0.0
      %928 = vst [vmem:[#allocation2 + $0x8] sm:$0xff] %v922
      %929 = vst [vmem:[#allocation2 + $0x10] sm:$0xff] %v923
      %930 = vst [vmem:[#allocation2 + $0x18] sm:$0xff] %v924
      %931 = vst [vmem:[#allocation2 + $0x20] sm:$0xff] %v925
      %v932 = vld [vmem:[#allocation2] sm:$0xff]
      %v933 = vld [vmem:[#allocation2 + $0x8] sm:$0xff]
      %v934 = vld [vmem:[#allocation2 + $0x10] sm:$0xff]
      %v935 = vld [vmem:[#allocation2 + $0x18] sm:$0xff]
      %v936 = vld [vmem:[#allocation2 + $0x20] sm:$0xff]
      %v937 = vld [vmem:[%s2] ss:$8 sm:$0xf]
      %v939 = vlaneseq
      %v940 = vshrl.u32 %v939, 7
      %v941 = vsub.s32 0, %v940
      %v942 = vrot.slane %v937, %v941
      %v943 = vlaneseq
      %v944 = vshrl.u32 %v943, 7
      %v945 = vsub.s32 1, %v944
      %v946 = vrot.slane %v937, %v945
      %v947 = vlaneseq
      %v948 = vshrl.u32 %v947, 7
      %v949 = vsub.s32 2, %v948
      %v950 = vrot.slane %v937, %v949
      %v951 = vlaneseq
      %v952 = vshrl.u32 %v951, 7
      %v953 = vsub.s32 3, %v952
      %v954 = vrot.slane %v937, %v953
      %955 = vrot.lane.b32.xlu0 %v942, 55
      %v956 = vpop.permute.xlu0 %955
      %957 = vrot.lane.b32.xlu0 %v946, 55
      %v958 = vpop.permute.xlu0 %957
      %959 = vrot.lane.b32.xlu0 %v950, 55
      %v960 = vpop.permute.xlu0 %959
      %961 = vrot.lane.b32.xlu0 %v954, 55
      %v962 = vpop.permute.xlu0 %961
      %vm963 = vcmask 449536
      %v964 = vsel %vm963, %v956, %v958
      %v965 = vsel %vm963, %v958, %v960
      %v966 = vsel %vm963, %v960, %v962
      %v972 = vmul.f32 %v932, %v956
      %v973 = vmul.f32 %v933, %v964
      %v974 = vmul.f32 %v934, %v965
      %v975 = vmul.f32 %v935, %v966
      %v976 = vmul.f32 %v936, %v962
      %v977 = vpack.c.bf16 %v972, %v972
      %v978 = vpack.c.bf16 %v973, %v973
      %v979 = vpack.c.bf16 %v974, %v974
      %v980 = vpack.c.bf16 %v975, %v975
      %v981 = vpack.c.bf16 %v976, %v976
      %v987 = vunpack.c.l.b16 %v977
      %v988 = vunpack.c.l.b16 %v978
      %v989 = vunpack.c.l.b16 %v979
      %v990 = vunpack.c.l.b16 %v980
      %v991 = vunpack.c.l.b16 %v981
      %v992 = vpack.c.b16 %v988, %v987
      %v993 = vpack.c.b16 %v990, %v989
      %v994 = vpack.c.b16 %v991, %v991
      %995 = vrot.lane.b32.xlu0 %v992, 73
      %v996 = vpop.permute.xlu0 %995
      %997 = vrot.lane.b32.xlu0 %v993, 73
      %v998 = vpop.permute.xlu0 %997
      %999 = vrot.lane.b32.xlu0 %v994, 73
      %v1000 = vpop.permute.xlu0 %999
      %v1001 = vrot.slane %v996, 4
      %v1002 = vrot.slane %v998, 4
      %v1003 = vrot.slane %v1000, 4
      %vm1004 = vcmask 1043456
      %v1005 = vsel %vm1004, %v1001, %v1002
      %vm1006 = vcmask 596992
      %v1007 = vsel %vm1006, %v996, %v1005
      %v1008 = vsel %vm1004, %v1002, %v1003
      %v1009 = vsel %vm1006, %v998, %v1008
      %1012 = vst [vmem:[#allocation4] sm:$0xff] %v1007
      %1013 = vst [vmem:[#allocation4 + $0x8] sm:$0xff] %v1009
      %v1014 = vld [vmem:[#allocation2] sm:$0xff]
      %v1015 = vld [vmem:[#allocation2 + $0x8] sm:$0xff]
      %v1016 = vld [vmem:[#allocation2 + $0x10] sm:$0xff]
      %v1017 = vld [vmem:[#allocation2 + $0x18] sm:$0xff]
      %v1018 = vld [vmem:[#allocation2 + $0x20] sm:$0xff]
      %s1019 = scalar_lea.vmem %s2, 1
      %v1020 = vld [vmem:[%s1019] ss:$8 sm:$0xf]
      %v1022 = vlaneseq
      %v1023 = vshrl.u32 %v1022, 7
      %v1024 = vsub.s32 0, %v1023
      %v1025 = vrot.slane %v1020, %v1024
      %v1026 = vlaneseq
      %v1027 = vshrl.u32 %v1026, 7
      %v1028 = vsub.s32 1, %v1027
      %v1029 = vrot.slane %v1020, %v1028
      %v1030 = vlaneseq
      %v1031 = vshrl.u32 %v1030, 7
      %v1032 = vsub.s32 2, %v1031
      %v1033 = vrot.slane %v1020, %v1032
      %v1034 = vlaneseq
      %v1035 = vshrl.u32 %v1034, 7
      %v1036 = vsub.s32 3, %v1035
      %v1037 = vrot.slane %v1020, %v1036
      %1038 = vrot.lane.b32.xlu0 %v1025, 56
      %v1039 = vpop.permute.xlu0 %1038
      %1040 = vrot.lane.b32.xlu0 %v1029, 56
      %v1041 = vpop.permute.xlu0 %1040
      %1042 = vrot.lane.b32.xlu0 %v1033, 56
      %v1043 = vpop.permute.xlu0 %1042
      %1044 = vrot.lane.b32.xlu0 %v1037, 56
      %v1045 = vpop.permute.xlu0 %1044
      %vm1046 = vcmask 457728
      %v1047 = vsel %vm1046, %v1039, %v1041
      %v1048 = vsel %vm1046, %v1041, %v1043
      %v1049 = vsel %vm1046, %v1043, %v1045
      %v1055 = vmul.f32 %v1014, %v1039
      %v1056 = vmul.f32 %v1015, %v1047
      %v1057 = vmul.f32 %v1016, %v1048
      %v1058 = vmul.f32 %v1017, %v1049
      %v1059 = vmul.f32 %v1018, %v1045
      %v1060 = vpack.c.bf16 %v1055, %v1055
      %v1061 = vpack.c.bf16 %v1056, %v1056
      %v1062 = vpack.c.bf16 %v1057, %v1057
      %v1063 = vpack.c.bf16 %v1058, %v1058
      %v1064 = vpack.c.bf16 %v1059, %v1059
      %v1070 = vunpack.c.l.b16 %v1060
      %v1071 = vunpack.c.l.b16 %v1061
      %v1072 = vunpack.c.l.b16 %v1062
      %v1073 = vunpack.c.l.b16 %v1063
      %v1074 = vunpack.c.l.b16 %v1064
      %v1075 = vpack.c.b16 %v1071, %v1070
      %v1076 = vpack.c.b16 %v1073, %v1072
      %v1077 = vpack.c.b16 %v1074, %v1074
      %1078 = vrot.lane.b32.xlu0 %v1075, 72
      %v1079 = vpop.permute.xlu0 %1078
      %1080 = vrot.lane.b32.xlu0 %v1076, 72
      %v1081 = vpop.permute.xlu0 %1080
      %1082 = vrot.lane.b32.xlu0 %v1077, 72
      %v1083 = vpop.permute.xlu0 %1082
      %v1084 = vrot.slane %v1079, 4
      %v1085 = vrot.slane %v1081, 4
      %v1086 = vrot.slane %v1083, 4
      %v1087 = vsel %vm1004, %v1084, %v1085
      %vm1088 = vcmask 588800
      %v1089 = vsel %vm1088, %v1079, %v1087
      %v1090 = vsel %vm1004, %v1085, %v1086
      %v1091 = vsel %vm1088, %v1081, %v1090
      %1094 = vst [vmem:[#allocation4 + $0x10] sm:$0xff] %v1089
      %1095 = vst [vmem:[#allocation4 + $0x18] sm:$0xff] %v1091
      %v1096 = vld [vmem:[#allocation2] sm:$0xff]
      %v1097 = vld [vmem:[#allocation2 + $0x8] sm:$0xff]
      %v1098 = vld [vmem:[#allocation2 + $0x10] sm:$0xff]
      %v1099 = vld [vmem:[#allocation2 + $0x18] sm:$0xff]
      %v1100 = vld [vmem:[#allocation2 + $0x20] sm:$0xff]
      %s1101 = scalar_lea.vmem %s2, 2
      %v1102 = vld [vmem:[%s1101] ss:$8 sm:$0xf]
      %v1104 = vlaneseq
      %v1105 = vshrl.u32 %v1104, 7
      %v1106 = vsub.s32 0, %v1105
      %v1107 = vrot.slane %v1102, %v1106
      %v1108 = vlaneseq
      %v1109 = vshrl.u32 %v1108, 7
      %v1110 = vsub.s32 1, %v1109
      %v1111 = vrot.slane %v1102, %v1110
      %v1112 = vlaneseq
      %v1113 = vshrl.u32 %v1112, 7
      %v1114 = vsub.s32 2, %v1113
      %v1115 = vrot.slane %v1102, %v1114
      %v1116 = vlaneseq
      %v1117 = vshrl.u32 %v1116, 7
      %v1118 = vsub.s32 3, %v1117
      %v1119 = vrot.slane %v1102, %v1118
      %1120 = vrot.lane.b32.xlu0 %v1107, 57
      %v1121 = vpop.permute.xlu0 %1120
      %1122 = vrot.lane.b32.xlu0 %v1111, 57
      %v1123 = vpop.permute.xlu0 %1122
      %1124 = vrot.lane.b32.xlu0 %v1115, 57
      %v1125 = vpop.permute.xlu0 %1124
      %1126 = vrot.lane.b32.xlu0 %v1119, 57
      %v1127 = vpop.permute.xlu0 %1126
      %vm1128 = vcmask 465920
      %v1129 = vsel %vm1128, %v1121, %v1123
      %v1130 = vsel %vm1128, %v1123, %v1125
      %v1131 = vsel %vm1128, %v1125, %v1127
      %v1137 = vmul.f32 %v1096, %v1121
      %v1138 = vmul.f32 %v1097, %v1129
      %v1139 = vmul.f32 %v1098, %v1130
      %v1140 = vmul.f32 %v1099, %v1131
      %v1141 = vmul.f32 %v1100, %v1127
      %v1142 = vpack.c.bf16 %v1137, %v1137
      %v1143 = vpack.c.bf16 %v1138, %v1138
      %v1144 = vpack.c.bf16 %v1139, %v1139
      %v1145 = vpack.c.bf16 %v1140, %v1140
      %v1146 = vpack.c.bf16 %v1141, %v1141
      %v1152 = vunpack.c.l.b16 %v1142
      %v1153 = vunpack.c.l.b16 %v1143
      %v1154 = vunpack.c.l.b16 %v1144
      %v1155 = vunpack.c.l.b16 %v1145
      %v1156 = vunpack.c.l.b16 %v1146
      %v1157 = vpack.c.b16 %v1153, %v1152
      %v1158 = vpack.c.b16 %v1155, %v1154
      %v1159 = vpack.c.b16 %v1156, %v1156
      %1160 = vrot.lane.b32.xlu0 %v1157, 71
      %v1161 = vpop.permute.xlu0 %1160
      %1162 = vrot.lane.b32.xlu0 %v1158, 71
      %v1163 = vpop.permute.xlu0 %1162
      %1164 = vrot.lane.b32.xlu0 %v1159, 71
      %v1165 = vpop.permute.xlu0 %1164
      %v1166 = vrot.slane %v1161, 4
      %v1167 = vrot.slane %v1163, 4
      %v1168 = vrot.slane %v1165, 4
      %v1169 = vsel %vm1004, %v1166, %v1167
      %vm1170 = vcmask 580608
      %v1171 = vsel %vm1170, %v1161, %v1169
      %v1172 = vsel %vm1004, %v1167, %v1168
      %v1173 = vsel %vm1170, %v1163, %v1172
      %1176 = vst [vmem:[#allocation4 + $0x20] sm:$0xff] %v1171
      %1177 = vst [vmem:[#allocation4 + $0x28] sm:$0xff] %v1173
      %v1178 = vld [vmem:[#allocation2] sm:$0xff]
      %v1179 = vld [vmem:[#allocation2 + $0x8] sm:$0xff]
      %v1180 = vld [vmem:[#allocation2 + $0x10] sm:$0xff]
      %v1181 = vld [vmem:[#allocation2 + $0x18] sm:$0xff]
      %v1182 = vld [vmem:[#allocation2 + $0x20] sm:$0xff]
      %s1183 = scalar_lea.vmem %s2, 3
      %v1184 = vld [vmem:[%s1183] ss:$8 sm:$0xf]
      %v1186 = vlaneseq
      %v1187 = vshrl.u32 %v1186, 7
      %v1188 = vsub.s32 0, %v1187
      %v1189 = vrot.slane %v1184, %v1188
      %v1190 = vlaneseq
      %v1191 = vshrl.u32 %v1190, 7
      %v1192 = vsub.s32 1, %v1191
      %v1193 = vrot.slane %v1184, %v1192
      %v1194 = vlaneseq
      %v1195 = vshrl.u32 %v1194, 7
      %v1196 = vsub.s32 2, %v1195
      %v1197 = vrot.slane %v1184, %v1196
      %v1198 = vlaneseq
      %v1199 = vshrl.u32 %v1198, 7
      %v1200 = vsub.s32 3, %v1199
      %v1201 = vrot.slane %v1184, %v1200
      %1202 = vrot.lane.b32.xlu0 %v1189, 63
      %v1203 = vpop.permute.xlu0 %1202
      %1204 = vrot.lane.b32.xlu0 %v1193, 63
      %v1205 = vpop.permute.xlu0 %1204
      %1206 = vrot.lane.b32.xlu0 %v1197, 63
      %v1207 = vpop.permute.xlu0 %1206
      %1208 = vrot.lane.b32.xlu0 %v1201, 63
      %v1209 = vpop.permute.xlu0 %1208
      %vm1210 = vcmask 515072
      %v1211 = vsel %vm1210, %v1203, %v1205
      %v1212 = vsel %vm1210, %v1205, %v1207
      %v1213 = vsel %vm1210, %v1207, %v1209
      %v1219 = vmul.f32 %v1178, %v1203
      %v1220 = vmul.f32 %v1179, %v1211
      %v1221 = vmul.f32 %v1180, %v1212
      %v1222 = vmul.f32 %v1181, %v1213
      %v1223 = vmul.f32 %v1182, %v1209
      %v1224 = vpack.c.bf16 %v1219, %v1219
      %v1225 = vpack.c.bf16 %v1220, %v1220
      %v1226 = vpack.c.bf16 %v1221, %v1221
      %v1227 = vpack.c.bf16 %v1222, %v1222
      %v1228 = vpack.c.bf16 %v1223, %v1223
      %v1234 = vunpack.c.l.b16 %v1224
      %v1235 = vunpack.c.l.b16 %v1225
      %v1236 = vunpack.c.l.b16 %v1226
      %v1237 = vunpack.c.l.b16 %v1227
      %v1238 = vunpack.c.l.b16 %v1228
      %v1239 = vpack.c.b16 %v1235, %v1234
      %v1240 = vpack.c.b16 %v1237, %v1236
      %v1241 = vpack.c.b16 %v1238, %v1238
      %1242 = vrot.lane.b32.xlu0 %v1239, 65
      %v1243 = vpop.permute.xlu0 %1242
      %1244 = vrot.lane.b32.xlu0 %v1240, 65
      %v1245 = vpop.permute.xlu0 %1244
      %1246 = vrot.lane.b32.xlu0 %v1241, 65
      %v1247 = vpop.permute.xlu0 %1246
      %v1248 = vrot.slane %v1243, 4
      %v1249 = vrot.slane %v1245, 4
      %v1250 = vrot.slane %v1247, 4
      %v1251 = vsel %vm1004, %v1248, %v1249
      %vm1252 = vcmask 531456
      %v1253 = vsel %vm1252, %v1243, %v1251
      %v1254 = vsel %vm1004, %v1249, %v1250
      %v1255 = vsel %vm1252, %v1245, %v1254
      %1258 = vst [vmem:[#allocation4 + $0x30] sm:$0xff] %v1253
      %1259 = vst [vmem:[#allocation4 + $0x38] sm:$0xff] %v1255
      %v1260 = vld [vmem:[#allocation2] sm:$0xff]
      %v1261 = vld [vmem:[#allocation2 + $0x8] sm:$0xff]
      %v1262 = vld [vmem:[#allocation2 + $0x10] sm:$0xff]
      %v1263 = vld [vmem:[#allocation2 + $0x18] sm:$0xff]
      %v1264 = vld [vmem:[#allocation2 + $0x20] sm:$0xff]
      %s1265 = scalar_lea.vmem %s2, 4
      %v1266 = vld [vmem:[%s1265] ss:$8 sm:$0xf]
      %v1268 = vlaneseq
      %v1269 = vshrl.u32 %v1268, 7
      %v1270 = vsub.s32 0, %v1269
      %v1271 = vrot.slane %v1266, %v1270
      %v1272 = vlaneseq
      %v1273 = vshrl.u32 %v1272, 7
      %v1274 = vsub.s32 1, %v1273
      %v1275 = vrot.slane %v1266, %v1274
      %v1276 = vlaneseq
      %v1277 = vshrl.u32 %v1276, 7
      %v1278 = vsub.s32 2, %v1277
      %v1279 = vrot.slane %v1266, %v1278
      %v1280 = vlaneseq
      %v1281 = vshrl.u32 %v1280, 7
      %v1282 = vsub.s32 3, %v1281
      %v1283 = vrot.slane %v1266, %v1282
      %1284 = vrot.lane.b32.xlu0 %v1271, 64
      %v1285 = vpop.permute.xlu0 %1284
      %1286 = vrot.lane.b32.xlu0 %v1275, 64
      %v1287 = vpop.permute.xlu0 %1286
      %1288 = vrot.lane.b32.xlu0 %v1279, 64
      %v1289 = vpop.permute.xlu0 %1288
      %1290 = vrot.lane.b32.xlu0 %v1283, 64
      %v1291 = vpop.permute.xlu0 %1290
      %vm1292 = vcmask 523264
      %v1293 = vsel %vm1292, %v1285, %v1287
      %v1294 = vsel %vm1292, %v1287, %v1289
      %v1295 = vsel %vm1292, %v1289, %v1291
      %v1301 = vmul.f32 %v1260, %v1285
      %v1302 = vmul.f32 %v1261, %v1293
      %v1303 = vmul.f32 %v1262, %v1294
      %v1304 = vmul.f32 %v1263, %v1295
      %v1305 = vmul.f32 %v1264, %v1291
      %v1306 = vpack.c.bf16 %v1301, %v1301
      %v1307 = vpack.c.bf16 %v1302, %v1302
      %v1308 = vpack.c.bf16 %v1303, %v1303
      %v1309 = vpack.c.bf16 %v1304, %v1304
      %v1310 = vpack.c.bf16 %v1305, %v1305
      %v1316 = vunpack.c.l.b16 %v1306
      %v1317 = vunpack.c.l.b16 %v1307
      %v1318 = vunpack.c.l.b16 %v1308
      %v1319 = vunpack.c.l.b16 %v1309
      %v1320 = vunpack.c.l.b16 %v1310
      %v1321 = vpack.c.b16 %v1317, %v1316
      %v1322 = vpack.c.b16 %v1319, %v1318
      %v1323 = vpack.c.b16 %v1320, %v1320
      %1324 = vrot.lane.b32.xlu0 %v1321, 64
      %v1325 = vpop.permute.xlu0 %1324
      %1326 = vrot.lane.b32.xlu0 %v1322, 64
      %v1327 = vpop.permute.xlu0 %1326
      %1328 = vrot.lane.b32.xlu0 %v1323, 64
      %v1329 = vpop.permute.xlu0 %1328
      %v1330 = vrot.slane %v1325, 4
      %v1331 = vrot.slane %v1327, 4
      %v1332 = vrot.slane %v1329, 4
      %v1333 = vsel %vm1004, %v1330, %v1331
      %vm1334 = vcmask 523264
      %v1335 = vsel %vm1334, %v1325, %v1333
      %v1336 = vsel %vm1004, %v1331, %v1332
      %v1337 = vsel %vm1334, %v1327, %v1336
      %1340 = vst [vmem:[#allocation4 + $0x40] sm:$0xff] %v1335
      %1341 = vst [vmem:[#allocation4 + $0x48] sm:$0xff] %v1337
      %v1342 = vld [vmem:[#allocation2] sm:$0xff]
      %v1343 = vld [vmem:[#allocation2 + $0x8] sm:$0xff]
      %v1344 = vld [vmem:[#allocation2 + $0x10] sm:$0xff]
      %v1345 = vld [vmem:[#allocation2 + $0x18] sm:$0xff]
      %v1346 = vld [vmem:[#allocation2 + $0x20] sm:$0xff]
      %s1347 = scalar_lea.vmem %s2, 5
      %v1348 = vld [vmem:[%s1347] ss:$8 sm:$0xf]
      %v1350 = vlaneseq
      %v1351 = vshrl.u32 %v1350, 7
      %v1352 = vsub.s32 0, %v1351
      %v1353 = vrot.slane %v1348, %v1352
      %v1354 = vlaneseq
      %v1355 = vshrl.u32 %v1354, 7
      %v1356 = vsub.s32 1, %v1355
      %v1357 = vrot.slane %v1348, %v1356
      %v1358 = vlaneseq
      %v1359 = vshrl.u32 %v1358, 7
      %v1360 = vsub.s32 2, %v1359
      %v1361 = vrot.slane %v1348, %v1360
      %v1362 = vlaneseq
      %v1363 = vshrl.u32 %v1362, 7
      %v1364 = vsub.s32 3, %v1363
      %v1365 = vrot.slane %v1348, %v1364
      %1366 = vrot.lane.b32.xlu0 %v1353, 65
      %v1367 = vpop.permute.xlu0 %1366
      %1368 = vrot.lane.b32.xlu0 %v1357, 65
      %v1369 = vpop.permute.xlu0 %1368
      %1370 = vrot.lane.b32.xlu0 %v1361, 65
      %v1371 = vpop.permute.xlu0 %1370
      %1372 = vrot.lane.b32.xlu0 %v1365, 65
      %v1373 = vpop.permute.xlu0 %1372
      %vm1374 = vcmask 531456
      %v1375 = vsel %vm1374, %v1367, %v1369
      %v1376 = vsel %vm1374, %v1369, %v1371
      %v1377 = vsel %vm1374, %v1371, %v1373
      %v1383 = vmul.f32 %v1342, %v1367
      %v1384 = vmul.f32 %v1343, %v1375
      %v1385 = vmul.f32 %v1344, %v1376
      %v1386 = vmul.f32 %v1345, %v1377
      %v1387 = vmul.f32 %v1346, %v1373
      %v1388 = vpack.c.bf16 %v1383, %v1383
      %v1389 = vpack.c.bf16 %v1384, %v1384
      %v1390 = vpack.c.bf16 %v1385, %v1385
      %v1391 = vpack.c.bf16 %v1386, %v1386
      %v1392 = vpack.c.bf16 %v1387, %v1387
      %v1398 = vunpack.c.l.b16 %v1388
      %v1399 = vunpack.c.l.b16 %v1389
      %v1400 = vunpack.c.l.b16 %v1390
      %v1401 = vunpack.c.l.b16 %v1391
      %v1402 = vunpack.c.l.b16 %v1392
      %v1403 = vpack.c.b16 %v1399, %v1398
      %v1404 = vpack.c.b16 %v1401, %v1400
      %v1405 = vpack.c.b16 %v1402, %v1402
      %1406 = vrot.lane.b32.xlu0 %v1403, 63
      %v1407 = vpop.permute.xlu0 %1406
      %1408 = vrot.lane.b32.xlu0 %v1404, 63
      %v1409 = vpop.permute.xlu0 %1408
      %1410 = vrot.lane.b32.xlu0 %v1405, 63
      %v1411 = vpop.permute.xlu0 %1410
      %v1412 = vrot.slane %v1407, 4
      %v1413 = vrot.slane %v1409, 4
      %v1414 = vrot.slane %v1411, 4
      %v1415 = vsel %vm1004, %v1412, %v1413
      %vm1416 = vcmask 515072
      %v1417 = vsel %vm1416, %v1407, %v1415
      %v1418 = vsel %vm1004, %v1413, %v1414
      %v1419 = vsel %vm1416, %v1409, %v1418
      %1422 = vst [vmem:[#allocation4 + $0x50] sm:$0xff] %v1417
      %1423 = vst [vmem:[#allocation4 + $0x58] sm:$0xff] %v1419
      %v1424 = vld [vmem:[#allocation2] sm:$0xff]
      %v1425 = vld [vmem:[#allocation2 + $0x8] sm:$0xff]
      %v1426 = vld [vmem:[#allocation2 + $0x10] sm:$0xff]
      %v1427 = vld [vmem:[#allocation2 + $0x18] sm:$0xff]
      %v1428 = vld [vmem:[#allocation2 + $0x20] sm:$0xff]
      %s1429 = scalar_lea.vmem %s2, 6
      %v1430 = vld [vmem:[%s1429] ss:$8 sm:$0xf]
      %v1432 = vlaneseq
      %v1433 = vshrl.u32 %v1432, 7
      %v1434 = vsub.s32 0, %v1433
      %v1435 = vrot.slane %v1430, %v1434
      %v1436 = vlaneseq
      %v1437 = vshrl.u32 %v1436, 7
      %v1438 = vsub.s32 1, %v1437
      %v1439 = vrot.slane %v1430, %v1438
      %v1440 = vlaneseq
      %v1441 = vshrl.u32 %v1440, 7
      %v1442 = vsub.s32 2, %v1441
      %v1443 = vrot.slane %v1430, %v1442
      %v1444 = vlaneseq
      %v1445 = vshrl.u32 %v1444, 7
      %v1446 = vsub.s32 3, %v1445
      %v1447 = vrot.slane %v1430, %v1446
      %1448 = vrot.lane.b32.xlu0 %v1435, 71
      %v1449 = vpop.permute.xlu0 %1448
      %1450 = vrot.lane.b32.xlu0 %v1439, 71
      %v1451 = vpop.permute.xlu0 %1450
      %1452 = vrot.lane.b32.xlu0 %v1443, 71
      %v1453 = vpop.permute.xlu0 %1452
      %1454 = vrot.lane.b32.xlu0 %v1447, 71
      %v1455 = vpop.permute.xlu0 %1454
      %vm1456 = vcmask 580608
      %v1457 = vsel %vm1456, %v1449, %v1451
      %v1458 = vsel %vm1456, %v1451, %v1453
      %v1459 = vsel %vm1456, %v1453, %v1455
      %v1465 = vmul.f32 %v1424, %v1449
      %v1466 = vmul.f32 %v1425, %v1457
      %v1467 = vmul.f32 %v1426, %v1458
      %v1468 = vmul.f32 %v1427, %v1459
      %v1469 = vmul.f32 %v1428, %v1455
      %v1470 = vpack.c.bf16 %v1465, %v1465
      %v1471 = vpack.c.bf16 %v1466, %v1466
      %v1472 = vpack.c.bf16 %v1467, %v1467
      %v1473 = vpack.c.bf16 %v1468, %v1468
      %v1474 = vpack.c.bf16 %v1469, %v1469
      %v1480 = vunpack.c.l.b16 %v1470
      %v1481 = vunpack.c.l.b16 %v1471
      %v1482 = vunpack.c.l.b16 %v1472
      %v1483 = vunpack.c.l.b16 %v1473
      %v1484 = vunpack.c.l.b16 %v1474
      %v1485 = vpack.c.b16 %v1481, %v1480
      %v1486 = vpack.c.b16 %v1483, %v1482
      %v1487 = vpack.c.b16 %v1484, %v1484
      %1488 = vrot.lane.b32.xlu0 %v1485, 57
      %v1489 = vpop.permute.xlu0 %1488
      %1490 = vrot.lane.b32.xlu0 %v1486, 57
      %v1491 = vpop.permute.xlu0 %1490
      %1492 = vrot.lane.b32.xlu0 %v1487, 57
      %v1493 = vpop.permute.xlu0 %1492
      %v1494 = vrot.slane %v1489, 4
      %v1495 = vrot.slane %v1491, 4
      %v1496 = vrot.slane %v1493, 4
      %v1497 = vsel %vm1004, %v1494, %v1495
      %vm1498 = vcmask 465920
      %v1499 = vsel %vm1498, %v1489, %v1497
      %v1500 = vsel %vm1004, %v1495, %v1496
      %v1501 = vsel %vm1498, %v1491, %v1500
      %1504 = vst [vmem:[#allocation4 + $0x60] sm:$0xff] %v1499
      %1505 = vst [vmem:[#allocation4 + $0x68] sm:$0xff] %v1501
      %v1506 = vld [vmem:[#allocation2] sm:$0xff]
      %v1507 = vld [vmem:[#allocation2 + $0x8] sm:$0xff]
      %v1508 = vld [vmem:[#allocation2 + $0x10] sm:$0xff]
      %v1509 = vld [vmem:[#allocation2 + $0x18] sm:$0xff]
      %v1510 = vld [vmem:[#allocation2 + $0x20] sm:$0xff]
      %s1511 = scalar_lea.vmem %s2, 7
      %v1512 = vld [vmem:[%s1511] ss:$8 sm:$0xf]
      %v1514 = vlaneseq
      %v1515 = vshrl.u32 %v1514, 7
      %v1516 = vsub.s32 0, %v1515
      %v1517 = vrot.slane %v1512, %v1516
      %v1518 = vlaneseq
      %v1519 = vshrl.u32 %v1518, 7
      %v1520 = vsub.s32 1, %v1519
      %v1521 = vrot.slane %v1512, %v1520
      %v1522 = vlaneseq
      %v1523 = vshrl.u32 %v1522, 7
      %v1524 = vsub.s32 2, %v1523
      %v1525 = vrot.slane %v1512, %v1524
      %v1526 = vlaneseq
      %v1527 = vshrl.u32 %v1526, 7
      %v1528 = vsub.s32 3, %v1527
      %v1529 = vrot.slane %v1512, %v1528
      %1530 = vrot.lane.b32.xlu0 %v1517, 72
      %v1531 = vpop.permute.xlu0 %1530
      %1532 = vrot.lane.b32.xlu0 %v1521, 72
      %v1533 = vpop.permute.xlu0 %1532
      %1534 = vrot.lane.b32.xlu0 %v1525, 72
      %v1535 = vpop.permute.xlu0 %1534
      %1536 = vrot.lane.b32.xlu0 %v1529, 72
      %v1537 = vpop.permute.xlu0 %1536
      %vm1538 = vcmask 588800
      %v1539 = vsel %vm1538, %v1531, %v1533
      %v1540 = vsel %vm1538, %v1533, %v1535
      %v1541 = vsel %vm1538, %v1535, %v1537
      %v1547 = vmul.f32 %v1506, %v1531
      %v1548 = vmul.f32 %v1507, %v1539
      %v1549 = vmul.f32 %v1508, %v1540
      %v1550 = vmul.f32 %v1509, %v1541
      %v1551 = vmul.f32 %v1510, %v1537
      %v1552 = vpack.c.bf16 %v1547, %v1547
      %v1553 = vpack.c.bf16 %v1548, %v1548
      %v1554 = vpack.c.bf16 %v1549, %v1549
      %v1555 = vpack.c.bf16 %v1550, %v1550
      %v1556 = vpack.c.bf16 %v1551, %v1551
      %v1562 = vunpack.c.l.b16 %v1552
      %v1563 = vunpack.c.l.b16 %v1553
      %v1564 = vunpack.c.l.b16 %v1554
      %v1565 = vunpack.c.l.b16 %v1555
      %v1566 = vunpack.c.l.b16 %v1556
      %v1567 = vpack.c.b16 %v1563, %v1562
      %v1568 = vpack.c.b16 %v1565, %v1564
      %v1569 = vpack.c.b16 %v1566, %v1566
      %1570 = vrot.lane.b32.xlu0 %v1567, 56
      %v1571 = vpop.permute.xlu0 %1570
      %1572 = vrot.lane.b32.xlu0 %v1568, 56
      %v1573 = vpop.permute.xlu0 %1572
      %1574 = vrot.lane.b32.xlu0 %v1569, 56
      %v1575 = vpop.permute.xlu0 %1574
      %v1576 = vrot.slane %v1571, 4
      %v1577 = vrot.slane %v1573, 4
      %v1578 = vrot.slane %v1575, 4
      %v1579 = vsel %vm1004, %v1576, %v1577
      %vm1580 = vcmask 457728
      %v1581 = vsel %vm1580, %v1571, %v1579
      %v1582 = vsel %vm1004, %v1577, %v1578
      %v1583 = vsel %vm1580, %v1573, %v1582
      %1586 = vst [vmem:[#allocation4 + $0x70] sm:$0xff] %v1581
      %1587 = vst [vmem:[#allocation4 + $0x78] sm:$0xff] %v1583
      %v1588 = vld [vmem:[#allocation2] sm:$0xff]
      %v1589 = vld [vmem:[#allocation2 + $0x8] sm:$0xff]
      %v1590 = vld [vmem:[#allocation2 + $0x10] sm:$0xff]
      %v1591 = vld [vmem:[#allocation2 + $0x18] sm:$0xff]
      %v1592 = vld [vmem:[#allocation2 + $0x20] sm:$0xff]
      %s1593 = scalar_lea.vmem %s2, 32
      %v1594 = vld [vmem:[%s1593] ss:$8 sm:$0xf]
      %v1596 = vlaneseq
      %v1597 = vshrl.u32 %v1596, 7
      %v1598 = vsub.s32 0, %v1597
      %v1599 = vrot.slane %v1594, %v1598
      %v1600 = vlaneseq
      %v1601 = vshrl.u32 %v1600, 7
      %v1602 = vsub.s32 1, %v1601
      %v1603 = vrot.slane %v1594, %v1602
      %v1604 = vlaneseq
      %v1605 = vshrl.u32 %v1604, 7
      %v1606 = vsub.s32 2, %v1605
      %v1607 = vrot.slane %v1594, %v1606
      %v1608 = vlaneseq
      %v1609 = vshrl.u32 %v1608, 7
      %v1610 = vsub.s32 3, %v1609
      %v1611 = vrot.slane %v1594, %v1610
      %1612 = vrot.lane.b32.xlu0 %v1599, 73
      %v1613 = vpop.permute.xlu0 %1612
      %1614 = vrot.lane.b32.xlu0 %v1603, 73
      %v1615 = vpop.permute.xlu0 %1614
      %1616 = vrot.lane.b32.xlu0 %v1607, 73
      %v1617 = vpop.permute.xlu0 %1616
      %1618 = vrot.lane.b32.xlu0 %v1611, 73
      %v1619 = vpop.permute.xlu0 %1618
      %vm1620 = vcmask 596992
      %v1621 = vsel %vm1620, %v1613, %v1615
      %v1622 = vsel %vm1620, %v1615, %v1617
      %v1623 = vsel %vm1620, %v1617, %v1619
      %v1629 = vmul.f32 %v1588, %v1613
      %v1630 = vmul.f32 %v1589, %v1621
      %v1631 = vmul.f32 %v1590, %v1622
      %v1632 = vmul.f32 %v1591, %v1623
      %v1633 = vmul.f32 %v1592, %v1619
      %v1634 = vpack.c.bf16 %v1629, %v1629
      %v1635 = vpack.c.bf16 %v1630, %v1630
      %v1636 = vpack.c.bf16 %v1631, %v1631
      %v1637 = vpack.c.bf16 %v1632, %v1632
      %v1638 = vpack.c.bf16 %v1633, %v1633
      %v1644 = vunpack.c.l.b16 %v1634
      %v1645 = vunpack.c.l.b16 %v1635
      %v1646 = vunpack.c.l.b16 %v1636
      %v1647 = vunpack.c.l.b16 %v1637
      %v1648 = vunpack.c.l.b16 %v1638
      %v1649 = vpack.c.b16 %v1645, %v1644
      %v1650 = vpack.c.b16 %v1647, %v1646
      %v1651 = vpack.c.b16 %v1648, %v1648
      %1652 = vrot.lane.b32.xlu0 %v1649, 55
      %v1653 = vpop.permute.xlu0 %1652
      %1654 = vrot.lane.b32.xlu0 %v1650, 55
      %v1655 = vpop.permute.xlu0 %1654
      %1656 = vrot.lane.b32.xlu0 %v1651, 55
      %v1657 = vpop.permute.xlu0 %1656
      %v1658 = vrot.slane %v1653, 4
      %v1659 = vrot.slane %v1655, 4
      %v1660 = vrot.slane %v1657, 4
      %v1661 = vsel %vm1004, %v1658, %v1659
      %vm1662 = vcmask 449536
      %v1663 = vsel %vm1662, %v1653, %v1661
      %v1664 = vsel %vm1004, %v1659, %v1660
      %v1665 = vsel %vm1662, %v1655, %v1664
      %1668 = vst [vmem:[#allocation4 + $0x80] sm:$0xff] %v1663
      %1669 = vst [vmem:[#allocation4 + $0x88] sm:$0xff] %v1665
      %v1670 = vld [vmem:[#allocation2] sm:$0xff]
      %v1671 = vld [vmem:[#allocation2 + $0x8] sm:$0xff]
      %v1672 = vld [vmem:[#allocation2 + $0x10] sm:$0xff]
      %v1673 = vld [vmem:[#allocation2 + $0x18] sm:$0xff]
      %v1674 = vld [vmem:[#allocation2 + $0x20] sm:$0xff]
      %s1675 = scalar_lea.vmem %s2, 33
      %v1676 = vld [vmem:[%s1675] ss:$8 sm:$0xf]
      %v1678 = vlaneseq
      %v1679 = vshrl.u32 %v1678, 7
      %v1680 = vsub.s32 0, %v1679
      %v1681 = vrot.slane %v1676, %v1680
      %v1682 = vlaneseq
      %v1683 = vshrl.u32 %v1682, 7
      %v1684 = vsub.s32 1, %v1683
      %v1685 = vrot.slane %v1676, %v1684
      %v1686 = vlaneseq
      %v1687 = vshrl.u32 %v1686, 7
      %v1688 = vsub.s32 2, %v1687
      %v1689 = vrot.slane %v1676, %v1688
      %v1690 = vlaneseq
      %v1691 = vshrl.u32 %v1690, 7
      %v1692 = vsub.s32 3, %v1691
      %v1693 = vrot.slane %v1676, %v1692
      %1694 = vrot.lane.b32.xlu0 %v1681, 119
      %v1695 = vpop.permute.xlu0 %1694
      %1696 = vrot.lane.b32.xlu0 %v1685, 119
      %v1697 = vpop.permute.xlu0 %1696
      %1698 = vrot.lane.b32.xlu0 %v1689, 119
      %v1699 = vpop.permute.xlu0 %1698
      %1700 = vrot.lane.b32.xlu0 %v1693, 119
      %v1701 = vpop.permute.xlu0 %1700
      %vm1702 = vcmask 973824
      %v1703 = vsel %vm1702, %v1695, %v1697
      %v1704 = vsel %vm1702, %v1697, %v1699
      %v1705 = vsel %vm1702, %v1699, %v1701
      %v1711 = vmul.f32 %v1670, %v1695
      %v1712 = vmul.f32 %v1671, %v1703
      %v1713 = vmul.f32 %v1672, %v1704
      %v1714 = vmul.f32 %v1673, %v1705
      %v1715 = vmul.f32 %v1674, %v1701
      %v1716 = vpack.c.bf16 %v1711, %v1711
      %v1717 = vpack.c.bf16 %v1712, %v1712
      %v1718 = vpack.c.bf16 %v1713, %v1713
      %v1719 = vpack.c.bf16 %v1714, %v1714
      %v1720 = vpack.c.bf16 %v1715, %v1715
      %v1726 = vunpack.c.l.b16 %v1716
      %v1727 = vunpack.c.l.b16 %v1717
      %v1728 = vunpack.c.l.b16 %v1718
      %v1729 = vunpack.c.l.b16 %v1719
      %v1730 = vunpack.c.l.b16 %v1720
      %v1731 = vpack.c.b16 %v1727, %v1726
      %v1732 = vpack.c.b16 %v1729, %v1728
      %v1733 = vpack.c.b16 %v1730, %v1730
      %1734 = vrot.lane.b32.xlu0 %v1731, 9
      %v1735 = vpop.permute.xlu0 %1734
      %1736 = vrot.lane.b32.xlu0 %v1732, 9
      %v1737 = vpop.permute.xlu0 %1736
      %1738 = vrot.lane.b32.xlu0 %v1733, 9
      %v1739 = vpop.permute.xlu0 %1738
      %v1740 = vrot.slane %v1735, 4
      %v1741 = vrot.slane %v1737, 4
      %v1742 = vrot.slane %v1739, 4
      %v1743 = vsel %vm1004, %v1740, %v1741
      %vm1744 = vcmask 72704
      %v1745 = vsel %vm1744, %v1735, %v1743
      %v1746 = vsel %vm1004, %v1741, %v1742
      %v1747 = vsel %vm1744, %v1737, %v1746
      %1750 = vst [vmem:[#allocation4 + $0x90] sm:$0xff] %v1745
      %1751 = vst [vmem:[#allocation4 + $0x98] sm:$0xff] %v1747
      %v1752 = vld [vmem:[#allocation2] sm:$0xff]
      %v1753 = vld [vmem:[#allocation2 + $0x8] sm:$0xff]
      %v1754 = vld [vmem:[#allocation2 + $0x10] sm:$0xff]
      %v1755 = vld [vmem:[#allocation2 + $0x18] sm:$0xff]
      %v1756 = vld [vmem:[#allocation2 + $0x20] sm:$0xff]
      %s1757 = scalar_lea.vmem %s2, 34
      %v1758 = vld [vmem:[%s1757] ss:$8 sm:$0xf]
      %v1760 = vlaneseq
      %v1761 = vshrl.u32 %v1760, 7
      %v1762 = vsub.s32 0, %v1761
      %v1763 = vrot.slane %v1758, %v1762
      %v1764 = vlaneseq
      %v1765 = vshrl.u32 %v1764, 7
      %v1766 = vsub.s32 1, %v1765
      %v1767 = vrot.slane %v1758, %v1766
      %v1768 = vlaneseq
      %v1769 = vshrl.u32 %v1768, 7
      %v1770 = vsub.s32 2, %v1769
      %v1771 = vrot.slane %v1758, %v1770
      %v1772 = vlaneseq
      %v1773 = vshrl.u32 %v1772, 7
      %v1774 = vsub.s32 3, %v1773
      %v1775 = vrot.slane %v1758, %v1774
      %1776 = vrot.lane.b32.xlu0 %v1763, 120
      %v1777 = vpop.permute.xlu0 %1776
      %1778 = vrot.lane.b32.xlu0 %v1767, 120
      %v1779 = vpop.permute.xlu0 %1778
      %1780 = vrot.lane.b32.xlu0 %v1771, 120
      %v1781 = vpop.permute.xlu0 %1780
      %1782 = vrot.lane.b32.xlu0 %v1775, 120
      %v1783 = vpop.permute.xlu0 %1782
      %vm1784 = vcmask 982016
      %v1785 = vsel %vm1784, %v1777, %v1779
      %v1786 = vsel %vm1784, %v1779, %v1781
      %v1787 = vsel %vm1784, %v1781, %v1783
      %v1793 = vmul.f32 %v1752, %v1777
      %v1794 = vmul.f32 %v1753, %v1785
      %v1795 = vmul.f32 %v1754, %v1786
      %v1796 = vmul.f32 %v1755, %v1787
      %v1797 = vmul.f32 %v1756, %v1783
      %v1798 = vpack.c.bf16 %v1793, %v1793
      %v1799 = vpack.c.bf16 %v1794, %v1794
      %v1800 = vpack.c.bf16 %v1795, %v1795
      %v1801 = vpack.c.bf16 %v1796, %v1796
      %v1802 = vpack.c.bf16 %v1797, %v1797
      %v1808 = vunpack.c.l.b16 %v1798
      %v1809 = vunpack.c.l.b16 %v1799
      %v1810 = vunpack.c.l.b16 %v1800
      %v1811 = vunpack.c.l.b16 %v1801
      %v1812 = vunpack.c.l.b16 %v1802
      %v1813 = vpack.c.b16 %v1809, %v1808
      %v1814 = vpack.c.b16 %v1811, %v1810
      %v1815 = vpack.c.b16 %v1812, %v1812
      %1816 = vrot.lane.b32.xlu0 %v1813, 8
      %v1817 = vpop.permute.xlu0 %1816
      %1818 = vrot.lane.b32.xlu0 %v1814, 8
      %v1819 = vpop.permute.xlu0 %1818
      %1820 = vrot.lane.b32.xlu0 %v1815, 8
      %v1821 = vpop.permute.xlu0 %1820
      %v1822 = vrot.slane %v1817, 4
      %v1823 = vrot.slane %v1819, 4
      %v1824 = vrot.slane %v1821, 4
      %v1825 = vsel %vm1004, %v1822, %v1823
      %vm1826 = vcmask 64512
      %v1827 = vsel %vm1826, %v1817, %v1825
      %v1828 = vsel %vm1004, %v1823, %v1824
      %v1829 = vsel %vm1826, %v1819, %v1828
      %1832 = vst [vmem:[#allocation4 + $0xa0] sm:$0xff] %v1827
      %1833 = vst [vmem:[#allocation4 + $0xa8] sm:$0xff] %v1829
      %v1834 = vld [vmem:[#allocation2] sm:$0xff]
      %v1835 = vld [vmem:[#allocation2 + $0x8] sm:$0xff]
      %v1836 = vld [vmem:[#allocation2 + $0x10] sm:$0xff]
      %v1837 = vld [vmem:[#allocation2 + $0x18] sm:$0xff]
      %v1838 = vld [vmem:[#allocation2 + $0x20] sm:$0xff]
      %s1839 = scalar_lea.vmem %s2, 35
      %v1840 = vld [vmem:[%s1839] ss:$8 sm:$0xf]
      %v1842 = vlaneseq
      %v1843 = vshrl.u32 %v1842, 7
      %v1844 = vsub.s32 0, %v1843
      %v1845 = vrot.slane %v1840, %v1844
      %v1846 = vlaneseq
      %v1847 = vshrl.u32 %v1846, 7
      %v1848 = vsub.s32 1, %v1847
      %v1849 = vrot.slane %v1840, %v1848
      %v1850 = vlaneseq
      %v1851 = vshrl.u32 %v1850, 7
      %v1852 = vsub.s32 2, %v1851
      %v1853 = vrot.slane %v1840, %v1852
      %v1854 = vlaneseq
      %v1855 = vshrl.u32 %v1854, 7
      %v1856 = vsub.s32 3, %v1855
      %v1857 = vrot.slane %v1840, %v1856
      %1858 = vrot.lane.b32.xlu0 %v1845, 121
      %v1859 = vpop.permute.xlu0 %1858
      %1860 = vrot.lane.b32.xlu0 %v1849, 121
      %v1861 = vpop.permute.xlu0 %1860
      %1862 = vrot.lane.b32.xlu0 %v1853, 121
      %v1863 = vpop.permute.xlu0 %1862
      %1864 = vrot.lane.b32.xlu0 %v1857, 121
      %v1865 = vpop.permute.xlu0 %1864
      %vm1866 = vcmask 990208
      %v1867 = vsel %vm1866, %v1859, %v1861
      %v1868 = vsel %vm1866, %v1861, %v1863
      %v1869 = vsel %vm1866, %v1863, %v1865
      %v1875 = vmul.f32 %v1834, %v1859
      %v1876 = vmul.f32 %v1835, %v1867
      %v1877 = vmul.f32 %v1836, %v1868
      %v1878 = vmul.f32 %v1837, %v1869
      %v1879 = vmul.f32 %v1838, %v1865
      %v1880 = vpack.c.bf16 %v1875, %v1875
      %v1881 = vpack.c.bf16 %v1876, %v1876
      %v1882 = vpack.c.bf16 %v1877, %v1877
      %v1883 = vpack.c.bf16 %v1878, %v1878
      %v1884 = vpack.c.bf16 %v1879, %v1879
      %v1890 = vunpack.c.l.b16 %v1880
      %v1891 = vunpack.c.l.b16 %v1881
      %v1892 = vunpack.c.l.b16 %v1882
      %v1893 = vunpack.c.l.b16 %v1883
      %v1894 = vunpack.c.l.b16 %v1884
      %v1895 = vpack.c.b16 %v1891, %v1890
      %v1896 = vpack.c.b16 %v1893, %v1892
      %v1897 = vpack.c.b16 %v1894, %v1894
      %1898 = vrot.lane.b32.xlu0 %v1895, 7
      %v1899 = vpop.permute.xlu0 %1898
      %1900 = vrot.lane.b32.xlu0 %v1896, 7
      %v1901 = vpop.permute.xlu0 %1900
      %1902 = vrot.lane.b32.xlu0 %v1897, 7
      %v1903 = vpop.permute.xlu0 %1902
      %v1904 = vrot.slane %v1899, 4
      %v1905 = vrot.slane %v1901, 4
      %v1906 = vrot.slane %v1903, 4
      %v1907 = vsel %vm1004, %v1904, %v1905
      %vm1908 = vcmask 56320
      %v1909 = vsel %vm1908, %v1899, %v1907
      %v1910 = vsel %vm1004, %v1905, %v1906
      %v1911 = vsel %vm1908, %v1901, %v1910
      %1914 = vst [vmem:[#allocation4 + $0xb0] sm:$0xff] %v1909
      %1915 = vst [vmem:[#allocation4 + $0xb8] sm:$0xff] %v1911
      %v1916 = vld [vmem:[#allocation2] sm:$0xff]
      %v1917 = vld [vmem:[#allocation2 + $0x8] sm:$0xff]
      %v1918 = vld [vmem:[#allocation2 + $0x10] sm:$0xff]
      %v1919 = vld [vmem:[#allocation2 + $0x18] sm:$0xff]
      %v1920 = vld [vmem:[#allocation2 + $0x20] sm:$0xff]
      %s1921 = scalar_lea.vmem %s2, 36
      %v1922 = vld [vmem:[%s1921] ss:$8 sm:$0xf]
      %v1924 = vlaneseq
      %v1925 = vshrl.u32 %v1924, 7
      %v1926 = vsub.s32 0, %v1925
      %v1927 = vrot.slane %v1922, %v1926
      %v1928 = vlaneseq
      %v1929 = vshrl.u32 %v1928, 7
      %v1930 = vsub.s32 1, %v1929
      %v1931 = vrot.slane %v1922, %v1930
      %v1932 = vlaneseq
      %v1933 = vshrl.u32 %v1932, 7
      %v1934 = vsub.s32 2, %v1933
      %v1935 = vrot.slane %v1922, %v1934
      %v1936 = vlaneseq
      %v1937 = vshrl.u32 %v1936, 7
      %v1938 = vsub.s32 3, %v1937
      %v1939 = vrot.slane %v1922, %v1938
      %1940 = vrot.lane.b32.xlu0 %v1927, 127
      %v1941 = vpop.permute.xlu0 %1940
      %1942 = vrot.lane.b32.xlu0 %v1931, 127
      %v1943 = vpop.permute.xlu0 %1942
      %1944 = vrot.lane.b32.xlu0 %v1935, 127
      %v1945 = vpop.permute.xlu0 %1944
      %1946 = vrot.lane.b32.xlu0 %v1939, 127
      %v1947 = vpop.permute.xlu0 %1946
      %vm1948 = vcmask 1039360
      %v1949 = vsel %vm1948, %v1941, %v1943
      %v1950 = vsel %vm1948, %v1943, %v1945
      %v1951 = vsel %vm1948, %v1945, %v1947
      %v1957 = vmul.f32 %v1916, %v1941
      %v1958 = vmul.f32 %v1917, %v1949
      %v1959 = vmul.f32 %v1918, %v1950
      %v1960 = vmul.f32 %v1919, %v1951
      %v1961 = vmul.f32 %v1920, %v1947
      %v1962 = vpack.c.bf16 %v1957, %v1957
      %v1963 = vpack.c.bf16 %v1958, %v1958
      %v1964 = vpack.c.bf16 %v1959, %v1959
      %v1965 = vpack.c.bf16 %v1960, %v1960
      %v1966 = vpack.c.bf16 %v1961, %v1961
      %v1972 = vunpack.c.l.b16 %v1962
      %v1973 = vunpack.c.l.b16 %v1963
      %v1974 = vunpack.c.l.b16 %v1964
      %v1975 = vunpack.c.l.b16 %v1965
      %v1976 = vunpack.c.l.b16 %v1966
      %v1977 = vpack.c.b16 %v1973, %v1972
      %v1978 = vpack.c.b16 %v1975, %v1974
      %v1979 = vpack.c.b16 %v1976, %v1976
      %1980 = vrot.lane.b32.xlu0 %v1977, 1
      %v1981 = vpop.permute.xlu0 %1980
      %1982 = vrot.lane.b32.xlu0 %v1978, 1
      %v1983 = vpop.permute.xlu0 %1982
      %1984 = vrot.lane.b32.xlu0 %v1979, 1
      %v1985 = vpop.permute.xlu0 %1984
      %v1986 = vrot.slane %v1981, 4
      %v1987 = vrot.slane %v1983, 4
      %v1988 = vrot.slane %v1985, 4
      %v1989 = vsel %vm1004, %v1986, %v1987
      %vm1990 = vcmask 7168
      %v1991 = vsel %vm1990, %v1981, %v1989
      %v1992 = vsel %vm1004, %v1987, %v1988
      %v1993 = vsel %vm1990, %v1983, %v1992
      %1996 = vst [vmem:[#allocation4 + $0xc0] sm:$0xff] %v1991
      %1997 = vst [vmem:[#allocation4 + $0xc8] sm:$0xff] %v1993
      %v1998 = vld [vmem:[#allocation2 + $0x8] sm:$0xff]
      %v1999 = vld [vmem:[#allocation2 + $0x10] sm:$0xff]
      %v2000 = vld [vmem:[#allocation2 + $0x18] sm:$0xff]
      %v2001 = vld [vmem:[#allocation2 + $0x20] sm:$0xff]
      %s2002 = scalar_lea.vmem %s2, 37
      %v2003 = vld [vmem:[%s2002] ss:$8 sm:$0xf]
      %v2005 = vlaneseq
      %v2006 = vshrl.u32 %v2005, 7
      %v2007 = vsub.s32 0, %v2006
      %v2008 = vrot.slane %v2003, %v2007
      %v2009 = vlaneseq
      %v2010 = vshrl.u32 %v2009, 7
      %v2011 = vsub.s32 1, %v2010
      %v2012 = vrot.slane %v2003, %v2011
      %v2013 = vlaneseq
      %v2014 = vshrl.u32 %v2013, 7
      %v2015 = vsub.s32 2, %v2014
      %v2016 = vrot.slane %v2003, %v2015
      %v2017 = vlaneseq
      %v2018 = vshrl.u32 %v2017, 7
      %v2019 = vsub.s32 3, %v2018
      %v2020 = vrot.slane %v2003, %v2019
      %v2025 = vmul.f32 %v1998, %v2008
      %v2026 = vmul.f32 %v1999, %v2012
      %v2027 = vmul.f32 %v2000, %v2016
      %v2028 = vmul.f32 %v2001, %v2020
      %v2029 = vpack.c.bf16 %v2025, %v2025
      %v2030 = vpack.c.bf16 %v2026, %v2026
      %v2031 = vpack.c.bf16 %v2027, %v2027
      %v2032 = vpack.c.bf16 %v2028, %v2028
      %v2037 = vunpack.c.l.b16 %v2029
      %v2038 = vunpack.c.l.b16 %v2030
      %v2039 = vunpack.c.l.b16 %v2031
      %v2040 = vunpack.c.l.b16 %v2032
      %v2041 = vpack.c.b16 %v2038, %v2037
      %v2042 = vpack.c.b16 %v2040, %v2039
      %2045 = vst [vmem:[#allocation4 + $0xd0] sm:$0xff] %v2041
      %2046 = vst [vmem:[#allocation4 + $0xd8] sm:$0xff] %v2042
      %v2047 = vld [vmem:[#allocation2 + $0x8] sm:$0xff]
      %v2048 = vld [vmem:[#allocation2 + $0x10] sm:$0xff]
      %v2049 = vld [vmem:[#allocation2 + $0x18] sm:$0xff]
      %v2050 = vld [vmem:[#allocation2 + $0x20] sm:$0xff]
      %v2051 = vld [vmem:[#allocation2 + $0x28] sm:$0xff]
      %s2052 = scalar_lea.vmem %s2, 38
      %v2053 = vld [vmem:[%s2052] ss:$8 sm:$0xf]
      %v2055 = vlaneseq
      %v2056 = vshrl.u32 %v2055, 7
      %v2057 = vsub.s32 0, %v2056
      %v2058 = vrot.slane %v2053, %v2057
      %v2059 = vlaneseq
      %v2060 = vshrl.u32 %v2059, 7
      %v2061 = vsub.s32 1, %v2060
      %v2062 = vrot.slane %v2053, %v2061
      %v2063 = vlaneseq
      %v2064 = vshrl.u32 %v2063, 7
      %v2065 = vsub.s32 2, %v2064
      %v2066 = vrot.slane %v2053, %v2065
      %v2067 = vlaneseq
      %v2068 = vshrl.u32 %v2067, 7
      %v2069 = vsub.s32 3, %v2068
      %v2070 = vrot.slane %v2053, %v2069
      %2071 = vrot.lane.b32.xlu0 %v2058, 1
      %v2072 = vpop.permute.xlu0 %2071
      %2073 = vrot.lane.b32.xlu0 %v2062, 1
      %v2074 = vpop.permute.xlu0 %2073
      %2075 = vrot.lane.b32.xlu0 %v2066, 1
      %v2076 = vpop.permute.xlu0 %2075
      %2077 = vrot.lane.b32.xlu0 %v2070, 1
      %v2078 = vpop.permute.xlu0 %2077
      %vm2079 = vcmask 7168
      %v2080 = vsel %vm2079, %v2072, %v2074
      %v2081 = vsel %vm2079, %v2074, %v2076
      %v2082 = vsel %vm2079, %v2076, %v2078
      %v2088 = vmul.f32 %v2047, %v2072
      %v2089 = vmul.f32 %v2048, %v2080
      %v2090 = vmul.f32 %v2049, %v2081
      %v2091 = vmul.f32 %v2050, %v2082
      %v2092 = vmul.f32 %v2051, %v2078
      %v2093 = vpack.c.bf16 %v2088, %v2088
      %v2094 = vpack.c.bf16 %v2089, %v2089
      %v2095 = vpack.c.bf16 %v2090, %v2090
      %v2096 = vpack.c.bf16 %v2091, %v2091
      %v2097 = vpack.c.bf16 %v2092, %v2092
      %v2103 = vunpack.c.l.b16 %v2093
      %v2104 = vunpack.c.l.b16 %v2094
      %v2105 = vunpack.c.l.b16 %v2095
      %v2106 = vunpack.c.l.b16 %v2096
      %v2107 = vunpack.c.l.b16 %v2097
      %v2108 = vpack.c.b16 %v2104, %v2103
      %v2109 = vpack.c.b16 %v2106, %v2105
      %v2110 = vpack.c.b16 %v2107, %v2107
      %2111 = vrot.lane.b32.xlu0 %v2108, 127
      %v2112 = vpop.permute.xlu0 %2111
      %2113 = vrot.lane.b32.xlu0 %v2109, 127
      %v2114 = vpop.permute.xlu0 %2113
      %2115 = vrot.lane.b32.xlu0 %v2110, 127
      %v2116 = vpop.permute.xlu0 %2115
      %v2117 = vrot.slane %v2112, 4
      %v2118 = vrot.slane %v2114, 4
      %v2119 = vrot.slane %v2116, 4
      %v2120 = vsel %vm1004, %v2117, %v2118
      %vm2121 = vcmask 1039360
      %v2122 = vsel %vm2121, %v2112, %v2120
      %v2123 = vsel %vm1004, %v2118, %v2119
      %v2124 = vsel %vm2121, %v2114, %v2123
      %2127 = vst [vmem:[#allocation4 + $0xe0] sm:$0xff] %v2122
      %2128 = vst [vmem:[#allocation4 + $0xe8] sm:$0xff] %v2124
      %v2129 = vld [vmem:[#allocation2 + $0x8] sm:$0xff]
      %v2130 = vld [vmem:[#allocation2 + $0x10] sm:$0xff]
      %v2131 = vld [vmem:[#allocation2 + $0x18] sm:$0xff]
      %v2132 = vld [vmem:[#allocation2 + $0x20] sm:$0xff]
      %v2133 = vld [vmem:[#allocation2 + $0x28] sm:$0xff]
      %s2134 = scalar_lea.vmem %s2, 39
      %v2135 = vld [vmem:[%s2134] ss:$8 sm:$0xf]
      %v2137 = vlaneseq
      %v2138 = vshrl.u32 %v2137, 7
      %v2139 = vsub.s32 0, %v2138
      %v2140 = vrot.slane %v2135, %v2139
      %v2141 = vlaneseq
      %v2142 = vshrl.u32 %v2141, 7
      %v2143 = vsub.s32 1, %v2142
      %v2144 = vrot.slane %v2135, %v2143
      %v2145 = vlaneseq
      %v2146 = vshrl.u32 %v2145, 7
      %v2147 = vsub.s32 2, %v2146
      %v2148 = vrot.slane %v2135, %v2147
      %v2149 = vlaneseq
      %v2150 = vshrl.u32 %v2149, 7
      %v2151 = vsub.s32 3, %v2150
      %v2152 = vrot.slane %v2135, %v2151
      %2153 = vrot.lane.b32.xlu0 %v2140, 7
      %v2154 = vpop.permute.xlu0 %2153
      %2155 = vrot.lane.b32.xlu0 %v2144, 7
      %v2156 = vpop.permute.xlu0 %2155
      %2157 = vrot.lane.b32.xlu0 %v2148, 7
      %v2158 = vpop.permute.xlu0 %2157
      %2159 = vrot.lane.b32.xlu0 %v2152, 7
      %v2160 = vpop.permute.xlu0 %2159
      %vm2161 = vcmask 56320
      %v2162 = vsel %vm2161, %v2154, %v2156
      %v2163 = vsel %vm2161, %v2156, %v2158
      %v2164 = vsel %vm2161, %v2158, %v2160
      %v2170 = vmul.f32 %v2129, %v2154
      %v2171 = vmul.f32 %v2130, %v2162
      %v2172 = vmul.f32 %v2131, %v2163
      %v2173 = vmul.f32 %v2132, %v2164
      %v2174 = vmul.f32 %v2133, %v2160
      %v2175 = vpack.c.bf16 %v2170, %v2170
      %v2176 = vpack.c.bf16 %v2171, %v2171
      %v2177 = vpack.c.bf16 %v2172, %v2172
      %v2178 = vpack.c.bf16 %v2173, %v2173
      %v2179 = vpack.c.bf16 %v2174, %v2174
      %v2185 = vunpack.c.l.b16 %v2175
      %v2186 = vunpack.c.l.b16 %v2176
      %v2187 = vunpack.c.l.b16 %v2177
      %v2188 = vunpack.c.l.b16 %v2178
      %v2189 = vunpack.c.l.b16 %v2179
      %v2190 = vpack.c.b16 %v2186, %v2185
      %v2191 = vpack.c.b16 %v2188, %v2187
      %v2192 = vpack.c.b16 %v2189, %v2189
      %2193 = vrot.lane.b32.xlu0 %v2190, 121
      %v2194 = vpop.permute.xlu0 %2193
      %2195 = vrot.lane.b32.xlu0 %v2191, 121
      %v2196 = vpop.permute.xlu0 %2195
      %2197 = vrot.lane.b32.xlu0 %v2192, 121
      %v2198 = vpop.permute.xlu0 %2197
      %v2199 = vrot.slane %v2194, 4
      %v2200 = vrot.slane %v2196, 4
      %v2201 = vrot.slane %v2198, 4
      %v2202 = vsel %vm1004, %v2199, %v2200
      %vm2203 = vcmask 990208
      %v2204 = vsel %vm2203, %v2194, %v2202
      %v2205 = vsel %vm1004, %v2200, %v2201
      %v2206 = vsel %vm2203, %v2196, %v2205
      %2209 = vst [vmem:[#allocation4 + $0xf0] sm:$0xff] %v2204
      %2210 = vst [vmem:[#allocation4 + $0xf8] sm:$0xff] %v2206
      %v2211 = vld [vmem:[#allocation2 + $0x8] sm:$0xff]
      %v2212 = vld [vmem:[#allocation2 + $0x10] sm:$0xff]
      %v2213 = vld [vmem:[#allocation2 + $0x18] sm:$0xff]
      %v2214 = vld [vmem:[#allocation2 + $0x20] sm:$0xff]
      %v2215 = vld [vmem:[#allocation2 + $0x28] sm:$0xff]
      %s2216 = scalar_lea.vmem %s2, 64
      %v2217 = vld [vmem:[%s2216] ss:$8 sm:$0xf]
      %v2219 = vlaneseq
      %v2220 = vshrl.u32 %v2219, 7
      %v2221 = vsub.s32 0, %v2220
      %v2222 = vrot.slane %v2217, %v2221
      %v2223 = vlaneseq
      %v2224 = vshrl.u32 %v2223, 7
      %v2225 = vsub.s32 1, %v2224
      %v2226 = vrot.slane %v2217, %v2225
      %v2227 = vlaneseq
      %v2228 = vshrl.u32 %v2227, 7
      %v2229 = vsub.s32 2, %v2228
      %v2230 = vrot.slane %v2217, %v2229
      %v2231 = vlaneseq
      %v2232 = vshrl.u32 %v2231, 7
      %v2233 = vsub.s32 3, %v2232
      %v2234 = vrot.slane %v2217, %v2233
      %2235 = vrot.lane.b32.xlu0 %v2222, 8
      %v2236 = vpop.permute.xlu0 %2235
      %2237 = vrot.lane.b32.xlu0 %v2226, 8
      %v2238 = vpop.permute.xlu0 %2237
      %2239 = vrot.lane.b32.xlu0 %v2230, 8
      %v2240 = vpop.permute.xlu0 %2239
      %2241 = vrot.lane.b32.xlu0 %v2234, 8
      %v2242 = vpop.permute.xlu0 %2241
      %v2243 = vsel %vm588, %v2236, %v2238
      %v2244 = vsel %vm588, %v2238, %v2240
      %v2245 = vsel %vm588, %v2240, %v2242
      %v2251 = vmul.f32 %v2211, %v2236
      %v2252 = vmul.f32 %v2212, %v2243
      %v2253 = vmul.f32 %v2213, %v2244
      %v2254 = vmul.f32 %v2214, %v2245
      %v2255 = vmul.f32 %v2215, %v2242
      %v2256 = vpack.c.bf16 %v2251, %v2251
      %v2257 = vpack.c.bf16 %v2252, %v2252
      %v2258 = vpack.c.bf16 %v2253, %v2253
      %v2259 = vpack.c.bf16 %v2254, %v2254
      %v2260 = vpack.c.bf16 %v2255, %v2255
      %v2266 = vunpack.c.l.b16 %v2256
      %v2267 = vunpack.c.l.b16 %v2257
      %v2268 = vunpack.c.l.b16 %v2258
      %v2269 = vunpack.c.l.b16 %v2259
      %v2270 = vunpack.c.l.b16 %v2260
      %v2271 = vpack.c.b16 %v2267, %v2266
      %v2272 = vpack.c.b16 %v2269, %v2268
      %v2273 = vpack.c.b16 %v2270, %v2270
      %2274 = vrot.lane.b32.xlu0 %v2271, 120
      %v2275 = vpop.permute.xlu0 %2274
      %2276 = vrot.lane.b32.xlu0 %v2272, 120
      %v2277 = vpop.permute.xlu0 %2276
      %2278 = vrot.lane.b32.xlu0 %v2273, 120
      %v2279 = vpop.permute.xlu0 %2278
      %v2280 = vrot.slane %v2275, 4
      %v2281 = vrot.slane %v2277, 4
      %v2282 = vrot.slane %v2279, 4
      %v2283 = vsel %vm1004, %v2280, %v2281
      %vm2284 = vcmask 982016
      %v2285 = vsel %vm2284, %v2275, %v2283
      %v2286 = vsel %vm1004, %v2281, %v2282
      %v2287 = vsel %vm2284, %v2277, %v2286
      %2290 = vst [vmem:[#allocation4 + $0x100] sm:$0xff] %v2285
      %2291 = vst [vmem:[#allocation4 + $0x108] sm:$0xff] %v2287
      %v2292 = vld [vmem:[#allocation2 + $0x8] sm:$0xff]
      %v2293 = vld [vmem:[#allocation2 + $0x10] sm:$0xff]
      %v2294 = vld [vmem:[#allocation2 + $0x18] sm:$0xff]
      %v2295 = vld [vmem:[#allocation2 + $0x20] sm:$0xff]
      %v2296 = vld [vmem:[#allocation2 + $0x28] sm:$0xff]
      %s2297 = scalar_lea.vmem %s2, 65
      %v2298 = vld [vmem:[%s2297] ss:$8 sm:$0xf]
      %v2300 = vlaneseq
      %v2301 = vshrl.u32 %v2300, 7
      %v2302 = vsub.s32 0, %v2301
      %v2303 = vrot.slane %v2298, %v2302
      %v2304 = vlaneseq
      %v2305 = vshrl.u32 %v2304, 7
      %v2306 = vsub.s32 1, %v2305
      %v2307 = vrot.slane %v2298, %v2306
      %v2308 = vlaneseq
      %v2309 = vshrl.u32 %v2308, 7
      %v2310 = vsub.s32 2, %v2309
      %v2311 = vrot.slane %v2298, %v2310
      %v2312 = vlaneseq
      %v2313 = vshrl.u32 %v2312, 7
      %v2314 = vsub.s32 3, %v2313
      %v2315 = vrot.slane %v2298, %v2314
      %2316 = vrot.lane.b32.xlu0 %v2303, 9
      %v2317 = vpop.permute.xlu0 %2316
      %2318 = vrot.lane.b32.xlu0 %v2307, 9
      %v2319 = vpop.permute.xlu0 %2318
      %2320 = vrot.lane.b32.xlu0 %v2311, 9
      %v2321 = vpop.permute.xlu0 %2320
      %2322 = vrot.lane.b32.xlu0 %v2315, 9
      %v2323 = vpop.permute.xlu0 %2322
      %vm2324 = vcmask 72704
      %v2325 = vsel %vm2324, %v2317, %v2319
      %v2326 = vsel %vm2324, %v2319, %v2321
      %v2327 = vsel %vm2324, %v2321, %v2323
      %v2333 = vmul.f32 %v2292, %v2317
      %v2334 = vmul.f32 %v2293, %v2325
      %v2335 = vmul.f32 %v2294, %v2326
      %v2336 = vmul.f32 %v2295, %v2327
      %v2337 = vmul.f32 %v2296, %v2323
      %v2338 = vpack.c.bf16 %v2333, %v2333
      %v2339 = vpack.c.bf16 %v2334, %v2334
      %v2340 = vpack.c.bf16 %v2335, %v2335
      %v2341 = vpack.c.bf16 %v2336, %v2336
      %v2342 = vpack.c.bf16 %v2337, %v2337
      %v2348 = vunpack.c.l.b16 %v2338
      %v2349 = vunpack.c.l.b16 %v2339
      %v2350 = vunpack.c.l.b16 %v2340
      %v2351 = vunpack.c.l.b16 %v2341
      %v2352 = vunpack.c.l.b16 %v2342
      %v2353 = vpack.c.b16 %v2349, %v2348
      %v2354 = vpack.c.b16 %v2351, %v2350
      %v2355 = vpack.c.b16 %v2352, %v2352
      %2356 = vrot.lane.b32.xlu0 %v2353, 119
      %v2357 = vpop.permute.xlu0 %2356
      %2358 = vrot.lane.b32.xlu0 %v2354, 119
      %v2359 = vpop.permute.xlu0 %2358
      %2360 = vrot.lane.b32.xlu0 %v2355, 119
      %v2361 = vpop.permute.xlu0 %2360
      %v2362 = vrot.slane %v2357, 4
      %v2363 = vrot.slane %v2359, 4
      %v2364 = vrot.slane %v2361, 4
      %v2365 = vsel %vm1004, %v2362, %v2363
      %vm2366 = vcmask 973824
      %v2367 = vsel %vm2366, %v2357, %v2365
      %v2368 = vsel %vm1004, %v2363, %v2364
      %v2369 = vsel %vm2366, %v2359, %v2368
      %2372 = vst [vmem:[#allocation4 + $0x110] sm:$0xff] %v2367
      %2373 = vst [vmem:[#allocation4 + $0x118] sm:$0xff] %v2369
      %v2374 = vld [vmem:[#allocation2 + $0x8] sm:$0xff]
      %v2375 = vld [vmem:[#allocation2 + $0x10] sm:$0xff]
      %v2376 = vld [vmem:[#allocation2 + $0x18] sm:$0xff]
      %v2377 = vld [vmem:[#allocation2 + $0x20] sm:$0xff]
      %v2378 = vld [vmem:[#allocation2 + $0x28] sm:$0xff]
      %s2379 = scalar_lea.vmem %s2, 66
      %v2380 = vld [vmem:[%s2379] ss:$8 sm:$0xf]
      %v2382 = vlaneseq
      %v2383 = vshrl.u32 %v2382, 7
      %v2384 = vsub.s32 0, %v2383
      %v2385 = vrot.slane %v2380, %v2384
      %v2386 = vlaneseq
      %v2387 = vshrl.u32 %v2386, 7
      %v2388 = vsub.s32 1, %v2387
      %v2389 = vrot.slane %v2380, %v2388
      %v2390 = vlaneseq
      %v2391 = vshrl.u32 %v2390, 7
      %v2392 = vsub.s32 2, %v2391
      %v2393 = vrot.slane %v2380, %v2392
      %v2394 = vlaneseq
      %v2395 = vshrl.u32 %v2394, 7
      %v2396 = vsub.s32 3, %v2395
      %v2397 = vrot.slane %v2380, %v2396
      %2398 = vrot.lane.b32.xlu0 %v2385, 55
      %v2399 = vpop.permute.xlu0 %2398
      %2400 = vrot.lane.b32.xlu0 %v2389, 55
      %v2401 = vpop.permute.xlu0 %2400
      %2402 = vrot.lane.b32.xlu0 %v2393, 55
      %v2403 = vpop.permute.xlu0 %2402
      %2404 = vrot.lane.b32.xlu0 %v2397, 55
      %v2405 = vpop.permute.xlu0 %2404
      %v2406 = vsel %vm963, %v2399, %v2401
      %v2407 = vsel %vm963, %v2401, %v2403
      %v2408 = vsel %vm963, %v2403, %v2405
      %v2414 = vmul.f32 %v2374, %v2399
      %v2415 = vmul.f32 %v2375, %v2406
      %v2416 = vmul.f32 %v2376, %v2407
      %v2417 = vmul.f32 %v2377, %v2408
      %v2418 = vmul.f32 %v2378, %v2405
      %v2419 = vpack.c.bf16 %v2414, %v2414
      %v2420 = vpack.c.bf16 %v2415, %v2415
      %v2421 = vpack.c.bf16 %v2416, %v2416
      %v2422 = vpack.c.bf16 %v2417, %v2417
      %v2423 = vpack.c.bf16 %v2418, %v2418
      %v2429 = vunpack.c.l.b16 %v2419
      %v2430 = vunpack.c.l.b16 %v2420
      %v2431 = vunpack.c.l.b16 %v2421
      %v2432 = vunpack.c.l.b16 %v2422
      %v2433 = vunpack.c.l.b16 %v2423
      %v2434 = vpack.c.b16 %v2430, %v2429
      %v2435 = vpack.c.b16 %v2432, %v2431
      %v2436 = vpack.c.b16 %v2433, %v2433
      %2437 = vrot.lane.b32.xlu0 %v2434, 73
      %v2438 = vpop.permute.xlu0 %2437
      %2439 = vrot.lane.b32.xlu0 %v2435, 73
      %v2440 = vpop.permute.xlu0 %2439
      %2441 = vrot.lane.b32.xlu0 %v2436, 73
      %v2442 = vpop.permute.xlu0 %2441
      %v2443 = vrot.slane %v2438, 4
      %v2444 = vrot.slane %v2440, 4
      %v2445 = vrot.slane %v2442, 4
      %v2446 = vsel %vm1004, %v2443, %v2444
      %v2447 = vsel %vm1006, %v2438, %v2446
      %v2448 = vsel %vm1004, %v2444, %v2445
      %v2449 = vsel %vm1006, %v2440, %v2448
      %2452 = vst [vmem:[#allocation4 + $0x120] sm:$0xff] %v2447
      %2453 = vst [vmem:[#allocation4 + $0x128] sm:$0xff] %v2449
      %v2454 = vld [vmem:[#allocation2 + $0x8] sm:$0xff]
      %v2455 = vld [vmem:[#allocation2 + $0x10] sm:$0xff]
      %v2456 = vld [vmem:[#allocation2 + $0x18] sm:$0xff]
      %v2457 = vld [vmem:[#allocation2 + $0x20] sm:$0xff]
      %v2458 = vld [vmem:[#allocation2 + $0x28] sm:$0xff]
      %s2459 = scalar_lea.vmem %s2, 67
      %v2460 = vld [vmem:[%s2459] ss:$8 sm:$0xf]
      %v2462 = vlaneseq
      %v2463 = vshrl.u32 %v2462, 7
      %v2464 = vsub.s32 0, %v2463
      %v2465 = vrot.slane %v2460, %v2464
      %v2466 = vlaneseq
      %v2467 = vshrl.u32 %v2466, 7
      %v2468 = vsub.s32 1, %v2467
      %v2469 = vrot.slane %v2460, %v2468
      %v2470 = vlaneseq
      %v2471 = vshrl.u32 %v2470, 7
      %v2472 = vsub.s32 2, %v2471
      %v2473 = vrot.slane %v2460, %v2472
      %v2474 = vlaneseq
      %v2475 = vshrl.u32 %v2474, 7
      %v2476 = vsub.s32 3, %v2475
      %v2477 = vrot.slane %v2460, %v2476
      %2478 = vrot.lane.b32.xlu0 %v2465, 56
      %v2479 = vpop.permute.xlu0 %2478
      %2480 = vrot.lane.b32.xlu0 %v2469, 56
      %v2481 = vpop.permute.xlu0 %2480
      %2482 = vrot.lane.b32.xlu0 %v2473, 56
      %v2483 = vpop.permute.xlu0 %2482
      %2484 = vrot.lane.b32.xlu0 %v2477, 56
      %v2485 = vpop.permute.xlu0 %2484
      %v2486 = vsel %vm1046, %v2479, %v2481
      %v2487 = vsel %vm1046, %v2481, %v2483
      %v2488 = vsel %vm1046, %v2483, %v2485
      %v2494 = vmul.f32 %v2454, %v2479
      %v2495 = vmul.f32 %v2455, %v2486
      %v2496 = vmul.f32 %v2456, %v2487
      %v2497 = vmul.f32 %v2457, %v2488
      %v2498 = vmul.f32 %v2458, %v2485
      %v2499 = vpack.c.bf16 %v2494, %v2494
      %v2500 = vpack.c.bf16 %v2495, %v2495
      %v2501 = vpack.c.bf16 %v2496, %v2496
      %v2502 = vpack.c.bf16 %v2497, %v2497
      %v2503 = vpack.c.bf16 %v2498, %v2498
      %v2509 = vunpack.c.l.b16 %v2499
      %v2510 = vunpack.c.l.b16 %v2500
      %v2511 = vunpack.c.l.b16 %v2501
      %v2512 = vunpack.c.l.b16 %v2502
      %v2513 = vunpack.c.l.b16 %v2503
      %v2514 = vpack.c.b16 %v2510, %v2509
      %v2515 = vpack.c.b16 %v2512, %v2511
      %v2516 = vpack.c.b16 %v2513, %v2513
      %2517 = vrot.lane.b32.xlu0 %v2514, 72
      %v2518 = vpop.permute.xlu0 %2517
      %2519 = vrot.lane.b32.xlu0 %v2515, 72
      %v2520 = vpop.permute.xlu0 %2519
      %2521 = vrot.lane.b32.xlu0 %v2516, 72
      %v2522 = vpop.permute.xlu0 %2521
      %v2523 = vrot.slane %v2518, 4
      %v2524 = vrot.slane %v2520, 4
      %v2525 = vrot.slane %v2522, 4
      %v2526 = vsel %vm1004, %v2523, %v2524
      %v2527 = vsel %vm1088, %v2518, %v2526
      %v2528 = vsel %vm1004, %v2524, %v2525
      %v2529 = vsel %vm1088, %v2520, %v2528
      %2532 = vst [vmem:[#allocation4 + $0x130] sm:$0xff] %v2527
      %2533 = vst [vmem:[#allocation4 + $0x138] sm:$0xff] %v2529
      %v2534 = vld [vmem:[#allocation2 + $0x8] sm:$0xff]
      %v2535 = vld [vmem:[#allocation2 + $0x10] sm:$0xff]
      %v2536 = vld [vmem:[#allocation2 + $0x18] sm:$0xff]
      %v2537 = vld [vmem:[#allocation2 + $0x20] sm:$0xff]
      %v2538 = vld [vmem:[#allocation2 + $0x28] sm:$0xff]
      %s2539 = scalar_lea.vmem %s2, 68
      %v2540 = vld [vmem:[%s2539] ss:$8 sm:$0xf]
      %v2542 = vlaneseq
      %v2543 = vshrl.u32 %v2542, 7
      %v2544 = vsub.s32 0, %v2543
      %v2545 = vrot.slane %v2540, %v2544
      %v2546 = vlaneseq
      %v2547 = vshrl.u32 %v2546, 7
      %v2548 = vsub.s32 1, %v2547
      %v2549 = vrot.slane %v2540, %v2548
      %v2550 = vlaneseq
      %v2551 = vshrl.u32 %v2550, 7
      %v2552 = vsub.s32 2, %v2551
      %v2553 = vrot.slane %v2540, %v2552
      %v2554 = vlaneseq
      %v2555 = vshrl.u32 %v2554, 7
      %v2556 = vsub.s32 3, %v2555
      %v2557 = vrot.slane %v2540, %v2556
      %2558 = vrot.lane.b32.xlu0 %v2545, 57
      %v2559 = vpop.permute.xlu0 %2558
      %2560 = vrot.lane.b32.xlu0 %v2549, 57
      %v2561 = vpop.permute.xlu0 %2560
      %2562 = vrot.lane.b32.xlu0 %v2553, 57
      %v2563 = vpop.permute.xlu0 %2562
      %2564 = vrot.lane.b32.xlu0 %v2557, 57
      %v2565 = vpop.permute.xlu0 %2564
      %v2566 = vsel %vm1128, %v2559, %v2561
      %v2567 = vsel %vm1128, %v2561, %v2563
      %v2568 = vsel %vm1128, %v2563, %v2565
      %v2574 = vmul.f32 %v2534, %v2559
      %v2575 = vmul.f32 %v2535, %v2566
      %v2576 = vmul.f32 %v2536, %v2567
      %v2577 = vmul.f32 %v2537, %v2568
      %v2578 = vmul.f32 %v2538, %v2565
      %v2579 = vpack.c.bf16 %v2574, %v2574
      %v2580 = vpack.c.bf16 %v2575, %v2575
      %v2581 = vpack.c.bf16 %v2576, %v2576
      %v2582 = vpack.c.bf16 %v2577, %v2577
      %v2583 = vpack.c.bf16 %v2578, %v2578
      %v2589 = vunpack.c.l.b16 %v2579
      %v2590 = vunpack.c.l.b16 %v2580
      %v2591 = vunpack.c.l.b16 %v2581
      %v2592 = vunpack.c.l.b16 %v2582
      %v2593 = vunpack.c.l.b16 %v2583
      %v2594 = vpack.c.b16 %v2590, %v2589
      %v2595 = vpack.c.b16 %v2592, %v2591
      %v2596 = vpack.c.b16 %v2593, %v2593
      %2597 = vrot.lane.b32.xlu0 %v2594, 71
      %v2598 = vpop.permute.xlu0 %2597
      %2599 = vrot.lane.b32.xlu0 %v2595, 71
      %v2600 = vpop.permute.xlu0 %2599
      %2601 = vrot.lane.b32.xlu0 %v2596, 71
      %v2602 = vpop.permute.xlu0 %2601
      %v2603 = vrot.slane %v2598, 4
      %v2604 = vrot.slane %v2600, 4
      %v2605 = vrot.slane %v2602, 4
      %v2606 = vsel %vm1004, %v2603, %v2604
      %v2607 = vsel %vm1170, %v2598, %v2606
      %v2608 = vsel %vm1004, %v2604, %v2605
      %v2609 = vsel %vm1170, %v2600, %v2608
      %2612 = vst [vmem:[#allocation4 + $0x140] sm:$0xff] %v2607
      %2613 = vst [vmem:[#allocation4 + $0x148] sm:$0xff] %v2609
      %v2614 = vld [vmem:[#allocation2 + $0x8] sm:$0xff]
      %v2615 = vld [vmem:[#allocation2 + $0x10] sm:$0xff]
      %v2616 = vld [vmem:[#allocation2 + $0x18] sm:$0xff]
      %v2617 = vld [vmem:[#allocation2 + $0x20] sm:$0xff]
      %v2618 = vld [vmem:[#allocation2 + $0x28] sm:$0xff]
      %s2619 = scalar_lea.vmem %s2, 69
      %v2620 = vld [vmem:[%s2619] ss:$8 sm:$0xf]
      %v2622 = vlaneseq
      %v2623 = vshrl.u32 %v2622, 7
      %v2624 = vsub.s32 0, %v2623
      %v2625 = vrot.slane %v2620, %v2624
      %v2626 = vlaneseq
      %v2627 = vshrl.u32 %v2626, 7
      %v2628 = vsub.s32 1, %v2627
      %v2629 = vrot.slane %v2620, %v2628
      %v2630 = vlaneseq
      %v2631 = vshrl.u32 %v2630, 7
      %v2632 = vsub.s32 2, %v2631
      %v2633 = vrot.slane %v2620, %v2632
      %v2634 = vlaneseq
      %v2635 = vshrl.u32 %v2634, 7
      %v2636 = vsub.s32 3, %v2635
      %v2637 = vrot.slane %v2620, %v2636
      %2638 = vrot.lane.b32.xlu0 %v2625, 63
      %v2639 = vpop.permute.xlu0 %2638
      %2640 = vrot.lane.b32.xlu0 %v2629, 63
      %v2641 = vpop.permute.xlu0 %2640
      %2642 = vrot.lane.b32.xlu0 %v2633, 63
      %v2643 = vpop.permute.xlu0 %2642
      %2644 = vrot.lane.b32.xlu0 %v2637, 63
      %v2645 = vpop.permute.xlu0 %2644
      %v2646 = vsel %vm1210, %v2639, %v2641
      %v2647 = vsel %vm1210, %v2641, %v2643
      %v2648 = vsel %vm1210, %v2643, %v2645
      %v2654 = vmul.f32 %v2614, %v2639
      %v2655 = vmul.f32 %v2615, %v2646
      %v2656 = vmul.f32 %v2616, %v2647
      %v2657 = vmul.f32 %v2617, %v2648
      %v2658 = vmul.f32 %v2618, %v2645
      %v2659 = vpack.c.bf16 %v2654, %v2654
      %v2660 = vpack.c.bf16 %v2655, %v2655
      %v2661 = vpack.c.bf16 %v2656, %v2656
      %v2662 = vpack.c.bf16 %v2657, %v2657
      %v2663 = vpack.c.bf16 %v2658, %v2658
      %v2669 = vunpack.c.l.b16 %v2659
      %v2670 = vunpack.c.l.b16 %v2660
      %v2671 = vunpack.c.l.b16 %v2661
      %v2672 = vunpack.c.l.b16 %v2662
      %v2673 = vunpack.c.l.b16 %v2663
      %v2674 = vpack.c.b16 %v2670, %v2669
      %v2675 = vpack.c.b16 %v2672, %v2671
      %v2676 = vpack.c.b16 %v2673, %v2673
      %2677 = vrot.lane.b32.xlu0 %v2674, 65
      %v2678 = vpop.permute.xlu0 %2677
      %2679 = vrot.lane.b32.xlu0 %v2675, 65
      %v2680 = vpop.permute.xlu0 %2679
      %2681 = vrot.lane.b32.xlu0 %v2676, 65
      %v2682 = vpop.permute.xlu0 %2681
      %v2683 = vrot.slane %v2678, 4
      %v2684 = vrot.slane %v2680, 4
      %v2685 = vrot.slane %v2682, 4
      %v2686 = vsel %vm1004, %v2683, %v2684
      %v2687 = vsel %vm1252, %v2678, %v2686
      %v2688 = vsel %vm1004, %v2684, %v2685
      %v2689 = vsel %vm1252, %v2680, %v2688
      %2692 = vst [vmem:[#allocation4 + $0x150] sm:$0xff] %v2687
      %2693 = vst [vmem:[#allocation4 + $0x158] sm:$0xff] %v2689
      %v2694 = vld [vmem:[#allocation2 + $0x8] sm:$0xff]
      %v2695 = vld [vmem:[#allocation2 + $0x10] sm:$0xff]
      %v2696 = vld [vmem:[#allocation2 + $0x18] sm:$0xff]
      %v2697 = vld [vmem:[#allocation2 + $0x20] sm:$0xff]
      %v2698 = vld [vmem:[#allocation2 + $0x28] sm:$0xff]
      %s2699 = scalar_lea.vmem %s2, 70
      %v2700 = vld [vmem:[%s2699] ss:$8 sm:$0xf]
      %v2702 = vlaneseq
      %v2703 = vshrl.u32 %v2702, 7
      %v2704 = vsub.s32 0, %v2703
      %v2705 = vrot.slane %v2700, %v2704
      %v2706 = vlaneseq
      %v2707 = vshrl.u32 %v2706, 7
      %v2708 = vsub.s32 1, %v2707
      %v2709 = vrot.slane %v2700, %v2708
      %v2710 = vlaneseq
      %v2711 = vshrl.u32 %v2710, 7
      %v2712 = vsub.s32 2, %v2711
      %v2713 = vrot.slane %v2700, %v2712
      %v2714 = vlaneseq
      %v2715 = vshrl.u32 %v2714, 7
      %v2716 = vsub.s32 3, %v2715
      %v2717 = vrot.slane %v2700, %v2716
      %2718 = vrot.lane.b32.xlu0 %v2705, 64
      %v2719 = vpop.permute.xlu0 %2718
      %2720 = vrot.lane.b32.xlu0 %v2709, 64
      %v2721 = vpop.permute.xlu0 %2720
      %2722 = vrot.lane.b32.xlu0 %v2713, 64
      %v2723 = vpop.permute.xlu0 %2722
      %2724 = vrot.lane.b32.xlu0 %v2717, 64
      %v2725 = vpop.permute.xlu0 %2724
      %v2726 = vsel %vm1292, %v2719, %v2721
      %v2727 = vsel %vm1292, %v2721, %v2723
      %v2728 = vsel %vm1292, %v2723, %v2725
      %v2734 = vmul.f32 %v2694, %v2719
      %v2735 = vmul.f32 %v2695, %v2726
      %v2736 = vmul.f32 %v2696, %v2727
      %v2737 = vmul.f32 %v2697, %v2728
      %v2738 = vmul.f32 %v2698, %v2725
      %v2739 = vpack.c.bf16 %v2734, %v2734
      %v2740 = vpack.c.bf16 %v2735, %v2735
      %v2741 = vpack.c.bf16 %v2736, %v2736
      %v2742 = vpack.c.bf16 %v2737, %v2737
      %v2743 = vpack.c.bf16 %v2738, %v2738
      %v2749 = vunpack.c.l.b16 %v2739
      %v2750 = vunpack.c.l.b16 %v2740
      %v2751 = vunpack.c.l.b16 %v2741
      %v2752 = vunpack.c.l.b16 %v2742
      %v2753 = vunpack.c.l.b16 %v2743
      %v2754 = vpack.c.b16 %v2750, %v2749
      %v2755 = vpack.c.b16 %v2752, %v2751
      %v2756 = vpack.c.b16 %v2753, %v2753
      %2757 = vrot.lane.b32.xlu0 %v2754, 64
      %v2758 = vpop.permute.xlu0 %2757
      %2759 = vrot.lane.b32.xlu0 %v2755, 64
      %v2760 = vpop.permute.xlu0 %2759
      %2761 = vrot.lane.b32.xlu0 %v2756, 64
      %v2762 = vpop.permute.xlu0 %2761
      %v2763 = vrot.slane %v2758, 4
      %v2764 = vrot.slane %v2760, 4
      %v2765 = vrot.slane %v2762, 4
      %v2766 = vsel %vm1004, %v2763, %v2764
      %v2767 = vsel %vm1334, %v2758, %v2766
      %v2768 = vsel %vm1004, %v2764, %v2765
      %v2769 = vsel %vm1334, %v2760, %v2768
      %2772 = vst [vmem:[#allocation4 + $0x160] sm:$0xff] %v2767
      %2773 = vst [vmem:[#allocation4 + $0x168] sm:$0xff] %v2769
      %v2774 = vld [vmem:[#allocation2 + $0x8] sm:$0xff]
      %v2775 = vld [vmem:[#allocation2 + $0x10] sm:$0xff]
      %v2776 = vld [vmem:[#allocation2 + $0x18] sm:$0xff]
      %v2777 = vld [vmem:[#allocation2 + $0x20] sm:$0xff]
      %v2778 = vld [vmem:[#allocation2 + $0x28] sm:$0xff]
      %s2779 = scalar_lea.vmem %s2, 71
      %v2780 = vld [vmem:[%s2779] ss:$8 sm:$0xf]
      %v2782 = vlaneseq
      %v2783 = vshrl.u32 %v2782, 7
      %v2784 = vsub.s32 0, %v2783
      %v2785 = vrot.slane %v2780, %v2784
      %v2786 = vlaneseq
      %v2787 = vshrl.u32 %v2786, 7
      %v2788 = vsub.s32 1, %v2787
      %v2789 = vrot.slane %v2780, %v2788
      %v2790 = vlaneseq
      %v2791 = vshrl.u32 %v2790, 7
      %v2792 = vsub.s32 2, %v2791
      %v2793 = vrot.slane %v2780, %v2792
      %v2794 = vlaneseq
      %v2795 = vshrl.u32 %v2794, 7
      %v2796 = vsub.s32 3, %v2795
      %v2797 = vrot.slane %v2780, %v2796
      %2798 = vrot.lane.b32.xlu0 %v2785, 65
      %v2799 = vpop.permute.xlu0 %2798
      %2800 = vrot.lane.b32.xlu0 %v2789, 65
      %v2801 = vpop.permute.xlu0 %2800
      %2802 = vrot.lane.b32.xlu0 %v2793, 65
      %v2803 = vpop.permute.xlu0 %2802
      %2804 = vrot.lane.b32.xlu0 %v2797, 65
      %v2805 = vpop.permute.xlu0 %2804
      %v2806 = vsel %vm1374, %v2799, %v2801
      %v2807 = vsel %vm1374, %v2801, %v2803
      %v2808 = vsel %vm1374, %v2803, %v2805
      %v2814 = vmul.f32 %v2774, %v2799
      %v2815 = vmul.f32 %v2775, %v2806
      %v2816 = vmul.f32 %v2776, %v2807
      %v2817 = vmul.f32 %v2777, %v2808
      %v2818 = vmul.f32 %v2778, %v2805
      %v2819 = vpack.c.bf16 %v2814, %v2814
      %v2820 = vpack.c.bf16 %v2815, %v2815
      %v2821 = vpack.c.bf16 %v2816, %v2816
      %v2822 = vpack.c.bf16 %v2817, %v2817
      %v2823 = vpack.c.bf16 %v2818, %v2818
      %v2829 = vunpack.c.l.b16 %v2819
      %v2830 = vunpack.c.l.b16 %v2820
      %v2831 = vunpack.c.l.b16 %v2821
      %v2832 = vunpack.c.l.b16 %v2822
      %v2833 = vunpack.c.l.b16 %v2823
      %v2834 = vpack.c.b16 %v2830, %v2829
      %v2835 = vpack.c.b16 %v2832, %v2831
      %v2836 = vpack.c.b16 %v2833, %v2833
      %2837 = vrot.lane.b32.xlu0 %v2834, 63
      %v2838 = vpop.permute.xlu0 %2837
      %2839 = vrot.lane.b32.xlu0 %v2835, 63
      %v2840 = vpop.permute.xlu0 %2839
      %2841 = vrot.lane.b32.xlu0 %v2836, 63
      %v2842 = vpop.permute.xlu0 %2841
      %v2843 = vrot.slane %v2838, 4
      %v2844 = vrot.slane %v2840, 4
      %v2845 = vrot.slane %v2842, 4
      %v2846 = vsel %vm1004, %v2843, %v2844
      %v2847 = vsel %vm1416, %v2838, %v2846
      %v2848 = vsel %vm1004, %v2844, %v2845
      %v2849 = vsel %vm1416, %v2840, %v2848
      %2852 = vst [vmem:[#allocation4 + $0x170] sm:$0xff] %v2847
      %2853 = vst [vmem:[#allocation4 + $0x178] sm:$0xff] %v2849
      %v2854 = vld [vmem:[#allocation2 + $0x8] sm:$0xff]
      %v2855 = vld [vmem:[#allocation2 + $0x10] sm:$0xff]
      %v2856 = vld [vmem:[#allocation2 + $0x18] sm:$0xff]
      %v2857 = vld [vmem:[#allocation2 + $0x20] sm:$0xff]
      %v2858 = vld [vmem:[#allocation2 + $0x28] sm:$0xff]
      %s2859 = scalar_lea.vmem %s2, 96
      %v2860 = vld [vmem:[%s2859] ss:$8 sm:$0xf]
      %v2862 = vlaneseq
      %v2863 = vshrl.u32 %v2862, 7
      %v2864 = vsub.s32 0, %v2863
      %v2865 = vrot.slane %v2860, %v2864
      %v2866 = vlaneseq
      %v2867 = vshrl.u32 %v2866, 7
      %v2868 = vsub.s32 1, %v2867
      %v2869 = vrot.slane %v2860, %v2868
      %v2870 = vlaneseq
      %v2871 = vshrl.u32 %v2870, 7
      %v2872 = vsub.s32 2, %v2871
      %v2873 = vrot.slane %v2860, %v2872
      %v2874 = vlaneseq
      %v2875 = vshrl.u32 %v2874, 7
      %v2876 = vsub.s32 3, %v2875
      %v2877 = vrot.slane %v2860, %v2876
      %2878 = vrot.lane.b32.xlu0 %v2865, 71
      %v2879 = vpop.permute.xlu0 %2878
      %2880 = vrot.lane.b32.xlu0 %v2869, 71
      %v2881 = vpop.permute.xlu0 %2880
      %2882 = vrot.lane.b32.xlu0 %v2873, 71
      %v2883 = vpop.permute.xlu0 %2882
      %2884 = vrot.lane.b32.xlu0 %v2877, 71
      %v2885 = vpop.permute.xlu0 %2884
      %v2886 = vsel %vm1456, %v2879, %v2881
      %v2887 = vsel %vm1456, %v2881, %v2883
      %v2888 = vsel %vm1456, %v2883, %v2885
      %v2894 = vmul.f32 %v2854, %v2879
      %v2895 = vmul.f32 %v2855, %v2886
      %v2896 = vmul.f32 %v2856, %v2887
      %v2897 = vmul.f32 %v2857, %v2888
      %v2898 = vmul.f32 %v2858, %v2885
      %v2899 = vpack.c.bf16 %v2894, %v2894
      %v2900 = vpack.c.bf16 %v2895, %v2895
      %v2901 = vpack.c.bf16 %v2896, %v2896
      %v2902 = vpack.c.bf16 %v2897, %v2897
      %v2903 = vpack.c.bf16 %v2898, %v2898
      %v2909 = vunpack.c.l.b16 %v2899
      %v2910 = vunpack.c.l.b16 %v2900
      %v2911 = vunpack.c.l.b16 %v2901
      %v2912 = vunpack.c.l.b16 %v2902
      %v2913 = vunpack.c.l.b16 %v2903
      %v2914 = vpack.c.b16 %v2910, %v2909
      %v2915 = vpack.c.b16 %v2912, %v2911
      %v2916 = vpack.c.b16 %v2913, %v2913
      %2917 = vrot.lane.b32.xlu0 %v2914, 57
      %v2918 = vpop.permute.xlu0 %2917
      %2919 = vrot.lane.b32.xlu0 %v2915, 57
      %v2920 = vpop.permute.xlu0 %2919
      %2921 = vrot.lane.b32.xlu0 %v2916, 57
      %v2922 = vpop.permute.xlu0 %2921
      %v2923 = vrot.slane %v2918, 4
      %v2924 = vrot.slane %v2920, 4
      %v2925 = vrot.slane %v2922, 4
      %v2926 = vsel %vm1004, %v2923, %v2924
      %v2927 = vsel %vm1498, %v2918, %v2926
      %v2928 = vsel %vm1004, %v2924, %v2925
      %v2929 = vsel %vm1498, %v2920, %v2928
      %2932 = vst [vmem:[#allocation4 + $0x180] sm:$0xff] %v2927
      %2933 = vst [vmem:[#allocation4 + $0x188] sm:$0xff] %v2929
      %v2934 = vld [vmem:[#allocation2 + $0x8] sm:$0xff]
      %v2935 = vld [vmem:[#allocation2 + $0x10] sm:$0xff]
      %v2936 = vld [vmem:[#allocation2 + $0x18] sm:$0xff]
      %v2937 = vld [vmem:[#allocation2 + $0x20] sm:$0xff]
      %v2938 = vld [vmem:[#allocation2 + $0x28] sm:$0xff]
      %s2939 = scalar_lea.vmem %s2, 97
      %v2940 = vld [vmem:[%s2939] ss:$8 sm:$0xf]
      %v2942 = vlaneseq
      %v2943 = vshrl.u32 %v2942, 7
      %v2944 = vsub.s32 0, %v2943
      %v2945 = vrot.slane %v2940, %v2944
      %v2946 = vlaneseq
      %v2947 = vshrl.u32 %v2946, 7
      %v2948 = vsub.s32 1, %v2947
      %v2949 = vrot.slane %v2940, %v2948
      %v2950 = vlaneseq
      %v2951 = vshrl.u32 %v2950, 7
      %v2952 = vsub.s32 2, %v2951
      %v2953 = vrot.slane %v2940, %v2952
      %v2954 = vlaneseq
      %v2955 = vshrl.u32 %v2954, 7
      %v2956 = vsub.s32 3, %v2955
      %v2957 = vrot.slane %v2940, %v2956
      %2958 = vrot.lane.b32.xlu0 %v2945, 72
      %v2959 = vpop.permute.xlu0 %2958
      %2960 = vrot.lane.b32.xlu0 %v2949, 72
      %v2961 = vpop.permute.xlu0 %2960
      %2962 = vrot.lane.b32.xlu0 %v2953, 72
      %v2963 = vpop.permute.xlu0 %2962
      %2964 = vrot.lane.b32.xlu0 %v2957, 72
      %v2965 = vpop.permute.xlu0 %2964
      %v2966 = vsel %vm1538, %v2959, %v2961
      %v2967 = vsel %vm1538, %v2961, %v2963
      %v2968 = vsel %vm1538, %v2963, %v2965
      %v2974 = vmul.f32 %v2934, %v2959
      %v2975 = vmul.f32 %v2935, %v2966
      %v2976 = vmul.f32 %v2936, %v2967
      %v2977 = vmul.f32 %v2937, %v2968
      %v2978 = vmul.f32 %v2938, %v2965
      %v2979 = vpack.c.bf16 %v2974, %v2974
      %v2980 = vpack.c.bf16 %v2975, %v2975
      %v2981 = vpack.c.bf16 %v2976, %v2976
      %v2982 = vpack.c.bf16 %v2977, %v2977
      %v2983 = vpack.c.bf16 %v2978, %v2978
      %v2989 = vunpack.c.l.b16 %v2979
      %v2990 = vunpack.c.l.b16 %v2980
      %v2991 = vunpack.c.l.b16 %v2981
      %v2992 = vunpack.c.l.b16 %v2982
      %v2993 = vunpack.c.l.b16 %v2983
      %v2994 = vpack.c.b16 %v2990, %v2989
      %v2995 = vpack.c.b16 %v2992, %v2991
      %v2996 = vpack.c.b16 %v2993, %v2993
      %2997 = vrot.lane.b32.xlu0 %v2994, 56
      %v2998 = vpop.permute.xlu0 %2997
      %2999 = vrot.lane.b32.xlu0 %v2995, 56
      %v3000 = vpop.permute.xlu0 %2999
      %3001 = vrot.lane.b32.xlu0 %v2996, 56
      %v3002 = vpop.permute.xlu0 %3001
      %v3003 = vrot.slane %v2998, 4
      %v3004 = vrot.slane %v3000, 4
      %v3005 = vrot.slane %v3002, 4
      %v3006 = vsel %vm1004, %v3003, %v3004
      %v3007 = vsel %vm1580, %v2998, %v3006
      %v3008 = vsel %vm1004, %v3004, %v3005
      %v3009 = vsel %vm1580, %v3000, %v3008
      %3012 = vst [vmem:[#allocation4 + $0x190] sm:$0xff] %v3007
      %3013 = vst [vmem:[#allocation4 + $0x198] sm:$0xff] %v3009
      %v3014 = vld [vmem:[#allocation2 + $0x8] sm:$0xff]
      %v3015 = vld [vmem:[#allocation2 + $0x10] sm:$0xff]
      %v3016 = vld [vmem:[#allocation2 + $0x18] sm:$0xff]
      %v3017 = vld [vmem:[#allocation2 + $0x20] sm:$0xff]
      %v3018 = vld [vmem:[#allocation2 + $0x28] sm:$0xff]
      %s3019 = scalar_lea.vmem %s2, 98
      %v3020 = vld [vmem:[%s3019] ss:$8 sm:$0xf]
      %v3022 = vlaneseq
      %v3023 = vshrl.u32 %v3022, 7
      %v3024 = vsub.s32 0, %v3023
      %v3025 = vrot.slane %v3020, %v3024
      %v3026 = vlaneseq
      %v3027 = vshrl.u32 %v3026, 7
      %v3028 = vsub.s32 1, %v3027
      %v3029 = vrot.slane %v3020, %v3028
      %v3030 = vlaneseq
      %v3031 = vshrl.u32 %v3030, 7
      %v3032 = vsub.s32 2, %v3031
      %v3033 = vrot.slane %v3020, %v3032
      %v3034 = vlaneseq
      %v3035 = vshrl.u32 %v3034, 7
      %v3036 = vsub.s32 3, %v3035
      %v3037 = vrot.slane %v3020, %v3036
      %3038 = vrot.lane.b32.xlu0 %v3025, 73
      %v3039 = vpop.permute.xlu0 %3038
      %3040 = vrot.lane.b32.xlu0 %v3029, 73
      %v3041 = vpop.permute.xlu0 %3040
      %3042 = vrot.lane.b32.xlu0 %v3033, 73
      %v3043 = vpop.permute.xlu0 %3042
      %3044 = vrot.lane.b32.xlu0 %v3037, 73
      %v3045 = vpop.permute.xlu0 %3044
      %v3046 = vsel %vm1620, %v3039, %v3041
      %v3047 = vsel %vm1620, %v3041, %v3043
      %v3048 = vsel %vm1620, %v3043, %v3045
      %v3054 = vmul.f32 %v3014, %v3039
      %v3055 = vmul.f32 %v3015, %v3046
      %v3056 = vmul.f32 %v3016, %v3047
      %v3057 = vmul.f32 %v3017, %v3048
      %v3058 = vmul.f32 %v3018, %v3045
      %v3059 = vpack.c.bf16 %v3054, %v3054
      %v3060 = vpack.c.bf16 %v3055, %v3055
      %v3061 = vpack.c.bf16 %v3056, %v3056
      %v3062 = vpack.c.bf16 %v3057, %v3057
      %v3063 = vpack.c.bf16 %v3058, %v3058
      %v3069 = vunpack.c.l.b16 %v3059
      %v3070 = vunpack.c.l.b16 %v3060
      %v3071 = vunpack.c.l.b16 %v3061
      %v3072 = vunpack.c.l.b16 %v3062
      %v3073 = vunpack.c.l.b16 %v3063
      %v3074 = vpack.c.b16 %v3070, %v3069
      %v3075 = vpack.c.b16 %v3072, %v3071
      %v3076 = vpack.c.b16 %v3073, %v3073
      %3077 = vrot.lane.b32.xlu0 %v3074, 55
      %v3078 = vpop.permute.xlu0 %3077
      %3079 = vrot.lane.b32.xlu0 %v3075, 55
      %v3080 = vpop.permute.xlu0 %3079
      %3081 = vrot.lane.b32.xlu0 %v3076, 55
      %v3082 = vpop.permute.xlu0 %3081
      %v3083 = vrot.slane %v3078, 4
      %v3084 = vrot.slane %v3080, 4
      %v3085 = vrot.slane %v3082, 4
      %v3086 = vsel %vm1004, %v3083, %v3084
      %v3087 = vsel %vm1662, %v3078, %v3086
      %v3088 = vsel %vm1004, %v3084, %v3085
      %v3089 = vsel %vm1662, %v3080, %v3088
      %3092 = vst [vmem:[#allocation4 + $0x1a0] sm:$0xff] %v3087
      %3093 = vst [vmem:[#allocation4 + $0x1a8] sm:$0xff] %v3089
      %v3094 = vld [vmem:[%s12] sm:$0xff]
      %v3095 = vld [vmem:[%s12 + $0x8] sm:$0xff]
      %v3096 = vld [vmem:[#allocation4] sm:$0xff]
      %v3097 = vld [vmem:[#allocation4 + $0x8] sm:$0xff]
      %v3098 = vld [vmem:[#allocation4 + $0x10] sm:$0xff]
      %v3099 = vld [vmem:[#allocation4 + $0x18] sm:$0xff]
      %v3100 = vld [vmem:[#allocation4 + $0x20] sm:$0xff]
      %v3101 = vld [vmem:[#allocation4 + $0x28] sm:$0xff]
      %v3102 = vld [vmem:[#allocation4 + $0x30] sm:$0xff]
      %v3103 = vld [vmem:[#allocation4 + $0x38] sm:$0xff]
      %v3104 = vld [vmem:[#allocation4 + $0x40] sm:$0xff]
      %v3105 = vld [vmem:[#allocation4 + $0x48] sm:$0xff]
      %v3106 = vld [vmem:[#allocation4 + $0x50] sm:$0xff]
      %v3107 = vld [vmem:[#allocation4 + $0x58] sm:$0xff]
      %v3108 = vld [vmem:[#allocation4 + $0x60] sm:$0xff]
      %v3109 = vld [vmem:[#allocation4 + $0x68] sm:$0xff]
      %v3110 = vld [vmem:[#allocation4 + $0x70] sm:$0xff]
      %v3111 = vld [vmem:[#allocation4 + $0x78] sm:$0xff]
      %v3112 = vld [vmem:[#allocation4 + $0x80] sm:$0xff]
      %v3113 = vld [vmem:[#allocation4 + $0x88] sm:$0xff]
      %v3114 = vld [vmem:[#allocation4 + $0x90] sm:$0xff]
      %v3115 = vld [vmem:[#allocation4 + $0x98] sm:$0xff]
      %v3116 = vld [vmem:[#allocation4 + $0xa0] sm:$0xff]
      %v3117 = vld [vmem:[#allocation4 + $0xa8] sm:$0xff]
      %v3118 = vld [vmem:[#allocation4 + $0xb0] sm:$0xff]
      %v3119 = vld [vmem:[#allocation4 + $0xb8] sm:$0xff]
      %v3120 = vld [vmem:[#allocation4 + $0xc0] sm:$0xff]
      %v3121 = vld [vmem:[#allocation4 + $0xc8] sm:$0xff]
      %v3122 = vld [vmem:[#allocation4 + $0xd0] sm:$0xff]
      %v3123 = vld [vmem:[#allocation4 + $0xd8] sm:$0xff]
      %v3124 = vld [vmem:[#allocation4 + $0xe0] sm:$0xff]
      %v3125 = vld [vmem:[#allocation4 + $0xe8] sm:$0xff]
      %v3126 = vld [vmem:[#allocation4 + $0xf0] sm:$0xff]
      %v3127 = vld [vmem:[#allocation4 + $0xf8] sm:$0xff]
      %v3128 = vld [vmem:[#allocation4 + $0x100] sm:$0xff]
      %v3129 = vld [vmem:[#allocation4 + $0x108] sm:$0xff]
      %v3130 = vld [vmem:[#allocation4 + $0x110] sm:$0xff]
      %v3131 = vld [vmem:[#allocation4 + $0x118] sm:$0xff]
      %v3132 = vld [vmem:[#allocation4 + $0x120] sm:$0xff]
      %v3133 = vld [vmem:[#allocation4 + $0x128] sm:$0xff]
      %v3134 = vld [vmem:[#allocation4 + $0x130] sm:$0xff]
      %v3135 = vld [vmem:[#allocation4 + $0x138] sm:$0xff]
      %v3136 = vld [vmem:[#allocation4 + $0x140] sm:$0xff]
      %v3137 = vld [vmem:[#allocation4 + $0x148] sm:$0xff]
      %v3138 = vld [vmem:[#allocation4 + $0x150] sm:$0xff]
      %v3139 = vld [vmem:[#allocation4 + $0x158] sm:$0xff]
      %v3140 = vld [vmem:[#allocation4 + $0x160] sm:$0xff]
      %v3141 = vld [vmem:[#allocation4 + $0x168] sm:$0xff]
      %v3142 = vld [vmem:[#allocation4 + $0x170] sm:$0xff]
      %v3143 = vld [vmem:[#allocation4 + $0x178] sm:$0xff]
      %v3144 = vld [vmem:[#allocation4 + $0x180] sm:$0xff]
      %v3145 = vld [vmem:[#allocation4 + $0x188] sm:$0xff]
      %v3146 = vld [vmem:[#allocation4 + $0x190] sm:$0xff]
      %v3147 = vld [vmem:[#allocation4 + $0x198] sm:$0xff]
      %v3148 = vld [vmem:[#allocation4 + $0x1a0] sm:$0xff]
      %v3149 = vld [vmem:[#allocation4 + $0x1a8] sm:$0xff]
      %v3152 = vunpack.c.l.b16 %v3094
      %v3153 = vunpack.c.h.b16 %v3094
      %v3154 = vunpack.c.l.b16 %v3095
      %v3155 = vunpack.c.h.b16 %v3095
      %v3156 = vpack.c.b16 %v3154, %v3152
      %v3157 = vpack.c.b16 %v3155, %v3153
      %v3213 = vunpack.c.l.b16 %v3096
      %v3214 = vunpack.c.h.b16 %v3096
      %v3215 = vunpack.c.l.b16 %v3097
      %v3216 = vunpack.c.h.b16 %v3097
      %v3217 = vunpack.c.l.b16 %v3098
      %v3218 = vunpack.c.h.b16 %v3098
      %v3219 = vunpack.c.l.b16 %v3099
      %v3220 = vunpack.c.h.b16 %v3099
      %v3221 = vunpack.c.l.b16 %v3100
      %v3222 = vunpack.c.h.b16 %v3100
      %v3223 = vunpack.c.l.b16 %v3101
      %v3224 = vunpack.c.h.b16 %v3101
      %v3225 = vunpack.c.l.b16 %v3102
      %v3226 = vunpack.c.h.b16 %v3102
      %v3227 = vunpack.c.l.b16 %v3103
      %v3228 = vunpack.c.h.b16 %v3103
      %v3229 = vunpack.c.l.b16 %v3104
      %v3230 = vunpack.c.h.b16 %v3104
      %v3231 = vunpack.c.l.b16 %v3105
      %v3232 = vunpack.c.h.b16 %v3105
      %v3233 = vunpack.c.l.b16 %v3106
      %v3234 = vunpack.c.h.b16 %v3106
      %v3235 = vunpack.c.l.b16 %v3107
      %v3236 = vunpack.c.h.b16 %v3107
      %v3237 = vunpack.c.l.b16 %v3108
      %v3238 = vunpack.c.h.b16 %v3108
      %v3239 = vunpack.c.l.b16 %v3109
      %v3240 = vunpack.c.h.b16 %v3109
      %v3241 = vunpack.c.l.b16 %v3110
      %v3242 = vunpack.c.h.b16 %v3110
      %v3243 = vunpack.c.l.b16 %v3111
      %v3244 = vunpack.c.h.b16 %v3111
      %v3245 = vunpack.c.l.b16 %v3112
      %v3246 = vunpack.c.h.b16 %v3112
      %v3247 = vunpack.c.l.b16 %v3113
      %v3248 = vunpack.c.h.b16 %v3113
      %v3249 = vunpack.c.l.b16 %v3114
      %v3250 = vunpack.c.h.b16 %v3114
      %v3251 = vunpack.c.l.b16 %v3115
      %v3252 = vunpack.c.h.b16 %v3115
      %v3253 = vunpack.c.l.b16 %v3116
      %v3254 = vunpack.c.h.b16 %v3116
      %v3255 = vunpack.c.l.b16 %v3117
      %v3256 = vunpack.c.h.b16 %v3117
      %v3257 = vunpack.c.l.b16 %v3118
      %v3258 = vunpack.c.h.b16 %v3118
      %v3259 = vunpack.c.l.b16 %v3119
      %v3260 = vunpack.c.h.b16 %v3119
      %v3261 = vunpack.c.l.b16 %v3120
      %v3262 = vunpack.c.h.b16 %v3120
      %v3263 = vunpack.c.l.b16 %v3121
      %v3264 = vunpack.c.h.b16 %v3121
      %v3265 = vunpack.c.l.b16 %v3122
      %v3266 = vunpack.c.h.b16 %v3122
      %v3267 = vunpack.c.l.b16 %v3123
      %v3268 = vunpack.c.h.b16 %v3123
      %v3269 = vunpack.c.l.b16 %v3124
      %v3270 = vunpack.c.h.b16 %v3124
      %v3271 = vunpack.c.l.b16 %v3125
      %v3272 = vunpack.c.h.b16 %v3125
      %v3273 = vunpack.c.l.b16 %v3126
      %v3274 = vunpack.c.h.b16 %v3126
      %v3275 = vunpack.c.l.b16 %v3127
      %v3276 = vunpack.c.h.b16 %v3127
      %v3277 = vunpack.c.l.b16 %v3128
      %v3278 = vunpack.c.h.b16 %v3128
      %v3279 = vunpack.c.l.b16 %v3129
      %v3280 = vunpack.c.h.b16 %v3129
      %v3281 = vunpack.c.l.b16 %v3130
      %v3282 = vunpack.c.h.b16 %v3130
      %v3283 = vunpack.c.l.b16 %v3131
      %v3284 = vunpack.c.h.b16 %v3131
      %v3285 = vunpack.c.l.b16 %v3132
      %v3286 = vunpack.c.h.b16 %v3132
      %v3287 = vunpack.c.l.b16 %v3133
      %v3288 = vunpack.c.h.b16 %v3133
      %v3289 = vunpack.c.l.b16 %v3134
      %v3290 = vunpack.c.h.b16 %v3134
      %v3291 = vunpack.c.l.b16 %v3135
      %v3292 = vunpack.c.h.b16 %v3135
      %v3293 = vunpack.c.l.b16 %v3136
      %v3294 = vunpack.c.h.b16 %v3136
      %v3295 = vunpack.c.l.b16 %v3137
      %v3296 = vunpack.c.h.b16 %v3137
      %v3297 = vunpack.c.l.b16 %v3138
      %v3298 = vunpack.c.h.b16 %v3138
      %v3299 = vunpack.c.l.b16 %v3139
      %v3300 = vunpack.c.h.b16 %v3139
      %v3301 = vunpack.c.l.b16 %v3140
      %v3302 = vunpack.c.h.b16 %v3140
      %v3303 = vunpack.c.l.b16 %v3141
      %v3304 = vunpack.c.h.b16 %v3141
      %v3305 = vunpack.c.l.b16 %v3142
      %v3306 = vunpack.c.h.b16 %v3142
      %v3307 = vunpack.c.l.b16 %v3143
      %v3308 = vunpack.c.h.b16 %v3143
      %v3309 = vunpack.c.l.b16 %v3144
      %v3310 = vunpack.c.h.b16 %v3144
      %v3311 = vunpack.c.l.b16 %v3145
      %v3312 = vunpack.c.h.b16 %v3145
      %v3313 = vunpack.c.l.b16 %v3146
      %v3314 = vunpack.c.h.b16 %v3146
      %v3315 = vunpack.c.l.b16 %v3147
      %v3316 = vunpack.c.h.b16 %v3147
      %v3317 = vunpack.c.l.b16 %v3148
      %v3318 = vunpack.c.h.b16 %v3148
      %v3319 = vunpack.c.l.b16 %v3149
      %v3320 = vunpack.c.h.b16 %v3149
      %v3321 = vpack.c.b16 %v3217, %v3213
      %v3322 = vpack.c.b16 %v3218, %v3214
      %v3323 = vpack.c.b16 %v3219, %v3215
      %v3324 = vpack.c.b16 %v3220, %v3216
      %v3325 = vpack.c.b16 %v3225, %v3221
      %v3326 = vpack.c.b16 %v3226, %v3222
      %v3327 = vpack.c.b16 %v3227, %v3223
      %v3328 = vpack.c.b16 %v3228, %v3224
      %v3329 = vpack.c.b16 %v3233, %v3229
      %v3330 = vpack.c.b16 %v3234, %v3230
      %v3331 = vpack.c.b16 %v3235, %v3231
      %v3332 = vpack.c.b16 %v3236, %v3232
      %v3333 = vpack.c.b16 %v3241, %v3237
      %v3334 = vpack.c.b16 %v3242, %v3238
      %v3335 = vpack.c.b16 %v3243, %v3239
      %v3336 = vpack.c.b16 %v3244, %v3240
      %v3337 = vpack.c.b16 %v3249, %v3245
      %v3338 = vpack.c.b16 %v3250, %v3246
      %v3339 = vpack.c.b16 %v3251, %v3247
      %v3340 = vpack.c.b16 %v3252, %v3248
      %v3341 = vpack.c.b16 %v3257, %v3253
      %v3342 = vpack.c.b16 %v3258, %v3254
      %v3343 = vpack.c.b16 %v3259, %v3255
      %v3344 = vpack.c.b16 %v3260, %v3256
      %v3345 = vpack.c.b16 %v3265, %v3261
      %v3346 = vpack.c.b16 %v3266, %v3262
      %v3347 = vpack.c.b16 %v3267, %v3263
      %v3348 = vpack.c.b16 %v3268, %v3264
      %v3349 = vpack.c.b16 %v3273, %v3269
      %v3350 = vpack.c.b16 %v3274, %v3270
      %v3351 = vpack.c.b16 %v3275, %v3271
      %v3352 = vpack.c.b16 %v3276, %v3272
      %v3353 = vpack.c.b16 %v3281, %v3277
      %v3354 = vpack.c.b16 %v3282, %v3278
      %v3355 = vpack.c.b16 %v3283, %v3279
      %v3356 = vpack.c.b16 %v3284, %v3280
      %v3357 = vpack.c.b16 %v3289, %v3285
      %v3358 = vpack.c.b16 %v3290, %v3286
      %v3359 = vpack.c.b16 %v3291, %v3287
      %v3360 = vpack.c.b16 %v3292, %v3288
      %v3361 = vpack.c.b16 %v3297, %v3293
      %v3362 = vpack.c.b16 %v3298, %v3294
      %v3363 = vpack.c.b16 %v3299, %v3295
      %v3364 = vpack.c.b16 %v3300, %v3296
      %v3365 = vpack.c.b16 %v3305, %v3301
      %v3366 = vpack.c.b16 %v3306, %v3302
      %v3367 = vpack.c.b16 %v3307, %v3303
      %v3368 = vpack.c.b16 %v3308, %v3304
      %v3369 = vpack.c.b16 %v3313, %v3309
      %v3370 = vpack.c.b16 %v3314, %v3310
      %v3371 = vpack.c.b16 %v3315, %v3311
      %v3372 = vpack.c.b16 %v3316, %v3312
      %v3373 = vpack.c.b16 %v3317, %v3317
      %v3374 = vpack.c.b16 %v3318, %v3318
      %v3375 = vpack.c.b16 %v3319, %v3319
      %v3376 = vpack.c.b16 %v3320, %v3320
      %vm3429 = vcmask 719872
      %v3431 = vsel %vm3429, %v3157, 0
      %vm3433 = vcmask 1043456
      %v3435 = vsel %vm3433, %v3373, 0
      %v3438 = vsel %vm3433, %v3374, 0
      %v3441 = vsel %vm3433, %v3375, 0
      %v3444 = vsel %vm3433, %v3376, 0
      %3446 = vmatprep.subr.bf16.mxu0 %v3322
      %3447 = vmatpush1.bf16.msra.mxu0 %v3321
      %3448 = vmatprep.subr.bf16.mxu0 %v3326
      %3449 = vmatpush1.bf16.msra.mxu0 %v3325
      %3450 = vmatprep.subr.bf16.mxu0 %v3330
      %3451 = vmatpush1.bf16.msra.mxu0 %v3329
      %3452 = vmatprep.subr.bf16.mxu0 %v3334
      %3453 = vmatpush1.bf16.msra.mxu0 %v3333
      %3454 = vmatprep.subr.bf16.mxu0 %v3338
      %3455 = vmatpush1.bf16.msra.mxu0 %v3337
      %3456 = vmatprep.subr.bf16.mxu0 %v3342
      %3457 = vmatpush1.bf16.msra.mxu0 %v3341
      %3458 = vmatprep.subr.bf16.mxu0 %v3346
      %3459 = vmatpush1.bf16.msra.mxu0 %v3345
      %3460 = vmatprep.subr.bf16.mxu0 %v3350
      %3461 = vmatpush1.bf16.msra.mxu0 %v3349
      %3462 = vmatprep.subr.bf16.mxu0 %v3354
      %3463 = vmatpush1.bf16.msra.mxu0 %v3353
      %3464 = vmatprep.subr.bf16.mxu0 %v3358
      %3465 = vmatpush1.bf16.msra.mxu0 %v3357
      %3466 = vmatprep.subr.bf16.mxu0 %v3362
      %3467 = vmatpush1.bf16.msra.mxu0 %v3361
      %3468 = vmatprep.subr.bf16.mxu0 %v3366
      %3469 = vmatpush1.bf16.msra.mxu0 %v3365
      %3470 = vmatprep.subr.bf16.mxu0 %v3370
      %3471 = vmatpush1.bf16.msra.mxu0 %v3369
      %3472 = vmatprep.subr.bf16.mxu0 %v3438
      %3473 = vmatpush1.bf16.msra.mxu0 %v3435
      %3474 = vmatprep.subr.bf16.mxu0 0
      %3475 = vmatpush1.bf16.msra.mxu0 0
      %3476 = vmatprep.subr.bf16.mxu0 0
      %3477 = vmatpush1.bf16.msra.mxu0 0
      %3478 = vmatprep.mubr.bf16.mxu0 %v3431
      %3479 = vmatmul.mubr.bf16.gmra.mrb[0].mxu0 %v3156
      %v3480 = vpop.f32.mrb[0].mxu0
      %v3481 = vadd.f32 0.0, %v3480
      %v3482 = vpop.f32.mrb[0].mxu0
      %v3483 = vadd.f32 0.0, %v3482
      %v3484 = vpop.f32.mrb[0].mxu0
      %v3485 = vadd.f32 0.0, %v3484
      %v3486 = vpop.f32.mrb[0].mxu0
      %v3487 = vadd.f32 0.0, %v3486
      %3488 = vdwg.mxu0
      %3489 = vmatprep.subr.bf16.mxu0 %v3324
      %3490 = vmatpush1.bf16.msra.mxu0 %v3323
      %3491 = vmatprep.subr.bf16.mxu0 %v3328
      %3492 = vmatpush1.bf16.msra.mxu0 %v3327
      %3493 = vmatprep.subr.bf16.mxu0 %v3332
      %3494 = vmatpush1.bf16.msra.mxu0 %v3331
      %3495 = vmatprep.subr.bf16.mxu0 %v3336
      %3496 = vmatpush1.bf16.msra.mxu0 %v3335
      %3497 = vmatprep.subr.bf16.mxu0 %v3340
      %3498 = vmatpush1.bf16.msra.mxu0 %v3339
      %3499 = vmatprep.subr.bf16.mxu0 %v3344
      %3500 = vmatpush1.bf16.msra.mxu0 %v3343
      %3501 = vmatprep.subr.bf16.mxu0 %v3348
      %3502 = vmatpush1.bf16.msra.mxu0 %v3347
      %3503 = vmatprep.subr.bf16.mxu0 %v3352
      %3504 = vmatpush1.bf16.msra.mxu0 %v3351
      %3505 = vmatprep.subr.bf16.mxu0 %v3356
      %3506 = vmatpush1.bf16.msra.mxu0 %v3355
      %3507 = vmatprep.subr.bf16.mxu0 %v3360
      %3508 = vmatpush1.bf16.msra.mxu0 %v3359
      %3509 = vmatprep.subr.bf16.mxu0 %v3364
      %3510 = vmatpush1.bf16.msra.mxu0 %v3363
      %3511 = vmatprep.subr.bf16.mxu0 %v3368
      %3512 = vmatpush1.bf16.msra.mxu0 %v3367
      %3513 = vmatprep.subr.bf16.mxu0 %v3372
      %3514 = vmatpush1.bf16.msra.mxu0 %v3371
      %3515 = vmatprep.subr.bf16.mxu0 %v3444
      %3516 = vmatpush1.bf16.msra.mxu0 %v3441
      %3517 = vmatprep.subr.bf16.mxu0 0
      %3518 = vmatpush1.bf16.msra.mxu0 0
      %3519 = vmatprep.subr.bf16.mxu0 0
      %3520 = vmatpush1.bf16.msra.mxu0 0
      %3521 = vmatprep.mubr.bf16.mxu0 %v3431
      %3522 = vmatmul.mubr.bf16.gmra.mrb[0].mxu0 %v3156
      %v3523 = vpop.f32.mrb[0].mxu0
      %v3524 = vadd.f32 0.0, %v3523
      %v3525 = vpop.f32.mrb[0].mxu0
      %v3526 = vadd.f32 0.0, %v3525
      %v3527 = vpop.f32.mrb[0].mxu0
      %v3528 = vadd.f32 0.0, %v3527
      %v3529 = vpop.f32.mrb[0].mxu0
      %v3530 = vadd.f32 0.0, %v3529
      %3531 = vdwg.mxu0
      %3532 = vst [vmem:[#allocation6] sm:$0xff] %v3481
      %3533 = vst [vmem:[#allocation6 + $0x8] sm:$0xff] %v3483
      %3534 = vst [vmem:[#allocation6 + $0x10] sm:$0xff] %v3524
      %3535 = vst [vmem:[#allocation6 + $0x18] sm:$0xff] %v3526
      %3536 = vst [vmem:[#allocation6 + $0x20] sm:$0xff] %v3485
      %3537 = vst [vmem:[#allocation6 + $0x28] sm:$0xff] %v3487
      %3538 = vst [vmem:[#allocation6 + $0x30] sm:$0xff] %v3528
      %3539 = vst [vmem:[#allocation6 + $0x38] sm:$0xff] %v3530
      %v3540 = vxor.u32 %v3481, 2147483648
      %v3541 = vxor.u32 %v3483, 2147483648
      %v3542 = vxor.u32 %v3524, 2147483648
      %v3543 = vxor.u32 %v3526, 2147483648
      %v3544 = vxor.u32 %v3485, 2147483648
      %v3545 = vxor.u32 %v3487, 2147483648
      %v3546 = vxor.u32 %v3528, 2147483648
      %v3547 = vxor.u32 %v3530, 2147483648
      %v3548 = vmul.f32 %v3540, 1.442695
      %v3549 = vpow.pop %v3548
      %v3550 = vmul.f32 %v3541, 1.442695
      %v3551 = vpow.pop %v3550
      %v3552 = vmul.f32 %v3542, 1.442695
      %v3553 = vpow.pop %v3552
      %v3554 = vmul.f32 %v3543, 1.442695
      %v3555 = vpow.pop %v3554
      %v3556 = vmul.f32 %v3544, 1.442695
      %v3557 = vpow.pop %v3556
      %v3558 = vmul.f32 %v3545, 1.442695
      %v3559 = vpow.pop %v3558
      %v3560 = vmul.f32 %v3546, 1.442695
      %v3561 = vpow.pop %v3560
      %v3562 = vmul.f32 %v3547, 1.442695
      %v3563 = vpow.pop %v3562
      %v3564 = vadd.f32 %v3549, 1.0
      %v3565 = vadd.f32 %v3551, 1.0
      %v3566 = vadd.f32 %v3553, 1.0
      %v3567 = vadd.f32 %v3555, 1.0
      %v3568 = vadd.f32 %v3557, 1.0
      %v3569 = vadd.f32 %v3559, 1.0
      %v3570 = vadd.f32 %v3561, 1.0
      %v3571 = vadd.f32 %v3563, 1.0
      %v3572 = vrcp.pop %v3564
      %v3573 = vmul.f32 1.0, %v3572
      %v3574 = vrcp.pop %v3565
      %v3575 = vmul.f32 1.0, %v3574
      %v3576 = vrcp.pop %v3566
      %v3577 = vmul.f32 1.0, %v3576
      %v3578 = vrcp.pop %v3567
      %v3579 = vmul.f32 1.0, %v3578
      %v3580 = vrcp.pop %v3568
      %v3581 = vmul.f32 1.0, %v3580
      %v3582 = vrcp.pop %v3569
      %v3583 = vmul.f32 1.0, %v3582
      %v3584 = vrcp.pop %v3570
      %v3585 = vmul.f32 1.0, %v3584
      %v3586 = vrcp.pop %v3571
      %v3587 = vmul.f32 1.0, %v3586
      %3588 = vrot.lane.b32.xlu0 %v3573, 64
      %v3589 = vpop.permute.xlu0 %3588
      %3590 = vrot.lane.b32.xlu0 %v3581, 64
      %v3591 = vpop.permute.xlu0 %3590
      %3592 = vrot.lane.b32.xlu0 %v3575, 64
      %v3593 = vpop.permute.xlu0 %3592
      %3594 = vrot.lane.b32.xlu0 %v3583, 64
      %v3595 = vpop.permute.xlu0 %3594
      %3596 = vrot.lane.b32.xlu0 %v3577, 64
      %v3597 = vpop.permute.xlu0 %3596
      %3598 = vrot.lane.b32.xlu0 %v3585, 64
      %v3599 = vpop.permute.xlu0 %3598
      %3600 = vrot.lane.b32.xlu0 %v3579, 64
      %v3601 = vpop.permute.xlu0 %3600
      %3602 = vrot.lane.b32.xlu0 %v3587, 64
      %v3603 = vpop.permute.xlu0 %3602
      %v3604 = vlaneseq
      %v3605 = vand.u32 %v3604, 127
      %vm3606 = vcmp.lt.s32.totalorder %v3605, 64
      %v3607 = vsel %vm3606, %v3597, %v3601
      %v3608 = vsel %vm3606, %v3599, %v3603
      %v3609 = vsel %vm3606, %v3593, %v3597
      %v3610 = vsel %vm3606, %v3595, %v3599
      %v3611 = vsel %vm3606, %v3589, %v3593
      %v3612 = vsel %vm3606, %v3591, %v3595
      %v3613 = vsel %vm3606, %v3601, %v3589
      %v3614 = vsel %vm3606, %v3603, %v3591
      %v3615 = vsub.f32 %v3573, %v3613
      %v3616 = vsub.f32 %v3575, %v3611
      %v3617 = vsub.f32 %v3577, %v3609
      %v3618 = vsub.f32 %v3579, %v3607
      %v3619 = vsub.f32 %v3581, %v3614
      %v3620 = vsub.f32 %v3583, %v3612
      %v3621 = vsub.f32 %v3585, %v3610
      %v3622 = vsub.f32 %v3587, %v3608
      %v3623 = vand.u32 2147483647, %v3615
      %v3624 = vand.u32 2147483647, %v3616
      %v3625 = vand.u32 2147483647, %v3617
      %v3626 = vand.u32 2147483647, %v3618
      %v3627 = vand.u32 2147483647, %v3619
      %v3628 = vand.u32 2147483647, %v3620
      %v3629 = vand.u32 2147483647, %v3621
      %v3630 = vand.u32 2147483647, %v3622
      %v3631 = vld [vmem:[%s3] sm:$0xf]
      %v3633 = vlaneseq
      %v3634 = vshrl.u32 %v3633, 7
      %v3635 = vsub.s32 0, %v3634
      %v3636 = vrot.slane %v3631, %v3635
      %v3637 = vlaneseq
      %v3638 = vshrl.u32 %v3637, 7
      %v3639 = vsub.s32 1, %v3638
      %v3640 = vrot.slane %v3631, %v3639
      %v3641 = vlaneseq
      %v3642 = vshrl.u32 %v3641, 7
      %v3643 = vsub.s32 2, %v3642
      %v3644 = vrot.slane %v3631, %v3643
      %v3645 = vlaneseq
      %v3646 = vshrl.u32 %v3645, 7
      %v3647 = vsub.s32 3, %v3646
      %v3648 = vrot.slane %v3631, %v3647
      %v3653 = vmul.f32 %v3623, %v3636
      %v3654 = vmul.f32 %v3624, %v3640
      %v3655 = vmul.f32 %v3625, %v3644
      %v3656 = vmul.f32 %v3626, %v3648
      %v3657 = vmul.f32 %v3627, %v3636
      %v3658 = vmul.f32 %v3628, %v3640
      %v3659 = vmul.f32 %v3629, %v3644
      %v3660 = vmul.f32 %v3630, %v3648
      %v3661 = vld [vmem:[%s15] sm:$0xff]
      %v3662 = vld [vmem:[%s15 + $0x8] sm:$0xff]
      %vm3663 = vcmask 130048
      %v3665 = vsel %vm3663, %v3661, 0
      %v3668 = vsel %vm3663, %v3662, 0
      %3670 = vmatprep.subr.mxu0 %v3654
      %3671 = vmatpush1.msra.mxu0 %v3653
      %3672 = vmatprep.subr.mxu0 %v3658
      %3673 = vmatpush1.msra.mxu0 %v3657
      %3674 = vmatprep.subr.mxu0 0.0
      %3675 = vmatpush1.msra.mxu0 0.0
      %3676 = vmatprep.subr.mxu0 0.0
      %3677 = vmatpush1.msra.mxu0 0.0
      %3678 = vmatprep.subr.mxu0 0.0
      %3679 = vmatpush1.msra.mxu0 0.0
      %3680 = vmatprep.subr.mxu0 0.0
      %3681 = vmatpush1.msra.mxu0 0.0
      %3682 = vmatprep.subr.mxu0 0.0
      %3683 = vmatpush1.msra.mxu0 0.0
      %3684 = vmatprep.subr.mxu0 0.0
      %3685 = vmatpush1.msra.mxu0 0.0
      %3686 = vmatprep.subr.mxu0 0.0
      %3687 = vmatpush1.msra.mxu0 0.0
      %3688 = vmatprep.subr.mxu0 0.0
      %3689 = vmatpush1.msra.mxu0 0.0
      %3690 = vmatprep.subr.mxu0 0.0
      %3691 = vmatpush1.msra.mxu0 0.0
      %3692 = vmatprep.subr.mxu0 0.0
      %3693 = vmatpush1.msra.mxu0 0.0
      %3694 = vmatprep.subr.mxu0 0.0
      %3695 = vmatpush1.msra.mxu0 0.0
      %3696 = vmatprep.subr.mxu0 0.0
      %3697 = vmatpush1.msra.mxu0 0.0
      %3698 = vmatprep.subr.mxu0 0.0
      %3699 = vmatpush1.msra.mxu0 0.0
      %3700 = vmatprep.subr.mxu0 0.0
      %3701 = vmatpush1.msra.mxu0 0.0
      %3702 = vmatprep.subr.mxu0 0.0
      %3703 = vmatpush1.msra.mxu0 0.0
      %3704 = vmatprep.subr.mxu0 0.0
      %3705 = vmatpush1.msra.mxu0 0.0
      %3706 = vmatprep.subr.mxu0 0.0
      %3707 = vmatpush1.msra.mxu0 0.0
      %3708 = vmatprep.subr.mxu0 0.0
      %3709 = vmatpush1.msra.mxu0 0.0
      %3710 = vmatprep.subr.mxu0 0.0
      %3711 = vmatpush1.msra.mxu0 0.0
      %3712 = vmatprep.subr.mxu0 0.0
      %3713 = vmatpush1.msra.mxu0 0.0
      %3714 = vmatprep.subr.mxu0 0.0
      %3715 = vmatpush1.msra.mxu0 0.0
      %3716 = vmatprep.subr.mxu0 0.0
      %3717 = vmatpush1.msra.mxu0 0.0
      %3718 = vmatprep.subr.mxu0 0.0
      %3719 = vmatpush1.msra.mxu0 0.0
      %3720 = vmatprep.subr.mxu0 0.0
      %3721 = vmatpush1.msra.mxu0 0.0
      %3722 = vmatprep.subr.mxu0 0.0
      %3723 = vmatpush1.msra.mxu0 0.0
      %3724 = vmatprep.subr.mxu0 0.0
      %3725 = vmatpush1.msra.mxu0 0.0
      %3726 = vmatprep.subr.mxu0 0.0
      %3727 = vmatpush1.msra.mxu0 0.0
      %3728 = vmatprep.subr.mxu0 0.0
      %3729 = vmatpush1.msra.mxu0 0.0
      %3730 = vmatprep.subr.mxu0 0.0
      %3731 = vmatpush1.msra.mxu0 0.0
      %3732 = vmatprep.subr.mxu0 0.0
      %3733 = vmatpush1.msra.mxu0 0.0
      %3734 = vmatprep.mubr.f32.mxu0 0.0
      %3735 = vmatmul.mubr.f32.gmra.mrb[0].mxu0 %v3665
      %v3736 = vpop.f32.mrb[0].mxu0
      %v3737 = vadd.f32 0.0, %v3736
      %v3738 = vpop.f32.mrb[0].mxu0
      %v3739 = vadd.f32 0.0, %v3738
      %3740 = vmatprep.mubr.f32.mxu0 0.0
      %3741 = vmatmul.mubr.f32.gmra.mrb[0].mxu0 %v3668
      %v3742 = vpop.f32.mrb[0].mxu0
      %v3743 = vadd.f32 0.0, %v3742
      %v3744 = vpop.f32.mrb[0].mxu0
      %v3745 = vadd.f32 0.0, %v3744
      %3746 = vdwg.mxu0
      %3747 = vmatprep.subr.mxu0 %v3656
      %3748 = vmatpush1.msra.mxu0 %v3655
      %3749 = vmatprep.subr.mxu0 %v3660
      %3750 = vmatpush1.msra.mxu0 %v3659
      %3751 = vmatprep.subr.mxu0 0.0
      %3752 = vmatpush1.msra.mxu0 0.0
      %3753 = vmatprep.subr.mxu0 0.0
      %3754 = vmatpush1.msra.mxu0 0.0
      %3755 = vmatprep.subr.mxu0 0.0
      %3756 = vmatpush1.msra.mxu0 0.0
      %3757 = vmatprep.subr.mxu0 0.0
      %3758 = vmatpush1.msra.mxu0 0.0
      %3759 = vmatprep.subr.mxu0 0.0
      %3760 = vmatpush1.msra.mxu0 0.0
      %3761 = vmatprep.subr.mxu0 0.0
      %3762 = vmatpush1.msra.mxu0 0.0
      %3763 = vmatprep.subr.mxu0 0.0
      %3764 = vmatpush1.msra.mxu0 0.0
      %3765 = vmatprep.subr.mxu0 0.0
      %3766 = vmatpush1.msra.mxu0 0.0
      %3767 = vmatprep.subr.mxu0 0.0
      %3768 = vmatpush1.msra.mxu0 0.0
      %3769 = vmatprep.subr.mxu0 0.0
      %3770 = vmatpush1.msra.mxu0 0.0
      %3771 = vmatprep.subr.mxu0 0.0
      %3772 = vmatpush1.msra.mxu0 0.0
      %3773 = vmatprep.subr.mxu0 0.0
      %3774 = vmatpush1.msra.mxu0 0.0
      %3775 = vmatprep.subr.mxu0 0.0
      %3776 = vmatpush1.msra.mxu0 0.0
      %3777 = vmatprep.subr.mxu0 0.0
      %3778 = vmatpush1.msra.mxu0 0.0
      %3779 = vmatprep.subr.mxu0 0.0
      %3780 = vmatpush1.msra.mxu0 0.0
      %3781 = vmatprep.subr.mxu0 0.0
      %3782 = vmatpush1.msra.mxu0 0.0
      %3783 = vmatprep.subr.mxu0 0.0
      %3784 = vmatpush1.msra.mxu0 0.0
      %3785 = vmatprep.subr.mxu0 0.0
      %3786 = vmatpush1.msra.mxu0 0.0
      %3787 = vmatprep.subr.mxu0 0.0
      %3788 = vmatpush1.msra.mxu0 0.0
      %3789 = vmatprep.subr.mxu0 0.0
      %3790 = vmatpush1.msra.mxu0 0.0
      %3791 = vmatprep.subr.mxu0 0.0
      %3792 = vmatpush1.msra.mxu0 0.0
      %3793 = vmatprep.subr.mxu0 0.0
      %3794 = vmatpush1.msra.mxu0 0.0
      %3795 = vmatprep.subr.mxu0 0.0
      %3796 = vmatpush1.msra.mxu0 0.0
      %3797 = vmatprep.subr.mxu0 0.0
      %3798 = vmatpush1.msra.mxu0 0.0
      %3799 = vmatprep.subr.mxu0 0.0
      %3800 = vmatpush1.msra.mxu0 0.0
      %3801 = vmatprep.subr.mxu0 0.0
      %3802 = vmatpush1.msra.mxu0 0.0
      %3803 = vmatprep.subr.mxu0 0.0
      %3804 = vmatpush1.msra.mxu0 0.0
      %3805 = vmatprep.subr.mxu0 0.0
      %3806 = vmatpush1.msra.mxu0 0.0
      %3807 = vmatprep.subr.mxu0 0.0
      %3808 = vmatpush1.msra.mxu0 0.0
      %3809 = vmatprep.subr.mxu0 0.0
      %3810 = vmatpush1.msra.mxu0 0.0
      %3811 = vmatprep.mubr.f32.mxu0 0.0
      %3812 = vmatmul.mubr.f32.gmra.mrb[0].mxu0 %v3665
      %v3813 = vpop.f32.mrb[0].mxu0
      %v3814 = vadd.f32 0.0, %v3813
      %v3815 = vpop.f32.mrb[0].mxu0
      %v3816 = vadd.f32 0.0, %v3815
      %3817 = vmatprep.mubr.f32.mxu0 0.0
      %3818 = vmatmul.mubr.f32.gmra.mrb[0].mxu0 %v3668
      %v3819 = vpop.f32.mrb[0].mxu0
      %v3820 = vadd.f32 0.0, %v3819
      %v3821 = vpop.f32.mrb[0].mxu0
      %v3822 = vadd.f32 0.0, %v3821
      %3823 = vdwg.mxu0
      %v3824 = vld [vmem:[%s571] sm:$0xff]
      %v3825 = vld [vmem:[%s571 + $0x8] sm:$0xff]
      %v3826 = vld [vmem:[%s571 + $0x10] sm:$0xff]
      %v3827 = vld [vmem:[%s571 + $0x18] sm:$0xff]
      %v3828 = vld [vmem:[%s4] sm:$0xff]
      %v3830 = vsel %vm588, %v3828, 0
      %3832 = vmatprep.subr.mxu0 %v3825
      %3833 = vmatpush1.msra.mxu0 %v3824
      %3834 = vmatprep.subr.mxu0 0.0
      %3835 = vmatpush1.msra.mxu0 0.0
      %3836 = vmatprep.subr.mxu0 0.0
      %3837 = vmatpush1.msra.mxu0 0.0
      %3838 = vmatprep.subr.mxu0 0.0
      %3839 = vmatpush1.msra.mxu0 0.0
      %3840 = vmatprep.subr.mxu0 0.0
      %3841 = vmatpush1.msra.mxu0 0.0
      %3842 = vmatprep.subr.mxu0 0.0
      %3843 = vmatpush1.msra.mxu0 0.0
      %3844 = vmatprep.subr.mxu0 0.0
      %3845 = vmatpush1.msra.mxu0 0.0
      %3846 = vmatprep.subr.mxu0 0.0
      %3847 = vmatpush1.msra.mxu0 0.0
      %3848 = vmatprep.subr.mxu0 0.0
      %3849 = vmatpush1.msra.mxu0 0.0
      %3850 = vmatprep.subr.mxu0 0.0
      %3851 = vmatpush1.msra.mxu0 0.0
      %3852 = vmatprep.subr.mxu0 0.0
      %3853 = vmatpush1.msra.mxu0 0.0
      %3854 = vmatprep.subr.mxu0 0.0
      %3855 = vmatpush1.msra.mxu0 0.0
      %3856 = vmatprep.subr.mxu0 0.0
      %3857 = vmatpush1.msra.mxu0 0.0
      %3858 = vmatprep.subr.mxu0 0.0
      %3859 = vmatpush1.msra.mxu0 0.0
      %3860 = vmatprep.subr.mxu0 0.0
      %3861 = vmatpush1.msra.mxu0 0.0
      %3862 = vmatprep.subr.mxu0 0.0
      %3863 = vmatpush1.msra.mxu0 0.0
      %3864 = vmatprep.subr.mxu0 0.0
      %3865 = vmatpush1.msra.mxu0 0.0
      %3866 = vmatprep.subr.mxu0 0.0
      %3867 = vmatpush1.msra.mxu0 0.0
      %3868 = vmatprep.subr.mxu0 0.0
      %3869 = vmatpush1.msra.mxu0 0.0
      %3870 = vmatprep.subr.mxu0 0.0
      %3871 = vmatpush1.msra.mxu0 0.0
      %3872 = vmatprep.subr.mxu0 0.0
      %3873 = vmatpush1.msra.mxu0 0.0
      %3874 = vmatprep.subr.mxu0 0.0
      %3875 = vmatpush1.msra.mxu0 0.0
      %3876 = vmatprep.subr.mxu0 0.0
      %3877 = vmatpush1.msra.mxu0 0.0
      %3878 = vmatprep.subr.mxu0 0.0
      %3879 = vmatpush1.msra.mxu0 0.0
      %3880 = vmatprep.subr.mxu0 0.0
      %3881 = vmatpush1.msra.mxu0 0.0
      %3882 = vmatprep.subr.mxu0 0.0
      %3883 = vmatpush1.msra.mxu0 0.0
      %3884 = vmatprep.subr.mxu0 0.0
      %3885 = vmatpush1.msra.mxu0 0.0
      %3886 = vmatprep.subr.mxu0 0.0
      %3887 = vmatpush1.msra.mxu0 0.0
      %3888 = vmatprep.subr.mxu0 0.0
      %3889 = vmatpush1.msra.mxu0 0.0
      %3890 = vmatprep.subr.mxu0 0.0
      %3891 = vmatpush1.msra.mxu0 0.0
      %3892 = vmatprep.subr.mxu0 0.0
      %3893 = vmatpush1.msra.mxu0 0.0
      %3894 = vmatprep.subr.mxu0 0.0
      %3895 = vmatpush1.msra.mxu0 0.0
      %3896 = vmatprep.mubr.f32.mxu0 0.0
      %3897 = vmatmul.mubr.f32.gmra.mrb[0].mxu0 %v3830
      %v3898 = vpop.f32.mrb[0].mxu0
      %v3899 = vadd.f32 0.0, %v3898
      %v3900 = vpop.f32.mrb[0].mxu0
      %v3901 = vadd.f32 0.0, %v3900
      %3902 = vdwg.mxu0
      %3903 = vmatprep.subr.mxu0 %v3827
      %3904 = vmatpush1.msra.mxu0 %v3826
      %3905 = vmatprep.subr.mxu0 0.0
      %3906 = vmatpush1.msra.mxu0 0.0
      %3907 = vmatprep.subr.mxu0 0.0
      %3908 = vmatpush1.msra.mxu0 0.0
      %3909 = vmatprep.subr.mxu0 0.0
      %3910 = vmatpush1.msra.mxu0 0.0
      %3911 = vmatprep.subr.mxu0 0.0
      %3912 = vmatpush1.msra.mxu0 0.0
      %3913 = vmatprep.subr.mxu0 0.0
      %3914 = vmatpush1.msra.mxu0 0.0
      %3915 = vmatprep.subr.mxu0 0.0
      %3916 = vmatpush1.msra.mxu0 0.0
      %3917 = vmatprep.subr.mxu0 0.0
      %3918 = vmatpush1.msra.mxu0 0.0
      %3919 = vmatprep.subr.mxu0 0.0
      %3920 = vmatpush1.msra.mxu0 0.0
      %3921 = vmatprep.subr.mxu0 0.0
      %3922 = vmatpush1.msra.mxu0 0.0
      %3923 = vmatprep.subr.mxu0 0.0
      %3924 = vmatpush1.msra.mxu0 0.0
      %3925 = vmatprep.subr.mxu0 0.0
      %3926 = vmatpush1.msra.mxu0 0.0
      %3927 = vmatprep.subr.mxu0 0.0
      %3928 = vmatpush1.msra.mxu0 0.0
      %3929 = vmatprep.subr.mxu0 0.0
      %3930 = vmatpush1.msra.mxu0 0.0
      %3931 = vmatprep.subr.mxu0 0.0
      %3932 = vmatpush1.msra.mxu0 0.0
      %3933 = vmatprep.subr.mxu0 0.0
      %3934 = vmatpush1.msra.mxu0 0.0
      %3935 = vmatprep.subr.mxu0 0.0
      %3936 = vmatpush1.msra.mxu0 0.0
      %3937 = vmatprep.subr.mxu0 0.0
      %3938 = vmatpush1.msra.mxu0 0.0
      %3939 = vmatprep.subr.mxu0 0.0
      %3940 = vmatpush1.msra.mxu0 0.0
      %3941 = vmatprep.subr.mxu0 0.0
      %3942 = vmatpush1.msra.mxu0 0.0
      %3943 = vmatprep.subr.mxu0 0.0
      %3944 = vmatpush1.msra.mxu0 0.0
      %3945 = vmatprep.subr.mxu0 0.0
      %3946 = vmatpush1.msra.mxu0 0.0
      %3947 = vmatprep.subr.mxu0 0.0
      %3948 = vmatpush1.msra.mxu0 0.0
      %3949 = vmatprep.subr.mxu0 0.0
      %3950 = vmatpush1.msra.mxu0 0.0
      %3951 = vmatprep.subr.mxu0 0.0
      %3952 = vmatpush1.msra.mxu0 0.0
      %3953 = vmatprep.subr.mxu0 0.0
      %3954 = vmatpush1.msra.mxu0 0.0
      %3955 = vmatprep.subr.mxu0 0.0
      %3956 = vmatpush1.msra.mxu0 0.0
      %3957 = vmatprep.subr.mxu0 0.0
      %3958 = vmatpush1.msra.mxu0 0.0
      %3959 = vmatprep.subr.mxu0 0.0
      %3960 = vmatpush1.msra.mxu0 0.0
      %3961 = vmatprep.subr.mxu0 0.0
      %3962 = vmatpush1.msra.mxu0 0.0
      %3963 = vmatprep.subr.mxu0 0.0
      %3964 = vmatpush1.msra.mxu0 0.0
      %3965 = vmatprep.subr.mxu0 0.0
      %3966 = vmatpush1.msra.mxu0 0.0
      %3967 = vmatprep.mubr.f32.mxu0 0.0
      %3968 = vmatmul.mubr.f32.gmra.mrb[0].mxu0 %v3830
      %v3969 = vpop.f32.mrb[0].mxu0
      %v3970 = vadd.f32 0.0, %v3969
      %v3971 = vpop.f32.mrb[0].mxu0
      %v3972 = vadd.f32 0.0, %v3971
      %3973 = vdwg.mxu0
      %v3974 = vmul.f32 %v3824, %v3824
      %v3975 = vmul.f32 %v3825, %v3825
      %v3976 = vmul.f32 %v3826, %v3826
      %v3977 = vmul.f32 %v3827, %v3827
      %3978 = vmatprep.subr.mxu0 %v3975
      %3979 = vmatpush1.msra.mxu0 %v3974
      %3980 = vmatprep.subr.mxu0 0.0
      %3981 = vmatpush1.msra.mxu0 0.0
      %3982 = vmatprep.subr.mxu0 0.0
      %3983 = vmatpush1.msra.mxu0 0.0
      %3984 = vmatprep.subr.mxu0 0.0
      %3985 = vmatpush1.msra.mxu0 0.0
      %3986 = vmatprep.subr.mxu0 0.0
      %3987 = vmatpush1.msra.mxu0 0.0
      %3988 = vmatprep.subr.mxu0 0.0
      %3989 = vmatpush1.msra.mxu0 0.0
      %3990 = vmatprep.subr.mxu0 0.0
      %3991 = vmatpush1.msra.mxu0 0.0
      %3992 = vmatprep.subr.mxu0 0.0
      %3993 = vmatpush1.msra.mxu0 0.0
      %3994 = vmatprep.subr.mxu0 0.0
      %3995 = vmatpush1.msra.mxu0 0.0
      %3996 = vmatprep.subr.mxu0 0.0
      %3997 = vmatpush1.msra.mxu0 0.0
      %3998 = vmatprep.subr.mxu0 0.0
      %3999 = vmatpush1.msra.mxu0 0.0
      %4000 = vmatprep.subr.mxu0 0.0
      %4001 = vmatpush1.msra.mxu0 0.0
      %4002 = vmatprep.subr.mxu0 0.0
      %4003 = vmatpush1.msra.mxu0 0.0
      %4004 = vmatprep.subr.mxu0 0.0
      %4005 = vmatpush1.msra.mxu0 0.0
      %4006 = vmatprep.subr.mxu0 0.0
      %4007 = vmatpush1.msra.mxu0 0.0
      %4008 = vmatprep.subr.mxu0 0.0
      %4009 = vmatpush1.msra.mxu0 0.0
      %4010 = vmatprep.subr.mxu0 0.0
      %4011 = vmatpush1.msra.mxu0 0.0
      %4012 = vmatprep.subr.mxu0 0.0
      %4013 = vmatpush1.msra.mxu0 0.0
      %4014 = vmatprep.subr.mxu0 0.0
      %4015 = vmatpush1.msra.mxu0 0.0
      %4016 = vmatprep.subr.mxu0 0.0
      %4017 = vmatpush1.msra.mxu0 0.0
      %4018 = vmatprep.subr.mxu0 0.0
      %4019 = vmatpush1.msra.mxu0 0.0
      %4020 = vmatprep.subr.mxu0 0.0
      %4021 = vmatpush1.msra.mxu0 0.0
      %4022 = vmatprep.subr.mxu0 0.0
      %4023 = vmatpush1.msra.mxu0 0.0
      %4024 = vmatprep.subr.mxu0 0.0
      %4025 = vmatpush1.msra.mxu0 0.0
      %4026 = vmatprep.subr.mxu0 0.0
      %4027 = vmatpush1.msra.mxu0 0.0
      %4028 = vmatprep.subr.mxu0 0.0
      %4029 = vmatpush1.msra.mxu0 0.0
      %4030 = vmatprep.subr.mxu0 0.0
      %4031 = vmatpush1.msra.mxu0 0.0
      %4032 = vmatprep.subr.mxu0 0.0
      %4033 = vmatpush1.msra.mxu0 0.0
      %4034 = vmatprep.subr.mxu0 0.0
      %4035 = vmatpush1.msra.mxu0 0.0
      %4036 = vmatprep.subr.mxu0 0.0
      %4037 = vmatpush1.msra.mxu0 0.0
      %4038 = vmatprep.subr.mxu0 0.0
      %4039 = vmatpush1.msra.mxu0 0.0
      %4040 = vmatprep.subr.mxu0 0.0
      %4041 = vmatpush1.msra.mxu0 0.0
      %4042 = vmatprep.mubr.f32.mxu0 0.0
      %4043 = vmatmul.mubr.f32.gmra.mrb[0].mxu0 %v3830
      %v4044 = vpop.f32.mrb[0].mxu0
      %v4045 = vadd.f32 0.0, %v4044
      %v4046 = vpop.f32.mrb[0].mxu0
      %v4047 = vadd.f32 0.0, %v4046
      %4048 = vdwg.mxu0
      %4049 = vmatprep.subr.mxu0 %v3977
      %4050 = vmatpush1.msra.mxu0 %v3976
      %4051 = vmatprep.subr.mxu0 0.0
      %4052 = vmatpush1.msra.mxu0 0.0
      %4053 = vmatprep.subr.mxu0 0.0
      %4054 = vmatpush1.msra.mxu0 0.0
      %4055 = vmatprep.subr.mxu0 0.0
      %4056 = vmatpush1.msra.mxu0 0.0
      %4057 = vmatprep.subr.mxu0 0.0
      %4058 = vmatpush1.msra.mxu0 0.0
      %4059 = vmatprep.subr.mxu0 0.0
      %4060 = vmatpush1.msra.mxu0 0.0
      %4061 = vmatprep.subr.mxu0 0.0
      %4062 = vmatpush1.msra.mxu0 0.0
      %4063 = vmatprep.subr.mxu0 0.0
      %4064 = vmatpush1.msra.mxu0 0.0
      %4065 = vmatprep.subr.mxu0 0.0
      %4066 = vmatpush1.msra.mxu0 0.0
      %4067 = vmatprep.subr.mxu0 0.0
      %4068 = vmatpush1.msra.mxu0 0.0
      %4069 = vmatprep.subr.mxu0 0.0
      %4070 = vmatpush1.msra.mxu0 0.0
      %4071 = vmatprep.subr.mxu0 0.0
      %4072 = vmatpush1.msra.mxu0 0.0
      %4073 = vmatprep.subr.mxu0 0.0
      %4074 = vmatpush1.msra.mxu0 0.0
      %4075 = vmatprep.subr.mxu0 0.0
      %4076 = vmatpush1.msra.mxu0 0.0
      %4077 = vmatprep.subr.mxu0 0.0
      %4078 = vmatpush1.msra.mxu0 0.0
      %4079 = vmatprep.subr.mxu0 0.0
      %4080 = vmatpush1.msra.mxu0 0.0
      %4081 = vmatprep.subr.mxu0 0.0
      %4082 = vmatpush1.msra.mxu0 0.0
      %4083 = vmatprep.subr.mxu0 0.0
      %4084 = vmatpush1.msra.mxu0 0.0
      %4085 = vmatprep.subr.mxu0 0.0
      %4086 = vmatpush1.msra.mxu0 0.0
      %4087 = vmatprep.subr.mxu0 0.0
      %4088 = vmatpush1.msra.mxu0 0.0
      %4089 = vmatprep.subr.mxu0 0.0
      %4090 = vmatpush1.msra.mxu0 0.0
      %4091 = vmatprep.subr.mxu0 0.0
      %4092 = vmatpush1.msra.mxu0 0.0
      %4093 = vmatprep.subr.mxu0 0.0
      %4094 = vmatpush1.msra.mxu0 0.0
      %4095 = vmatprep.subr.mxu0 0.0
      %4096 = vmatpush1.msra.mxu0 0.0
      %4097 = vmatprep.subr.mxu0 0.0
      %4098 = vmatpush1.msra.mxu0 0.0
      %4099 = vmatprep.subr.mxu0 0.0
      %4100 = vmatpush1.msra.mxu0 0.0
      %4101 = vmatprep.subr.mxu0 0.0
      %4102 = vmatpush1.msra.mxu0 0.0
      %4103 = vmatprep.subr.mxu0 0.0
      %4104 = vmatpush1.msra.mxu0 0.0
      %4105 = vmatprep.subr.mxu0 0.0
      %4106 = vmatpush1.msra.mxu0 0.0
      %4107 = vmatprep.subr.mxu0 0.0
      %4108 = vmatpush1.msra.mxu0 0.0
      %4109 = vmatprep.subr.mxu0 0.0
      %4110 = vmatpush1.msra.mxu0 0.0
      %4111 = vmatprep.subr.mxu0 0.0
      %4112 = vmatpush1.msra.mxu0 0.0
      %4113 = vmatprep.mubr.f32.mxu0 0.0
      %4114 = vmatmul.mubr.f32.gmra.mrb[0].mxu0 %v3830
      %v4115 = vpop.f32.mrb[0].mxu0
      %v4116 = vadd.f32 0.0, %v4115
      %v4117 = vpop.f32.mrb[0].mxu0
      %v4118 = vadd.f32 0.0, %v4117
      %4119 = vdwg.mxu0
      %v4120 = vadd.f32 %v3899, %v3901
      %v4121 = vadd.f32 %v4120, %v3970
      %v4122 = vadd.f32 %v4121, %v3972
      %4123 = vadd.xlane.f32.xlu0 %v4122
      %v4124 = vpop.xlane.xlu0 %4123
      %v4125 = vadd.f32 %v4045, %v4047
      %v4126 = vadd.f32 %v4125, %v4116
      %v4127 = vadd.f32 %v4126, %v4118
      %4128 = vadd.xlane.f32.xlu0 %v4127
      %v4129 = vpop.xlane.xlu0 %4128
      %v4130 = vmul.f32 %v4124, %v4124
      %v4131 = vsub.f32 %v4129, %v4130
      %v4132 = vsub.f32 %v3824, %v4124
      %v4133 = vsub.f32 %v3825, %v4124
      %v4134 = vsub.f32 %v3826, %v4124
      %v4135 = vsub.f32 %v3827, %v4124
      %v4136 = vadd.f32 %v4131, 1e-05
      %v4137 = vrsqrt.pop %v4136
      %v4138 = vmul.f32 %v4132, %v4137
      %v4139 = vmul.f32 %v4133, %v4137
      %v4140 = vmul.f32 %v4134, %v4137
      %v4141 = vmul.f32 %v4135, %v4137
      %v4142 = vld [vmem:[%s8] sm:$0xff]
      %4144 = vset.pattern.permute.xlu0 0
      %4145 = vperm.xlu0 %4144, %v4142
      %v4146 = vpop.permute.xlu0 %4145
      %v4148 = vmul.f32 %v4138, %v4146
      %v4149 = vmul.f32 %v4139, %v4146
      %v4150 = vmul.f32 %v4140, %v4146
      %v4151 = vmul.f32 %v4141, %v4146
      %v4152 = vld [vmem:[%s9] sm:$0xff]
      %4154 = vset.pattern.permute.xlu0 0
      %4155 = vperm.xlu0 %4154, %v4152
      %v4156 = vpop.permute.xlu0 %4155
      %v4158 = vadd.f32 %v4148, %v4156
      %v4159 = vadd.f32 %v4149, %v4156
      %v4160 = vadd.f32 %v4150, %v4156
      %v4161 = vadd.f32 %v4151, %v4156
      %v4162 = vmax.f32 %v4158, 0.0
      %v4163 = vmax.f32 %v4159, 0.0
      %v4164 = vmax.f32 %v4160, 0.0
      %v4165 = vmax.f32 %v4161, 0.0
      %4166 = vst [vmem:[#allocation2] sm:$0xff] 0.0
      %4167 = vst [vmem:[#allocation2 + $0x28] sm:$0xff] 0.0
      %4168 = vst [vmem:[#allocation2 + $0x8] sm:$0xff] %v4162
      %4169 = vst [vmem:[#allocation2 + $0x10] sm:$0xff] %v4163
      %4170 = vst [vmem:[#allocation2 + $0x18] sm:$0xff] %v4164
      %4171 = vst [vmem:[#allocation2 + $0x20] sm:$0xff] %v4165
      %v4172 = vld [vmem:[#allocation2] sm:$0xff]
      %v4173 = vld [vmem:[#allocation2 + $0x8] sm:$0xff]
      %v4174 = vld [vmem:[#allocation2 + $0x10] sm:$0xff]
      %v4175 = vld [vmem:[#allocation2 + $0x18] sm:$0xff]
      %v4176 = vld [vmem:[#allocation2 + $0x20] sm:$0xff]
      %v4177 = vld [vmem:[%s2] ss:$8 sm:$0xf]
      %v4179 = vlaneseq
      %v4180 = vshrl.u32 %v4179, 7
      %v4181 = vsub.s32 0, %v4180
      %v4182 = vrot.slane %v4177, %v4181
      %v4183 = vlaneseq
      %v4184 = vshrl.u32 %v4183, 7
      %v4185 = vsub.s32 1, %v4184
      %v4186 = vrot.slane %v4177, %v4185
      %v4187 = vlaneseq
      %v4188 = vshrl.u32 %v4187, 7
      %v4189 = vsub.s32 2, %v4188
      %v4190 = vrot.slane %v4177, %v4189
      %v4191 = vlaneseq
      %v4192 = vshrl.u32 %v4191, 7
      %v4193 = vsub.s32 3, %v4192
      %v4194 = vrot.slane %v4177, %v4193
      %4195 = vrot.lane.b32.xlu0 %v4182, 55
      %v4196 = vpop.permute.xlu0 %4195
      %4197 = vrot.lane.b32.xlu0 %v4186, 55
      %v4198 = vpop.permute.xlu0 %4197
      %4199 = vrot.lane.b32.xlu0 %v4190, 55
      %v4200 = vpop.permute.xlu0 %4199
      %4201 = vrot.lane.b32.xlu0 %v4194, 55
      %v4202 = vpop.permute.xlu0 %4201
      %v4203 = vsel %vm963, %v4196, %v4198
      %v4204 = vsel %vm963, %v4198, %v4200
      %v4205 = vsel %vm963, %v4200, %v4202
      %v4211 = vmul.f32 %v4172, %v4196
      %v4212 = vmul.f32 %v4173, %v4203
      %v4213 = vmul.f32 %v4174, %v4204
      %v4214 = vmul.f32 %v4175, %v4205
      %v4215 = vmul.f32 %v4176, %v4202
      %v4216 = vpack.c.bf16 %v4211, %v4211
      %v4217 = vpack.c.bf16 %v4212, %v4212
      %v4218 = vpack.c.bf16 %v4213, %v4213
      %v4219 = vpack.c.bf16 %v4214, %v4214
      %v4220 = vpack.c.bf16 %v4215, %v4215
      %v4226 = vunpack.c.l.b16 %v4216
      %v4227 = vunpack.c.l.b16 %v4217
      %v4228 = vunpack.c.l.b16 %v4218
      %v4229 = vunpack.c.l.b16 %v4219
      %v4230 = vunpack.c.l.b16 %v4220
      %v4231 = vpack.c.b16 %v4227, %v4226
      %v4232 = vpack.c.b16 %v4229, %v4228
      %v4233 = vpack.c.b16 %v4230, %v4230
      %4234 = vrot.lane.b32.xlu0 %v4231, 73
      %v4235 = vpop.permute.xlu0 %4234
      %4236 = vrot.lane.b32.xlu0 %v4232, 73
      %v4237 = vpop.permute.xlu0 %4236
      %4238 = vrot.lane.b32.xlu0 %v4233, 73
      %v4239 = vpop.permute.xlu0 %4238
      %v4240 = vrot.slane %v4235, 4
      %v4241 = vrot.slane %v4237, 4
      %v4242 = vrot.slane %v4239, 4
      %v4243 = vsel %vm1004, %v4240, %v4241
      %v4244 = vsel %vm1006, %v4235, %v4243
      %v4245 = vsel %vm1004, %v4241, %v4242
      %v4246 = vsel %vm1006, %v4237, %v4245
      %4249 = vst [vmem:[#allocation4] sm:$0xff] %v4244
      %4250 = vst [vmem:[#allocation4 + $0x8] sm:$0xff] %v4246
      %v4251 = vld [vmem:[#allocation2] sm:$0xff]
      %v4252 = vld [vmem:[#allocation2 + $0x8] sm:$0xff]
      %v4253 = vld [vmem:[#allocation2 + $0x10] sm:$0xff]
      %v4254 = vld [vmem:[#allocation2 + $0x18] sm:$0xff]
      %v4255 = vld [vmem:[#allocation2 + $0x20] sm:$0xff]
      %v4256 = vld [vmem:[%s1019] ss:$8 sm:$0xf]
      %v4258 = vlaneseq
      %v4259 = vshrl.u32 %v4258, 7
      %v4260 = vsub.s32 0, %v4259
      %v4261 = vrot.slane %v4256, %v4260
      %v4262 = vlaneseq
      %v4263 = vshrl.u32 %v4262, 7
      %v4264 = vsub.s32 1, %v4263
      %v4265 = vrot.slane %v4256, %v4264
      %v4266 = vlaneseq
      %v4267 = vshrl.u32 %v4266, 7
      %v4268 = vsub.s32 2, %v4267
      %v4269 = vrot.slane %v4256, %v4268
      %v4270 = vlaneseq
      %v4271 = vshrl.u32 %v4270, 7
      %v4272 = vsub.s32 3, %v4271
      %v4273 = vrot.slane %v4256, %v4272
      %4274 = vrot.lane.b32.xlu0 %v4261, 56
      %v4275 = vpop.permute.xlu0 %4274
      %4276 = vrot.lane.b32.xlu0 %v4265, 56
      %v4277 = vpop.permute.xlu0 %4276
      %4278 = vrot.lane.b32.xlu0 %v4269, 56
      %v4279 = vpop.permute.xlu0 %4278
      %4280 = vrot.lane.b32.xlu0 %v4273, 56
      %v4281 = vpop.permute.xlu0 %4280
      %v4282 = vsel %vm1046, %v4275, %v4277
      %v4283 = vsel %vm1046, %v4277, %v4279
      %v4284 = vsel %vm1046, %v4279, %v4281
      %v4290 = vmul.f32 %v4251, %v4275
      %v4291 = vmul.f32 %v4252, %v4282
      %v4292 = vmul.f32 %v4253, %v4283
      %v4293 = vmul.f32 %v4254, %v4284
      %v4294 = vmul.f32 %v4255, %v4281
      %v4295 = vpack.c.bf16 %v4290, %v4290
      %v4296 = vpack.c.bf16 %v4291, %v4291
      %v4297 = vpack.c.bf16 %v4292, %v4292
      %v4298 = vpack.c.bf16 %v4293, %v4293
      %v4299 = vpack.c.bf16 %v4294, %v4294
      %v4305 = vunpack.c.l.b16 %v4295
      %v4306 = vunpack.c.l.b16 %v4296
      %v4307 = vunpack.c.l.b16 %v4297
      %v4308 = vunpack.c.l.b16 %v4298
      %v4309 = vunpack.c.l.b16 %v4299
      %v4310 = vpack.c.b16 %v4306, %v4305
      %v4311 = vpack.c.b16 %v4308, %v4307
      %v4312 = vpack.c.b16 %v4309, %v4309
      %4313 = vrot.lane.b32.xlu0 %v4310, 72
      %v4314 = vpop.permute.xlu0 %4313
      %4315 = vrot.lane.b32.xlu0 %v4311, 72
      %v4316 = vpop.permute.xlu0 %4315
      %4317 = vrot.lane.b32.xlu0 %v4312, 72
      %v4318 = vpop.permute.xlu0 %4317
      %v4319 = vrot.slane %v4314, 4
      %v4320 = vrot.slane %v4316, 4
      %v4321 = vrot.slane %v4318, 4
      %v4322 = vsel %vm1004, %v4319, %v4320
      %v4323 = vsel %vm1088, %v4314, %v4322
      %v4324 = vsel %vm1004, %v4320, %v4321
      %v4325 = vsel %vm1088, %v4316, %v4324
      %4328 = vst [vmem:[#allocation4 + $0x10] sm:$0xff] %v4323
      %4329 = vst [vmem:[#allocation4 + $0x18] sm:$0xff] %v4325
      %v4330 = vld [vmem:[#allocation2] sm:$0xff]
      %v4331 = vld [vmem:[#allocation2 + $0x8] sm:$0xff]
      %v4332 = vld [vmem:[#allocation2 + $0x10] sm:$0xff]
      %v4333 = vld [vmem:[#allocation2 + $0x18] sm:$0xff]
      %v4334 = vld [vmem:[#allocation2 + $0x20] sm:$0xff]
      %v4335 = vld [vmem:[%s1101] ss:$8 sm:$0xf]
      %v4337 = vlaneseq
      %v4338 = vshrl.u32 %v4337, 7
      %v4339 = vsub.s32 0, %v4338
      %v4340 = vrot.slane %v4335, %v4339
      %v4341 = vlaneseq
      %v4342 = vshrl.u32 %v4341, 7
      %v4343 = vsub.s32 1, %v4342
      %v4344 = vrot.slane %v4335, %v4343
      %v4345 = vlaneseq
      %v4346 = vshrl.u32 %v4345, 7
      %v4347 = vsub.s32 2, %v4346
      %v4348 = vrot.slane %v4335, %v4347
      %v4349 = vlaneseq
      %v4350 = vshrl.u32 %v4349, 7
      %v4351 = vsub.s32 3, %v4350
      %v4352 = vrot.slane %v4335, %v4351
      %4353 = vrot.lane.b32.xlu0 %v4340, 57
      %v4354 = vpop.permute.xlu0 %4353
      %4355 = vrot.lane.b32.xlu0 %v4344, 57
      %v4356 = vpop.permute.xlu0 %4355
      %4357 = vrot.lane.b32.xlu0 %v4348, 57
      %v4358 = vpop.permute.xlu0 %4357
      %4359 = vrot.lane.b32.xlu0 %v4352, 57
      %v4360 = vpop.permute.xlu0 %4359
      %v4361 = vsel %vm1128, %v4354, %v4356
      %v4362 = vsel %vm1128, %v4356, %v4358
      %v4363 = vsel %vm1128, %v4358, %v4360
      %v4369 = vmul.f32 %v4330, %v4354
      %v4370 = vmul.f32 %v4331, %v4361
      %v4371 = vmul.f32 %v4332, %v4362
      %v4372 = vmul.f32 %v4333, %v4363
      %v4373 = vmul.f32 %v4334, %v4360
      %v4374 = vpack.c.bf16 %v4369, %v4369
      %v4375 = vpack.c.bf16 %v4370, %v4370
      %v4376 = vpack.c.bf16 %v4371, %v4371
      %v4377 = vpack.c.bf16 %v4372, %v4372
      %v4378 = vpack.c.bf16 %v4373, %v4373
      %v4384 = vunpack.c.l.b16 %v4374
      %v4385 = vunpack.c.l.b16 %v4375
      %v4386 = vunpack.c.l.b16 %v4376
      %v4387 = vunpack.c.l.b16 %v4377
      %v4388 = vunpack.c.l.b16 %v4378
      %v4389 = vpack.c.b16 %v4385, %v4384
      %v4390 = vpack.c.b16 %v4387, %v4386
      %v4391 = vpack.c.b16 %v4388, %v4388
      %4392 = vrot.lane.b32.xlu0 %v4389, 71
      %v4393 = vpop.permute.xlu0 %4392
      %4394 = vrot.lane.b32.xlu0 %v4390, 71
      %v4395 = vpop.permute.xlu0 %4394
      %4396 = vrot.lane.b32.xlu0 %v4391, 71
      %v4397 = vpop.permute.xlu0 %4396
      %v4398 = vrot.slane %v4393, 4
      %v4399 = vrot.slane %v4395, 4
      %v4400 = vrot.slane %v4397, 4
      %v4401 = vsel %vm1004, %v4398, %v4399
      %v4402 = vsel %vm1170, %v4393, %v4401
      %v4403 = vsel %vm1004, %v4399, %v4400
      %v4404 = vsel %vm1170, %v4395, %v4403
      %4407 = vst [vmem:[#allocation4 + $0x20] sm:$0xff] %v4402
      %4408 = vst [vmem:[#allocation4 + $0x28] sm:$0xff] %v4404
      %v4409 = vld [vmem:[#allocation2] sm:$0xff]
      %v4410 = vld [vmem:[#allocation2 + $0x8] sm:$0xff]
      %v4411 = vld [vmem:[#allocation2 + $0x10] sm:$0xff]
      %v4412 = vld [vmem:[#allocation2 + $0x18] sm:$0xff]
      %v4413 = vld [vmem:[#allocation2 + $0x20] sm:$0xff]
      %v4414 = vld [vmem:[%s1183] ss:$8 sm:$0xf]
      %v4416 = vlaneseq
      %v4417 = vshrl.u32 %v4416, 7
      %v4418 = vsub.s32 0, %v4417
      %v4419 = vrot.slane %v4414, %v4418
      %v4420 = vlaneseq
      %v4421 = vshrl.u32 %v4420, 7
      %v4422 = vsub.s32 1, %v4421
      %v4423 = vrot.slane %v4414, %v4422
      %v4424 = vlaneseq
      %v4425 = vshrl.u32 %v4424, 7
      %v4426 = vsub.s32 2, %v4425
      %v4427 = vrot.slane %v4414, %v4426
      %v4428 = vlaneseq
      %v4429 = vshrl.u32 %v4428, 7
      %v4430 = vsub.s32 3, %v4429
      %v4431 = vrot.slane %v4414, %v4430
      %4432 = vrot.lane.b32.xlu0 %v4419, 63
      %v4433 = vpop.permute.xlu0 %4432
      %4434 = vrot.lane.b32.xlu0 %v4423, 63
      %v4435 = vpop.permute.xlu0 %4434
      %4436 = vrot.lane.b32.xlu0 %v4427, 63
      %v4437 = vpop.permute.xlu0 %4436
      %4438 = vrot.lane.b32.xlu0 %v4431, 63
      %v4439 = vpop.permute.xlu0 %4438
      %v4440 = vsel %vm1210, %v4433, %v4435
      %v4441 = vsel %vm1210, %v4435, %v4437
      %v4442 = vsel %vm1210, %v4437, %v4439
      %v4448 = vmul.f32 %v4409, %v4433
      %v4449 = vmul.f32 %v4410, %v4440
      %v4450 = vmul.f32 %v4411, %v4441
      %v4451 = vmul.f32 %v4412, %v4442
      %v4452 = vmul.f32 %v4413, %v4439
      %v4453 = vpack.c.bf16 %v4448, %v4448
      %v4454 = vpack.c.bf16 %v4449, %v4449
      %v4455 = vpack.c.bf16 %v4450, %v4450
      %v4456 = vpack.c.bf16 %v4451, %v4451
      %v4457 = vpack.c.bf16 %v4452, %v4452
      %v4463 = vunpack.c.l.b16 %v4453
      %v4464 = vunpack.c.l.b16 %v4454
      %v4465 = vunpack.c.l.b16 %v4455
      %v4466 = vunpack.c.l.b16 %v4456
      %v4467 = vunpack.c.l.b16 %v4457
      %v4468 = vpack.c.b16 %v4464, %v4463
      %v4469 = vpack.c.b16 %v4466, %v4465
      %v4470 = vpack.c.b16 %v4467, %v4467
      %4471 = vrot.lane.b32.xlu0 %v4468, 65
      %v4472 = vpop.permute.xlu0 %4471
      %4473 = vrot.lane.b32.xlu0 %v4469, 65
      %v4474 = vpop.permute.xlu0 %4473
      %4475 = vrot.lane.b32.xlu0 %v4470, 65
      %v4476 = vpop.permute.xlu0 %4475
      %v4477 = vrot.slane %v4472, 4
      %v4478 = vrot.slane %v4474, 4
      %v4479 = vrot.slane %v4476, 4
      %v4480 = vsel %vm1004, %v4477, %v4478
      %v4481 = vsel %vm1252, %v4472, %v4480
      %v4482 = vsel %vm1004, %v4478, %v4479
      %v4483 = vsel %vm1252, %v4474, %v4482
      %4486 = vst [vmem:[#allocation4 + $0x30] sm:$0xff] %v4481
      %4487 = vst [vmem:[#allocation4 + $0x38] sm:$0xff] %v4483
      %v4488 = vld [vmem:[#allocation2] sm:$0xff]
      %v4489 = vld [vmem:[#allocation2 + $0x8] sm:$0xff]
      %v4490 = vld [vmem:[#allocation2 + $0x10] sm:$0xff]
      %v4491 = vld [vmem:[#allocation2 + $0x18] sm:$0xff]
      %v4492 = vld [vmem:[#allocation2 + $0x20] sm:$0xff]
      %v4493 = vld [vmem:[%s1265] ss:$8 sm:$0xf]
      %v4495 = vlaneseq
      %v4496 = vshrl.u32 %v4495, 7
      %v4497 = vsub.s32 0, %v4496
      %v4498 = vrot.slane %v4493, %v4497
      %v4499 = vlaneseq
      %v4500 = vshrl.u32 %v4499, 7
      %v4501 = vsub.s32 1, %v4500
      %v4502 = vrot.slane %v4493, %v4501
      %v4503 = vlaneseq
      %v4504 = vshrl.u32 %v4503, 7
      %v4505 = vsub.s32 2, %v4504
      %v4506 = vrot.slane %v4493, %v4505
      %v4507 = vlaneseq
      %v4508 = vshrl.u32 %v4507, 7
      %v4509 = vsub.s32 3, %v4508
      %v4510 = vrot.slane %v4493, %v4509
      %4511 = vrot.lane.b32.xlu0 %v4498, 64
      %v4512 = vpop.permute.xlu0 %4511
      %4513 = vrot.lane.b32.xlu0 %v4502, 64
      %v4514 = vpop.permute.xlu0 %4513
      %4515 = vrot.lane.b32.xlu0 %v4506, 64
      %v4516 = vpop.permute.xlu0 %4515
      %4517 = vrot.lane.b32.xlu0 %v4510, 64
      %v4518 = vpop.permute.xlu0 %4517
      %v4519 = vsel %vm1292, %v4512, %v4514
      %v4520 = vsel %vm1292, %v4514, %v4516
      %v4521 = vsel %vm1292, %v4516, %v4518
      %v4527 = vmul.f32 %v4488, %v4512
      %v4528 = vmul.f32 %v4489, %v4519
      %v4529 = vmul.f32 %v4490, %v4520
      %v4530 = vmul.f32 %v4491, %v4521
      %v4531 = vmul.f32 %v4492, %v4518
      %v4532 = vpack.c.bf16 %v4527, %v4527
      %v4533 = vpack.c.bf16 %v4528, %v4528
      %v4534 = vpack.c.bf16 %v4529, %v4529
      %v4535 = vpack.c.bf16 %v4530, %v4530
      %v4536 = vpack.c.bf16 %v4531, %v4531
      %v4542 = vunpack.c.l.b16 %v4532
      %v4543 = vunpack.c.l.b16 %v4533
      %v4544 = vunpack.c.l.b16 %v4534
      %v4545 = vunpack.c.l.b16 %v4535
      %v4546 = vunpack.c.l.b16 %v4536
      %v4547 = vpack.c.b16 %v4543, %v4542
      %v4548 = vpack.c.b16 %v4545, %v4544
      %v4549 = vpack.c.b16 %v4546, %v4546
      %4550 = vrot.lane.b32.xlu0 %v4547, 64
      %v4551 = vpop.permute.xlu0 %4550
      %4552 = vrot.lane.b32.xlu0 %v4548, 64
      %v4553 = vpop.permute.xlu0 %4552
      %4554 = vrot.lane.b32.xlu0 %v4549, 64
      %v4555 = vpop.permute.xlu0 %4554
      %v4556 = vrot.slane %v4551, 4
      %v4557 = vrot.slane %v4553, 4
      %v4558 = vrot.slane %v4555, 4
      %v4559 = vsel %vm1004, %v4556, %v4557
      %v4560 = vsel %vm1334, %v4551, %v4559
      %v4561 = vsel %vm1004, %v4557, %v4558
      %v4562 = vsel %vm1334, %v4553, %v4561
      %4565 = vst [vmem:[#allocation4 + $0x40] sm:$0xff] %v4560
      %4566 = vst [vmem:[#allocation4 + $0x48] sm:$0xff] %v4562
      %v4567 = vld [vmem:[#allocation2] sm:$0xff]
      %v4568 = vld [vmem:[#allocation2 + $0x8] sm:$0xff]
      %v4569 = vld [vmem:[#allocation2 + $0x10] sm:$0xff]
      %v4570 = vld [vmem:[#allocation2 + $0x18] sm:$0xff]
      %v4571 = vld [vmem:[#allocation2 + $0x20] sm:$0xff]
      %v4572 = vld [vmem:[%s1347] ss:$8 sm:$0xf]
      %v4574 = vlaneseq
      %v4575 = vshrl.u32 %v4574, 7
      %v4576 = vsub.s32 0, %v4575
      %v4577 = vrot.slane %v4572, %v4576
      %v4578 = vlaneseq
      %v4579 = vshrl.u32 %v4578, 7
      %v4580 = vsub.s32 1, %v4579
      %v4581 = vrot.slane %v4572, %v4580
      %v4582 = vlaneseq
      %v4583 = vshrl.u32 %v4582, 7
      %v4584 = vsub.s32 2, %v4583
      %v4585 = vrot.slane %v4572, %v4584
      %v4586 = vlaneseq
      %v4587 = vshrl.u32 %v4586, 7
      %v4588 = vsub.s32 3, %v4587
      %v4589 = vrot.slane %v4572, %v4588
      %4590 = vrot.lane.b32.xlu0 %v4577, 65
      %v4591 = vpop.permute.xlu0 %4590
      %4592 = vrot.lane.b32.xlu0 %v4581, 65
      %v4593 = vpop.permute.xlu0 %4592
      %4594 = vrot.lane.b32.xlu0 %v4585, 65
      %v4595 = vpop.permute.xlu0 %4594
      %4596 = vrot.lane.b32.xlu0 %v4589, 65
      %v4597 = vpop.permute.xlu0 %4596
      %v4598 = vsel %vm1374, %v4591, %v4593
      %v4599 = vsel %vm1374, %v4593, %v4595
      %v4600 = vsel %vm1374, %v4595, %v4597
      %v4606 = vmul.f32 %v4567, %v4591
      %v4607 = vmul.f32 %v4568, %v4598
      %v4608 = vmul.f32 %v4569, %v4599
      %v4609 = vmul.f32 %v4570, %v4600
      %v4610 = vmul.f32 %v4571, %v4597
      %v4611 = vpack.c.bf16 %v4606, %v4606
      %v4612 = vpack.c.bf16 %v4607, %v4607
      %v4613 = vpack.c.bf16 %v4608, %v4608
      %v4614 = vpack.c.bf16 %v4609, %v4609
      %v4615 = vpack.c.bf16 %v4610, %v4610
      %v4621 = vunpack.c.l.b16 %v4611
      %v4622 = vunpack.c.l.b16 %v4612
      %v4623 = vunpack.c.l.b16 %v4613
      %v4624 = vunpack.c.l.b16 %v4614
      %v4625 = vunpack.c.l.b16 %v4615
      %v4626 = vpack.c.b16 %v4622, %v4621
      %v4627 = vpack.c.b16 %v4624, %v4623
      %v4628 = vpack.c.b16 %v4625, %v4625
      %4629 = vrot.lane.b32.xlu0 %v4626, 63
      %v4630 = vpop.permute.xlu0 %4629
      %4631 = vrot.lane.b32.xlu0 %v4627, 63
      %v4632 = vpop.permute.xlu0 %4631
      %4633 = vrot.lane.b32.xlu0 %v4628, 63
      %v4634 = vpop.permute.xlu0 %4633
      %v4635 = vrot.slane %v4630, 4
      %v4636 = vrot.slane %v4632, 4
      %v4637 = vrot.slane %v4634, 4
      %v4638 = vsel %vm1004, %v4635, %v4636
      %v4639 = vsel %vm1416, %v4630, %v4638
      %v4640 = vsel %vm1004, %v4636, %v4637
      %v4641 = vsel %vm1416, %v4632, %v4640
      %4644 = vst [vmem:[#allocation4 + $0x50] sm:$0xff] %v4639
      %4645 = vst [vmem:[#allocation4 + $0x58] sm:$0xff] %v4641
      %v4646 = vld [vmem:[#allocation2] sm:$0xff]
      %v4647 = vld [vmem:[#allocation2 + $0x8] sm:$0xff]
      %v4648 = vld [vmem:[#allocation2 + $0x10] sm:$0xff]
      %v4649 = vld [vmem:[#allocation2 + $0x18] sm:$0xff]
      %v4650 = vld [vmem:[#allocation2 + $0x20] sm:$0xff]
      %v4651 = vld [vmem:[%s1429] ss:$8 sm:$0xf]
      %v4653 = vlaneseq
      %v4654 = vshrl.u32 %v4653, 7
      %v4655 = vsub.s32 0, %v4654
      %v4656 = vrot.slane %v4651, %v4655
      %v4657 = vlaneseq
      %v4658 = vshrl.u32 %v4657, 7
      %v4659 = vsub.s32 1, %v4658
      %v4660 = vrot.slane %v4651, %v4659
      %v4661 = vlaneseq
      %v4662 = vshrl.u32 %v4661, 7
      %v4663 = vsub.s32 2, %v4662
      %v4664 = vrot.slane %v4651, %v4663
      %v4665 = vlaneseq
      %v4666 = vshrl.u32 %v4665, 7
      %v4667 = vsub.s32 3, %v4666
      %v4668 = vrot.slane %v4651, %v4667
      %4669 = vrot.lane.b32.xlu0 %v4656, 71
      %v4670 = vpop.permute.xlu0 %4669
      %4671 = vrot.lane.b32.xlu0 %v4660, 71
      %v4672 = vpop.permute.xlu0 %4671
      %4673 = vrot.lane.b32.xlu0 %v4664, 71
      %v4674 = vpop.permute.xlu0 %4673
      %4675 = vrot.lane.b32.xlu0 %v4668, 71
      %v4676 = vpop.permute.xlu0 %4675
      %v4677 = vsel %vm1456, %v4670, %v4672
      %v4678 = vsel %vm1456, %v4672, %v4674
      %v4679 = vsel %vm1456, %v4674, %v4676
      %v4685 = vmul.f32 %v4646, %v4670
      %v4686 = vmul.f32 %v4647, %v4677
      %v4687 = vmul.f32 %v4648, %v4678
      %v4688 = vmul.f32 %v4649, %v4679
      %v4689 = vmul.f32 %v4650, %v4676
      %v4690 = vpack.c.bf16 %v4685, %v4685
      %v4691 = vpack.c.bf16 %v4686, %v4686
      %v4692 = vpack.c.bf16 %v4687, %v4687
      %v4693 = vpack.c.bf16 %v4688, %v4688
      %v4694 = vpack.c.bf16 %v4689, %v4689
      %v4700 = vunpack.c.l.b16 %v4690
      %v4701 = vunpack.c.l.b16 %v4691
      %v4702 = vunpack.c.l.b16 %v4692
      %v4703 = vunpack.c.l.b16 %v4693
      %v4704 = vunpack.c.l.b16 %v4694
      %v4705 = vpack.c.b16 %v4701, %v4700
      %v4706 = vpack.c.b16 %v4703, %v4702
      %v4707 = vpack.c.b16 %v4704, %v4704
      %4708 = vrot.lane.b32.xlu0 %v4705, 57
      %v4709 = vpop.permute.xlu0 %4708
      %4710 = vrot.lane.b32.xlu0 %v4706, 57
      %v4711 = vpop.permute.xlu0 %4710
      %4712 = vrot.lane.b32.xlu0 %v4707, 57
      %v4713 = vpop.permute.xlu0 %4712
      %v4714 = vrot.slane %v4709, 4
      %v4715 = vrot.slane %v4711, 4
      %v4716 = vrot.slane %v4713, 4
      %v4717 = vsel %vm1004, %v4714, %v4715
      %v4718 = vsel %vm1498, %v4709, %v4717
      %v4719 = vsel %vm1004, %v4715, %v4716
      %v4720 = vsel %vm1498, %v4711, %v4719
      %4723 = vst [vmem:[#allocation4 + $0x60] sm:$0xff] %v4718
      %4724 = vst [vmem:[#allocation4 + $0x68] sm:$0xff] %v4720
      %v4725 = vld [vmem:[#allocation2] sm:$0xff]
      %v4726 = vld [vmem:[#allocation2 + $0x8] sm:$0xff]
      %v4727 = vld [vmem:[#allocation2 + $0x10] sm:$0xff]
      %v4728 = vld [vmem:[#allocation2 + $0x18] sm:$0xff]
      %v4729 = vld [vmem:[#allocation2 + $0x20] sm:$0xff]
      %v4730 = vld [vmem:[%s1511] ss:$8 sm:$0xf]
      %v4732 = vlaneseq
      %v4733 = vshrl.u32 %v4732, 7
      %v4734 = vsub.s32 0, %v4733
      %v4735 = vrot.slane %v4730, %v4734
      %v4736 = vlaneseq
      %v4737 = vshrl.u32 %v4736, 7
      %v4738 = vsub.s32 1, %v4737
      %v4739 = vrot.slane %v4730, %v4738
      %v4740 = vlaneseq
      %v4741 = vshrl.u32 %v4740, 7
      %v4742 = vsub.s32 2, %v4741
      %v4743 = vrot.slane %v4730, %v4742
      %v4744 = vlaneseq
      %v4745 = vshrl.u32 %v4744, 7
      %v4746 = vsub.s32 3, %v4745
      %v4747 = vrot.slane %v4730, %v4746
      %4748 = vrot.lane.b32.xlu0 %v4735, 72
      %v4749 = vpop.permute.xlu0 %4748
      %4750 = vrot.lane.b32.xlu0 %v4739, 72
      %v4751 = vpop.permute.xlu0 %4750
      %4752 = vrot.lane.b32.xlu0 %v4743, 72
      %v4753 = vpop.permute.xlu0 %4752
      %4754 = vrot.lane.b32.xlu0 %v4747, 72
      %v4755 = vpop.permute.xlu0 %4754
      %v4756 = vsel %vm1538, %v4749, %v4751
      %v4757 = vsel %vm1538, %v4751, %v4753
      %v4758 = vsel %vm1538, %v4753, %v4755
      %v4764 = vmul.f32 %v4725, %v4749
      %v4765 = vmul.f32 %v4726, %v4756
      %v4766 = vmul.f32 %v4727, %v4757
      %v4767 = vmul.f32 %v4728, %v4758
      %v4768 = vmul.f32 %v4729, %v4755
      %v4769 = vpack.c.bf16 %v4764, %v4764
      %v4770 = vpack.c.bf16 %v4765, %v4765
      %v4771 = vpack.c.bf16 %v4766, %v4766
      %v4772 = vpack.c.bf16 %v4767, %v4767
      %v4773 = vpack.c.bf16 %v4768, %v4768
      %v4779 = vunpack.c.l.b16 %v4769
      %v4780 = vunpack.c.l.b16 %v4770
      %v4781 = vunpack.c.l.b16 %v4771
      %v4782 = vunpack.c.l.b16 %v4772
      %v4783 = vunpack.c.l.b16 %v4773
      %v4784 = vpack.c.b16 %v4780, %v4779
      %v4785 = vpack.c.b16 %v4782, %v4781
      %v4786 = vpack.c.b16 %v4783, %v4783
      %4787 = vrot.lane.b32.xlu0 %v4784, 56
      %v4788 = vpop.permute.xlu0 %4787
      %4789 = vrot.lane.b32.xlu0 %v4785, 56
      %v4790 = vpop.permute.xlu0 %4789
      %4791 = vrot.lane.b32.xlu0 %v4786, 56
      %v4792 = vpop.permute.xlu0 %4791
      %v4793 = vrot.slane %v4788, 4
      %v4794 = vrot.slane %v4790, 4
      %v4795 = vrot.slane %v4792, 4
      %v4796 = vsel %vm1004, %v4793, %v4794
      %v4797 = vsel %vm1580, %v4788, %v4796
      %v4798 = vsel %vm1004, %v4794, %v4795
      %v4799 = vsel %vm1580, %v4790, %v4798
      %4802 = vst [vmem:[#allocation4 + $0x70] sm:$0xff] %v4797
      %4803 = vst [vmem:[#allocation4 + $0x78] sm:$0xff] %v4799
      %v4804 = vld [vmem:[#allocation2] sm:$0xff]
      %v4805 = vld [vmem:[#allocation2 + $0x8] sm:$0xff]
      %v4806 = vld [vmem:[#allocation2 + $0x10] sm:$0xff]
      %v4807 = vld [vmem:[#allocation2 + $0x18] sm:$0xff]
      %v4808 = vld [vmem:[#allocation2 + $0x20] sm:$0xff]
      %v4809 = vld [vmem:[%s1593] ss:$8 sm:$0xf]
      %v4811 = vlaneseq
      %v4812 = vshrl.u32 %v4811, 7
      %v4813 = vsub.s32 0, %v4812
      %v4814 = vrot.slane %v4809, %v4813
      %v4815 = vlaneseq
      %v4816 = vshrl.u32 %v4815, 7
      %v4817 = vsub.s32 1, %v4816
      %v4818 = vrot.slane %v4809, %v4817
      %v4819 = vlaneseq
      %v4820 = vshrl.u32 %v4819, 7
      %v4821 = vsub.s32 2, %v4820
      %v4822 = vrot.slane %v4809, %v4821
      %v4823 = vlaneseq
      %v4824 = vshrl.u32 %v4823, 7
      %v4825 = vsub.s32 3, %v4824
      %v4826 = vrot.slane %v4809, %v4825
      %4827 = vrot.lane.b32.xlu0 %v4814, 73
      %v4828 = vpop.permute.xlu0 %4827
      %4829 = vrot.lane.b32.xlu0 %v4818, 73
      %v4830 = vpop.permute.xlu0 %4829
      %4831 = vrot.lane.b32.xlu0 %v4822, 73
      %v4832 = vpop.permute.xlu0 %4831
      %4833 = vrot.lane.b32.xlu0 %v4826, 73
      %v4834 = vpop.permute.xlu0 %4833
      %v4835 = vsel %vm1620, %v4828, %v4830
      %v4836 = vsel %vm1620, %v4830, %v4832
      %v4837 = vsel %vm1620, %v4832, %v4834
      %v4843 = vmul.f32 %v4804, %v4828
      %v4844 = vmul.f32 %v4805, %v4835
      %v4845 = vmul.f32 %v4806, %v4836
      %v4846 = vmul.f32 %v4807, %v4837
      %v4847 = vmul.f32 %v4808, %v4834
      %v4848 = vpack.c.bf16 %v4843, %v4843
      %v4849 = vpack.c.bf16 %v4844, %v4844
      %v4850 = vpack.c.bf16 %v4845, %v4845
      %v4851 = vpack.c.bf16 %v4846, %v4846
      %v4852 = vpack.c.bf16 %v4847, %v4847
      %v4858 = vunpack.c.l.b16 %v4848
      %v4859 = vunpack.c.l.b16 %v4849
      %v4860 = vunpack.c.l.b16 %v4850
      %v4861 = vunpack.c.l.b16 %v4851
      %v4862 = vunpack.c.l.b16 %v4852
      %v4863 = vpack.c.b16 %v4859, %v4858
      %v4864 = vpack.c.b16 %v4861, %v4860
      %v4865 = vpack.c.b16 %v4862, %v4862
      %4866 = vrot.lane.b32.xlu0 %v4863, 55
      %v4867 = vpop.permute.xlu0 %4866
      %4868 = vrot.lane.b32.xlu0 %v4864, 55
      %v4869 = vpop.permute.xlu0 %4868
      %4870 = vrot.lane.b32.xlu0 %v4865, 55
      %v4871 = vpop.permute.xlu0 %4870
      %v4872 = vrot.slane %v4867, 4
      %v4873 = vrot.slane %v4869, 4
      %v4874 = vrot.slane %v4871, 4
      %v4875 = vsel %vm1004, %v4872, %v4873
      %v4876 = vsel %vm1662, %v4867, %v4875
      %v4877 = vsel %vm1004, %v4873, %v4874
      %v4878 = vsel %vm1662, %v4869, %v4877
      %4881 = vst [vmem:[#allocation4 + $0x80] sm:$0xff] %v4876
      %4882 = vst [vmem:[#allocation4 + $0x88] sm:$0xff] %v4878
      %v4883 = vld [vmem:[#allocation2] sm:$0xff]
      %v4884 = vld [vmem:[#allocation2 + $0x8] sm:$0xff]
      %v4885 = vld [vmem:[#allocation2 + $0x10] sm:$0xff]
      %v4886 = vld [vmem:[#allocation2 + $0x18] sm:$0xff]
      %v4887 = vld [vmem:[#allocation2 + $0x20] sm:$0xff]
      %v4888 = vld [vmem:[%s1675] ss:$8 sm:$0xf]
      %v4890 = vlaneseq
      %v4891 = vshrl.u32 %v4890, 7
      %v4892 = vsub.s32 0, %v4891
      %v4893 = vrot.slane %v4888, %v4892
      %v4894 = vlaneseq
      %v4895 = vshrl.u32 %v4894, 7
      %v4896 = vsub.s32 1, %v4895
      %v4897 = vrot.slane %v4888, %v4896
      %v4898 = vlaneseq
      %v4899 = vshrl.u32 %v4898, 7
      %v4900 = vsub.s32 2, %v4899
      %v4901 = vrot.slane %v4888, %v4900
      %v4902 = vlaneseq
      %v4903 = vshrl.u32 %v4902, 7
      %v4904 = vsub.s32 3, %v4903
      %v4905 = vrot.slane %v4888, %v4904
      %4906 = vrot.lane.b32.xlu0 %v4893, 119
      %v4907 = vpop.permute.xlu0 %4906
      %4908 = vrot.lane.b32.xlu0 %v4897, 119
      %v4909 = vpop.permute.xlu0 %4908
      %4910 = vrot.lane.b32.xlu0 %v4901, 119
      %v4911 = vpop.permute.xlu0 %4910
      %4912 = vrot.lane.b32.xlu0 %v4905, 119
      %v4913 = vpop.permute.xlu0 %4912
      %v4914 = vsel %vm1702, %v4907, %v4909
      %v4915 = vsel %vm1702, %v4909, %v4911
      %v4916 = vsel %vm1702, %v4911, %v4913
      %v4922 = vmul.f32 %v4883, %v4907
      %v4923 = vmul.f32 %v4884, %v4914
      %v4924 = vmul.f32 %v4885, %v4915
      %v4925 = vmul.f32 %v4886, %v4916
      %v4926 = vmul.f32 %v4887, %v4913
      %v4927 = vpack.c.bf16 %v4922, %v4922
      %v4928 = vpack.c.bf16 %v4923, %v4923
      %v4929 = vpack.c.bf16 %v4924, %v4924
      %v4930 = vpack.c.bf16 %v4925, %v4925
      %v4931 = vpack.c.bf16 %v4926, %v4926
      %v4937 = vunpack.c.l.b16 %v4927
      %v4938 = vunpack.c.l.b16 %v4928
      %v4939 = vunpack.c.l.b16 %v4929
      %v4940 = vunpack.c.l.b16 %v4930
      %v4941 = vunpack.c.l.b16 %v4931
      %v4942 = vpack.c.b16 %v4938, %v4937
      %v4943 = vpack.c.b16 %v4940, %v4939
      %v4944 = vpack.c.b16 %v4941, %v4941
      %4945 = vrot.lane.b32.xlu0 %v4942, 9
      %v4946 = vpop.permute.xlu0 %4945
      %4947 = vrot.lane.b32.xlu0 %v4943, 9
      %v4948 = vpop.permute.xlu0 %4947
      %4949 = vrot.lane.b32.xlu0 %v4944, 9
      %v4950 = vpop.permute.xlu0 %4949
      %v4951 = vrot.slane %v4946, 4
      %v4952 = vrot.slane %v4948, 4
      %v4953 = vrot.slane %v4950, 4
      %v4954 = vsel %vm1004, %v4951, %v4952
      %v4955 = vsel %vm1744, %v4946, %v4954
      %v4956 = vsel %vm1004, %v4952, %v4953
      %v4957 = vsel %vm1744, %v4948, %v4956
      %4960 = vst [vmem:[#allocation4 + $0x90] sm:$0xff] %v4955
      %4961 = vst [vmem:[#allocation4 + $0x98] sm:$0xff] %v4957
      %v4962 = vld [vmem:[#allocation2] sm:$0xff]
      %v4963 = vld [vmem:[#allocation2 + $0x8] sm:$0xff]
      %v4964 = vld [vmem:[#allocation2 + $0x10] sm:$0xff]
      %v4965 = vld [vmem:[#allocation2 + $0x18] sm:$0xff]
      %v4966 = vld [vmem:[#allocation2 + $0x20] sm:$0xff]
      %v4967 = vld [vmem:[%s1757] ss:$8 sm:$0xf]
      %v4969 = vlaneseq
      %v4970 = vshrl.u32 %v4969, 7
      %v4971 = vsub.s32 0, %v4970
      %v4972 = vrot.slane %v4967, %v4971
      %v4973 = vlaneseq
      %v4974 = vshrl.u32 %v4973, 7
      %v4975 = vsub.s32 1, %v4974
      %v4976 = vrot.slane %v4967, %v4975
      %v4977 = vlaneseq
      %v4978 = vshrl.u32 %v4977, 7
      %v4979 = vsub.s32 2, %v4978
      %v4980 = vrot.slane %v4967, %v4979
      %v4981 = vlaneseq
      %v4982 = vshrl.u32 %v4981, 7
      %v4983 = vsub.s32 3, %v4982
      %v4984 = vrot.slane %v4967, %v4983
      %4985 = vrot.lane.b32.xlu0 %v4972, 120
      %v4986 = vpop.permute.xlu0 %4985
      %4987 = vrot.lane.b32.xlu0 %v4976, 120
      %v4988 = vpop.permute.xlu0 %4987
      %4989 = vrot.lane.b32.xlu0 %v4980, 120
      %v4990 = vpop.permute.xlu0 %4989
      %4991 = vrot.lane.b32.xlu0 %v4984, 120
      %v4992 = vpop.permute.xlu0 %4991
      %v4993 = vsel %vm1784, %v4986, %v4988
      %v4994 = vsel %vm1784, %v4988, %v4990
      %v4995 = vsel %vm1784, %v4990, %v4992
      %v5001 = vmul.f32 %v4962, %v4986
      %v5002 = vmul.f32 %v4963, %v4993
      %v5003 = vmul.f32 %v4964, %v4994
      %v5004 = vmul.f32 %v4965, %v4995
      %v5005 = vmul.f32 %v4966, %v4992
      %v5006 = vpack.c.bf16 %v5001, %v5001
      %v5007 = vpack.c.bf16 %v5002, %v5002
      %v5008 = vpack.c.bf16 %v5003, %v5003
      %v5009 = vpack.c.bf16 %v5004, %v5004
      %v5010 = vpack.c.bf16 %v5005, %v5005
      %v5016 = vunpack.c.l.b16 %v5006
      %v5017 = vunpack.c.l.b16 %v5007
      %v5018 = vunpack.c.l.b16 %v5008
      %v5019 = vunpack.c.l.b16 %v5009
      %v5020 = vunpack.c.l.b16 %v5010
      %v5021 = vpack.c.b16 %v5017, %v5016
      %v5022 = vpack.c.b16 %v5019, %v5018
      %v5023 = vpack.c.b16 %v5020, %v5020
      %5024 = vrot.lane.b32.xlu0 %v5021, 8
      %v5025 = vpop.permute.xlu0 %5024
      %5026 = vrot.lane.b32.xlu0 %v5022, 8
      %v5027 = vpop.permute.xlu0 %5026
      %5028 = vrot.lane.b32.xlu0 %v5023, 8
      %v5029 = vpop.permute.xlu0 %5028
      %v5030 = vrot.slane %v5025, 4
      %v5031 = vrot.slane %v5027, 4
      %v5032 = vrot.slane %v5029, 4
      %v5033 = vsel %vm1004, %v5030, %v5031
      %v5034 = vsel %vm1826, %v5025, %v5033
      %v5035 = vsel %vm1004, %v5031, %v5032
      %v5036 = vsel %vm1826, %v5027, %v5035
      %5039 = vst [vmem:[#allocation4 + $0xa0] sm:$0xff] %v5034
      %5040 = vst [vmem:[#allocation4 + $0xa8] sm:$0xff] %v5036
      %v5041 = vld [vmem:[#allocation2] sm:$0xff]
      %v5042 = vld [vmem:[#allocation2 + $0x8] sm:$0xff]
      %v5043 = vld [vmem:[#allocation2 + $0x10] sm:$0xff]
      %v5044 = vld [vmem:[#allocation2 + $0x18] sm:$0xff]
      %v5045 = vld [vmem:[#allocation2 + $0x20] sm:$0xff]
      %v5046 = vld [vmem:[%s1839] ss:$8 sm:$0xf]
      %v5048 = vlaneseq
      %v5049 = vshrl.u32 %v5048, 7
      %v5050 = vsub.s32 0, %v5049
      %v5051 = vrot.slane %v5046, %v5050
      %v5052 = vlaneseq
      %v5053 = vshrl.u32 %v5052, 7
      %v5054 = vsub.s32 1, %v5053
      %v5055 = vrot.slane %v5046, %v5054
      %v5056 = vlaneseq
      %v5057 = vshrl.u32 %v5056, 7
      %v5058 = vsub.s32 2, %v5057
      %v5059 = vrot.slane %v5046, %v5058
      %v5060 = vlaneseq
      %v5061 = vshrl.u32 %v5060, 7
      %v5062 = vsub.s32 3, %v5061
      %v5063 = vrot.slane %v5046, %v5062
      %5064 = vrot.lane.b32.xlu0 %v5051, 121
      %v5065 = vpop.permute.xlu0 %5064
      %5066 = vrot.lane.b32.xlu0 %v5055, 121
      %v5067 = vpop.permute.xlu0 %5066
      %5068 = vrot.lane.b32.xlu0 %v5059, 121
      %v5069 = vpop.permute.xlu0 %5068
      %5070 = vrot.lane.b32.xlu0 %v5063, 121
      %v5071 = vpop.permute.xlu0 %5070
      %v5072 = vsel %vm1866, %v5065, %v5067
      %v5073 = vsel %vm1866, %v5067, %v5069
      %v5074 = vsel %vm1866, %v5069, %v5071
      %v5080 = vmul.f32 %v5041, %v5065
      %v5081 = vmul.f32 %v5042, %v5072
      %v5082 = vmul.f32 %v5043, %v5073
      %v5083 = vmul.f32 %v5044, %v5074
      %v5084 = vmul.f32 %v5045, %v5071
      %v5085 = vpack.c.bf16 %v5080, %v5080
      %v5086 = vpack.c.bf16 %v5081, %v5081
      %v5087 = vpack.c.bf16 %v5082, %v5082
      %v5088 = vpack.c.bf16 %v5083, %v5083
      %v5089 = vpack.c.bf16 %v5084, %v5084
      %v5095 = vunpack.c.l.b16 %v5085
      %v5096 = vunpack.c.l.b16 %v5086
      %v5097 = vunpack.c.l.b16 %v5087
      %v5098 = vunpack.c.l.b16 %v5088
      %v5099 = vunpack.c.l.b16 %v5089
      %v5100 = vpack.c.b16 %v5096, %v5095
      %v5101 = vpack.c.b16 %v5098, %v5097
      %v5102 = vpack.c.b16 %v5099, %v5099
      %5103 = vrot.lane.b32.xlu0 %v5100, 7
      %v5104 = vpop.permute.xlu0 %5103
      %5105 = vrot.lane.b32.xlu0 %v5101, 7
      %v5106 = vpop.permute.xlu0 %5105
      %5107 = vrot.lane.b32.xlu0 %v5102, 7
      %v5108 = vpop.permute.xlu0 %5107
      %v5109 = vrot.slane %v5104, 4
      %v5110 = vrot.slane %v5106, 4
      %v5111 = vrot.slane %v5108, 4
      %v5112 = vsel %vm1004, %v5109, %v5110
      %v5113 = vsel %vm1908, %v5104, %v5112
      %v5114 = vsel %vm1004, %v5110, %v5111
      %v5115 = vsel %vm1908, %v5106, %v5114
      %5118 = vst [vmem:[#allocation4 + $0xb0] sm:$0xff] %v5113
      %5119 = vst [vmem:[#allocation4 + $0xb8] sm:$0xff] %v5115
      %v5120 = vld [vmem:[#allocation2] sm:$0xff]
      %v5121 = vld [vmem:[#allocation2 + $0x8] sm:$0xff]
      %v5122 = vld [vmem:[#allocation2 + $0x10] sm:$0xff]
      %v5123 = vld [vmem:[#allocation2 + $0x18] sm:$0xff]
      %v5124 = vld [vmem:[#allocation2 + $0x20] sm:$0xff]
      %v5125 = vld [vmem:[%s1921] ss:$8 sm:$0xf]
      %v5127 = vlaneseq
      %v5128 = vshrl.u32 %v5127, 7
      %v5129 = vsub.s32 0, %v5128
      %v5130 = vrot.slane %v5125, %v5129
      %v5131 = vlaneseq
      %v5132 = vshrl.u32 %v5131, 7
      %v5133 = vsub.s32 1, %v5132
      %v5134 = vrot.slane %v5125, %v5133
      %v5135 = vlaneseq
      %v5136 = vshrl.u32 %v5135, 7
      %v5137 = vsub.s32 2, %v5136
      %v5138 = vrot.slane %v5125, %v5137
      %v5139 = vlaneseq
      %v5140 = vshrl.u32 %v5139, 7
      %v5141 = vsub.s32 3, %v5140
      %v5142 = vrot.slane %v5125, %v5141
      %5143 = vrot.lane.b32.xlu0 %v5130, 127
      %v5144 = vpop.permute.xlu0 %5143
      %5145 = vrot.lane.b32.xlu0 %v5134, 127
      %v5146 = vpop.permute.xlu0 %5145
      %5147 = vrot.lane.b32.xlu0 %v5138, 127
      %v5148 = vpop.permute.xlu0 %5147
      %5149 = vrot.lane.b32.xlu0 %v5142, 127
      %v5150 = vpop.permute.xlu0 %5149
      %v5151 = vsel %vm1948, %v5144, %v5146
      %v5152 = vsel %vm1948, %v5146, %v5148
      %v5153 = vsel %vm1948, %v5148, %v5150
      %v5159 = vmul.f32 %v5120, %v5144
      %v5160 = vmul.f32 %v5121, %v5151
      %v5161 = vmul.f32 %v5122, %v5152
      %v5162 = vmul.f32 %v5123, %v5153
      %v5163 = vmul.f32 %v5124, %v5150
      %v5164 = vpack.c.bf16 %v5159, %v5159
      %v5165 = vpack.c.bf16 %v5160, %v5160
      %v5166 = vpack.c.bf16 %v5161, %v5161
      %v5167 = vpack.c.bf16 %v5162, %v5162
      %v5168 = vpack.c.bf16 %v5163, %v5163
      %v5174 = vunpack.c.l.b16 %v5164
      %v5175 = vunpack.c.l.b16 %v5165
      %v5176 = vunpack.c.l.b16 %v5166
      %v5177 = vunpack.c.l.b16 %v5167
      %v5178 = vunpack.c.l.b16 %v5168
      %v5179 = vpack.c.b16 %v5175, %v5174
      %v5180 = vpack.c.b16 %v5177, %v5176
      %v5181 = vpack.c.b16 %v5178, %v5178
      %5182 = vrot.lane.b32.xlu0 %v5179, 1
      %v5183 = vpop.permute.xlu0 %5182
      %5184 = vrot.lane.b32.xlu0 %v5180, 1
      %v5185 = vpop.permute.xlu0 %5184
      %5186 = vrot.lane.b32.xlu0 %v5181, 1
      %v5187 = vpop.permute.xlu0 %5186
      %v5188 = vrot.slane %v5183, 4
      %v5189 = vrot.slane %v5185, 4
      %v5190 = vrot.slane %v5187, 4
      %v5191 = vsel %vm1004, %v5188, %v5189
      %v5192 = vsel %vm1990, %v5183, %v5191
      %v5193 = vsel %vm1004, %v5189, %v5190
      %v5194 = vsel %vm1990, %v5185, %v5193
      %5197 = vst [vmem:[#allocation4 + $0xc0] sm:$0xff] %v5192
      %5198 = vst [vmem:[#allocation4 + $0xc8] sm:$0xff] %v5194
      %v5199 = vld [vmem:[#allocation2 + $0x8] sm:$0xff]
      %v5200 = vld [vmem:[#allocation2 + $0x10] sm:$0xff]
      %v5201 = vld [vmem:[#allocation2 + $0x18] sm:$0xff]
      %v5202 = vld [vmem:[#allocation2 + $0x20] sm:$0xff]
      %v5203 = vld [vmem:[%s2002] ss:$8 sm:$0xf]
      %v5205 = vlaneseq
      %v5206 = vshrl.u32 %v5205, 7
      %v5207 = vsub.s32 0, %v5206
      %v5208 = vrot.slane %v5203, %v5207
      %v5209 = vlaneseq
      %v5210 = vshrl.u32 %v5209, 7
      %v5211 = vsub.s32 1, %v5210
      %v5212 = vrot.slane %v5203, %v5211
      %v5213 = vlaneseq
      %v5214 = vshrl.u32 %v5213, 7
      %v5215 = vsub.s32 2, %v5214
      %v5216 = vrot.slane %v5203, %v5215
      %v5217 = vlaneseq
      %v5218 = vshrl.u32 %v5217, 7
      %v5219 = vsub.s32 3, %v5218
      %v5220 = vrot.slane %v5203, %v5219
      %v5225 = vmul.f32 %v5199, %v5208
      %v5226 = vmul.f32 %v5200, %v5212
      %v5227 = vmul.f32 %v5201, %v5216
      %v5228 = vmul.f32 %v5202, %v5220
      %v5229 = vpack.c.bf16 %v5225, %v5225
      %v5230 = vpack.c.bf16 %v5226, %v5226
      %v5231 = vpack.c.bf16 %v5227, %v5227
      %v5232 = vpack.c.bf16 %v5228, %v5228
      %v5237 = vunpack.c.l.b16 %v5229
      %v5238 = vunpack.c.l.b16 %v5230
      %v5239 = vunpack.c.l.b16 %v5231
      %v5240 = vunpack.c.l.b16 %v5232
      %v5241 = vpack.c.b16 %v5238, %v5237
      %v5242 = vpack.c.b16 %v5240, %v5239
      %5245 = vst [vmem:[#allocation4 + $0xd0] sm:$0xff] %v5241
      %5246 = vst [vmem:[#allocation4 + $0xd8] sm:$0xff] %v5242
      %v5247 = vld [vmem:[#allocation2 + $0x8] sm:$0xff]
      %v5248 = vld [vmem:[#allocation2 + $0x10] sm:$0xff]
      %v5249 = vld [vmem:[#allocation2 + $0x18] sm:$0xff]
      %v5250 = vld [vmem:[#allocation2 + $0x20] sm:$0xff]
      %v5251 = vld [vmem:[#allocation2 + $0x28] sm:$0xff]
      %v5252 = vld [vmem:[%s2052] ss:$8 sm:$0xf]
      %v5254 = vlaneseq
      %v5255 = vshrl.u32 %v5254, 7
      %v5256 = vsub.s32 0, %v5255
      %v5257 = vrot.slane %v5252, %v5256
      %v5258 = vlaneseq
      %v5259 = vshrl.u32 %v5258, 7
      %v5260 = vsub.s32 1, %v5259
      %v5261 = vrot.slane %v5252, %v5260
      %v5262 = vlaneseq
      %v5263 = vshrl.u32 %v5262, 7
      %v5264 = vsub.s32 2, %v5263
      %v5265 = vrot.slane %v5252, %v5264
      %v5266 = vlaneseq
      %v5267 = vshrl.u32 %v5266, 7
      %v5268 = vsub.s32 3, %v5267
      %v5269 = vrot.slane %v5252, %v5268
      %5270 = vrot.lane.b32.xlu0 %v5257, 1
      %v5271 = vpop.permute.xlu0 %5270
      %5272 = vrot.lane.b32.xlu0 %v5261, 1
      %v5273 = vpop.permute.xlu0 %5272
      %5274 = vrot.lane.b32.xlu0 %v5265, 1
      %v5275 = vpop.permute.xlu0 %5274
      %5276 = vrot.lane.b32.xlu0 %v5269, 1
      %v5277 = vpop.permute.xlu0 %5276
      %v5278 = vsel %vm2079, %v5271, %v5273
      %v5279 = vsel %vm2079, %v5273, %v5275
      %v5280 = vsel %vm2079, %v5275, %v5277
      %v5286 = vmul.f32 %v5247, %v5271
      %v5287 = vmul.f32 %v5248, %v5278
      %v5288 = vmul.f32 %v5249, %v5279
      %v5289 = vmul.f32 %v5250, %v5280
      %v5290 = vmul.f32 %v5251, %v5277
      %v5291 = vpack.c.bf16 %v5286, %v5286
      %v5292 = vpack.c.bf16 %v5287, %v5287
      %v5293 = vpack.c.bf16 %v5288, %v5288
      %v5294 = vpack.c.bf16 %v5289, %v5289
      %v5295 = vpack.c.bf16 %v5290, %v5290
      %v5301 = vunpack.c.l.b16 %v5291
      %v5302 = vunpack.c.l.b16 %v5292
      %v5303 = vunpack.c.l.b16 %v5293
      %v5304 = vunpack.c.l.b16 %v5294
      %v5305 = vunpack.c.l.b16 %v5295
      %v5306 = vpack.c.b16 %v5302, %v5301
      %v5307 = vpack.c.b16 %v5304, %v5303
      %v5308 = vpack.c.b16 %v5305, %v5305
      %5309 = vrot.lane.b32.xlu0 %v5306, 127
      %v5310 = vpop.permute.xlu0 %5309
      %5311 = vrot.lane.b32.xlu0 %v5307, 127
      %v5312 = vpop.permute.xlu0 %5311
      %5313 = vrot.lane.b32.xlu0 %v5308, 127
      %v5314 = vpop.permute.xlu0 %5313
      %v5315 = vrot.slane %v5310, 4
      %v5316 = vrot.slane %v5312, 4
      %v5317 = vrot.slane %v5314, 4
      %v5318 = vsel %vm1004, %v5315, %v5316
      %v5319 = vsel %vm2121, %v5310, %v5318
      %v5320 = vsel %vm1004, %v5316, %v5317
      %v5321 = vsel %vm2121, %v5312, %v5320
      %5324 = vst [vmem:[#allocation4 + $0xe0] sm:$0xff] %v5319
      %5325 = vst [vmem:[#allocation4 + $0xe8] sm:$0xff] %v5321
      %v5326 = vld [vmem:[#allocation2 + $0x8] sm:$0xff]
      %v5327 = vld [vmem:[#allocation2 + $0x10] sm:$0xff]
      %v5328 = vld [vmem:[#allocation2 + $0x18] sm:$0xff]
      %v5329 = vld [vmem:[#allocation2 + $0x20] sm:$0xff]
      %v5330 = vld [vmem:[#allocation2 + $0x28] sm:$0xff]
      %v5331 = vld [vmem:[%s2134] ss:$8 sm:$0xf]
      %v5333 = vlaneseq
      %v5334 = vshrl.u32 %v5333, 7
      %v5335 = vsub.s32 0, %v5334
      %v5336 = vrot.slane %v5331, %v5335
      %v5337 = vlaneseq
      %v5338 = vshrl.u32 %v5337, 7
      %v5339 = vsub.s32 1, %v5338
      %v5340 = vrot.slane %v5331, %v5339
      %v5341 = vlaneseq
      %v5342 = vshrl.u32 %v5341, 7
      %v5343 = vsub.s32 2, %v5342
      %v5344 = vrot.slane %v5331, %v5343
      %v5345 = vlaneseq
      %v5346 = vshrl.u32 %v5345, 7
      %v5347 = vsub.s32 3, %v5346
      %v5348 = vrot.slane %v5331, %v5347
      %5349 = vrot.lane.b32.xlu0 %v5336, 7
      %v5350 = vpop.permute.xlu0 %5349
      %5351 = vrot.lane.b32.xlu0 %v5340, 7
      %v5352 = vpop.permute.xlu0 %5351
      %5353 = vrot.lane.b32.xlu0 %v5344, 7
      %v5354 = vpop.permute.xlu0 %5353
      %5355 = vrot.lane.b32.xlu0 %v5348, 7
      %v5356 = vpop.permute.xlu0 %5355
      %v5357 = vsel %vm2161, %v5350, %v5352
      %v5358 = vsel %vm2161, %v5352, %v5354
      %v5359 = vsel %vm2161, %v5354, %v5356
      %v5365 = vmul.f32 %v5326, %v5350
      %v5366 = vmul.f32 %v5327, %v5357
      %v5367 = vmul.f32 %v5328, %v5358
      %v5368 = vmul.f32 %v5329, %v5359
      %v5369 = vmul.f32 %v5330, %v5356
      %v5370 = vpack.c.bf16 %v5365, %v5365
      %v5371 = vpack.c.bf16 %v5366, %v5366
      %v5372 = vpack.c.bf16 %v5367, %v5367
      %v5373 = vpack.c.bf16 %v5368, %v5368
      %v5374 = vpack.c.bf16 %v5369, %v5369
      %v5380 = vunpack.c.l.b16 %v5370
      %v5381 = vunpack.c.l.b16 %v5371
      %v5382 = vunpack.c.l.b16 %v5372
      %v5383 = vunpack.c.l.b16 %v5373
      %v5384 = vunpack.c.l.b16 %v5374
      %v5385 = vpack.c.b16 %v5381, %v5380
      %v5386 = vpack.c.b16 %v5383, %v5382
      %v5387 = vpack.c.b16 %v5384, %v5384
      %5388 = vrot.lane.b32.xlu0 %v5385, 121
      %v5389 = vpop.permute.xlu0 %5388
      %5390 = vrot.lane.b32.xlu0 %v5386, 121
      %v5391 = vpop.permute.xlu0 %5390
      %5392 = vrot.lane.b32.xlu0 %v5387, 121
      %v5393 = vpop.permute.xlu0 %5392
      %v5394 = vrot.slane %v5389, 4
      %v5395 = vrot.slane %v5391, 4
      %v5396 = vrot.slane %v5393, 4
      %v5397 = vsel %vm1004, %v5394, %v5395
      %v5398 = vsel %vm2203, %v5389, %v5397
      %v5399 = vsel %vm1004, %v5395, %v5396
      %v5400 = vsel %vm2203, %v5391, %v5399
      %5403 = vst [vmem:[#allocation4 + $0xf0] sm:$0xff] %v5398
      %5404 = vst [vmem:[#allocation4 + $0xf8] sm:$0xff] %v5400
      %v5405 = vld [vmem:[#allocation2 + $0x8] sm:$0xff]
      %v5406 = vld [vmem:[#allocation2 + $0x10] sm:$0xff]
      %v5407 = vld [vmem:[#allocation2 + $0x18] sm:$0xff]
      %v5408 = vld [vmem:[#allocation2 + $0x20] sm:$0xff]
      %v5409 = vld [vmem:[#allocation2 + $0x28] sm:$0xff]
      %v5410 = vld [vmem:[%s2216] ss:$8 sm:$0xf]
      %v5412 = vlaneseq
      %v5413 = vshrl.u32 %v5412, 7
      %v5414 = vsub.s32 0, %v5413
      %v5415 = vrot.slane %v5410, %v5414
      %v5416 = vlaneseq
      %v5417 = vshrl.u32 %v5416, 7
      %v5418 = vsub.s32 1, %v5417
      %v5419 = vrot.slane %v5410, %v5418
      %v5420 = vlaneseq
      %v5421 = vshrl.u32 %v5420, 7
      %v5422 = vsub.s32 2, %v5421
      %v5423 = vrot.slane %v5410, %v5422
      %v5424 = vlaneseq
      %v5425 = vshrl.u32 %v5424, 7
      %v5426 = vsub.s32 3, %v5425
      %v5427 = vrot.slane %v5410, %v5426
      %5428 = vrot.lane.b32.xlu0 %v5415, 8
      %v5429 = vpop.permute.xlu0 %5428
      %5430 = vrot.lane.b32.xlu0 %v5419, 8
      %v5431 = vpop.permute.xlu0 %5430
      %5432 = vrot.lane.b32.xlu0 %v5423, 8
      %v5433 = vpop.permute.xlu0 %5432
      %5434 = vrot.lane.b32.xlu0 %v5427, 8
      %v5435 = vpop.permute.xlu0 %5434
      %v5436 = vsel %vm588, %v5429, %v5431
      %v5437 = vsel %vm588, %v5431, %v5433
      %v5438 = vsel %vm588, %v5433, %v5435
      %v5444 = vmul.f32 %v5405, %v5429
      %v5445 = vmul.f32 %v5406, %v5436
      %v5446 = vmul.f32 %v5407, %v5437
      %v5447 = vmul.f32 %v5408, %v5438
      %v5448 = vmul.f32 %v5409, %v5435
      %v5449 = vpack.c.bf16 %v5444, %v5444
      %v5450 = vpack.c.bf16 %v5445, %v5445
      %v5451 = vpack.c.bf16 %v5446, %v5446
      %v5452 = vpack.c.bf16 %v5447, %v5447
      %v5453 = vpack.c.bf16 %v5448, %v5448
      %v5459 = vunpack.c.l.b16 %v5449
      %v5460 = vunpack.c.l.b16 %v5450
      %v5461 = vunpack.c.l.b16 %v5451
      %v5462 = vunpack.c.l.b16 %v5452
      %v5463 = vunpack.c.l.b16 %v5453
      %v5464 = vpack.c.b16 %v5460, %v5459
      %v5465 = vpack.c.b16 %v5462, %v5461
      %v5466 = vpack.c.b16 %v5463, %v5463
      %5467 = vrot.lane.b32.xlu0 %v5464, 120
      %v5468 = vpop.permute.xlu0 %5467
      %5469 = vrot.lane.b32.xlu0 %v5465, 120
      %v5470 = vpop.permute.xlu0 %5469
      %5471 = vrot.lane.b32.xlu0 %v5466, 120
      %v5472 = vpop.permute.xlu0 %5471
      %v5473 = vrot.slane %v5468, 4
      %v5474 = vrot.slane %v5470, 4
      %v5475 = vrot.slane %v5472, 4
      %v5476 = vsel %vm1004, %v5473, %v5474
      %v5477 = vsel %vm2284, %v5468, %v5476
      %v5478 = vsel %vm1004, %v5474, %v5475
      %v5479 = vsel %vm2284, %v5470, %v5478
      %5482 = vst [vmem:[#allocation4 + $0x100] sm:$0xff] %v5477
      %5483 = vst [vmem:[#allocation4 + $0x108] sm:$0xff] %v5479
      %v5484 = vld [vmem:[#allocation2 + $0x8] sm:$0xff]
      %v5485 = vld [vmem:[#allocation2 + $0x10] sm:$0xff]
      %v5486 = vld [vmem:[#allocation2 + $0x18] sm:$0xff]
      %v5487 = vld [vmem:[#allocation2 + $0x20] sm:$0xff]
      %v5488 = vld [vmem:[#allocation2 + $0x28] sm:$0xff]
      %v5489 = vld [vmem:[%s2297] ss:$8 sm:$0xf]
      %v5491 = vlaneseq
      %v5492 = vshrl.u32 %v5491, 7
      %v5493 = vsub.s32 0, %v5492
      %v5494 = vrot.slane %v5489, %v5493
      %v5495 = vlaneseq
      %v5496 = vshrl.u32 %v5495, 7
      %v5497 = vsub.s32 1, %v5496
      %v5498 = vrot.slane %v5489, %v5497
      %v5499 = vlaneseq
      %v5500 = vshrl.u32 %v5499, 7
      %v5501 = vsub.s32 2, %v5500
      %v5502 = vrot.slane %v5489, %v5501
      %v5503 = vlaneseq
      %v5504 = vshrl.u32 %v5503, 7
      %v5505 = vsub.s32 3, %v5504
      %v5506 = vrot.slane %v5489, %v5505
      %5507 = vrot.lane.b32.xlu0 %v5494, 9
      %v5508 = vpop.permute.xlu0 %5507
      %5509 = vrot.lane.b32.xlu0 %v5498, 9
      %v5510 = vpop.permute.xlu0 %5509
      %5511 = vrot.lane.b32.xlu0 %v5502, 9
      %v5512 = vpop.permute.xlu0 %5511
      %5513 = vrot.lane.b32.xlu0 %v5506, 9
      %v5514 = vpop.permute.xlu0 %5513
      %v5515 = vsel %vm2324, %v5508, %v5510
      %v5516 = vsel %vm2324, %v5510, %v5512
      %v5517 = vsel %vm2324, %v5512, %v5514
      %v5523 = vmul.f32 %v5484, %v5508
      %v5524 = vmul.f32 %v5485, %v5515
      %v5525 = vmul.f32 %v5486, %v5516
      %v5526 = vmul.f32 %v5487, %v5517
      %v5527 = vmul.f32 %v5488, %v5514
      %v5528 = vpack.c.bf16 %v5523, %v5523
      %v5529 = vpack.c.bf16 %v5524, %v5524
      %v5530 = vpack.c.bf16 %v5525, %v5525
      %v5531 = vpack.c.bf16 %v5526, %v5526
      %v5532 = vpack.c.bf16 %v5527, %v5527
      %v5538 = vunpack.c.l.b16 %v5528
      %v5539 = vunpack.c.l.b16 %v5529
      %v5540 = vunpack.c.l.b16 %v5530
      %v5541 = vunpack.c.l.b16 %v5531
      %v5542 = vunpack.c.l.b16 %v5532
      %v5543 = vpack.c.b16 %v5539, %v5538
      %v5544 = vpack.c.b16 %v5541, %v5540
      %v5545 = vpack.c.b16 %v5542, %v5542
      %5546 = vrot.lane.b32.xlu0 %v5543, 119
      %v5547 = vpop.permute.xlu0 %5546
      %5548 = vrot.lane.b32.xlu0 %v5544, 119
      %v5549 = vpop.permute.xlu0 %5548
      %5550 = vrot.lane.b32.xlu0 %v5545, 119
      %v5551 = vpop.permute.xlu0 %5550
      %v5552 = vrot.slane %v5547, 4
      %v5553 = vrot.slane %v5549, 4
      %v5554 = vrot.slane %v5551, 4
      %v5555 = vsel %vm1004, %v5552, %v5553
      %v5556 = vsel %vm2366, %v5547, %v5555
      %v5557 = vsel %vm1004, %v5553, %v5554
      %v5558 = vsel %vm2366, %v5549, %v5557
      %5561 = vst [vmem:[#allocation4 + $0x110] sm:$0xff] %v5556
      %5562 = vst [vmem:[#allocation4 + $0x118] sm:$0xff] %v5558
      %v5563 = vld [vmem:[#allocation2 + $0x8] sm:$0xff]
      %v5564 = vld [vmem:[#allocation2 + $0x10] sm:$0xff]
      %v5565 = vld [vmem:[#allocation2 + $0x18] sm:$0xff]
      %v5566 = vld [vmem:[#allocation2 + $0x20] sm:$0xff]
      %v5567 = vld [vmem:[#allocation2 + $0x28] sm:$0xff]
      %v5568 = vld [vmem:[%s2379] ss:$8 sm:$0xf]
      %v5570 = vlaneseq
      %v5571 = vshrl.u32 %v5570, 7
      %v5572 = vsub.s32 0, %v5571
      %v5573 = vrot.slane %v5568, %v5572
      %v5574 = vlaneseq
      %v5575 = vshrl.u32 %v5574, 7
      %v5576 = vsub.s32 1, %v5575
      %v5577 = vrot.slane %v5568, %v5576
      %v5578 = vlaneseq
      %v5579 = vshrl.u32 %v5578, 7
      %v5580 = vsub.s32 2, %v5579
      %v5581 = vrot.slane %v5568, %v5580
      %v5582 = vlaneseq
      %v5583 = vshrl.u32 %v5582, 7
      %v5584 = vsub.s32 3, %v5583
      %v5585 = vrot.slane %v5568, %v5584
      %5586 = vrot.lane.b32.xlu0 %v5573, 55
      %v5587 = vpop.permute.xlu0 %5586
      %5588 = vrot.lane.b32.xlu0 %v5577, 55
      %v5589 = vpop.permute.xlu0 %5588
      %5590 = vrot.lane.b32.xlu0 %v5581, 55
      %v5591 = vpop.permute.xlu0 %5590
      %5592 = vrot.lane.b32.xlu0 %v5585, 55
      %v5593 = vpop.permute.xlu0 %5592
      %v5594 = vsel %vm963, %v5587, %v5589
      %v5595 = vsel %vm963, %v5589, %v5591
      %v5596 = vsel %vm963, %v5591, %v5593
      %v5602 = vmul.f32 %v5563, %v5587
      %v5603 = vmul.f32 %v5564, %v5594
      %v5604 = vmul.f32 %v5565, %v5595
      %v5605 = vmul.f32 %v5566, %v5596
      %v5606 = vmul.f32 %v5567, %v5593
      %v5607 = vpack.c.bf16 %v5602, %v5602
      %v5608 = vpack.c.bf16 %v5603, %v5603
      %v5609 = vpack.c.bf16 %v5604, %v5604
      %v5610 = vpack.c.bf16 %v5605, %v5605
      %v5611 = vpack.c.bf16 %v5606, %v5606
      %v5617 = vunpack.c.l.b16 %v5607
      %v5618 = vunpack.c.l.b16 %v5608
      %v5619 = vunpack.c.l.b16 %v5609
      %v5620 = vunpack.c.l.b16 %v5610
      %v5621 = vunpack.c.l.b16 %v5611
      %v5622 = vpack.c.b16 %v5618, %v5617
      %v5623 = vpack.c.b16 %v5620, %v5619
      %v5624 = vpack.c.b16 %v5621, %v5621
      %5625 = vrot.lane.b32.xlu0 %v5622, 73
      %v5626 = vpop.permute.xlu0 %5625
      %5627 = vrot.lane.b32.xlu0 %v5623, 73
      %v5628 = vpop.permute.xlu0 %5627
      %5629 = vrot.lane.b32.xlu0 %v5624, 73
      %v5630 = vpop.permute.xlu0 %5629
      %v5631 = vrot.slane %v5626, 4
      %v5632 = vrot.slane %v5628, 4
      %v5633 = vrot.slane %v5630, 4
      %v5634 = vsel %vm1004, %v5631, %v5632
      %v5635 = vsel %vm1006, %v5626, %v5634
      %v5636 = vsel %vm1004, %v5632, %v5633
      %v5637 = vsel %vm1006, %v5628, %v5636
      %5640 = vst [vmem:[#allocation4 + $0x120] sm:$0xff] %v5635
      %5641 = vst [vmem:[#allocation4 + $0x128] sm:$0xff] %v5637
      %v5642 = vld [vmem:[#allocation2 + $0x8] sm:$0xff]
      %v5643 = vld [vmem:[#allocation2 + $0x10] sm:$0xff]
      %v5644 = vld [vmem:[#allocation2 + $0x18] sm:$0xff]
      %v5645 = vld [vmem:[#allocation2 + $0x20] sm:$0xff]
      %v5646 = vld [vmem:[#allocation2 + $0x28] sm:$0xff]
      %v5647 = vld [vmem:[%s2459] ss:$8 sm:$0xf]
      %v5649 = vlaneseq
      %v5650 = vshrl.u32 %v5649, 7
      %v5651 = vsub.s32 0, %v5650
      %v5652 = vrot.slane %v5647, %v5651
      %v5653 = vlaneseq
      %v5654 = vshrl.u32 %v5653, 7
      %v5655 = vsub.s32 1, %v5654
      %v5656 = vrot.slane %v5647, %v5655
      %v5657 = vlaneseq
      %v5658 = vshrl.u32 %v5657, 7
      %v5659 = vsub.s32 2, %v5658
      %v5660 = vrot.slane %v5647, %v5659
      %v5661 = vlaneseq
      %v5662 = vshrl.u32 %v5661, 7
      %v5663 = vsub.s32 3, %v5662
      %v5664 = vrot.slane %v5647, %v5663
      %5665 = vrot.lane.b32.xlu0 %v5652, 56
      %v5666 = vpop.permute.xlu0 %5665
      %5667 = vrot.lane.b32.xlu0 %v5656, 56
      %v5668 = vpop.permute.xlu0 %5667
      %5669 = vrot.lane.b32.xlu0 %v5660, 56
      %v5670 = vpop.permute.xlu0 %5669
      %5671 = vrot.lane.b32.xlu0 %v5664, 56
      %v5672 = vpop.permute.xlu0 %5671
      %v5673 = vsel %vm1046, %v5666, %v5668
      %v5674 = vsel %vm1046, %v5668, %v5670
      %v5675 = vsel %vm1046, %v5670, %v5672
      %v5681 = vmul.f32 %v5642, %v5666
      %v5682 = vmul.f32 %v5643, %v5673
      %v5683 = vmul.f32 %v5644, %v5674
      %v5684 = vmul.f32 %v5645, %v5675
      %v5685 = vmul.f32 %v5646, %v5672
      %v5686 = vpack.c.bf16 %v5681, %v5681
      %v5687 = vpack.c.bf16 %v5682, %v5682
      %v5688 = vpack.c.bf16 %v5683, %v5683
      %v5689 = vpack.c.bf16 %v5684, %v5684
      %v5690 = vpack.c.bf16 %v5685, %v5685
      %v5696 = vunpack.c.l.b16 %v5686
      %v5697 = vunpack.c.l.b16 %v5687
      %v5698 = vunpack.c.l.b16 %v5688
      %v5699 = vunpack.c.l.b16 %v5689
      %v5700 = vunpack.c.l.b16 %v5690
      %v5701 = vpack.c.b16 %v5697, %v5696
      %v5702 = vpack.c.b16 %v5699, %v5698
      %v5703 = vpack.c.b16 %v5700, %v5700
      %5704 = vrot.lane.b32.xlu0 %v5701, 72
      %v5705 = vpop.permute.xlu0 %5704
      %5706 = vrot.lane.b32.xlu0 %v5702, 72
      %v5707 = vpop.permute.xlu0 %5706
      %5708 = vrot.lane.b32.xlu0 %v5703, 72
      %v5709 = vpop.permute.xlu0 %5708
      %v5710 = vrot.slane %v5705, 4
      %v5711 = vrot.slane %v5707, 4
      %v5712 = vrot.slane %v5709, 4
      %v5713 = vsel %vm1004, %v5710, %v5711
      %v5714 = vsel %vm1088, %v5705, %v5713
      %v5715 = vsel %vm1004, %v5711, %v5712
      %v5716 = vsel %vm1088, %v5707, %v5715
      %5719 = vst [vmem:[#allocation4 + $0x130] sm:$0xff] %v5714
      %5720 = vst [vmem:[#allocation4 + $0x138] sm:$0xff] %v5716
      %v5721 = vld [vmem:[#allocation2 + $0x8] sm:$0xff]
      %v5722 = vld [vmem:[#allocation2 + $0x10] sm:$0xff]
      %v5723 = vld [vmem:[#allocation2 + $0x18] sm:$0xff]
      %v5724 = vld [vmem:[#allocation2 + $0x20] sm:$0xff]
      %v5725 = vld [vmem:[#allocation2 + $0x28] sm:$0xff]
      %v5726 = vld [vmem:[%s2539] ss:$8 sm:$0xf]
      %v5728 = vlaneseq
      %v5729 = vshrl.u32 %v5728, 7
      %v5730 = vsub.s32 0, %v5729
      %v5731 = vrot.slane %v5726, %v5730
      %v5732 = vlaneseq
      %v5733 = vshrl.u32 %v5732, 7
      %v5734 = vsub.s32 1, %v5733
      %v5735 = vrot.slane %v5726, %v5734
      %v5736 = vlaneseq
      %v5737 = vshrl.u32 %v5736, 7
      %v5738 = vsub.s32 2, %v5737
      %v5739 = vrot.slane %v5726, %v5738
      %v5740 = vlaneseq
      %v5741 = vshrl.u32 %v5740, 7
      %v5742 = vsub.s32 3, %v5741
      %v5743 = vrot.slane %v5726, %v5742
      %5744 = vrot.lane.b32.xlu0 %v5731, 57
      %v5745 = vpop.permute.xlu0 %5744
      %5746 = vrot.lane.b32.xlu0 %v5735, 57
      %v5747 = vpop.permute.xlu0 %5746
      %5748 = vrot.lane.b32.xlu0 %v5739, 57
      %v5749 = vpop.permute.xlu0 %5748
      %5750 = vrot.lane.b32.xlu0 %v5743, 57
      %v5751 = vpop.permute.xlu0 %5750
      %v5752 = vsel %vm1128, %v5745, %v5747
      %v5753 = vsel %vm1128, %v5747, %v5749
      %v5754 = vsel %vm1128, %v5749, %v5751
      %v5760 = vmul.f32 %v5721, %v5745
      %v5761 = vmul.f32 %v5722, %v5752
      %v5762 = vmul.f32 %v5723, %v5753
      %v5763 = vmul.f32 %v5724, %v5754
      %v5764 = vmul.f32 %v5725, %v5751
      %v5765 = vpack.c.bf16 %v5760, %v5760
      %v5766 = vpack.c.bf16 %v5761, %v5761
      %v5767 = vpack.c.bf16 %v5762, %v5762
      %v5768 = vpack.c.bf16 %v5763, %v5763
      %v5769 = vpack.c.bf16 %v5764, %v5764
      %v5775 = vunpack.c.l.b16 %v5765
      %v5776 = vunpack.c.l.b16 %v5766
      %v5777 = vunpack.c.l.b16 %v5767
      %v5778 = vunpack.c.l.b16 %v5768
      %v5779 = vunpack.c.l.b16 %v5769
      %v5780 = vpack.c.b16 %v5776, %v5775
      %v5781 = vpack.c.b16 %v5778, %v5777
      %v5782 = vpack.c.b16 %v5779, %v5779
      %5783 = vrot.lane.b32.xlu0 %v5780, 71
      %v5784 = vpop.permute.xlu0 %5783
      %5785 = vrot.lane.b32.xlu0 %v5781, 71
      %v5786 = vpop.permute.xlu0 %5785
      %5787 = vrot.lane.b32.xlu0 %v5782, 71
      %v5788 = vpop.permute.xlu0 %5787
      %v5789 = vrot.slane %v5784, 4
      %v5790 = vrot.slane %v5786, 4
      %v5791 = vrot.slane %v5788, 4
      %v5792 = vsel %vm1004, %v5789, %v5790
      %v5793 = vsel %vm1170, %v5784, %v5792
      %v5794 = vsel %vm1004, %v5790, %v5791
      %v5795 = vsel %vm1170, %v5786, %v5794
      %5798 = vst [vmem:[#allocation4 + $0x140] sm:$0xff] %v5793
      %5799 = vst [vmem:[#allocation4 + $0x148] sm:$0xff] %v5795
      %v5800 = vld [vmem:[#allocation2 + $0x8] sm:$0xff]
      %v5801 = vld [vmem:[#allocation2 + $0x10] sm:$0xff]
      %v5802 = vld [vmem:[#allocation2 + $0x18] sm:$0xff]
      %v5803 = vld [vmem:[#allocation2 + $0x20] sm:$0xff]
      %v5804 = vld [vmem:[#allocation2 + $0x28] sm:$0xff]
      %v5805 = vld [vmem:[%s2619] ss:$8 sm:$0xf]
      %v5807 = vlaneseq
      %v5808 = vshrl.u32 %v5807, 7
      %v5809 = vsub.s32 0, %v5808
      %v5810 = vrot.slane %v5805, %v5809
      %v5811 = vlaneseq
      %v5812 = vshrl.u32 %v5811, 7
      %v5813 = vsub.s32 1, %v5812
      %v5814 = vrot.slane %v5805, %v5813
      %v5815 = vlaneseq
      %v5816 = vshrl.u32 %v5815, 7
      %v5817 = vsub.s32 2, %v5816
      %v5818 = vrot.slane %v5805, %v5817
      %v5819 = vlaneseq
      %v5820 = vshrl.u32 %v5819, 7
      %v5821 = vsub.s32 3, %v5820
      %v5822 = vrot.slane %v5805, %v5821
      %5823 = vrot.lane.b32.xlu0 %v5810, 63
      %v5824 = vpop.permute.xlu0 %5823
      %5825 = vrot.lane.b32.xlu0 %v5814, 63
      %v5826 = vpop.permute.xlu0 %5825
      %5827 = vrot.lane.b32.xlu0 %v5818, 63
      %v5828 = vpop.permute.xlu0 %5827
      %5829 = vrot.lane.b32.xlu0 %v5822, 63
      %v5830 = vpop.permute.xlu0 %5829
      %v5831 = vsel %vm1210, %v5824, %v5826
      %v5832 = vsel %vm1210, %v5826, %v5828
      %v5833 = vsel %vm1210, %v5828, %v5830
      %v5839 = vmul.f32 %v5800, %v5824
      %v5840 = vmul.f32 %v5801, %v5831
      %v5841 = vmul.f32 %v5802, %v5832
      %v5842 = vmul.f32 %v5803, %v5833
      %v5843 = vmul.f32 %v5804, %v5830
      %v5844 = vpack.c.bf16 %v5839, %v5839
      %v5845 = vpack.c.bf16 %v5840, %v5840
      %v5846 = vpack.c.bf16 %v5841, %v5841
      %v5847 = vpack.c.bf16 %v5842, %v5842
      %v5848 = vpack.c.bf16 %v5843, %v5843
      %v5854 = vunpack.c.l.b16 %v5844
      %v5855 = vunpack.c.l.b16 %v5845
      %v5856 = vunpack.c.l.b16 %v5846
      %v5857 = vunpack.c.l.b16 %v5847
      %v5858 = vunpack.c.l.b16 %v5848
      %v5859 = vpack.c.b16 %v5855, %v5854
      %v5860 = vpack.c.b16 %v5857, %v5856
      %v5861 = vpack.c.b16 %v5858, %v5858
      %5862 = vrot.lane.b32.xlu0 %v5859, 65
      %v5863 = vpop.permute.xlu0 %5862
      %5864 = vrot.lane.b32.xlu0 %v5860, 65
      %v5865 = vpop.permute.xlu0 %5864
      %5866 = vrot.lane.b32.xlu0 %v5861, 65
      %v5867 = vpop.permute.xlu0 %5866
      %v5868 = vrot.slane %v5863, 4
      %v5869 = vrot.slane %v5865, 4
      %v5870 = vrot.slane %v5867, 4
      %v5871 = vsel %vm1004, %v5868, %v5869
      %v5872 = vsel %vm1252, %v5863, %v5871
      %v5873 = vsel %vm1004, %v5869, %v5870
      %v5874 = vsel %vm1252, %v5865, %v5873
      %5877 = vst [vmem:[#allocation4 + $0x150] sm:$0xff] %v5872
      %5878 = vst [vmem:[#allocation4 + $0x158] sm:$0xff] %v5874
      %v5879 = vld [vmem:[#allocation2 + $0x8] sm:$0xff]
      %v5880 = vld [vmem:[#allocation2 + $0x10] sm:$0xff]
      %v5881 = vld [vmem:[#allocation2 + $0x18] sm:$0xff]
      %v5882 = vld [vmem:[#allocation2 + $0x20] sm:$0xff]
      %v5883 = vld [vmem:[#allocation2 + $0x28] sm:$0xff]
      %v5884 = vld [vmem:[%s2699] ss:$8 sm:$0xf]
      %v5886 = vlaneseq
      %v5887 = vshrl.u32 %v5886, 7
      %v5888 = vsub.s32 0, %v5887
      %v5889 = vrot.slane %v5884, %v5888
      %v5890 = vlaneseq
      %v5891 = vshrl.u32 %v5890, 7
      %v5892 = vsub.s32 1, %v5891
      %v5893 = vrot.slane %v5884, %v5892
      %v5894 = vlaneseq
      %v5895 = vshrl.u32 %v5894, 7
      %v5896 = vsub.s32 2, %v5895
      %v5897 = vrot.slane %v5884, %v5896
      %v5898 = vlaneseq
      %v5899 = vshrl.u32 %v5898, 7
      %v5900 = vsub.s32 3, %v5899
      %v5901 = vrot.slane %v5884, %v5900
      %5902 = vrot.lane.b32.xlu0 %v5889, 64
      %v5903 = vpop.permute.xlu0 %5902
      %5904 = vrot.lane.b32.xlu0 %v5893, 64
      %v5905 = vpop.permute.xlu0 %5904
      %5906 = vrot.lane.b32.xlu0 %v5897, 64
      %v5907 = vpop.permute.xlu0 %5906
      %5908 = vrot.lane.b32.xlu0 %v5901, 64
      %v5909 = vpop.permute.xlu0 %5908
      %v5910 = vsel %vm1292, %v5903, %v5905
      %v5911 = vsel %vm1292, %v5905, %v5907
      %v5912 = vsel %vm1292, %v5907, %v5909
      %v5918 = vmul.f32 %v5879, %v5903
      %v5919 = vmul.f32 %v5880, %v5910
      %v5920 = vmul.f32 %v5881, %v5911
      %v5921 = vmul.f32 %v5882, %v5912
      %v5922 = vmul.f32 %v5883, %v5909
      %v5923 = vpack.c.bf16 %v5918, %v5918
      %v5924 = vpack.c.bf16 %v5919, %v5919
      %v5925 = vpack.c.bf16 %v5920, %v5920
      %v5926 = vpack.c.bf16 %v5921, %v5921
      %v5927 = vpack.c.bf16 %v5922, %v5922
      %v5933 = vunpack.c.l.b16 %v5923
      %v5934 = vunpack.c.l.b16 %v5924
      %v5935 = vunpack.c.l.b16 %v5925
      %v5936 = vunpack.c.l.b16 %v5926
      %v5937 = vunpack.c.l.b16 %v5927
      %v5938 = vpack.c.b16 %v5934, %v5933
      %v5939 = vpack.c.b16 %v5936, %v5935
      %v5940 = vpack.c.b16 %v5937, %v5937
      %5941 = vrot.lane.b32.xlu0 %v5938, 64
      %v5942 = vpop.permute.xlu0 %5941
      %5943 = vrot.lane.b32.xlu0 %v5939, 64
      %v5944 = vpop.permute.xlu0 %5943
      %5945 = vrot.lane.b32.xlu0 %v5940, 64
      %v5946 = vpop.permute.xlu0 %5945
      %v5947 = vrot.slane %v5942, 4
      %v5948 = vrot.slane %v5944, 4
      %v5949 = vrot.slane %v5946, 4
      %v5950 = vsel %vm1004, %v5947, %v5948
      %v5951 = vsel %vm1334, %v5942, %v5950
      %v5952 = vsel %vm1004, %v5948, %v5949
      %v5953 = vsel %vm1334, %v5944, %v5952
      %5956 = vst [vmem:[#allocation4 + $0x160] sm:$0xff] %v5951
      %5957 = vst [vmem:[#allocation4 + $0x168] sm:$0xff] %v5953
      %v5958 = vld [vmem:[#allocation2 + $0x8] sm:$0xff]
      %v5959 = vld [vmem:[#allocation2 + $0x10] sm:$0xff]
      %v5960 = vld [vmem:[#allocation2 + $0x18] sm:$0xff]
      %v5961 = vld [vmem:[#allocation2 + $0x20] sm:$0xff]
      %v5962 = vld [vmem:[#allocation2 + $0x28] sm:$0xff]
      %v5963 = vld [vmem:[%s2779] ss:$8 sm:$0xf]
      %v5965 = vlaneseq
      %v5966 = vshrl.u32 %v5965, 7
      %v5967 = vsub.s32 0, %v5966
      %v5968 = vrot.slane %v5963, %v5967
      %v5969 = vlaneseq
      %v5970 = vshrl.u32 %v5969, 7
      %v5971 = vsub.s32 1, %v5970
      %v5972 = vrot.slane %v5963, %v5971
      %v5973 = vlaneseq
      %v5974 = vshrl.u32 %v5973, 7
      %v5975 = vsub.s32 2, %v5974
      %v5976 = vrot.slane %v5963, %v5975
      %v5977 = vlaneseq
      %v5978 = vshrl.u32 %v5977, 7
      %v5979 = vsub.s32 3, %v5978
      %v5980 = vrot.slane %v5963, %v5979
      %5981 = vrot.lane.b32.xlu0 %v5968, 65
      %v5982 = vpop.permute.xlu0 %5981
      %5983 = vrot.lane.b32.xlu0 %v5972, 65
      %v5984 = vpop.permute.xlu0 %5983
      %5985 = vrot.lane.b32.xlu0 %v5976, 65
      %v5986 = vpop.permute.xlu0 %5985
      %5987 = vrot.lane.b32.xlu0 %v5980, 65
      %v5988 = vpop.permute.xlu0 %5987
      %v5989 = vsel %vm1374, %v5982, %v5984
      %v5990 = vsel %vm1374, %v5984, %v5986
      %v5991 = vsel %vm1374, %v5986, %v5988
      %v5997 = vmul.f32 %v5958, %v5982
      %v5998 = vmul.f32 %v5959, %v5989
      %v5999 = vmul.f32 %v5960, %v5990
      %v6000 = vmul.f32 %v5961, %v5991
      %v6001 = vmul.f32 %v5962, %v5988
      %v6002 = vpack.c.bf16 %v5997, %v5997
      %v6003 = vpack.c.bf16 %v5998, %v5998
      %v6004 = vpack.c.bf16 %v5999, %v5999
      %v6005 = vpack.c.bf16 %v6000, %v6000
      %v6006 = vpack.c.bf16 %v6001, %v6001
      %v6012 = vunpack.c.l.b16 %v6002
      %v6013 = vunpack.c.l.b16 %v6003
      %v6014 = vunpack.c.l.b16 %v6004
      %v6015 = vunpack.c.l.b16 %v6005
      %v6016 = vunpack.c.l.b16 %v6006
      %v6017 = vpack.c.b16 %v6013, %v6012
      %v6018 = vpack.c.b16 %v6015, %v6014
      %v6019 = vpack.c.b16 %v6016, %v6016
      %6020 = vrot.lane.b32.xlu0 %v6017, 63
      %v6021 = vpop.permute.xlu0 %6020
      %6022 = vrot.lane.b32.xlu0 %v6018, 63
      %v6023 = vpop.permute.xlu0 %6022
      %6024 = vrot.lane.b32.xlu0 %v6019, 63
      %v6025 = vpop.permute.xlu0 %6024
      %v6026 = vrot.slane %v6021, 4
      %v6027 = vrot.slane %v6023, 4
      %v6028 = vrot.slane %v6025, 4
      %v6029 = vsel %vm1004, %v6026, %v6027
      %v6030 = vsel %vm1416, %v6021, %v6029
      %v6031 = vsel %vm1004, %v6027, %v6028
      %v6032 = vsel %vm1416, %v6023, %v6031
      %6035 = vst [vmem:[#allocation4 + $0x170] sm:$0xff] %v6030
      %6036 = vst [vmem:[#allocation4 + $0x178] sm:$0xff] %v6032
      %v6037 = vld [vmem:[#allocation2 + $0x8] sm:$0xff]
      %v6038 = vld [vmem:[#allocation2 + $0x10] sm:$0xff]
      %v6039 = vld [vmem:[#allocation2 + $0x18] sm:$0xff]
      %v6040 = vld [vmem:[#allocation2 + $0x20] sm:$0xff]
      %v6041 = vld [vmem:[#allocation2 + $0x28] sm:$0xff]
      %v6042 = vld [vmem:[%s2859] ss:$8 sm:$0xf]
      %v6044 = vlaneseq
      %v6045 = vshrl.u32 %v6044, 7
      %v6046 = vsub.s32 0, %v6045
      %v6047 = vrot.slane %v6042, %v6046
      %v6048 = vlaneseq
      %v6049 = vshrl.u32 %v6048, 7
      %v6050 = vsub.s32 1, %v6049
      %v6051 = vrot.slane %v6042, %v6050
      %v6052 = vlaneseq
      %v6053 = vshrl.u32 %v6052, 7
      %v6054 = vsub.s32 2, %v6053
      %v6055 = vrot.slane %v6042, %v6054
      %v6056 = vlaneseq
      %v6057 = vshrl.u32 %v6056, 7
      %v6058 = vsub.s32 3, %v6057
      %v6059 = vrot.slane %v6042, %v6058
      %6060 = vrot.lane.b32.xlu0 %v6047, 71
      %v6061 = vpop.permute.xlu0 %6060
      %6062 = vrot.lane.b32.xlu0 %v6051, 71
      %v6063 = vpop.permute.xlu0 %6062
      %6064 = vrot.lane.b32.xlu0 %v6055, 71
      %v6065 = vpop.permute.xlu0 %6064
      %6066 = vrot.lane.b32.xlu0 %v6059, 71
      %v6067 = vpop.permute.xlu0 %6066
      %v6068 = vsel %vm1456, %v6061, %v6063
      %v6069 = vsel %vm1456, %v6063, %v6065
      %v6070 = vsel %vm1456, %v6065, %v6067
      %v6076 = vmul.f32 %v6037, %v6061
      %v6077 = vmul.f32 %v6038, %v6068
      %v6078 = vmul.f32 %v6039, %v6069
      %v6079 = vmul.f32 %v6040, %v6070
      %v6080 = vmul.f32 %v6041, %v6067
      %v6081 = vpack.c.bf16 %v6076, %v6076
      %v6082 = vpack.c.bf16 %v6077, %v6077
      %v6083 = vpack.c.bf16 %v6078, %v6078
      %v6084 = vpack.c.bf16 %v6079, %v6079
      %v6085 = vpack.c.bf16 %v6080, %v6080
      %v6091 = vunpack.c.l.b16 %v6081
      %v6092 = vunpack.c.l.b16 %v6082
      %v6093 = vunpack.c.l.b16 %v6083
      %v6094 = vunpack.c.l.b16 %v6084
      %v6095 = vunpack.c.l.b16 %v6085
      %v6096 = vpack.c.b16 %v6092, %v6091
      %v6097 = vpack.c.b16 %v6094, %v6093
      %v6098 = vpack.c.b16 %v6095, %v6095
      %6099 = vrot.lane.b32.xlu0 %v6096, 57
      %v6100 = vpop.permute.xlu0 %6099
      %6101 = vrot.lane.b32.xlu0 %v6097, 57
      %v6102 = vpop.permute.xlu0 %6101
      %6103 = vrot.lane.b32.xlu0 %v6098, 57
      %v6104 = vpop.permute.xlu0 %6103
      %v6105 = vrot.slane %v6100, 4
      %v6106 = vrot.slane %v6102, 4
      %v6107 = vrot.slane %v6104, 4
      %v6108 = vsel %vm1004, %v6105, %v6106
      %v6109 = vsel %vm1498, %v6100, %v6108
      %v6110 = vsel %vm1004, %v6106, %v6107
      %v6111 = vsel %vm1498, %v6102, %v6110
      %6114 = vst [vmem:[#allocation4 + $0x180] sm:$0xff] %v6109
      %6115 = vst [vmem:[#allocation4 + $0x188] sm:$0xff] %v6111
      %v6116 = vld [vmem:[#allocation2 + $0x8] sm:$0xff]
      %v6117 = vld [vmem:[#allocation2 + $0x10] sm:$0xff]
      %v6118 = vld [vmem:[#allocation2 + $0x18] sm:$0xff]
      %v6119 = vld [vmem:[#allocation2 + $0x20] sm:$0xff]
      %v6120 = vld [vmem:[#allocation2 + $0x28] sm:$0xff]
      %v6121 = vld [vmem:[%s2939] ss:$8 sm:$0xf]
      %v6123 = vlaneseq
      %v6124 = vshrl.u32 %v6123, 7
      %v6125 = vsub.s32 0, %v6124
      %v6126 = vrot.slane %v6121, %v6125
      %v6127 = vlaneseq
      %v6128 = vshrl.u32 %v6127, 7
      %v6129 = vsub.s32 1, %v6128
      %v6130 = vrot.slane %v6121, %v6129
      %v6131 = vlaneseq
      %v6132 = vshrl.u32 %v6131, 7
      %v6133 = vsub.s32 2, %v6132
      %v6134 = vrot.slane %v6121, %v6133
      %v6135 = vlaneseq
      %v6136 = vshrl.u32 %v6135, 7
      %v6137 = vsub.s32 3, %v6136
      %v6138 = vrot.slane %v6121, %v6137
      %6139 = vrot.lane.b32.xlu0 %v6126, 72
      %v6140 = vpop.permute.xlu0 %6139
      %6141 = vrot.lane.b32.xlu0 %v6130, 72
      %v6142 = vpop.permute.xlu0 %6141
      %6143 = vrot.lane.b32.xlu0 %v6134, 72
      %v6144 = vpop.permute.xlu0 %6143
      %6145 = vrot.lane.b32.xlu0 %v6138, 72
      %v6146 = vpop.permute.xlu0 %6145
      %v6147 = vsel %vm1538, %v6140, %v6142
      %v6148 = vsel %vm1538, %v6142, %v6144
      %v6149 = vsel %vm1538, %v6144, %v6146
      %v6155 = vmul.f32 %v6116, %v6140
      %v6156 = vmul.f32 %v6117, %v6147
      %v6157 = vmul.f32 %v6118, %v6148
      %v6158 = vmul.f32 %v6119, %v6149
      %v6159 = vmul.f32 %v6120, %v6146
      %v6160 = vpack.c.bf16 %v6155, %v6155
      %v6161 = vpack.c.bf16 %v6156, %v6156
      %v6162 = vpack.c.bf16 %v6157, %v6157
      %v6163 = vpack.c.bf16 %v6158, %v6158
      %v6164 = vpack.c.bf16 %v6159, %v6159
      %v6170 = vunpack.c.l.b16 %v6160
      %v6171 = vunpack.c.l.b16 %v6161
      %v6172 = vunpack.c.l.b16 %v6162
      %v6173 = vunpack.c.l.b16 %v6163
      %v6174 = vunpack.c.l.b16 %v6164
      %v6175 = vpack.c.b16 %v6171, %v6170
      %v6176 = vpack.c.b16 %v6173, %v6172
      %v6177 = vpack.c.b16 %v6174, %v6174
      %6178 = vrot.lane.b32.xlu0 %v6175, 56
      %v6179 = vpop.permute.xlu0 %6178
      %6180 = vrot.lane.b32.xlu0 %v6176, 56
      %v6181 = vpop.permute.xlu0 %6180
      %6182 = vrot.lane.b32.xlu0 %v6177, 56
      %v6183 = vpop.permute.xlu0 %6182
      %v6184 = vrot.slane %v6179, 4
      %v6185 = vrot.slane %v6181, 4
      %v6186 = vrot.slane %v6183, 4
      %v6187 = vsel %vm1004, %v6184, %v6185
      %v6188 = vsel %vm1580, %v6179, %v6187
      %v6189 = vsel %vm1004, %v6185, %v6186
      %v6190 = vsel %vm1580, %v6181, %v6189
      %6193 = vst [vmem:[#allocation4 + $0x190] sm:$0xff] %v6188
      %6194 = vst [vmem:[#allocation4 + $0x198] sm:$0xff] %v6190
      %v6195 = vld [vmem:[#allocation2 + $0x8] sm:$0xff]
      %v6196 = vld [vmem:[#allocation2 + $0x10] sm:$0xff]
      %v6197 = vld [vmem:[#allocation2 + $0x18] sm:$0xff]
      %v6198 = vld [vmem:[#allocation2 + $0x20] sm:$0xff]
      %v6199 = vld [vmem:[#allocation2 + $0x28] sm:$0xff]
      %v6200 = vld [vmem:[%s3019] ss:$8 sm:$0xf]
      %v6202 = vlaneseq
      %v6203 = vshrl.u32 %v6202, 7
      %v6204 = vsub.s32 0, %v6203
      %v6205 = vrot.slane %v6200, %v6204
      %v6206 = vlaneseq
      %v6207 = vshrl.u32 %v6206, 7
      %v6208 = vsub.s32 1, %v6207
      %v6209 = vrot.slane %v6200, %v6208
      %v6210 = vlaneseq
      %v6211 = vshrl.u32 %v6210, 7
      %v6212 = vsub.s32 2, %v6211
      %v6213 = vrot.slane %v6200, %v6212
      %v6214 = vlaneseq
      %v6215 = vshrl.u32 %v6214, 7
      %v6216 = vsub.s32 3, %v6215
      %v6217 = vrot.slane %v6200, %v6216
      %6218 = vrot.lane.b32.xlu0 %v6205, 73
      %v6219 = vpop.permute.xlu0 %6218
      %6220 = vrot.lane.b32.xlu0 %v6209, 73
      %v6221 = vpop.permute.xlu0 %6220
      %6222 = vrot.lane.b32.xlu0 %v6213, 73
      %v6223 = vpop.permute.xlu0 %6222
      %6224 = vrot.lane.b32.xlu0 %v6217, 73
      %v6225 = vpop.permute.xlu0 %6224
      %v6226 = vsel %vm1620, %v6219, %v6221
      %v6227 = vsel %vm1620, %v6221, %v6223
      %v6228 = vsel %vm1620, %v6223, %v6225
      %v6234 = vmul.f32 %v6195, %v6219
      %v6235 = vmul.f32 %v6196, %v6226
      %v6236 = vmul.f32 %v6197, %v6227
      %v6237 = vmul.f32 %v6198, %v6228
      %v6238 = vmul.f32 %v6199, %v6225
      %v6239 = vpack.c.bf16 %v6234, %v6234
      %v6240 = vpack.c.bf16 %v6235, %v6235
      %v6241 = vpack.c.bf16 %v6236, %v6236
      %v6242 = vpack.c.bf16 %v6237, %v6237
      %v6243 = vpack.c.bf16 %v6238, %v6238
      %v6249 = vunpack.c.l.b16 %v6239
      %v6250 = vunpack.c.l.b16 %v6240
      %v6251 = vunpack.c.l.b16 %v6241
      %v6252 = vunpack.c.l.b16 %v6242
      %v6253 = vunpack.c.l.b16 %v6243
      %v6254 = vpack.c.b16 %v6250, %v6249
      %v6255 = vpack.c.b16 %v6252, %v6251
      %v6256 = vpack.c.b16 %v6253, %v6253
      %6257 = vrot.lane.b32.xlu0 %v6254, 55
      %v6258 = vpop.permute.xlu0 %6257
      %6259 = vrot.lane.b32.xlu0 %v6255, 55
      %v6260 = vpop.permute.xlu0 %6259
      %6261 = vrot.lane.b32.xlu0 %v6256, 55
      %v6262 = vpop.permute.xlu0 %6261
      %v6263 = vrot.slane %v6258, 4
      %v6264 = vrot.slane %v6260, 4
      %v6265 = vrot.slane %v6262, 4
      %v6266 = vsel %vm1004, %v6263, %v6264
      %v6267 = vsel %vm1662, %v6258, %v6266
      %v6268 = vsel %vm1004, %v6264, %v6265
      %v6269 = vsel %vm1662, %v6260, %v6268
      %6272 = vst [vmem:[#allocation4 + $0x1a0] sm:$0xff] %v6267
      %6273 = vst [vmem:[#allocation4 + $0x1a8] sm:$0xff] %v6269
      %v6274 = vld [vmem:[%s13] sm:$0xff]
      %v6275 = vld [vmem:[%s13 + $0x8] sm:$0xff]
      %v6276 = vld [vmem:[#allocation4] sm:$0xff]
      %v6277 = vld [vmem:[#allocation4 + $0x8] sm:$0xff]
      %v6278 = vld [vmem:[#allocation4 + $0x10] sm:$0xff]
      %v6279 = vld [vmem:[#allocation4 + $0x18] sm:$0xff]
      %v6280 = vld [vmem:[#allocation4 + $0x20] sm:$0xff]
      %v6281 = vld [vmem:[#allocation4 + $0x28] sm:$0xff]
      %v6282 = vld [vmem:[#allocation4 + $0x30] sm:$0xff]
      %v6283 = vld [vmem:[#allocation4 + $0x38] sm:$0xff]
      %v6284 = vld [vmem:[#allocation4 + $0x40] sm:$0xff]
      %v6285 = vld [vmem:[#allocation4 + $0x48] sm:$0xff]
      %v6286 = vld [vmem:[#allocation4 + $0x50] sm:$0xff]
      %v6287 = vld [vmem:[#allocation4 + $0x58] sm:$0xff]
      %v6288 = vld [vmem:[#allocation4 + $0x60] sm:$0xff]
      %v6289 = vld [vmem:[#allocation4 + $0x68] sm:$0xff]
      %v6290 = vld [vmem:[#allocation4 + $0x70] sm:$0xff]
      %v6291 = vld [vmem:[#allocation4 + $0x78] sm:$0xff]
      %v6292 = vld [vmem:[#allocation4 + $0x80] sm:$0xff]
      %v6293 = vld [vmem:[#allocation4 + $0x88] sm:$0xff]
      %v6294 = vld [vmem:[#allocation4 + $0x90] sm:$0xff]
      %v6295 = vld [vmem:[#allocation4 + $0x98] sm:$0xff]
      %v6296 = vld [vmem:[#allocation4 + $0xa0] sm:$0xff]
      %v6297 = vld [vmem:[#allocation4 + $0xa8] sm:$0xff]
      %v6298 = vld [vmem:[#allocation4 + $0xb0] sm:$0xff]
      %v6299 = vld [vmem:[#allocation4 + $0xb8] sm:$0xff]
      %v6300 = vld [vmem:[#allocation4 + $0xc0] sm:$0xff]
      %v6301 = vld [vmem:[#allocation4 + $0xc8] sm:$0xff]
      %v6302 = vld [vmem:[#allocation4 + $0xd0] sm:$0xff]
      %v6303 = vld [vmem:[#allocation4 + $0xd8] sm:$0xff]
      %v6304 = vld [vmem:[#allocation4 + $0xe0] sm:$0xff]
      %v6305 = vld [vmem:[#allocation4 + $0xe8] sm:$0xff]
      %v6306 = vld [vmem:[#allocation4 + $0xf0] sm:$0xff]
      %v6307 = vld [vmem:[#allocation4 + $0xf8] sm:$0xff]
      %v6308 = vld [vmem:[#allocation4 + $0x100] sm:$0xff]
      %v6309 = vld [vmem:[#allocation4 + $0x108] sm:$0xff]
      %v6310 = vld [vmem:[#allocation4 + $0x110] sm:$0xff]
      %v6311 = vld [vmem:[#allocation4 + $0x118] sm:$0xff]
      %v6312 = vld [vmem:[#allocation4 + $0x120] sm:$0xff]
      %v6313 = vld [vmem:[#allocation4 + $0x128] sm:$0xff]
      %v6314 = vld [vmem:[#allocation4 + $0x130] sm:$0xff]
      %v6315 = vld [vmem:[#allocation4 + $0x138] sm:$0xff]
      %v6316 = vld [vmem:[#allocation4 + $0x140] sm:$0xff]
      %v6317 = vld [vmem:[#allocation4 + $0x148] sm:$0xff]
      %v6318 = vld [vmem:[#allocation4 + $0x150] sm:$0xff]
      %v6319 = vld [vmem:[#allocation4 + $0x158] sm:$0xff]
      %v6320 = vld [vmem:[#allocation4 + $0x160] sm:$0xff]
      %v6321 = vld [vmem:[#allocation4 + $0x168] sm:$0xff]
      %v6322 = vld [vmem:[#allocation4 + $0x170] sm:$0xff]
      %v6323 = vld [vmem:[#allocation4 + $0x178] sm:$0xff]
      %v6324 = vld [vmem:[#allocation4 + $0x180] sm:$0xff]
      %v6325 = vld [vmem:[#allocation4 + $0x188] sm:$0xff]
      %v6326 = vld [vmem:[#allocation4 + $0x190] sm:$0xff]
      %v6327 = vld [vmem:[#allocation4 + $0x198] sm:$0xff]
      %v6328 = vld [vmem:[#allocation4 + $0x1a0] sm:$0xff]
      %v6329 = vld [vmem:[#allocation4 + $0x1a8] sm:$0xff]
      %v6332 = vunpack.c.l.b16 %v6274
      %v6333 = vunpack.c.h.b16 %v6274
      %v6334 = vunpack.c.l.b16 %v6275
      %v6335 = vunpack.c.h.b16 %v6275
      %v6336 = vpack.c.b16 %v6334, %v6332
      %v6337 = vpack.c.b16 %v6335, %v6333
      %v6393 = vunpack.c.l.b16 %v6276
      %v6394 = vunpack.c.h.b16 %v6276
      %v6395 = vunpack.c.l.b16 %v6277
      %v6396 = vunpack.c.h.b16 %v6277
      %v6397 = vunpack.c.l.b16 %v6278
      %v6398 = vunpack.c.h.b16 %v6278
      %v6399 = vunpack.c.l.b16 %v6279
      %v6400 = vunpack.c.h.b16 %v6279
      %v6401 = vunpack.c.l.b16 %v6280
      %v6402 = vunpack.c.h.b16 %v6280
      %v6403 = vunpack.c.l.b16 %v6281
      %v6404 = vunpack.c.h.b16 %v6281
      %v6405 = vunpack.c.l.b16 %v6282
      %v6406 = vunpack.c.h.b16 %v6282
      %v6407 = vunpack.c.l.b16 %v6283
      %v6408 = vunpack.c.h.b16 %v6283
      %v6409 = vunpack.c.l.b16 %v6284
      %v6410 = vunpack.c.h.b16 %v6284
      %v6411 = vunpack.c.l.b16 %v6285
      %v6412 = vunpack.c.h.b16 %v6285
      %v6413 = vunpack.c.l.b16 %v6286
      %v6414 = vunpack.c.h.b16 %v6286
      %v6415 = vunpack.c.l.b16 %v6287
      %v6416 = vunpack.c.h.b16 %v6287
      %v6417 = vunpack.c.l.b16 %v6288
      %v6418 = vunpack.c.h.b16 %v6288
      %v6419 = vunpack.c.l.b16 %v6289
      %v6420 = vunpack.c.h.b16 %v6289
      %v6421 = vunpack.c.l.b16 %v6290
      %v6422 = vunpack.c.h.b16 %v6290
      %v6423 = vunpack.c.l.b16 %v6291
      %v6424 = vunpack.c.h.b16 %v6291
      %v6425 = vunpack.c.l.b16 %v6292
      %v6426 = vunpack.c.h.b16 %v6292
      %v6427 = vunpack.c.l.b16 %v6293
      %v6428 = vunpack.c.h.b16 %v6293
      %v6429 = vunpack.c.l.b16 %v6294
      %v6430 = vunpack.c.h.b16 %v6294
      %v6431 = vunpack.c.l.b16 %v6295
      %v6432 = vunpack.c.h.b16 %v6295
      %v6433 = vunpack.c.l.b16 %v6296
      %v6434 = vunpack.c.h.b16 %v6296
      %v6435 = vunpack.c.l.b16 %v6297
      %v6436 = vunpack.c.h.b16 %v6297
      %v6437 = vunpack.c.l.b16 %v6298
      %v6438 = vunpack.c.h.b16 %v6298
      %v6439 = vunpack.c.l.b16 %v6299
      %v6440 = vunpack.c.h.b16 %v6299
      %v6441 = vunpack.c.l.b16 %v6300
      %v6442 = vunpack.c.h.b16 %v6300
      %v6443 = vunpack.c.l.b16 %v6301
      %v6444 = vunpack.c.h.b16 %v6301
      %v6445 = vunpack.c.l.b16 %v6302
      %v6446 = vunpack.c.h.b16 %v6302
      %v6447 = vunpack.c.l.b16 %v6303
      %v6448 = vunpack.c.h.b16 %v6303
      %v6449 = vunpack.c.l.b16 %v6304
      %v6450 = vunpack.c.h.b16 %v6304
      %v6451 = vunpack.c.l.b16 %v6305
      %v6452 = vunpack.c.h.b16 %v6305
      %v6453 = vunpack.c.l.b16 %v6306
      %v6454 = vunpack.c.h.b16 %v6306
      %v6455 = vunpack.c.l.b16 %v6307
      %v6456 = vunpack.c.h.b16 %v6307
      %v6457 = vunpack.c.l.b16 %v6308
      %v6458 = vunpack.c.h.b16 %v6308
      %v6459 = vunpack.c.l.b16 %v6309
      %v6460 = vunpack.c.h.b16 %v6309
      %v6461 = vunpack.c.l.b16 %v6310
      %v6462 = vunpack.c.h.b16 %v6310
      %v6463 = vunpack.c.l.b16 %v6311
      %v6464 = vunpack.c.h.b16 %v6311
      %v6465 = vunpack.c.l.b16 %v6312
      %v6466 = vunpack.c.h.b16 %v6312
      %v6467 = vunpack.c.l.b16 %v6313
      %v6468 = vunpack.c.h.b16 %v6313
      %v6469 = vunpack.c.l.b16 %v6314
      %v6470 = vunpack.c.h.b16 %v6314
      %v6471 = vunpack.c.l.b16 %v6315
      %v6472 = vunpack.c.h.b16 %v6315
      %v6473 = vunpack.c.l.b16 %v6316
      %v6474 = vunpack.c.h.b16 %v6316
      %v6475 = vunpack.c.l.b16 %v6317
      %v6476 = vunpack.c.h.b16 %v6317
      %v6477 = vunpack.c.l.b16 %v6318
      %v6478 = vunpack.c.h.b16 %v6318
      %v6479 = vunpack.c.l.b16 %v6319
      %v6480 = vunpack.c.h.b16 %v6319
      %v6481 = vunpack.c.l.b16 %v6320
      %v6482 = vunpack.c.h.b16 %v6320
      %v6483 = vunpack.c.l.b16 %v6321
      %v6484 = vunpack.c.h.b16 %v6321
      %v6485 = vunpack.c.l.b16 %v6322
      %v6486 = vunpack.c.h.b16 %v6322
      %v6487 = vunpack.c.l.b16 %v6323
      %v6488 = vunpack.c.h.b16 %v6323
      %v6489 = vunpack.c.l.b16 %v6324
      %v6490 = vunpack.c.h.b16 %v6324
      %v6491 = vunpack.c.l.b16 %v6325
      %v6492 = vunpack.c.h.b16 %v6325
      %v6493 = vunpack.c.l.b16 %v6326
      %v6494 = vunpack.c.h.b16 %v6326
      %v6495 = vunpack.c.l.b16 %v6327
      %v6496 = vunpack.c.h.b16 %v6327
      %v6497 = vunpack.c.l.b16 %v6328
      %v6498 = vunpack.c.h.b16 %v6328
      %v6499 = vunpack.c.l.b16 %v6329
      %v6500 = vunpack.c.h.b16 %v6329
      %v6501 = vpack.c.b16 %v6397, %v6393
      %v6502 = vpack.c.b16 %v6398, %v6394
      %v6503 = vpack.c.b16 %v6399, %v6395
      %v6504 = vpack.c.b16 %v6400, %v6396
      %v6505 = vpack.c.b16 %v6405, %v6401
      %v6506 = vpack.c.b16 %v6406, %v6402
      %v6507 = vpack.c.b16 %v6407, %v6403
      %v6508 = vpack.c.b16 %v6408, %v6404
      %v6509 = vpack.c.b16 %v6413, %v6409
      %v6510 = vpack.c.b16 %v6414, %v6410
      %v6511 = vpack.c.b16 %v6415, %v6411
      %v6512 = vpack.c.b16 %v6416, %v6412
      %v6513 = vpack.c.b16 %v6421, %v6417
      %v6514 = vpack.c.b16 %v6422, %v6418
      %v6515 = vpack.c.b16 %v6423, %v6419
      %v6516 = vpack.c.b16 %v6424, %v6420
      %v6517 = vpack.c.b16 %v6429, %v6425
      %v6518 = vpack.c.b16 %v6430, %v6426
      %v6519 = vpack.c.b16 %v6431, %v6427
      %v6520 = vpack.c.b16 %v6432, %v6428
      %v6521 = vpack.c.b16 %v6437, %v6433
      %v6522 = vpack.c.b16 %v6438, %v6434
      %v6523 = vpack.c.b16 %v6439, %v6435
      %v6524 = vpack.c.b16 %v6440, %v6436
      %v6525 = vpack.c.b16 %v6445, %v6441
      %v6526 = vpack.c.b16 %v6446, %v6442
      %v6527 = vpack.c.b16 %v6447, %v6443
      %v6528 = vpack.c.b16 %v6448, %v6444
      %v6529 = vpack.c.b16 %v6453, %v6449
      %v6530 = vpack.c.b16 %v6454, %v6450
      %v6531 = vpack.c.b16 %v6455, %v6451
      %v6532 = vpack.c.b16 %v6456, %v6452
      %v6533 = vpack.c.b16 %v6461, %v6457
      %v6534 = vpack.c.b16 %v6462, %v6458
      %v6535 = vpack.c.b16 %v6463, %v6459
      %v6536 = vpack.c.b16 %v6464, %v6460
      %v6537 = vpack.c.b16 %v6469, %v6465
      %v6538 = vpack.c.b16 %v6470, %v6466
      %v6539 = vpack.c.b16 %v6471, %v6467
      %v6540 = vpack.c.b16 %v6472, %v6468
      %v6541 = vpack.c.b16 %v6477, %v6473
      %v6542 = vpack.c.b16 %v6478, %v6474
      %v6543 = vpack.c.b16 %v6479, %v6475
      %v6544 = vpack.c.b16 %v6480, %v6476
      %v6545 = vpack.c.b16 %v6485, %v6481
      %v6546 = vpack.c.b16 %v6486, %v6482
      %v6547 = vpack.c.b16 %v6487, %v6483
      %v6548 = vpack.c.b16 %v6488, %v6484
      %v6549 = vpack.c.b16 %v6493, %v6489
      %v6550 = vpack.c.b16 %v6494, %v6490
      %v6551 = vpack.c.b16 %v6495, %v6491
      %v6552 = vpack.c.b16 %v6496, %v6492
      %v6553 = vpack.c.b16 %v6497, %v6497
      %v6554 = vpack.c.b16 %v6498, %v6498
      %v6555 = vpack.c.b16 %v6499, %v6499
      %v6556 = vpack.c.b16 %v6500, %v6500
      %v6610 = vsel %vm3429, %v6337, 0
      %v6613 = vsel %vm3433, %v6553, 0
      %v6616 = vsel %vm3433, %v6554, 0
      %v6619 = vsel %vm3433, %v6555, 0
      %v6622 = vsel %vm3433, %v6556, 0
      %6624 = vmatprep.subr.bf16.mxu0 %v6502
      %6625 = vmatpush1.bf16.msra.mxu0 %v6501
      %6626 = vmatprep.subr.bf16.mxu0 %v6506
      %6627 = vmatpush1.bf16.msra.mxu0 %v6505
      %6628 = vmatprep.subr.bf16.mxu0 %v6510
      %6629 = vmatpush1.bf16.msra.mxu0 %v6509
      %6630 = vmatprep.subr.bf16.mxu0 %v6514
      %6631 = vmatpush1.bf16.msra.mxu0 %v6513
      %6632 = vmatprep.subr.bf16.mxu0 %v6518
      %6633 = vmatpush1.bf16.msra.mxu0 %v6517
      %6634 = vmatprep.subr.bf16.mxu0 %v6522
      %6635 = vmatpush1.bf16.msra.mxu0 %v6521
      %6636 = vmatprep.subr.bf16.mxu0 %v6526
      %6637 = vmatpush1.bf16.msra.mxu0 %v6525
      %6638 = vmatprep.subr.bf16.mxu0 %v6530
      %6639 = vmatpush1.bf16.msra.mxu0 %v6529
      %6640 = vmatprep.subr.bf16.mxu0 %v6534
      %6641 = vmatpush1.bf16.msra.mxu0 %v6533
      %6642 = vmatprep.subr.bf16.mxu0 %v6538
      %6643 = vmatpush1.bf16.msra.mxu0 %v6537
      %6644 = vmatprep.subr.bf16.mxu0 %v6542
      %6645 = vmatpush1.bf16.msra.mxu0 %v6541
      %6646 = vmatprep.subr.bf16.mxu0 %v6546
      %6647 = vmatpush1.bf16.msra.mxu0 %v6545
      %6648 = vmatprep.subr.bf16.mxu0 %v6550
      %6649 = vmatpush1.bf16.msra.mxu0 %v6549
      %6650 = vmatprep.subr.bf16.mxu0 %v6616
      %6651 = vmatpush1.bf16.msra.mxu0 %v6613
      %6652 = vmatprep.subr.bf16.mxu0 0
      %6653 = vmatpush1.bf16.msra.mxu0 0
      %6654 = vmatprep.subr.bf16.mxu0 0
      %6655 = vmatpush1.bf16.msra.mxu0 0
      %6656 = vmatprep.mubr.bf16.mxu0 %v6610
      %6657 = vmatmul.mubr.bf16.gmra.mrb[0].mxu0 %v6336
      %v6658 = vpop.f32.mrb[0].mxu0
      %v6659 = vadd.f32 %v3737, %v6658
      %v6660 = vpop.f32.mrb[0].mxu0
      %v6661 = vadd.f32 %v3739, %v6660
      %v6662 = vpop.f32.mrb[0].mxu0
      %v6663 = vadd.f32 %v3743, %v6662
      %v6664 = vpop.f32.mrb[0].mxu0
      %v6665 = vadd.f32 %v3745, %v6664
      %6666 = vdwg.mxu0
      %6667 = vmatprep.subr.bf16.mxu0 %v6504
      %6668 = vmatpush1.bf16.msra.mxu0 %v6503
      %6669 = vmatprep.subr.bf16.mxu0 %v6508
      %6670 = vmatpush1.bf16.msra.mxu0 %v6507
      %6671 = vmatprep.subr.bf16.mxu0 %v6512
      %6672 = vmatpush1.bf16.msra.mxu0 %v6511
      %6673 = vmatprep.subr.bf16.mxu0 %v6516
      %6674 = vmatpush1.bf16.msra.mxu0 %v6515
      %6675 = vmatprep.subr.bf16.mxu0 %v6520
      %6676 = vmatpush1.bf16.msra.mxu0 %v6519
      %6677 = vmatprep.subr.bf16.mxu0 %v6524
      %6678 = vmatpush1.bf16.msra.mxu0 %v6523
      %6679 = vmatprep.subr.bf16.mxu0 %v6528
      %6680 = vmatpush1.bf16.msra.mxu0 %v6527
      %6681 = vmatprep.subr.bf16.mxu0 %v6532
      %6682 = vmatpush1.bf16.msra.mxu0 %v6531
      %6683 = vmatprep.subr.bf16.mxu0 %v6536
      %6684 = vmatpush1.bf16.msra.mxu0 %v6535
      %6685 = vmatprep.subr.bf16.mxu0 %v6540
      %6686 = vmatpush1.bf16.msra.mxu0 %v6539
      %6687 = vmatprep.subr.bf16.mxu0 %v6544
      %6688 = vmatpush1.bf16.msra.mxu0 %v6543
      %6689 = vmatprep.subr.bf16.mxu0 %v6548
      %6690 = vmatpush1.bf16.msra.mxu0 %v6547
      %6691 = vmatprep.subr.bf16.mxu0 %v6552
      %6692 = vmatpush1.bf16.msra.mxu0 %v6551
      %6693 = vmatprep.subr.bf16.mxu0 %v6622
      %6694 = vmatpush1.bf16.msra.mxu0 %v6619
      %6695 = vmatprep.subr.bf16.mxu0 0
      %6696 = vmatpush1.bf16.msra.mxu0 0
      %6697 = vmatprep.subr.bf16.mxu0 0
      %6698 = vmatpush1.bf16.msra.mxu0 0
      %6699 = vmatprep.mubr.bf16.mxu0 %v6610
      %6700 = vmatmul.mubr.bf16.gmra.mrb[0].mxu0 %v6336
      %v6701 = vpop.f32.mrb[0].mxu0
      %v6702 = vadd.f32 %v3814, %v6701
      %v6703 = vpop.f32.mrb[0].mxu0
      %v6704 = vadd.f32 %v3816, %v6703
      %v6705 = vpop.f32.mrb[0].mxu0
      %v6706 = vadd.f32 %v3820, %v6705
      %v6707 = vpop.f32.mrb[0].mxu0
      %v6708 = vadd.f32 %v3822, %v6707
      %6709 = vdwg.mxu0
      %v6710 = vld [vmem:[%s5] sm:$0xff]
      %v6711 = vld [vmem:[%s5 + $0x8] sm:$0xff]
      %v6713 = vsel %vm3663, %v6710, 0
      %v6716 = vsel %vm3663, %v6711, 0
      %6718 = vmatprep.subr.mxu0 %v6661
      %6719 = vmatpush1.msra.mxu0 %v6659
      %6720 = vmatprep.subr.mxu0 %v6665
      %6721 = vmatpush1.msra.mxu0 %v6663
      %6722 = vmatprep.subr.mxu0 0.0
      %6723 = vmatpush1.msra.mxu0 0.0
      %6724 = vmatprep.subr.mxu0 0.0
      %6725 = vmatpush1.msra.mxu0 0.0
      %6726 = vmatprep.subr.mxu0 0.0
      %6727 = vmatpush1.msra.mxu0 0.0
      %6728 = vmatprep.subr.mxu0 0.0
      %6729 = vmatpush1.msra.mxu0 0.0
      %6730 = vmatprep.subr.mxu0 0.0
      %6731 = vmatpush1.msra.mxu0 0.0
      %6732 = vmatprep.subr.mxu0 0.0
      %6733 = vmatpush1.msra.mxu0 0.0
      %6734 = vmatprep.subr.mxu0 0.0
      %6735 = vmatpush1.msra.mxu0 0.0
      %6736 = vmatprep.subr.mxu0 0.0
      %6737 = vmatpush1.msra.mxu0 0.0
      %6738 = vmatprep.subr.mxu0 0.0
      %6739 = vmatpush1.msra.mxu0 0.0
      %6740 = vmatprep.subr.mxu0 0.0
      %6741 = vmatpush1.msra.mxu0 0.0
      %6742 = vmatprep.subr.mxu0 0.0
      %6743 = vmatpush1.msra.mxu0 0.0
      %6744 = vmatprep.subr.mxu0 0.0
      %6745 = vmatpush1.msra.mxu0 0.0
      %6746 = vmatprep.subr.mxu0 0.0
      %6747 = vmatpush1.msra.mxu0 0.0
      %6748 = vmatprep.subr.mxu0 0.0
      %6749 = vmatpush1.msra.mxu0 0.0
      %6750 = vmatprep.subr.mxu0 0.0
      %6751 = vmatpush1.msra.mxu0 0.0
      %6752 = vmatprep.subr.mxu0 0.0
      %6753 = vmatpush1.msra.mxu0 0.0
      %6754 = vmatprep.subr.mxu0 0.0
      %6755 = vmatpush1.msra.mxu0 0.0
      %6756 = vmatprep.subr.mxu0 0.0
      %6757 = vmatpush1.msra.mxu0 0.0
      %6758 = vmatprep.subr.mxu0 0.0
      %6759 = vmatpush1.msra.mxu0 0.0
      %6760 = vmatprep.subr.mxu0 0.0
      %6761 = vmatpush1.msra.mxu0 0.0
      %6762 = vmatprep.subr.mxu0 0.0
      %6763 = vmatpush1.msra.mxu0 0.0
      %6764 = vmatprep.subr.mxu0 0.0
      %6765 = vmatpush1.msra.mxu0 0.0
      %6766 = vmatprep.subr.mxu0 0.0
      %6767 = vmatpush1.msra.mxu0 0.0
      %6768 = vmatprep.subr.mxu0 0.0
      %6769 = vmatpush1.msra.mxu0 0.0
      %6770 = vmatprep.subr.mxu0 0.0
      %6771 = vmatpush1.msra.mxu0 0.0
      %6772 = vmatprep.subr.mxu0 0.0
      %6773 = vmatpush1.msra.mxu0 0.0
      %6774 = vmatprep.subr.mxu0 0.0
      %6775 = vmatpush1.msra.mxu0 0.0
      %6776 = vmatprep.subr.mxu0 0.0
      %6777 = vmatpush1.msra.mxu0 0.0
      %6778 = vmatprep.subr.mxu0 0.0
      %6779 = vmatpush1.msra.mxu0 0.0
      %6780 = vmatprep.subr.mxu0 0.0
      %6781 = vmatpush1.msra.mxu0 0.0
      %6782 = vmatprep.mubr.f32.mxu0 0.0
      %6783 = vmatmul.mubr.f32.gmra.mrb[0].mxu0 %v6713
      %v6784 = vpop.f32.mrb[0].mxu0
      %v6785 = vadd.f32 0.0, %v6784
      %v6786 = vpop.f32.mrb[0].mxu0
      %v6787 = vadd.f32 0.0, %v6786
      %6788 = vmatprep.mubr.f32.mxu0 0.0
      %6789 = vmatmul.mubr.f32.gmra.mrb[0].mxu0 %v6716
      %v6790 = vpop.f32.mrb[0].mxu0
      %v6791 = vadd.f32 0.0, %v6790
      %v6792 = vpop.f32.mrb[0].mxu0
      %v6793 = vadd.f32 0.0, %v6792
      %6794 = vdwg.mxu0
      %6795 = vmatprep.subr.mxu0 %v6704
      %6796 = vmatpush1.msra.mxu0 %v6702
      %6797 = vmatprep.subr.mxu0 %v6708
      %6798 = vmatpush1.msra.mxu0 %v6706
      %6799 = vmatprep.subr.mxu0 0.0
      %6800 = vmatpush1.msra.mxu0 0.0
      %6801 = vmatprep.subr.mxu0 0.0
      %6802 = vmatpush1.msra.mxu0 0.0
      %6803 = vmatprep.subr.mxu0 0.0
      %6804 = vmatpush1.msra.mxu0 0.0
      %6805 = vmatprep.subr.mxu0 0.0
      %6806 = vmatpush1.msra.mxu0 0.0
      %6807 = vmatprep.subr.mxu0 0.0
      %6808 = vmatpush1.msra.mxu0 0.0
      %6809 = vmatprep.subr.mxu0 0.0
      %6810 = vmatpush1.msra.mxu0 0.0
      %6811 = vmatprep.subr.mxu0 0.0
      %6812 = vmatpush1.msra.mxu0 0.0
      %6813 = vmatprep.subr.mxu0 0.0
      %6814 = vmatpush1.msra.mxu0 0.0
      %6815 = vmatprep.subr.mxu0 0.0
      %6816 = vmatpush1.msra.mxu0 0.0
      %6817 = vmatprep.subr.mxu0 0.0
      %6818 = vmatpush1.msra.mxu0 0.0
      %6819 = vmatprep.subr.mxu0 0.0
      %6820 = vmatpush1.msra.mxu0 0.0
      %6821 = vmatprep.subr.mxu0 0.0
      %6822 = vmatpush1.msra.mxu0 0.0
      %6823 = vmatprep.subr.mxu0 0.0
      %6824 = vmatpush1.msra.mxu0 0.0
      %6825 = vmatprep.subr.mxu0 0.0
      %6826 = vmatpush1.msra.mxu0 0.0
      %6827 = vmatprep.subr.mxu0 0.0
      %6828 = vmatpush1.msra.mxu0 0.0
      %6829 = vmatprep.subr.mxu0 0.0
      %6830 = vmatpush1.msra.mxu0 0.0
      %6831 = vmatprep.subr.mxu0 0.0
      %6832 = vmatpush1.msra.mxu0 0.0
      %6833 = vmatprep.subr.mxu0 0.0
      %6834 = vmatpush1.msra.mxu0 0.0
      %6835 = vmatprep.subr.mxu0 0.0
      %6836 = vmatpush1.msra.mxu0 0.0
      %6837 = vmatprep.subr.mxu0 0.0
      %6838 = vmatpush1.msra.mxu0 0.0
      %6839 = vmatprep.subr.mxu0 0.0
      %6840 = vmatpush1.msra.mxu0 0.0
      %6841 = vmatprep.subr.mxu0 0.0
      %6842 = vmatpush1.msra.mxu0 0.0
      %6843 = vmatprep.subr.mxu0 0.0
      %6844 = vmatpush1.msra.mxu0 0.0
      %6845 = vmatprep.subr.mxu0 0.0
      %6846 = vmatpush1.msra.mxu0 0.0
      %6847 = vmatprep.subr.mxu0 0.0
      %6848 = vmatpush1.msra.mxu0 0.0
      %6849 = vmatprep.subr.mxu0 0.0
      %6850 = vmatpush1.msra.mxu0 0.0
      %6851 = vmatprep.subr.mxu0 0.0
      %6852 = vmatpush1.msra.mxu0 0.0
      %6853 = vmatprep.subr.mxu0 0.0
      %6854 = vmatpush1.msra.mxu0 0.0
      %6855 = vmatprep.subr.mxu0 0.0
      %6856 = vmatpush1.msra.mxu0 0.0
      %6857 = vmatprep.subr.mxu0 0.0
      %6858 = vmatpush1.msra.mxu0 0.0
      %6859 = vmatprep.mubr.f32.mxu0 0.0
      %6860 = vmatmul.mubr.f32.gmra.mrb[0].mxu0 %v6713
      %v6861 = vpop.f32.mrb[0].mxu0
      %v6862 = vadd.f32 0.0, %v6861
      %v6863 = vpop.f32.mrb[0].mxu0
      %v6864 = vadd.f32 0.0, %v6863
      %6865 = vmatprep.mubr.f32.mxu0 0.0
      %6866 = vmatmul.mubr.f32.gmra.mrb[0].mxu0 %v6716
      %v6867 = vpop.f32.mrb[0].mxu0
      %v6868 = vadd.f32 0.0, %v6867
      %v6869 = vpop.f32.mrb[0].mxu0
      %v6870 = vadd.f32 0.0, %v6869
      %6871 = vdwg.mxu0
      %v6872 = vmul.f32 %v6659, %v6659
      %v6873 = vmul.f32 %v6661, %v6661
      %v6874 = vmul.f32 %v6702, %v6702
      %v6875 = vmul.f32 %v6704, %v6704
      %v6876 = vmul.f32 %v6663, %v6663
      %v6877 = vmul.f32 %v6665, %v6665
      %v6878 = vmul.f32 %v6706, %v6706
      %v6879 = vmul.f32 %v6708, %v6708
      %6880 = vmatprep.subr.mxu0 %v6873
      %6881 = vmatpush1.msra.mxu0 %v6872
      %6882 = vmatprep.subr.mxu0 %v6877
      %6883 = vmatpush1.msra.mxu0 %v6876
      %6884 = vmatprep.subr.mxu0 0.0
      %6885 = vmatpush1.msra.mxu0 0.0
      %6886 = vmatprep.subr.mxu0 0.0
      %6887 = vmatpush1.msra.mxu0 0.0
      %6888 = vmatprep.subr.mxu0 0.0
      %6889 = vmatpush1.msra.mxu0 0.0
      %6890 = vmatprep.subr.mxu0 0.0
      %6891 = vmatpush1.msra.mxu0 0.0
      %6892 = vmatprep.subr.mxu0 0.0
      %6893 = vmatpush1.msra.mxu0 0.0
      %6894 = vmatprep.subr.mxu0 0.0
      %6895 = vmatpush1.msra.mxu0 0.0
      %6896 = vmatprep.subr.mxu0 0.0
      %6897 = vmatpush1.msra.mxu0 0.0
      %6898 = vmatprep.subr.mxu0 0.0
      %6899 = vmatpush1.msra.mxu0 0.0
      %6900 = vmatprep.subr.mxu0 0.0
      %6901 = vmatpush1.msra.mxu0 0.0
      %6902 = vmatprep.subr.mxu0 0.0
      %6903 = vmatpush1.msra.mxu0 0.0
      %6904 = vmatprep.subr.mxu0 0.0
      %6905 = vmatpush1.msra.mxu0 0.0
      %6906 = vmatprep.subr.mxu0 0.0
      %6907 = vmatpush1.msra.mxu0 0.0
      %6908 = vmatprep.subr.mxu0 0.0
      %6909 = vmatpush1.msra.mxu0 0.0
      %6910 = vmatprep.subr.mxu0 0.0
      %6911 = vmatpush1.msra.mxu0 0.0
      %6912 = vmatprep.subr.mxu0 0.0
      %6913 = vmatpush1.msra.mxu0 0.0
      %6914 = vmatprep.subr.mxu0 0.0
      %6915 = vmatpush1.msra.mxu0 0.0
      %6916 = vmatprep.subr.mxu0 0.0
      %6917 = vmatpush1.msra.mxu0 0.0
      %6918 = vmatprep.subr.mxu0 0.0
      %6919 = vmatpush1.msra.mxu0 0.0
      %6920 = vmatprep.subr.mxu0 0.0
      %6921 = vmatpush1.msra.mxu0 0.0
      %6922 = vmatprep.subr.mxu0 0.0
      %6923 = vmatpush1.msra.mxu0 0.0
      %6924 = vmatprep.subr.mxu0 0.0
      %6925 = vmatpush1.msra.mxu0 0.0
      %6926 = vmatprep.subr.mxu0 0.0
      %6927 = vmatpush1.msra.mxu0 0.0
      %6928 = vmatprep.subr.mxu0 0.0
      %6929 = vmatpush1.msra.mxu0 0.0
      %6930 = vmatprep.subr.mxu0 0.0
      %6931 = vmatpush1.msra.mxu0 0.0
      %6932 = vmatprep.subr.mxu0 0.0
      %6933 = vmatpush1.msra.mxu0 0.0
      %6934 = vmatprep.subr.mxu0 0.0
      %6935 = vmatpush1.msra.mxu0 0.0
      %6936 = vmatprep.subr.mxu0 0.0
      %6937 = vmatpush1.msra.mxu0 0.0
      %6938 = vmatprep.subr.mxu0 0.0
      %6939 = vmatpush1.msra.mxu0 0.0
      %6940 = vmatprep.subr.mxu0 0.0
      %6941 = vmatpush1.msra.mxu0 0.0
      %6942 = vmatprep.subr.mxu0 0.0
      %6943 = vmatpush1.msra.mxu0 0.0
      %6944 = vmatprep.mubr.f32.mxu0 0.0
      %6945 = vmatmul.mubr.f32.gmra.mrb[0].mxu0 %v6713
      %v6946 = vpop.f32.mrb[0].mxu0
      %v6947 = vadd.f32 0.0, %v6946
      %v6948 = vpop.f32.mrb[0].mxu0
      %v6949 = vadd.f32 0.0, %v6948
      %6950 = vmatprep.mubr.f32.mxu0 0.0
      %6951 = vmatmul.mubr.f32.gmra.mrb[0].mxu0 %v6716
      %v6952 = vpop.f32.mrb[0].mxu0
      %v6953 = vadd.f32 0.0, %v6952
      %v6954 = vpop.f32.mrb[0].mxu0
      %v6955 = vadd.f32 0.0, %v6954
      %6956 = vdwg.mxu0
      %6957 = vmatprep.subr.mxu0 %v6875
      %6958 = vmatpush1.msra.mxu0 %v6874
      %6959 = vmatprep.subr.mxu0 %v6879
      %6960 = vmatpush1.msra.mxu0 %v6878
      %6961 = vmatprep.subr.mxu0 0.0
      %6962 = vmatpush1.msra.mxu0 0.0
      %6963 = vmatprep.subr.mxu0 0.0
      %6964 = vmatpush1.msra.mxu0 0.0
      %6965 = vmatprep.subr.mxu0 0.0
      %6966 = vmatpush1.msra.mxu0 0.0
      %6967 = vmatprep.subr.mxu0 0.0
      %6968 = vmatpush1.msra.mxu0 0.0
      %6969 = vmatprep.subr.mxu0 0.0
      %6970 = vmatpush1.msra.mxu0 0.0
      %6971 = vmatprep.subr.mxu0 0.0
      %6972 = vmatpush1.msra.mxu0 0.0
      %6973 = vmatprep.subr.mxu0 0.0
      %6974 = vmatpush1.msra.mxu0 0.0
      %6975 = vmatprep.subr.mxu0 0.0
      %6976 = vmatpush1.msra.mxu0 0.0
      %6977 = vmatprep.subr.mxu0 0.0
      %6978 = vmatpush1.msra.mxu0 0.0
      %6979 = vmatprep.subr.mxu0 0.0
      %6980 = vmatpush1.msra.mxu0 0.0
      %6981 = vmatprep.subr.mxu0 0.0
      %6982 = vmatpush1.msra.mxu0 0.0
      %6983 = vmatprep.subr.mxu0 0.0
      %6984 = vmatpush1.msra.mxu0 0.0
      %6985 = vmatprep.subr.mxu0 0.0
      %6986 = vmatpush1.msra.mxu0 0.0
      %6987 = vmatprep.subr.mxu0 0.0
      %6988 = vmatpush1.msra.mxu0 0.0
      %6989 = vmatprep.subr.mxu0 0.0
      %6990 = vmatpush1.msra.mxu0 0.0
      %6991 = vmatprep.subr.mxu0 0.0
      %6992 = vmatpush1.msra.mxu0 0.0
      %6993 = vmatprep.subr.mxu0 0.0
      %6994 = vmatpush1.msra.mxu0 0.0
      %6995 = vmatprep.subr.mxu0 0.0
      %6996 = vmatpush1.msra.mxu0 0.0
      %6997 = vmatprep.subr.mxu0 0.0
      %6998 = vmatpush1.msra.mxu0 0.0
      %6999 = vmatprep.subr.mxu0 0.0
      %7000 = vmatpush1.msra.mxu0 0.0
      %7001 = vmatprep.subr.mxu0 0.0
      %7002 = vmatpush1.msra.mxu0 0.0
      %7003 = vmatprep.subr.mxu0 0.0
      %7004 = vmatpush1.msra.mxu0 0.0
      %7005 = vmatprep.subr.mxu0 0.0
      %7006 = vmatpush1.msra.mxu0 0.0
      %7007 = vmatprep.subr.mxu0 0.0
      %7008 = vmatpush1.msra.mxu0 0.0
      %7009 = vmatprep.subr.mxu0 0.0
      %7010 = vmatpush1.msra.mxu0 0.0
      %7011 = vmatprep.subr.mxu0 0.0
      %7012 = vmatpush1.msra.mxu0 0.0
      %7013 = vmatprep.subr.mxu0 0.0
      %7014 = vmatpush1.msra.mxu0 0.0
      %7015 = vmatprep.subr.mxu0 0.0
      %7016 = vmatpush1.msra.mxu0 0.0
      %7017 = vmatprep.subr.mxu0 0.0
      %7018 = vmatpush1.msra.mxu0 0.0
      %7019 = vmatprep.subr.mxu0 0.0
      %7020 = vmatpush1.msra.mxu0 0.0
      %7021 = vmatprep.mubr.f32.mxu0 0.0
      %7022 = vmatmul.mubr.f32.gmra.mrb[0].mxu0 %v6713
      %v7023 = vpop.f32.mrb[0].mxu0
      %v7024 = vadd.f32 0.0, %v7023
      %v7025 = vpop.f32.mrb[0].mxu0
      %v7026 = vadd.f32 0.0, %v7025
      %7027 = vmatprep.mubr.f32.mxu0 0.0
      %7028 = vmatmul.mubr.f32.gmra.mrb[0].mxu0 %v6716
      %v7029 = vpop.f32.mrb[0].mxu0
      %v7030 = vadd.f32 0.0, %v7029
      %v7031 = vpop.f32.mrb[0].mxu0
      %v7032 = vadd.f32 0.0, %v7031
      %7033 = vdwg.mxu0
      %v7034 = vadd.f32 %v6785, %v6787
      %v7035 = vadd.f32 %v7034, %v6862
      %v7036 = vadd.f32 %v7035, %v6864
      %7037 = vadd.xlane.f32.xlu0 %v7036
      %v7038 = vpop.xlane.xlu0 %7037
      %v7039 = vadd.f32 %v6791, %v6793
      %v7040 = vadd.f32 %v7039, %v6868
      %v7041 = vadd.f32 %v7040, %v6870
      %7042 = vadd.xlane.f32.xlu0 %v7041
      %v7043 = vpop.xlane.xlu0 %7042
      %v7044 = vadd.f32 %v6947, %v6949
      %v7045 = vadd.f32 %v7044, %v7024
      %v7046 = vadd.f32 %v7045, %v7026
      %7047 = vadd.xlane.f32.xlu0 %v7046
      %v7048 = vpop.xlane.xlu0 %7047
      %v7049 = vadd.f32 %v6953, %v6955
      %v7050 = vadd.f32 %v7049, %v7030
      %v7051 = vadd.f32 %v7050, %v7032
      %7052 = vadd.xlane.f32.xlu0 %v7051
      %v7053 = vpop.xlane.xlu0 %7052
      %v7054 = vmul.f32 %v7038, %v7038
      %v7055 = vmul.f32 %v7043, %v7043
      %v7056 = vsub.f32 %v7048, %v7054
      %v7057 = vsub.f32 %v7053, %v7055
      %v7058 = vsub.f32 %v6659, %v7038
      %v7059 = vsub.f32 %v6661, %v7038
      %v7060 = vsub.f32 %v6702, %v7038
      %v7061 = vsub.f32 %v6704, %v7038
      %v7062 = vsub.f32 %v6663, %v7043
      %v7063 = vsub.f32 %v6665, %v7043
      %v7064 = vsub.f32 %v6706, %v7043
      %v7065 = vsub.f32 %v6708, %v7043
      %v7066 = vadd.f32 %v7056, 1e-05
      %v7067 = vadd.f32 %v7057, 1e-05
      %v7068 = vrsqrt.pop %v7066
      %v7069 = vrsqrt.pop %v7067
      %v7070 = vmul.f32 %v7058, %v7068
      %v7071 = vmul.f32 %v7059, %v7068
      %v7072 = vmul.f32 %v7060, %v7068
      %v7073 = vmul.f32 %v7061, %v7068
      %v7074 = vmul.f32 %v7062, %v7069
      %v7075 = vmul.f32 %v7063, %v7069
      %v7076 = vmul.f32 %v7064, %v7069
      %v7077 = vmul.f32 %v7065, %v7069
      %v7078 = vld [vmem:[%s10] sm:$0xff]
      %v7079 = vld [vmem:[%s10 + $0x8] sm:$0xff]
      %7081 = vset.pattern.permute.xlu0 0
      %7082 = vperm.xlu0 %7081, %v7078
      %v7083 = vpop.permute.xlu0 %7082
      %7086 = vset.pattern.permute.xlu0 0
      %7087 = vperm.xlu0 %7086, %v7079
      %v7088 = vpop.permute.xlu0 %7087
      %v7090 = vmul.f32 %v7070, %v7083
      %v7091 = vmul.f32 %v7071, %v7083
      %v7092 = vmul.f32 %v7072, %v7083
      %v7093 = vmul.f32 %v7073, %v7083
      %v7094 = vmul.f32 %v7074, %v7088
      %v7095 = vmul.f32 %v7075, %v7088
      %v7096 = vmul.f32 %v7076, %v7088
      %v7097 = vmul.f32 %v7077, %v7088
      %v7098 = vld [vmem:[%s11] sm:$0xff]
      %v7099 = vld [vmem:[%s11 + $0x8] sm:$0xff]
      %7101 = vset.pattern.permute.xlu0 0
      %7102 = vperm.xlu0 %7101, %v7098
      %v7103 = vpop.permute.xlu0 %7102
      %7106 = vset.pattern.permute.xlu0 0
      %7107 = vperm.xlu0 %7106, %v7099
      %v7108 = vpop.permute.xlu0 %7107
      %v7110 = vadd.f32 %v7090, %v7103
      %v7111 = vadd.f32 %v7091, %v7103
      %v7112 = vadd.f32 %v7092, %v7103
      %v7113 = vadd.f32 %v7093, %v7103
      %v7114 = vadd.f32 %v7094, %v7108
      %v7115 = vadd.f32 %v7095, %v7108
      %v7116 = vadd.f32 %v7096, %v7108
      %v7117 = vadd.f32 %v7097, %v7108
      %v7118 = vmax.f32 %v7110, 0.0
      %v7119 = vmax.f32 %v7111, 0.0
      %v7120 = vmax.f32 %v7112, 0.0
      %v7121 = vmax.f32 %v7113, 0.0
      %v7122 = vmax.f32 %v7114, 0.0
      %v7123 = vmax.f32 %v7115, 0.0
      %v7124 = vmax.f32 %v7116, 0.0
      %v7125 = vmax.f32 %v7117, 0.0
      %7126 = vst [vmem:[#allocation3] sm:$0xff] 0.0
      %7127 = vst [vmem:[#allocation3 + $0x30] sm:$0xff] 0.0
      %7128 = vst [vmem:[#allocation3 + $0x28] sm:$0xff] 0.0
      %7129 = vst [vmem:[#allocation3 + $0x58] sm:$0xff] 0.0
      %7130 = vst [vmem:[#allocation3 + $0x8] sm:$0xff] %v7118
      %7131 = vst [vmem:[#allocation3 + $0x10] sm:$0xff] %v7119
      %7132 = vst [vmem:[#allocation3 + $0x18] sm:$0xff] %v7120
      %7133 = vst [vmem:[#allocation3 + $0x20] sm:$0xff] %v7121
      %7134 = vst [vmem:[#allocation3 + $0x38] sm:$0xff] %v7122
      %7135 = vst [vmem:[#allocation3 + $0x40] sm:$0xff] %v7123
      %7136 = vst [vmem:[#allocation3 + $0x48] sm:$0xff] %v7124
      %7137 = vst [vmem:[#allocation3 + $0x50] sm:$0xff] %v7125
      %v7138 = vld [vmem:[#allocation3] sm:$0xff]
      %v7139 = vld [vmem:[#allocation3 + $0x8] sm:$0xff]
      %v7140 = vld [vmem:[#allocation3 + $0x10] sm:$0xff]
      %v7141 = vld [vmem:[#allocation3 + $0x18] sm:$0xff]
      %v7142 = vld [vmem:[#allocation3 + $0x20] sm:$0xff]
      %v7143 = vld [vmem:[#allocation3 + $0x30] sm:$0xff]
      %v7144 = vld [vmem:[#allocation3 + $0x38] sm:$0xff]
      %v7145 = vld [vmem:[#allocation3 + $0x40] sm:$0xff]
      %v7146 = vld [vmem:[#allocation3 + $0x48] sm:$0xff]
      %v7147 = vld [vmem:[#allocation3 + $0x50] sm:$0xff]
      %v7148 = vld [vmem:[%s2] ss:$8 sm:$0xf]
      %v7150 = vlaneseq
      %v7151 = vshrl.u32 %v7150, 7
      %v7152 = vsub.s32 0, %v7151
      %v7153 = vrot.slane %v7148, %v7152
      %v7154 = vlaneseq
      %v7155 = vshrl.u32 %v7154, 7
      %v7156 = vsub.s32 1, %v7155
      %v7157 = vrot.slane %v7148, %v7156
      %v7158 = vlaneseq
      %v7159 = vshrl.u32 %v7158, 7
      %v7160 = vsub.s32 2, %v7159
      %v7161 = vrot.slane %v7148, %v7160
      %v7162 = vlaneseq
      %v7163 = vshrl.u32 %v7162, 7
      %v7164 = vsub.s32 3, %v7163
      %v7165 = vrot.slane %v7148, %v7164
      %7166 = vrot.lane.b32.xlu0 %v7153, 55
      %v7167 = vpop.permute.xlu0 %7166
      %7168 = vrot.lane.b32.xlu0 %v7157, 55
      %v7169 = vpop.permute.xlu0 %7168
      %7170 = vrot.lane.b32.xlu0 %v7161, 55
      %v7171 = vpop.permute.xlu0 %7170
      %7172 = vrot.lane.b32.xlu0 %v7165, 55
      %v7173 = vpop.permute.xlu0 %7172
      %v7174 = vsel %vm963, %v7167, %v7169
      %v7175 = vsel %vm963, %v7169, %v7171
      %v7176 = vsel %vm963, %v7171, %v7173
      %v7182 = vmul.f32 %v7138, %v7167
      %v7183 = vmul.f32 %v7139, %v7174
      %v7184 = vmul.f32 %v7140, %v7175
      %v7185 = vmul.f32 %v7141, %v7176
      %v7186 = vmul.f32 %v7142, %v7173
      %v7187 = vmul.f32 %v7143, %v7167
      %v7188 = vmul.f32 %v7144, %v7174
      %v7189 = vmul.f32 %v7145, %v7175
      %v7190 = vmul.f32 %v7146, %v7176
      %v7191 = vmul.f32 %v7147, %v7173
      %v7192 = vpack.c.bf16 %v7187, %v7182
      %v7193 = vpack.c.bf16 %v7188, %v7183
      %v7194 = vpack.c.bf16 %v7189, %v7184
      %v7195 = vpack.c.bf16 %v7190, %v7185
      %v7196 = vpack.c.bf16 %v7191, %v7186
      %7202 = vrot.lane.b32.xlu0 %v7192, 73
      %v7203 = vpop.permute.xlu0 %7202
      %7204 = vrot.lane.b32.xlu0 %v7193, 73
      %v7205 = vpop.permute.xlu0 %7204
      %7206 = vrot.lane.b32.xlu0 %v7194, 73
      %v7207 = vpop.permute.xlu0 %7206
      %7208 = vrot.lane.b32.xlu0 %v7195, 73
      %v7209 = vpop.permute.xlu0 %7208
      %7210 = vrot.lane.b32.xlu0 %v7196, 73
      %v7211 = vpop.permute.xlu0 %7210
      %v7212 = vsel %vm1006, %v7203, %v7205
      %v7213 = vsel %vm1006, %v7205, %v7207
      %v7214 = vsel %vm1006, %v7207, %v7209
      %v7215 = vsel %vm1006, %v7209, %v7211
      %7220 = vst [vmem:[#allocation5] sm:$0xff] %v7212
      %7221 = vst [vmem:[#allocation5 + $0x8] sm:$0xff] %v7213
      %7222 = vst [vmem:[#allocation5 + $0x10] sm:$0xff] %v7214
      %7223 = vst [vmem:[#allocation5 + $0x18] sm:$0xff] %v7215
      %v7224 = vld [vmem:[#allocation3] sm:$0xff]
      %v7225 = vld [vmem:[#allocation3 + $0x8] sm:$0xff]
      %v7226 = vld [vmem:[#allocation3 + $0x10] sm:$0xff]
      %v7227 = vld [vmem:[#allocation3 + $0x18] sm:$0xff]
      %v7228 = vld [vmem:[#allocation3 + $0x20] sm:$0xff]
      %v7229 = vld [vmem:[#allocation3 + $0x30] sm:$0xff]
      %v7230 = vld [vmem:[#allocation3 + $0x38] sm:$0xff]
      %v7231 = vld [vmem:[#allocation3 + $0x40] sm:$0xff]
      %v7232 = vld [vmem:[#allocation3 + $0x48] sm:$0xff]
      %v7233 = vld [vmem:[#allocation3 + $0x50] sm:$0xff]
      %v7234 = vld [vmem:[%s1019] ss:$8 sm:$0xf]
      %v7236 = vlaneseq
      %v7237 = vshrl.u32 %v7236, 7
      %v7238 = vsub.s32 0, %v7237
      %v7239 = vrot.slane %v7234, %v7238
      %v7240 = vlaneseq
      %v7241 = vshrl.u32 %v7240, 7
      %v7242 = vsub.s32 1, %v7241
      %v7243 = vrot.slane %v7234, %v7242
      %v7244 = vlaneseq
      %v7245 = vshrl.u32 %v7244, 7
      %v7246 = vsub.s32 2, %v7245
      %v7247 = vrot.slane %v7234, %v7246
      %v7248 = vlaneseq
      %v7249 = vshrl.u32 %v7248, 7
      %v7250 = vsub.s32 3, %v7249
      %v7251 = vrot.slane %v7234, %v7250
      %7252 = vrot.lane.b32.xlu0 %v7239, 56
      %v7253 = vpop.permute.xlu0 %7252
      %7254 = vrot.lane.b32.xlu0 %v7243, 56
      %v7255 = vpop.permute.xlu0 %7254
      %7256 = vrot.lane.b32.xlu0 %v7247, 56
      %v7257 = vpop.permute.xlu0 %7256
      %7258 = vrot.lane.b32.xlu0 %v7251, 56
      %v7259 = vpop.permute.xlu0 %7258
      %v7260 = vsel %vm1046, %v7253, %v7255
      %v7261 = vsel %vm1046, %v7255, %v7257
      %v7262 = vsel %vm1046, %v7257, %v7259
      %v7268 = vmul.f32 %v7224, %v7253
      %v7269 = vmul.f32 %v7225, %v7260
      %v7270 = vmul.f32 %v7226, %v7261
      %v7271 = vmul.f32 %v7227, %v7262
      %v7272 = vmul.f32 %v7228, %v7259
      %v7273 = vmul.f32 %v7229, %v7253
      %v7274 = vmul.f32 %v7230, %v7260
      %v7275 = vmul.f32 %v7231, %v7261
      %v7276 = vmul.f32 %v7232, %v7262
      %v7277 = vmul.f32 %v7233, %v7259
      %v7278 = vpack.c.bf16 %v7273, %v7268
      %v7279 = vpack.c.bf16 %v7274, %v7269
      %v7280 = vpack.c.bf16 %v7275, %v7270
      %v7281 = vpack.c.bf16 %v7276, %v7271
      %v7282 = vpack.c.bf16 %v7277, %v7272
      %7288 = vrot.lane.b32.xlu0 %v7278, 72
      %v7289 = vpop.permute.xlu0 %7288
      %7290 = vrot.lane.b32.xlu0 %v7279, 72
      %v7291 = vpop.permute.xlu0 %7290
      %7292 = vrot.lane.b32.xlu0 %v7280, 72
      %v7293 = vpop.permute.xlu0 %7292
      %7294 = vrot.lane.b32.xlu0 %v7281, 72
      %v7295 = vpop.permute.xlu0 %7294
      %7296 = vrot.lane.b32.xlu0 %v7282, 72
      %v7297 = vpop.permute.xlu0 %7296
      %v7298 = vsel %vm1088, %v7289, %v7291
      %v7299 = vsel %vm1088, %v7291, %v7293
      %v7300 = vsel %vm1088, %v7293, %v7295
      %v7301 = vsel %vm1088, %v7295, %v7297
      %7306 = vst [vmem:[#allocation5 + $0x20] sm:$0xff] %v7298
      %7307 = vst [vmem:[#allocation5 + $0x28] sm:$0xff] %v7299
      %7308 = vst [vmem:[#allocation5 + $0x30] sm:$0xff] %v7300
      %7309 = vst [vmem:[#allocation5 + $0x38] sm:$0xff] %v7301
      %v7310 = vld [vmem:[#allocation3] sm:$0xff]
      %v7311 = vld [vmem:[#allocation3 + $0x8] sm:$0xff]
      %v7312 = vld [vmem:[#allocation3 + $0x10] sm:$0xff]
      %v7313 = vld [vmem:[#allocation3 + $0x18] sm:$0xff]
      %v7314 = vld [vmem:[#allocation3 + $0x20] sm:$0xff]
      %v7315 = vld [vmem:[#allocation3 + $0x30] sm:$0xff]
      %v7316 = vld [vmem:[#allocation3 + $0x38] sm:$0xff]
      %v7317 = vld [vmem:[#allocation3 + $0x40] sm:$0xff]
      %v7318 = vld [vmem:[#allocation3 + $0x48] sm:$0xff]
      %v7319 = vld [vmem:[#allocation3 + $0x50] sm:$0xff]
      %v7320 = vld [vmem:[%s1101] ss:$8 sm:$0xf]
      %v7322 = vlaneseq
      %v7323 = vshrl.u32 %v7322, 7
      %v7324 = vsub.s32 0, %v7323
      %v7325 = vrot.slane %v7320, %v7324
      %v7326 = vlaneseq
      %v7327 = vshrl.u32 %v7326, 7
      %v7328 = vsub.s32 1, %v7327
      %v7329 = vrot.slane %v7320, %v7328
      %v7330 = vlaneseq
      %v7331 = vshrl.u32 %v7330, 7
      %v7332 = vsub.s32 2, %v7331
      %v7333 = vrot.slane %v7320, %v7332
      %v7334 = vlaneseq
      %v7335 = vshrl.u32 %v7334, 7
      %v7336 = vsub.s32 3, %v7335
      %v7337 = vrot.slane %v7320, %v7336
      %7338 = vrot.lane.b32.xlu0 %v7325, 57
      %v7339 = vpop.permute.xlu0 %7338
      %7340 = vrot.lane.b32.xlu0 %v7329, 57
      %v7341 = vpop.permute.xlu0 %7340
      %7342 = vrot.lane.b32.xlu0 %v7333, 57
      %v7343 = vpop.permute.xlu0 %7342
      %7344 = vrot.lane.b32.xlu0 %v7337, 57
      %v7345 = vpop.permute.xlu0 %7344
      %v7346 = vsel %vm1128, %v7339, %v7341
      %v7347 = vsel %vm1128, %v7341, %v7343
      %v7348 = vsel %vm1128, %v7343, %v7345
      %v7354 = vmul.f32 %v7310, %v7339
      %v7355 = vmul.f32 %v7311, %v7346
      %v7356 = vmul.f32 %v7312, %v7347
      %v7357 = vmul.f32 %v7313, %v7348
      %v7358 = vmul.f32 %v7314, %v7345
      %v7359 = vmul.f32 %v7315, %v7339
      %v7360 = vmul.f32 %v7316, %v7346
      %v7361 = vmul.f32 %v7317, %v7347
      %v7362 = vmul.f32 %v7318, %v7348
      %v7363 = vmul.f32 %v7319, %v7345
      %v7364 = vpack.c.bf16 %v7359, %v7354
      %v7365 = vpack.c.bf16 %v7360, %v7355
      %v7366 = vpack.c.bf16 %v7361, %v7356
      %v7367 = vpack.c.bf16 %v7362, %v7357
      %v7368 = vpack.c.bf16 %v7363, %v7358
      %7374 = vrot.lane.b32.xlu0 %v7364, 71
      %v7375 = vpop.permute.xlu0 %7374
      %7376 = vrot.lane.b32.xlu0 %v7365, 71
      %v7377 = vpop.permute.xlu0 %7376
      %7378 = vrot.lane.b32.xlu0 %v7366, 71
      %v7379 = vpop.permute.xlu0 %7378
      %7380 = vrot.lane.b32.xlu0 %v7367, 71
      %v7381 = vpop.permute.xlu0 %7380
      %7382 = vrot.lane.b32.xlu0 %v7368, 71
      %v7383 = vpop.permute.xlu0 %7382
      %v7384 = vsel %vm1170, %v7375, %v7377
      %v7385 = vsel %vm1170, %v7377, %v7379
      %v7386 = vsel %vm1170, %v7379, %v7381
      %v7387 = vsel %vm1170, %v7381, %v7383
      %7392 = vst [vmem:[#allocation5 + $0x40] sm:$0xff] %v7384
      %7393 = vst [vmem:[#allocation5 + $0x48] sm:$0xff] %v7385
      %7394 = vst [vmem:[#allocation5 + $0x50] sm:$0xff] %v7386
      %7395 = vst [vmem:[#allocation5 + $0x58] sm:$0xff] %v7387
      %v7396 = vld [vmem:[#allocation3] sm:$0xff]
      %v7397 = vld [vmem:[#allocation3 + $0x8] sm:$0xff]
      %v7398 = vld [vmem:[#allocation3 + $0x10] sm:$0xff]
      %v7399 = vld [vmem:[#allocation3 + $0x18] sm:$0xff]
      %v7400 = vld [vmem:[#allocation3 + $0x20] sm:$0xff]
      %v7401 = vld [vmem:[#allocation3 + $0x30] sm:$0xff]
      %v7402 = vld [vmem:[#allocation3 + $0x38] sm:$0xff]
      %v7403 = vld [vmem:[#allocation3 + $0x40] sm:$0xff]
      %v7404 = vld [vmem:[#allocation3 + $0x48] sm:$0xff]
      %v7405 = vld [vmem:[#allocation3 + $0x50] sm:$0xff]
      %v7406 = vld [vmem:[%s1183] ss:$8 sm:$0xf]
      %v7408 = vlaneseq
      %v7409 = vshrl.u32 %v7408, 7
      %v7410 = vsub.s32 0, %v7409
      %v7411 = vrot.slane %v7406, %v7410
      %v7412 = vlaneseq
      %v7413 = vshrl.u32 %v7412, 7
      %v7414 = vsub.s32 1, %v7413
      %v7415 = vrot.slane %v7406, %v7414
      %v7416 = vlaneseq
      %v7417 = vshrl.u32 %v7416, 7
      %v7418 = vsub.s32 2, %v7417
      %v7419 = vrot.slane %v7406, %v7418
      %v7420 = vlaneseq
      %v7421 = vshrl.u32 %v7420, 7
      %v7422 = vsub.s32 3, %v7421
      %v7423 = vrot.slane %v7406, %v7422
      %7424 = vrot.lane.b32.xlu0 %v7411, 63
      %v7425 = vpop.permute.xlu0 %7424
      %7426 = vrot.lane.b32.xlu0 %v7415, 63
      %v7427 = vpop.permute.xlu0 %7426
      %7428 = vrot.lane.b32.xlu0 %v7419, 63
      %v7429 = vpop.permute.xlu0 %7428
      %7430 = vrot.lane.b32.xlu0 %v7423, 63
      %v7431 = vpop.permute.xlu0 %7430
      %v7432 = vsel %vm1210, %v7425, %v7427
      %v7433 = vsel %vm1210, %v7427, %v7429
      %v7434 = vsel %vm1210, %v7429, %v7431
      %v7440 = vmul.f32 %v7396, %v7425
      %v7441 = vmul.f32 %v7397, %v7432
      %v7442 = vmul.f32 %v7398, %v7433
      %v7443 = vmul.f32 %v7399, %v7434
      %v7444 = vmul.f32 %v7400, %v7431
      %v7445 = vmul.f32 %v7401, %v7425
      %v7446 = vmul.f32 %v7402, %v7432
      %v7447 = vmul.f32 %v7403, %v7433
      %v7448 = vmul.f32 %v7404, %v7434
      %v7449 = vmul.f32 %v7405, %v7431
      %v7450 = vpack.c.bf16 %v7445, %v7440
      %v7451 = vpack.c.bf16 %v7446, %v7441
      %v7452 = vpack.c.bf16 %v7447, %v7442
      %v7453 = vpack.c.bf16 %v7448, %v7443
      %v7454 = vpack.c.bf16 %v7449, %v7444
      %7460 = vrot.lane.b32.xlu0 %v7450, 65
      %v7461 = vpop.permute.xlu0 %7460
      %7462 = vrot.lane.b32.xlu0 %v7451, 65
      %v7463 = vpop.permute.xlu0 %7462
      %7464 = vrot.lane.b32.xlu0 %v7452, 65
      %v7465 = vpop.permute.xlu0 %7464
      %7466 = vrot.lane.b32.xlu0 %v7453, 65
      %v7467 = vpop.permute.xlu0 %7466
      %7468 = vrot.lane.b32.xlu0 %v7454, 65
      %v7469 = vpop.permute.xlu0 %7468
      %v7470 = vsel %vm1252, %v7461, %v7463
      %v7471 = vsel %vm1252, %v7463, %v7465
      %v7472 = vsel %vm1252, %v7465, %v7467
      %v7473 = vsel %vm1252, %v7467, %v7469
      %7478 = vst [vmem:[#allocation5 + $0x60] sm:$0xff] %v7470
      %7479 = vst [vmem:[#allocation5 + $0x68] sm:$0xff] %v7471
      %7480 = vst [vmem:[#allocation5 + $0x70] sm:$0xff] %v7472
      %7481 = vst [vmem:[#allocation5 + $0x78] sm:$0xff] %v7473
      %v7482 = vld [vmem:[#allocation3] sm:$0xff]
      %v7483 = vld [vmem:[#allocation3 + $0x8] sm:$0xff]
      %v7484 = vld [vmem:[#allocation3 + $0x10] sm:$0xff]
      %v7485 = vld [vmem:[#allocation3 + $0x18] sm:$0xff]
      %v7486 = vld [vmem:[#allocation3 + $0x20] sm:$0xff]
      %v7487 = vld [vmem:[#allocation3 + $0x30] sm:$0xff]
      %v7488 = vld [vmem:[#allocation3 + $0x38] sm:$0xff]
      %v7489 = vld [vmem:[#allocation3 + $0x40] sm:$0xff]
      %v7490 = vld [vmem:[#allocation3 + $0x48] sm:$0xff]
      %v7491 = vld [vmem:[#allocation3 + $0x50] sm:$0xff]
      %v7492 = vld [vmem:[%s1265] ss:$8 sm:$0xf]
      %v7494 = vlaneseq
      %v7495 = vshrl.u32 %v7494, 7
      %v7496 = vsub.s32 0, %v7495
      %v7497 = vrot.slane %v7492, %v7496
      %v7498 = vlaneseq
      %v7499 = vshrl.u32 %v7498, 7
      %v7500 = vsub.s32 1, %v7499
      %v7501 = vrot.slane %v7492, %v7500
      %v7502 = vlaneseq
      %v7503 = vshrl.u32 %v7502, 7
      %v7504 = vsub.s32 2, %v7503
      %v7505 = vrot.slane %v7492, %v7504
      %v7506 = vlaneseq
      %v7507 = vshrl.u32 %v7506, 7
      %v7508 = vsub.s32 3, %v7507
      %v7509 = vrot.slane %v7492, %v7508
      %7510 = vrot.lane.b32.xlu0 %v7497, 64
      %v7511 = vpop.permute.xlu0 %7510
      %7512 = vrot.lane.b32.xlu0 %v7501, 64
      %v7513 = vpop.permute.xlu0 %7512
      %7514 = vrot.lane.b32.xlu0 %v7505, 64
      %v7515 = vpop.permute.xlu0 %7514
      %7516 = vrot.lane.b32.xlu0 %v7509, 64
      %v7517 = vpop.permute.xlu0 %7516
      %v7518 = vsel %vm1292, %v7511, %v7513
      %v7519 = vsel %vm1292, %v7513, %v7515
      %v7520 = vsel %vm1292, %v7515, %v7517
      %v7526 = vmul.f32 %v7482, %v7511
      %v7527 = vmul.f32 %v7483, %v7518
      %v7528 = vmul.f32 %v7484, %v7519
      %v7529 = vmul.f32 %v7485, %v7520
      %v7530 = vmul.f32 %v7486, %v7517
      %v7531 = vmul.f32 %v7487, %v7511
      %v7532 = vmul.f32 %v7488, %v7518
      %v7533 = vmul.f32 %v7489, %v7519
      %v7534 = vmul.f32 %v7490, %v7520
      %v7535 = vmul.f32 %v7491, %v7517
      %v7536 = vpack.c.bf16 %v7531, %v7526
      %v7537 = vpack.c.bf16 %v7532, %v7527
      %v7538 = vpack.c.bf16 %v7533, %v7528
      %v7539 = vpack.c.bf16 %v7534, %v7529
      %v7540 = vpack.c.bf16 %v7535, %v7530
      %7546 = vrot.lane.b32.xlu0 %v7536, 64
      %v7547 = vpop.permute.xlu0 %7546
      %7548 = vrot.lane.b32.xlu0 %v7537, 64
      %v7549 = vpop.permute.xlu0 %7548
      %7550 = vrot.lane.b32.xlu0 %v7538, 64
      %v7551 = vpop.permute.xlu0 %7550
      %7552 = vrot.lane.b32.xlu0 %v7539, 64
      %v7553 = vpop.permute.xlu0 %7552
      %7554 = vrot.lane.b32.xlu0 %v7540, 64
      %v7555 = vpop.permute.xlu0 %7554
      %v7556 = vsel %vm1334, %v7547, %v7549
      %v7557 = vsel %vm1334, %v7549, %v7551
      %v7558 = vsel %vm1334, %v7551, %v7553
      %v7559 = vsel %vm1334, %v7553, %v7555
      %7564 = vst [vmem:[#allocation5 + $0x80] sm:$0xff] %v7556
      %7565 = vst [vmem:[#allocation5 + $0x88] sm:$0xff] %v7557
      %7566 = vst [vmem:[#allocation5 + $0x90] sm:$0xff] %v7558
      %7567 = vst [vmem:[#allocation5 + $0x98] sm:$0xff] %v7559
      %v7568 = vld [vmem:[#allocation3] sm:$0xff]
      %v7569 = vld [vmem:[#allocation3 + $0x8] sm:$0xff]
      %v7570 = vld [vmem:[#allocation3 + $0x10] sm:$0xff]
      %v7571 = vld [vmem:[#allocation3 + $0x18] sm:$0xff]
      %v7572 = vld [vmem:[#allocation3 + $0x20] sm:$0xff]
      %v7573 = vld [vmem:[#allocation3 + $0x30] sm:$0xff]
      %v7574 = vld [vmem:[#allocation3 + $0x38] sm:$0xff]
      %v7575 = vld [vmem:[#allocation3 + $0x40] sm:$0xff]
      %v7576 = vld [vmem:[#allocation3 + $0x48] sm:$0xff]
      %v7577 = vld [vmem:[#allocation3 + $0x50] sm:$0xff]
      %v7578 = vld [vmem:[%s1347] ss:$8 sm:$0xf]
      %v7580 = vlaneseq
      %v7581 = vshrl.u32 %v7580, 7
      %v7582 = vsub.s32 0, %v7581
      %v7583 = vrot.slane %v7578, %v7582
      %v7584 = vlaneseq
      %v7585 = vshrl.u32 %v7584, 7
      %v7586 = vsub.s32 1, %v7585
      %v7587 = vrot.slane %v7578, %v7586
      %v7588 = vlaneseq
      %v7589 = vshrl.u32 %v7588, 7
      %v7590 = vsub.s32 2, %v7589
      %v7591 = vrot.slane %v7578, %v7590
      %v7592 = vlaneseq
      %v7593 = vshrl.u32 %v7592, 7
      %v7594 = vsub.s32 3, %v7593
      %v7595 = vrot.slane %v7578, %v7594
      %7596 = vrot.lane.b32.xlu0 %v7583, 65
      %v7597 = vpop.permute.xlu0 %7596
      %7598 = vrot.lane.b32.xlu0 %v7587, 65
      %v7599 = vpop.permute.xlu0 %7598
      %7600 = vrot.lane.b32.xlu0 %v7591, 65
      %v7601 = vpop.permute.xlu0 %7600
      %7602 = vrot.lane.b32.xlu0 %v7595, 65
      %v7603 = vpop.permute.xlu0 %7602
      %v7604 = vsel %vm1374, %v7597, %v7599
      %v7605 = vsel %vm1374, %v7599, %v7601
      %v7606 = vsel %vm1374, %v7601, %v7603
      %v7612 = vmul.f32 %v7568, %v7597
      %v7613 = vmul.f32 %v7569, %v7604
      %v7614 = vmul.f32 %v7570, %v7605
      %v7615 = vmul.f32 %v7571, %v7606
      %v7616 = vmul.f32 %v7572, %v7603
      %v7617 = vmul.f32 %v7573, %v7597
      %v7618 = vmul.f32 %v7574, %v7604
      %v7619 = vmul.f32 %v7575, %v7605
      %v7620 = vmul.f32 %v7576, %v7606
      %v7621 = vmul.f32 %v7577, %v7603
      %v7622 = vpack.c.bf16 %v7617, %v7612
      %v7623 = vpack.c.bf16 %v7618, %v7613
      %v7624 = vpack.c.bf16 %v7619, %v7614
      %v7625 = vpack.c.bf16 %v7620, %v7615
      %v7626 = vpack.c.bf16 %v7621, %v7616
      %7632 = vrot.lane.b32.xlu0 %v7622, 63
      %v7633 = vpop.permute.xlu0 %7632
      %7634 = vrot.lane.b32.xlu0 %v7623, 63
      %v7635 = vpop.permute.xlu0 %7634
      %7636 = vrot.lane.b32.xlu0 %v7624, 63
      %v7637 = vpop.permute.xlu0 %7636
      %7638 = vrot.lane.b32.xlu0 %v7625, 63
      %v7639 = vpop.permute.xlu0 %7638
      %7640 = vrot.lane.b32.xlu0 %v7626, 63
      %v7641 = vpop.permute.xlu0 %7640
      %v7642 = vsel %vm1416, %v7633, %v7635
      %v7643 = vsel %vm1416, %v7635, %v7637
      %v7644 = vsel %vm1416, %v7637, %v7639
      %v7645 = vsel %vm1416, %v7639, %v7641
      %7650 = vst [vmem:[#allocation5 + $0xa0] sm:$0xff] %v7642
      %7651 = vst [vmem:[#allocation5 + $0xa8] sm:$0xff] %v7643
      %7652 = vst [vmem:[#allocation5 + $0xb0] sm:$0xff] %v7644
      %7653 = vst [vmem:[#allocation5 + $0xb8] sm:$0xff] %v7645
      %v7654 = vld [vmem:[#allocation3] sm:$0xff]
      %v7655 = vld [vmem:[#allocation3 + $0x8] sm:$0xff]
      %v7656 = vld [vmem:[#allocation3 + $0x10] sm:$0xff]
      %v7657 = vld [vmem:[#allocation3 + $0x18] sm:$0xff]
      %v7658 = vld [vmem:[#allocation3 + $0x20] sm:$0xff]
      %v7659 = vld [vmem:[#allocation3 + $0x30] sm:$0xff]
      %v7660 = vld [vmem:[#allocation3 + $0x38] sm:$0xff]
      %v7661 = vld [vmem:[#allocation3 + $0x40] sm:$0xff]
      %v7662 = vld [vmem:[#allocation3 + $0x48] sm:$0xff]
      %v7663 = vld [vmem:[#allocation3 + $0x50] sm:$0xff]
      %v7664 = vld [vmem:[%s1429] ss:$8 sm:$0xf]
      %v7666 = vlaneseq
      %v7667 = vshrl.u32 %v7666, 7
      %v7668 = vsub.s32 0, %v7667
      %v7669 = vrot.slane %v7664, %v7668
      %v7670 = vlaneseq
      %v7671 = vshrl.u32 %v7670, 7
      %v7672 = vsub.s32 1, %v7671
      %v7673 = vrot.slane %v7664, %v7672
      %v7674 = vlaneseq
      %v7675 = vshrl.u32 %v7674, 7
      %v7676 = vsub.s32 2, %v7675
      %v7677 = vrot.slane %v7664, %v7676
      %v7678 = vlaneseq
      %v7679 = vshrl.u32 %v7678, 7
      %v7680 = vsub.s32 3, %v7679
      %v7681 = vrot.slane %v7664, %v7680
      %7682 = vrot.lane.b32.xlu0 %v7669, 71
      %v7683 = vpop.permute.xlu0 %7682
      %7684 = vrot.lane.b32.xlu0 %v7673, 71
      %v7685 = vpop.permute.xlu0 %7684
      %7686 = vrot.lane.b32.xlu0 %v7677, 71
      %v7687 = vpop.permute.xlu0 %7686
      %7688 = vrot.lane.b32.xlu0 %v7681, 71
      %v7689 = vpop.permute.xlu0 %7688
      %v7690 = vsel %vm1456, %v7683, %v7685
      %v7691 = vsel %vm1456, %v7685, %v7687
      %v7692 = vsel %vm1456, %v7687, %v7689
      %v7698 = vmul.f32 %v7654, %v7683
      %v7699 = vmul.f32 %v7655, %v7690
      %v7700 = vmul.f32 %v7656, %v7691
      %v7701 = vmul.f32 %v7657, %v7692
      %v7702 = vmul.f32 %v7658, %v7689
      %v7703 = vmul.f32 %v7659, %v7683
      %v7704 = vmul.f32 %v7660, %v7690
      %v7705 = vmul.f32 %v7661, %v7691
      %v7706 = vmul.f32 %v7662, %v7692
      %v7707 = vmul.f32 %v7663, %v7689
      %v7708 = vpack.c.bf16 %v7703, %v7698
      %v7709 = vpack.c.bf16 %v7704, %v7699
      %v7710 = vpack.c.bf16 %v7705, %v7700
      %v7711 = vpack.c.bf16 %v7706, %v7701
      %v7712 = vpack.c.bf16 %v7707, %v7702
      %7718 = vrot.lane.b32.xlu0 %v7708, 57
      %v7719 = vpop.permute.xlu0 %7718
      %7720 = vrot.lane.b32.xlu0 %v7709, 57
      %v7721 = vpop.permute.xlu0 %7720
      %7722 = vrot.lane.b32.xlu0 %v7710, 57
      %v7723 = vpop.permute.xlu0 %7722
      %7724 = vrot.lane.b32.xlu0 %v7711, 57
      %v7725 = vpop.permute.xlu0 %7724
      %7726 = vrot.lane.b32.xlu0 %v7712, 57
      %v7727 = vpop.permute.xlu0 %7726
      %v7728 = vsel %vm1498, %v7719, %v7721
      %v7729 = vsel %vm1498, %v7721, %v7723
      %v7730 = vsel %vm1498, %v7723, %v7725
      %v7731 = vsel %vm1498, %v7725, %v7727
      %7736 = vst [vmem:[#allocation5 + $0xc0] sm:$0xff] %v7728
      %7737 = vst [vmem:[#allocation5 + $0xc8] sm:$0xff] %v7729
      %7738 = vst [vmem:[#allocation5 + $0xd0] sm:$0xff] %v7730
      %7739 = vst [vmem:[#allocation5 + $0xd8] sm:$0xff] %v7731
      %v7740 = vld [vmem:[#allocation3] sm:$0xff]
      %v7741 = vld [vmem:[#allocation3 + $0x8] sm:$0xff]
      %v7742 = vld [vmem:[#allocation3 + $0x10] sm:$0xff]
      %v7743 = vld [vmem:[#allocation3 + $0x18] sm:$0xff]
      %v7744 = vld [vmem:[#allocation3 + $0x20] sm:$0xff]
      %v7745 = vld [vmem:[#allocation3 + $0x30] sm:$0xff]
      %v7746 = vld [vmem:[#allocation3 + $0x38] sm:$0xff]
      %v7747 = vld [vmem:[#allocation3 + $0x40] sm:$0xff]
      %v7748 = vld [vmem:[#allocation3 + $0x48] sm:$0xff]
      %v7749 = vld [vmem:[#allocation3 + $0x50] sm:$0xff]
      %v7750 = vld [vmem:[%s1511] ss:$8 sm:$0xf]
      %v7752 = vlaneseq
      %v7753 = vshrl.u32 %v7752, 7
      %v7754 = vsub.s32 0, %v7753
      %v7755 = vrot.slane %v7750, %v7754
      %v7756 = vlaneseq
      %v7757 = vshrl.u32 %v7756, 7
      %v7758 = vsub.s32 1, %v7757
      %v7759 = vrot.slane %v7750, %v7758
      %v7760 = vlaneseq
      %v7761 = vshrl.u32 %v7760, 7
      %v7762 = vsub.s32 2, %v7761
      %v7763 = vrot.slane %v7750, %v7762
      %v7764 = vlaneseq
      %v7765 = vshrl.u32 %v7764, 7
      %v7766 = vsub.s32 3, %v7765
      %v7767 = vrot.slane %v7750, %v7766
      %7768 = vrot.lane.b32.xlu0 %v7755, 72
      %v7769 = vpop.permute.xlu0 %7768
      %7770 = vrot.lane.b32.xlu0 %v7759, 72
      %v7771 = vpop.permute.xlu0 %7770
      %7772 = vrot.lane.b32.xlu0 %v7763, 72
      %v7773 = vpop.permute.xlu0 %7772
      %7774 = vrot.lane.b32.xlu0 %v7767, 72
      %v7775 = vpop.permute.xlu0 %7774
      %v7776 = vsel %vm1538, %v7769, %v7771
      %v7777 = vsel %vm1538, %v7771, %v7773
      %v7778 = vsel %vm1538, %v7773, %v7775
      %v7784 = vmul.f32 %v7740, %v7769
      %v7785 = vmul.f32 %v7741, %v7776
      %v7786 = vmul.f32 %v7742, %v7777
      %v7787 = vmul.f32 %v7743, %v7778
      %v7788 = vmul.f32 %v7744, %v7775
      %v7789 = vmul.f32 %v7745, %v7769
      %v7790 = vmul.f32 %v7746, %v7776
      %v7791 = vmul.f32 %v7747, %v7777
      %v7792 = vmul.f32 %v7748, %v7778
      %v7793 = vmul.f32 %v7749, %v7775
      %v7794 = vpack.c.bf16 %v7789, %v7784
      %v7795 = vpack.c.bf16 %v7790, %v7785
      %v7796 = vpack.c.bf16 %v7791, %v7786
      %v7797 = vpack.c.bf16 %v7792, %v7787
      %v7798 = vpack.c.bf16 %v7793, %v7788
      %7804 = vrot.lane.b32.xlu0 %v7794, 56
      %v7805 = vpop.permute.xlu0 %7804
      %7806 = vrot.lane.b32.xlu0 %v7795, 56
      %v7807 = vpop.permute.xlu0 %7806
      %7808 = vrot.lane.b32.xlu0 %v7796, 56
      %v7809 = vpop.permute.xlu0 %7808
      %7810 = vrot.lane.b32.xlu0 %v7797, 56
      %v7811 = vpop.permute.xlu0 %7810
      %7812 = vrot.lane.b32.xlu0 %v7798, 56
      %v7813 = vpop.permute.xlu0 %7812
      %v7814 = vsel %vm1580, %v7805, %v7807
      %v7815 = vsel %vm1580, %v7807, %v7809
      %v7816 = vsel %vm1580, %v7809, %v7811
      %v7817 = vsel %vm1580, %v7811, %v7813
      %7822 = vst [vmem:[#allocation5 + $0xe0] sm:$0xff] %v7814
      %7823 = vst [vmem:[#allocation5 + $0xe8] sm:$0xff] %v7815
      %7824 = vst [vmem:[#allocation5 + $0xf0] sm:$0xff] %v7816
      %7825 = vst [vmem:[#allocation5 + $0xf8] sm:$0xff] %v7817
      %v7826 = vld [vmem:[#allocation3] sm:$0xff]
      %v7827 = vld [vmem:[#allocation3 + $0x8] sm:$0xff]
      %v7828 = vld [vmem:[#allocation3 + $0x10] sm:$0xff]
      %v7829 = vld [vmem:[#allocation3 + $0x18] sm:$0xff]
      %v7830 = vld [vmem:[#allocation3 + $0x20] sm:$0xff]
      %v7831 = vld [vmem:[#allocation3 + $0x30] sm:$0xff]
      %v7832 = vld [vmem:[#allocation3 + $0x38] sm:$0xff]
      %v7833 = vld [vmem:[#allocation3 + $0x40] sm:$0xff]
      %v7834 = vld [vmem:[#allocation3 + $0x48] sm:$0xff]
      %v7835 = vld [vmem:[#allocation3 + $0x50] sm:$0xff]
      %v7836 = vld [vmem:[%s1593] ss:$8 sm:$0xf]
      %v7838 = vlaneseq
      %v7839 = vshrl.u32 %v7838, 7
      %v7840 = vsub.s32 0, %v7839
      %v7841 = vrot.slane %v7836, %v7840
      %v7842 = vlaneseq
      %v7843 = vshrl.u32 %v7842, 7
      %v7844 = vsub.s32 1, %v7843
      %v7845 = vrot.slane %v7836, %v7844
      %v7846 = vlaneseq
      %v7847 = vshrl.u32 %v7846, 7
      %v7848 = vsub.s32 2, %v7847
      %v7849 = vrot.slane %v7836, %v7848
      %v7850 = vlaneseq
      %v7851 = vshrl.u32 %v7850, 7
      %v7852 = vsub.s32 3, %v7851
      %v7853 = vrot.slane %v7836, %v7852
      %7854 = vrot.lane.b32.xlu0 %v7841, 73
      %v7855 = vpop.permute.xlu0 %7854
      %7856 = vrot.lane.b32.xlu0 %v7845, 73
      %v7857 = vpop.permute.xlu0 %7856
      %7858 = vrot.lane.b32.xlu0 %v7849, 73
      %v7859 = vpop.permute.xlu0 %7858
      %7860 = vrot.lane.b32.xlu0 %v7853, 73
      %v7861 = vpop.permute.xlu0 %7860
      %v7862 = vsel %vm1620, %v7855, %v7857
      %v7863 = vsel %vm1620, %v7857, %v7859
      %v7864 = vsel %vm1620, %v7859, %v7861
      %v7870 = vmul.f32 %v7826, %v7855
      %v7871 = vmul.f32 %v7827, %v7862
      %v7872 = vmul.f32 %v7828, %v7863
      %v7873 = vmul.f32 %v7829, %v7864
      %v7874 = vmul.f32 %v7830, %v7861
      %v7875 = vmul.f32 %v7831, %v7855
      %v7876 = vmul.f32 %v7832, %v7862
      %v7877 = vmul.f32 %v7833, %v7863
      %v7878 = vmul.f32 %v7834, %v7864
      %v7879 = vmul.f32 %v7835, %v7861
      %v7880 = vpack.c.bf16 %v7875, %v7870
      %v7881 = vpack.c.bf16 %v7876, %v7871
      %v7882 = vpack.c.bf16 %v7877, %v7872
      %v7883 = vpack.c.bf16 %v7878, %v7873
      %v7884 = vpack.c.bf16 %v7879, %v7874
      %7890 = vrot.lane.b32.xlu0 %v7880, 55
      %v7891 = vpop.permute.xlu0 %7890
      %7892 = vrot.lane.b32.xlu0 %v7881, 55
      %v7893 = vpop.permute.xlu0 %7892
      %7894 = vrot.lane.b32.xlu0 %v7882, 55
      %v7895 = vpop.permute.xlu0 %7894
      %7896 = vrot.lane.b32.xlu0 %v7883, 55
      %v7897 = vpop.permute.xlu0 %7896
      %7898 = vrot.lane.b32.xlu0 %v7884, 55
      %v7899 = vpop.permute.xlu0 %7898
      %v7900 = vsel %vm1662, %v7891, %v7893
      %v7901 = vsel %vm1662, %v7893, %v7895
      %v7902 = vsel %vm1662, %v7895, %v7897
      %v7903 = vsel %vm1662, %v7897, %v7899
      %7908 = vst [vmem:[#allocation5 + $0x100] sm:$0xff] %v7900
      %7909 = vst [vmem:[#allocation5 + $0x108] sm:$0xff] %v7901
      %7910 = vst [vmem:[#allocation5 + $0x110] sm:$0xff] %v7902
      %7911 = vst [vmem:[#allocation5 + $0x118] sm:$0xff] %v7903
      %v7912 = vld [vmem:[#allocation3] sm:$0xff]
      %v7913 = vld [vmem:[#allocation3 + $0x8] sm:$0xff]
      %v7914 = vld [vmem:[#allocation3 + $0x10] sm:$0xff]
      %v7915 = vld [vmem:[#allocation3 + $0x18] sm:$0xff]
      %v7916 = vld [vmem:[#allocation3 + $0x20] sm:$0xff]
      %v7917 = vld [vmem:[#allocation3 + $0x30] sm:$0xff]
      %v7918 = vld [vmem:[#allocation3 + $0x38] sm:$0xff]
      %v7919 = vld [vmem:[#allocation3 + $0x40] sm:$0xff]
      %v7920 = vld [vmem:[#allocation3 + $0x48] sm:$0xff]
      %v7921 = vld [vmem:[#allocation3 + $0x50] sm:$0xff]
      %v7922 = vld [vmem:[%s1675] ss:$8 sm:$0xf]
      %v7924 = vlaneseq
      %v7925 = vshrl.u32 %v7924, 7
      %v7926 = vsub.s32 0, %v7925
      %v7927 = vrot.slane %v7922, %v7926
      %v7928 = vlaneseq
      %v7929 = vshrl.u32 %v7928, 7
      %v7930 = vsub.s32 1, %v7929
      %v7931 = vrot.slane %v7922, %v7930
      %v7932 = vlaneseq
      %v7933 = vshrl.u32 %v7932, 7
      %v7934 = vsub.s32 2, %v7933
      %v7935 = vrot.slane %v7922, %v7934
      %v7936 = vlaneseq
      %v7937 = vshrl.u32 %v7936, 7
      %v7938 = vsub.s32 3, %v7937
      %v7939 = vrot.slane %v7922, %v7938
      %7940 = vrot.lane.b32.xlu0 %v7927, 119
      %v7941 = vpop.permute.xlu0 %7940
      %7942 = vrot.lane.b32.xlu0 %v7931, 119
      %v7943 = vpop.permute.xlu0 %7942
      %7944 = vrot.lane.b32.xlu0 %v7935, 119
      %v7945 = vpop.permute.xlu0 %7944
      %7946 = vrot.lane.b32.xlu0 %v7939, 119
      %v7947 = vpop.permute.xlu0 %7946
      %v7948 = vsel %vm1702, %v7941, %v7943
      %v7949 = vsel %vm1702, %v7943, %v7945
      %v7950 = vsel %vm1702, %v7945, %v7947
      %v7956 = vmul.f32 %v7912, %v7941
      %v7957 = vmul.f32 %v7913, %v7948
      %v7958 = vmul.f32 %v7914, %v7949
      %v7959 = vmul.f32 %v7915, %v7950
      %v7960 = vmul.f32 %v7916, %v7947
      %v7961 = vmul.f32 %v7917, %v7941
      %v7962 = vmul.f32 %v7918, %v7948
      %v7963 = vmul.f32 %v7919, %v7949
      %v7964 = vmul.f32 %v7920, %v7950
      %v7965 = vmul.f32 %v7921, %v7947
      %v7966 = vpack.c.bf16 %v7961, %v7956
      %v7967 = vpack.c.bf16 %v7962, %v7957
      %v7968 = vpack.c.bf16 %v7963, %v7958
      %v7969 = vpack.c.bf16 %v7964, %v7959
      %v7970 = vpack.c.bf16 %v7965, %v7960
      %7976 = vrot.lane.b32.xlu0 %v7966, 9
      %v7977 = vpop.permute.xlu0 %7976
      %7978 = vrot.lane.b32.xlu0 %v7967, 9
      %v7979 = vpop.permute.xlu0 %7978
      %7980 = vrot.lane.b32.xlu0 %v7968, 9
      %v7981 = vpop.permute.xlu0 %7980
      %7982 = vrot.lane.b32.xlu0 %v7969, 9
      %v7983 = vpop.permute.xlu0 %7982
      %7984 = vrot.lane.b32.xlu0 %v7970, 9
      %v7985 = vpop.permute.xlu0 %7984
      %v7986 = vsel %vm1744, %v7977, %v7979
      %v7987 = vsel %vm1744, %v7979, %v7981
      %v7988 = vsel %vm1744, %v7981, %v7983
      %v7989 = vsel %vm1744, %v7983, %v7985
      %7994 = vst [vmem:[#allocation5 + $0x120] sm:$0xff] %v7986
      %7995 = vst [vmem:[#allocation5 + $0x128] sm:$0xff] %v7987
      %7996 = vst [vmem:[#allocation5 + $0x130] sm:$0xff] %v7988
      %7997 = vst [vmem:[#allocation5 + $0x138] sm:$0xff] %v7989
      %v7998 = vld [vmem:[#allocation3] sm:$0xff]
      %v7999 = vld [vmem:[#allocation3 + $0x8] sm:$0xff]
      %v8000 = vld [vmem:[#allocation3 + $0x10] sm:$0xff]
      %v8001 = vld [vmem:[#allocation3 + $0x18] sm:$0xff]
      %v8002 = vld [vmem:[#allocation3 + $0x20] sm:$0xff]
      %v8003 = vld [vmem:[#allocation3 + $0x30] sm:$0xff]
      %v8004 = vld [vmem:[#allocation3 + $0x38] sm:$0xff]
      %v8005 = vld [vmem:[#allocation3 + $0x40] sm:$0xff]
      %v8006 = vld [vmem:[#allocation3 + $0x48] sm:$0xff]
      %v8007 = vld [vmem:[#allocation3 + $0x50] sm:$0xff]
      %v8008 = vld [vmem:[%s1757] ss:$8 sm:$0xf]
      %v8010 = vlaneseq
      %v8011 = vshrl.u32 %v8010, 7
      %v8012 = vsub.s32 0, %v8011
      %v8013 = vrot.slane %v8008, %v8012
      %v8014 = vlaneseq
      %v8015 = vshrl.u32 %v8014, 7
      %v8016 = vsub.s32 1, %v8015
      %v8017 = vrot.slane %v8008, %v8016
      %v8018 = vlaneseq
      %v8019 = vshrl.u32 %v8018, 7
      %v8020 = vsub.s32 2, %v8019
      %v8021 = vrot.slane %v8008, %v8020
      %v8022 = vlaneseq
      %v8023 = vshrl.u32 %v8022, 7
      %v8024 = vsub.s32 3, %v8023
      %v8025 = vrot.slane %v8008, %v8024
      %8026 = vrot.lane.b32.xlu0 %v8013, 120
      %v8027 = vpop.permute.xlu0 %8026
      %8028 = vrot.lane.b32.xlu0 %v8017, 120
      %v8029 = vpop.permute.xlu0 %8028
      %8030 = vrot.lane.b32.xlu0 %v8021, 120
      %v8031 = vpop.permute.xlu0 %8030
      %8032 = vrot.lane.b32.xlu0 %v8025, 120
      %v8033 = vpop.permute.xlu0 %8032
      %v8034 = vsel %vm1784, %v8027, %v8029
      %v8035 = vsel %vm1784, %v8029, %v8031
      %v8036 = vsel %vm1784, %v8031, %v8033
      %v8042 = vmul.f32 %v7998, %v8027
      %v8043 = vmul.f32 %v7999, %v8034
      %v8044 = vmul.f32 %v8000, %v8035
      %v8045 = vmul.f32 %v8001, %v8036
      %v8046 = vmul.f32 %v8002, %v8033
      %v8047 = vmul.f32 %v8003, %v8027
      %v8048 = vmul.f32 %v8004, %v8034
      %v8049 = vmul.f32 %v8005, %v8035
      %v8050 = vmul.f32 %v8006, %v8036
      %v8051 = vmul.f32 %v8007, %v8033
      %v8052 = vpack.c.bf16 %v8047, %v8042
      %v8053 = vpack.c.bf16 %v8048, %v8043
      %v8054 = vpack.c.bf16 %v8049, %v8044
      %v8055 = vpack.c.bf16 %v8050, %v8045
      %v8056 = vpack.c.bf16 %v8051, %v8046
      %8062 = vrot.lane.b32.xlu0 %v8052, 8
      %v8063 = vpop.permute.xlu0 %8062
      %8064 = vrot.lane.b32.xlu0 %v8053, 8
      %v8065 = vpop.permute.xlu0 %8064
      %8066 = vrot.lane.b32.xlu0 %v8054, 8
      %v8067 = vpop.permute.xlu0 %8066
      %8068 = vrot.lane.b32.xlu0 %v8055, 8
      %v8069 = vpop.permute.xlu0 %8068
      %8070 = vrot.lane.b32.xlu0 %v8056, 8
      %v8071 = vpop.permute.xlu0 %8070
      %v8072 = vsel %vm1826, %v8063, %v8065
      %v8073 = vsel %vm1826, %v8065, %v8067
      %v8074 = vsel %vm1826, %v8067, %v8069
      %v8075 = vsel %vm1826, %v8069, %v8071
      %8080 = vst [vmem:[#allocation5 + $0x140] sm:$0xff] %v8072
      %8081 = vst [vmem:[#allocation5 + $0x148] sm:$0xff] %v8073
      %8082 = vst [vmem:[#allocation5 + $0x150] sm:$0xff] %v8074
      %8083 = vst [vmem:[#allocation5 + $0x158] sm:$0xff] %v8075
      %v8084 = vld [vmem:[#allocation3] sm:$0xff]
      %v8085 = vld [vmem:[#allocation3 + $0x8] sm:$0xff]
      %v8086 = vld [vmem:[#allocation3 + $0x10] sm:$0xff]
      %v8087 = vld [vmem:[#allocation3 + $0x18] sm:$0xff]
      %v8088 = vld [vmem:[#allocation3 + $0x20] sm:$0xff]
      %v8089 = vld [vmem:[#allocation3 + $0x30] sm:$0xff]
      %v8090 = vld [vmem:[#allocation3 + $0x38] sm:$0xff]
      %v8091 = vld [vmem:[#allocation3 + $0x40] sm:$0xff]
      %v8092 = vld [vmem:[#allocation3 + $0x48] sm:$0xff]
      %v8093 = vld [vmem:[#allocation3 + $0x50] sm:$0xff]
      %v8094 = vld [vmem:[%s1839] ss:$8 sm:$0xf]
      %v8096 = vlaneseq
      %v8097 = vshrl.u32 %v8096, 7
      %v8098 = vsub.s32 0, %v8097
      %v8099 = vrot.slane %v8094, %v8098
      %v8100 = vlaneseq
      %v8101 = vshrl.u32 %v8100, 7
      %v8102 = vsub.s32 1, %v8101
      %v8103 = vrot.slane %v8094, %v8102
      %v8104 = vlaneseq
      %v8105 = vshrl.u32 %v8104, 7
      %v8106 = vsub.s32 2, %v8105
      %v8107 = vrot.slane %v8094, %v8106
      %v8108 = vlaneseq
      %v8109 = vshrl.u32 %v8108, 7
      %v8110 = vsub.s32 3, %v8109
      %v8111 = vrot.slane %v8094, %v8110
      %8112 = vrot.lane.b32.xlu0 %v8099, 121
      %v8113 = vpop.permute.xlu0 %8112
      %8114 = vrot.lane.b32.xlu0 %v8103, 121
      %v8115 = vpop.permute.xlu0 %8114
      %8116 = vrot.lane.b32.xlu0 %v8107, 121
      %v8117 = vpop.permute.xlu0 %8116
      %8118 = vrot.lane.b32.xlu0 %v8111, 121
      %v8119 = vpop.permute.xlu0 %8118
      %v8120 = vsel %vm1866, %v8113, %v8115
      %v8121 = vsel %vm1866, %v8115, %v8117
      %v8122 = vsel %vm1866, %v8117, %v8119
      %v8128 = vmul.f32 %v8084, %v8113
      %v8129 = vmul.f32 %v8085, %v8120
      %v8130 = vmul.f32 %v8086, %v8121
      %v8131 = vmul.f32 %v8087, %v8122
      %v8132 = vmul.f32 %v8088, %v8119
      %v8133 = vmul.f32 %v8089, %v8113
      %v8134 = vmul.f32 %v8090, %v8120
      %v8135 = vmul.f32 %v8091, %v8121
      %v8136 = vmul.f32 %v8092, %v8122
      %v8137 = vmul.f32 %v8093, %v8119
      %v8138 = vpack.c.bf16 %v8133, %v8128
      %v8139 = vpack.c.bf16 %v8134, %v8129
      %v8140 = vpack.c.bf16 %v8135, %v8130
      %v8141 = vpack.c.bf16 %v8136, %v8131
      %v8142 = vpack.c.bf16 %v8137, %v8132
      %8148 = vrot.lane.b32.xlu0 %v8138, 7
      %v8149 = vpop.permute.xlu0 %8148
      %8150 = vrot.lane.b32.xlu0 %v8139, 7
      %v8151 = vpop.permute.xlu0 %8150
      %8152 = vrot.lane.b32.xlu0 %v8140, 7
      %v8153 = vpop.permute.xlu0 %8152
      %8154 = vrot.lane.b32.xlu0 %v8141, 7
      %v8155 = vpop.permute.xlu0 %8154
      %8156 = vrot.lane.b32.xlu0 %v8142, 7
      %v8157 = vpop.permute.xlu0 %8156
      %v8158 = vsel %vm1908, %v8149, %v8151
      %v8159 = vsel %vm1908, %v8151, %v8153
      %v8160 = vsel %vm1908, %v8153, %v8155
      %v8161 = vsel %vm1908, %v8155, %v8157
      %8166 = vst [vmem:[#allocation5 + $0x160] sm:$0xff] %v8158
      %8167 = vst [vmem:[#allocation5 + $0x168] sm:$0xff] %v8159
      %8168 = vst [vmem:[#allocation5 + $0x170] sm:$0xff] %v8160
      %8169 = vst [vmem:[#allocation5 + $0x178] sm:$0xff] %v8161
      %v8170 = vld [vmem:[#allocation3] sm:$0xff]
      %v8171 = vld [vmem:[#allocation3 + $0x8] sm:$0xff]
      %v8172 = vld [vmem:[#allocation3 + $0x10] sm:$0xff]
      %v8173 = vld [vmem:[#allocation3 + $0x18] sm:$0xff]
      %v8174 = vld [vmem:[#allocation3 + $0x20] sm:$0xff]
      %v8175 = vld [vmem:[#allocation3 + $0x30] sm:$0xff]
      %v8176 = vld [vmem:[#allocation3 + $0x38] sm:$0xff]
      %v8177 = vld [vmem:[#allocation3 + $0x40] sm:$0xff]
      %v8178 = vld [vmem:[#allocation3 + $0x48] sm:$0xff]
      %v8179 = vld [vmem:[#allocation3 + $0x50] sm:$0xff]
      %v8180 = vld [vmem:[%s1921] ss:$8 sm:$0xf]
      %v8182 = vlaneseq
      %v8183 = vshrl.u32 %v8182, 7
      %v8184 = vsub.s32 0, %v8183
      %v8185 = vrot.slane %v8180, %v8184
      %v8186 = vlaneseq
      %v8187 = vshrl.u32 %v8186, 7
      %v8188 = vsub.s32 1, %v8187
      %v8189 = vrot.slane %v8180, %v8188
      %v8190 = vlaneseq
      %v8191 = vshrl.u32 %v8190, 7
      %v8192 = vsub.s32 2, %v8191
      %v8193 = vrot.slane %v8180, %v8192
      %v8194 = vlaneseq
      %v8195 = vshrl.u32 %v8194, 7
      %v8196 = vsub.s32 3, %v8195
      %v8197 = vrot.slane %v8180, %v8196
      %8198 = vrot.lane.b32.xlu0 %v8185, 127
      %v8199 = vpop.permute.xlu0 %8198
      %8200 = vrot.lane.b32.xlu0 %v8189, 127
      %v8201 = vpop.permute.xlu0 %8200
      %8202 = vrot.lane.b32.xlu0 %v8193, 127
      %v8203 = vpop.permute.xlu0 %8202
      %8204 = vrot.lane.b32.xlu0 %v8197, 127
      %v8205 = vpop.permute.xlu0 %8204
      %v8206 = vsel %vm1948, %v8199, %v8201
      %v8207 = vsel %vm1948, %v8201, %v8203
      %v8208 = vsel %vm1948, %v8203, %v8205
      %v8214 = vmul.f32 %v8170, %v8199
      %v8215 = vmul.f32 %v8171, %v8206
      %v8216 = vmul.f32 %v8172, %v8207
      %v8217 = vmul.f32 %v8173, %v8208
      %v8218 = vmul.f32 %v8174, %v8205
      %v8219 = vmul.f32 %v8175, %v8199
      %v8220 = vmul.f32 %v8176, %v8206
      %v8221 = vmul.f32 %v8177, %v8207
      %v8222 = vmul.f32 %v8178, %v8208
      %v8223 = vmul.f32 %v8179, %v8205
      %v8224 = vpack.c.bf16 %v8219, %v8214
      %v8225 = vpack.c.bf16 %v8220, %v8215
      %v8226 = vpack.c.bf16 %v8221, %v8216
      %v8227 = vpack.c.bf16 %v8222, %v8217
      %v8228 = vpack.c.bf16 %v8223, %v8218
      %8234 = vrot.lane.b32.xlu0 %v8224, 1
      %v8235 = vpop.permute.xlu0 %8234
      %8236 = vrot.lane.b32.xlu0 %v8225, 1
      %v8237 = vpop.permute.xlu0 %8236
      %8238 = vrot.lane.b32.xlu0 %v8226, 1
      %v8239 = vpop.permute.xlu0 %8238
      %8240 = vrot.lane.b32.xlu0 %v8227, 1
      %v8241 = vpop.permute.xlu0 %8240
      %8242 = vrot.lane.b32.xlu0 %v8228, 1
      %v8243 = vpop.permute.xlu0 %8242
      %v8244 = vsel %vm1990, %v8235, %v8237
      %v8245 = vsel %vm1990, %v8237, %v8239
      %v8246 = vsel %vm1990, %v8239, %v8241
      %v8247 = vsel %vm1990, %v8241, %v8243
      %8252 = vst [vmem:[#allocation5 + $0x180] sm:$0xff] %v8244
      %8253 = vst [vmem:[#allocation5 + $0x188] sm:$0xff] %v8245
      %8254 = vst [vmem:[#allocation5 + $0x190] sm:$0xff] %v8246
      %8255 = vst [vmem:[#allocation5 + $0x198] sm:$0xff] %v8247
      %v8256 = vld [vmem:[#allocation3 + $0x8] sm:$0xff]
      %v8257 = vld [vmem:[#allocation3 + $0x10] sm:$0xff]
      %v8258 = vld [vmem:[#allocation3 + $0x18] sm:$0xff]
      %v8259 = vld [vmem:[#allocation3 + $0x20] sm:$0xff]
      %v8260 = vld [vmem:[#allocation3 + $0x38] sm:$0xff]
      %v8261 = vld [vmem:[#allocation3 + $0x40] sm:$0xff]
      %v8262 = vld [vmem:[#allocation3 + $0x48] sm:$0xff]
      %v8263 = vld [vmem:[#allocation3 + $0x50] sm:$0xff]
      %v8264 = vld [vmem:[%s2002] ss:$8 sm:$0xf]
      %v8266 = vlaneseq
      %v8267 = vshrl.u32 %v8266, 7
      %v8268 = vsub.s32 0, %v8267
      %v8269 = vrot.slane %v8264, %v8268
      %v8270 = vlaneseq
      %v8271 = vshrl.u32 %v8270, 7
      %v8272 = vsub.s32 1, %v8271
      %v8273 = vrot.slane %v8264, %v8272
      %v8274 = vlaneseq
      %v8275 = vshrl.u32 %v8274, 7
      %v8276 = vsub.s32 2, %v8275
      %v8277 = vrot.slane %v8264, %v8276
      %v8278 = vlaneseq
      %v8279 = vshrl.u32 %v8278, 7
      %v8280 = vsub.s32 3, %v8279
      %v8281 = vrot.slane %v8264, %v8280
      %v8286 = vmul.f32 %v8256, %v8269
      %v8287 = vmul.f32 %v8257, %v8273
      %v8288 = vmul.f32 %v8258, %v8277
      %v8289 = vmul.f32 %v8259, %v8281
      %v8290 = vmul.f32 %v8260, %v8269
      %v8291 = vmul.f32 %v8261, %v8273
      %v8292 = vmul.f32 %v8262, %v8277
      %v8293 = vmul.f32 %v8263, %v8281
      %v8294 = vpack.c.bf16 %v8290, %v8286
      %v8295 = vpack.c.bf16 %v8291, %v8287
      %v8296 = vpack.c.bf16 %v8292, %v8288
      %v8297 = vpack.c.bf16 %v8293, %v8289
      %8298 = vst [vmem:[#allocation5 + $0x1a0] sm:$0xff] %v8294
      %8299 = vst [vmem:[#allocation5 + $0x1a8] sm:$0xff] %v8295
      %8300 = vst [vmem:[#allocation5 + $0x1b0] sm:$0xff] %v8296
      %8301 = vst [vmem:[#allocation5 + $0x1b8] sm:$0xff] %v8297
      %v8302 = vld [vmem:[#allocation3 + $0x8] sm:$0xff]
      %v8303 = vld [vmem:[#allocation3 + $0x10] sm:$0xff]
      %v8304 = vld [vmem:[#allocation3 + $0x18] sm:$0xff]
      %v8305 = vld [vmem:[#allocation3 + $0x20] sm:$0xff]
      %v8306 = vld [vmem:[#allocation3 + $0x28] sm:$0xff]
      %v8307 = vld [vmem:[#allocation3 + $0x38] sm:$0xff]
      %v8308 = vld [vmem:[#allocation3 + $0x40] sm:$0xff]
      %v8309 = vld [vmem:[#allocation3 + $0x48] sm:$0xff]
      %v8310 = vld [vmem:[#allocation3 + $0x50] sm:$0xff]
      %v8311 = vld [vmem:[#allocation3 + $0x58] sm:$0xff]
      %v8312 = vld [vmem:[%s2052] ss:$8 sm:$0xf]
      %v8314 = vlaneseq
      %v8315 = vshrl.u32 %v8314, 7
      %v8316 = vsub.s32 0, %v8315
      %v8317 = vrot.slane %v8312, %v8316
      %v8318 = vlaneseq
      %v8319 = vshrl.u32 %v8318, 7
      %v8320 = vsub.s32 1, %v8319
      %v8321 = vrot.slane %v8312, %v8320
      %v8322 = vlaneseq
      %v8323 = vshrl.u32 %v8322, 7
      %v8324 = vsub.s32 2, %v8323
      %v8325 = vrot.slane %v8312, %v8324
      %v8326 = vlaneseq
      %v8327 = vshrl.u32 %v8326, 7
      %v8328 = vsub.s32 3, %v8327
      %v8329 = vrot.slane %v8312, %v8328
      %8330 = vrot.lane.b32.xlu0 %v8317, 1
      %v8331 = vpop.permute.xlu0 %8330
      %8332 = vrot.lane.b32.xlu0 %v8321, 1
      %v8333 = vpop.permute.xlu0 %8332
      %8334 = vrot.lane.b32.xlu0 %v8325, 1
      %v8335 = vpop.permute.xlu0 %8334
      %8336 = vrot.lane.b32.xlu0 %v8329, 1
      %v8337 = vpop.permute.xlu0 %8336
      %v8338 = vsel %vm2079, %v8331, %v8333
      %v8339 = vsel %vm2079, %v8333, %v8335
      %v8340 = vsel %vm2079, %v8335, %v8337
      %v8346 = vmul.f32 %v8302, %v8331
      %v8347 = vmul.f32 %v8303, %v8338
      %v8348 = vmul.f32 %v8304, %v8339
      %v8349 = vmul.f32 %v8305, %v8340
      %v8350 = vmul.f32 %v8306, %v8337
      %v8351 = vmul.f32 %v8307, %v8331
      %v8352 = vmul.f32 %v8308, %v8338
      %v8353 = vmul.f32 %v8309, %v8339
      %v8354 = vmul.f32 %v8310, %v8340
      %v8355 = vmul.f32 %v8311, %v8337
      %v8356 = vpack.c.bf16 %v8351, %v8346
      %v8357 = vpack.c.bf16 %v8352, %v8347
      %v8358 = vpack.c.bf16 %v8353, %v8348
      %v8359 = vpack.c.bf16 %v8354, %v8349
      %v8360 = vpack.c.bf16 %v8355, %v8350
      %8366 = vrot.lane.b32.xlu0 %v8356, 127
      %v8367 = vpop.permute.xlu0 %8366
      %8368 = vrot.lane.b32.xlu0 %v8357, 127
      %v8369 = vpop.permute.xlu0 %8368
      %8370 = vrot.lane.b32.xlu0 %v8358, 127
      %v8371 = vpop.permute.xlu0 %8370
      %8372 = vrot.lane.b32.xlu0 %v8359, 127
      %v8373 = vpop.permute.xlu0 %8372
      %8374 = vrot.lane.b32.xlu0 %v8360, 127
      %v8375 = vpop.permute.xlu0 %8374
      %v8376 = vsel %vm2121, %v8367, %v8369
      %v8377 = vsel %vm2121, %v8369, %v8371
      %v8378 = vsel %vm2121, %v8371, %v8373
      %v8379 = vsel %vm2121, %v8373, %v8375
      %8384 = vst [vmem:[#allocation5 + $0x1c0] sm:$0xff] %v8376
      %8385 = vst [vmem:[#allocation5 + $0x1c8] sm:$0xff] %v8377
      %8386 = vst [vmem:[#allocation5 + $0x1d0] sm:$0xff] %v8378
      %8387 = vst [vmem:[#allocation5 + $0x1d8] sm:$0xff] %v8379
      %v8388 = vld [vmem:[#allocation3 + $0x8] sm:$0xff]
      %v8389 = vld [vmem:[#allocation3 + $0x10] sm:$0xff]
      %v8390 = vld [vmem:[#allocation3 + $0x18] sm:$0xff]
      %v8391 = vld [vmem:[#allocation3 + $0x20] sm:$0xff]
      %v8392 = vld [vmem:[#allocation3 + $0x28] sm:$0xff]
      %v8393 = vld [vmem:[#allocation3 + $0x38] sm:$0xff]
      %v8394 = vld [vmem:[#allocation3 + $0x40] sm:$0xff]
      %v8395 = vld [vmem:[#allocation3 + $0x48] sm:$0xff]
      %v8396 = vld [vmem:[#allocation3 + $0x50] sm:$0xff]
      %v8397 = vld [vmem:[#allocation3 + $0x58] sm:$0xff]
      %v8398 = vld [vmem:[%s2134] ss:$8 sm:$0xf]
      %v8400 = vlaneseq
      %v8401 = vshrl.u32 %v8400, 7
      %v8402 = vsub.s32 0, %v8401
      %v8403 = vrot.slane %v8398, %v8402
      %v8404 = vlaneseq
      %v8405 = vshrl.u32 %v8404, 7
      %v8406 = vsub.s32 1, %v8405
      %v8407 = vrot.slane %v8398, %v8406
      %v8408 = vlaneseq
      %v8409 = vshrl.u32 %v8408, 7
      %v8410 = vsub.s32 2, %v8409
      %v8411 = vrot.slane %v8398, %v8410
      %v8412 = vlaneseq
      %v8413 = vshrl.u32 %v8412, 7
      %v8414 = vsub.s32 3, %v8413
      %v8415 = vrot.slane %v8398, %v8414
      %8416 = vrot.lane.b32.xlu0 %v8403, 7
      %v8417 = vpop.permute.xlu0 %8416
      %8418 = vrot.lane.b32.xlu0 %v8407, 7
      %v8419 = vpop.permute.xlu0 %8418
      %8420 = vrot.lane.b32.xlu0 %v8411, 7
      %v8421 = vpop.permute.xlu0 %8420
      %8422 = vrot.lane.b32.xlu0 %v8415, 7
      %v8423 = vpop.permute.xlu0 %8422
      %v8424 = vsel %vm2161, %v8417, %v8419
      %v8425 = vsel %vm2161, %v8419, %v8421
      %v8426 = vsel %vm2161, %v8421, %v8423
      %v8432 = vmul.f32 %v8388, %v8417
      %v8433 = vmul.f32 %v8389, %v8424
      %v8434 = vmul.f32 %v8390, %v8425
      %v8435 = vmul.f32 %v8391, %v8426
      %v8436 = vmul.f32 %v8392, %v8423
      %v8437 = vmul.f32 %v8393, %v8417
      %v8438 = vmul.f32 %v8394, %v8424
      %v8439 = vmul.f32 %v8395, %v8425
      %v8440 = vmul.f32 %v8396, %v8426
      %v8441 = vmul.f32 %v8397, %v8423
      %v8442 = vpack.c.bf16 %v8437, %v8432
      %v8443 = vpack.c.bf16 %v8438, %v8433
      %v8444 = vpack.c.bf16 %v8439, %v8434
      %v8445 = vpack.c.bf16 %v8440, %v8435
      %v8446 = vpack.c.bf16 %v8441, %v8436
      %8452 = vrot.lane.b32.xlu0 %v8442, 121
      %v8453 = vpop.permute.xlu0 %8452
      %8454 = vrot.lane.b32.xlu0 %v8443, 121
      %v8455 = vpop.permute.xlu0 %8454
      %8456 = vrot.lane.b32.xlu0 %v8444, 121
      %v8457 = vpop.permute.xlu0 %8456
      %8458 = vrot.lane.b32.xlu0 %v8445, 121
      %v8459 = vpop.permute.xlu0 %8458
      %8460 = vrot.lane.b32.xlu0 %v8446, 121
      %v8461 = vpop.permute.xlu0 %8460
      %v8462 = vsel %vm2203, %v8453, %v8455
      %v8463 = vsel %vm2203, %v8455, %v8457
      %v8464 = vsel %vm2203, %v8457, %v8459
      %v8465 = vsel %vm2203, %v8459, %v8461
      %8470 = vst [vmem:[#allocation5 + $0x1e0] sm:$0xff] %v8462
      %8471 = vst [vmem:[#allocation5 + $0x1e8] sm:$0xff] %v8463
      %8472 = vst [vmem:[#allocation5 + $0x1f0] sm:$0xff] %v8464
      %8473 = vst [vmem:[#allocation5 + $0x1f8] sm:$0xff] %v8465
      %v8474 = vld [vmem:[#allocation3 + $0x8] sm:$0xff]
      %v8475 = vld [vmem:[#allocation3 + $0x10] sm:$0xff]
      %v8476 = vld [vmem:[#allocation3 + $0x18] sm:$0xff]
      %v8477 = vld [vmem:[#allocation3 + $0x20] sm:$0xff]
      %v8478 = vld [vmem:[#allocation3 + $0x28] sm:$0xff]
      %v8479 = vld [vmem:[#allocation3 + $0x38] sm:$0xff]
      %v8480 = vld [vmem:[#allocation3 + $0x40] sm:$0xff]
      %v8481 = vld [vmem:[#allocation3 + $0x48] sm:$0xff]
      %v8482 = vld [vmem:[#allocation3 + $0x50] sm:$0xff]
      %v8483 = vld [vmem:[#allocation3 + $0x58] sm:$0xff]
      %v8484 = vld [vmem:[%s2216] ss:$8 sm:$0xf]
      %v8486 = vlaneseq
      %v8487 = vshrl.u32 %v8486, 7
      %v8488 = vsub.s32 0, %v8487
      %v8489 = vrot.slane %v8484, %v8488
      %v8490 = vlaneseq
      %v8491 = vshrl.u32 %v8490, 7
      %v8492 = vsub.s32 1, %v8491
      %v8493 = vrot.slane %v8484, %v8492
      %v8494 = vlaneseq
      %v8495 = vshrl.u32 %v8494, 7
      %v8496 = vsub.s32 2, %v8495
      %v8497 = vrot.slane %v8484, %v8496
      %v8498 = vlaneseq
      %v8499 = vshrl.u32 %v8498, 7
      %v8500 = vsub.s32 3, %v8499
      %v8501 = vrot.slane %v8484, %v8500
      %8502 = vrot.lane.b32.xlu0 %v8489, 8
      %v8503 = vpop.permute.xlu0 %8502
      %8504 = vrot.lane.b32.xlu0 %v8493, 8
      %v8505 = vpop.permute.xlu0 %8504
      %8506 = vrot.lane.b32.xlu0 %v8497, 8
      %v8507 = vpop.permute.xlu0 %8506
      %8508 = vrot.lane.b32.xlu0 %v8501, 8
      %v8509 = vpop.permute.xlu0 %8508
      %v8510 = vsel %vm588, %v8503, %v8505
      %v8511 = vsel %vm588, %v8505, %v8507
      %v8512 = vsel %vm588, %v8507, %v8509
      %v8518 = vmul.f32 %v8474, %v8503
      %v8519 = vmul.f32 %v8475, %v8510
      %v8520 = vmul.f32 %v8476, %v8511
      %v8521 = vmul.f32 %v8477, %v8512
      %v8522 = vmul.f32 %v8478, %v8509
      %v8523 = vmul.f32 %v8479, %v8503
      %v8524 = vmul.f32 %v8480, %v8510
      %v8525 = vmul.f32 %v8481, %v8511
      %v8526 = vmul.f32 %v8482, %v8512
      %v8527 = vmul.f32 %v8483, %v8509
      %v8528 = vpack.c.bf16 %v8523, %v8518
      %v8529 = vpack.c.bf16 %v8524, %v8519
      %v8530 = vpack.c.bf16 %v8525, %v8520
      %v8531 = vpack.c.bf16 %v8526, %v8521
      %v8532 = vpack.c.bf16 %v8527, %v8522
      %8538 = vrot.lane.b32.xlu0 %v8528, 120
      %v8539 = vpop.permute.xlu0 %8538
      %8540 = vrot.lane.b32.xlu0 %v8529, 120
      %v8541 = vpop.permute.xlu0 %8540
      %8542 = vrot.lane.b32.xlu0 %v8530, 120
      %v8543 = vpop.permute.xlu0 %8542
      %8544 = vrot.lane.b32.xlu0 %v8531, 120
      %v8545 = vpop.permute.xlu0 %8544
      %8546 = vrot.lane.b32.xlu0 %v8532, 120
      %v8547 = vpop.permute.xlu0 %8546
      %v8548 = vsel %vm2284, %v8539, %v8541
      %v8549 = vsel %vm2284, %v8541, %v8543
      %v8550 = vsel %vm2284, %v8543, %v8545
      %v8551 = vsel %vm2284, %v8545, %v8547
      %8556 = vst [vmem:[#allocation5 + $0x200] sm:$0xff] %v8548
      %8557 = vst [vmem:[#allocation5 + $0x208] sm:$0xff] %v8549
      %8558 = vst [vmem:[#allocation5 + $0x210] sm:$0xff] %v8550
      %8559 = vst [vmem:[#allocation5 + $0x218] sm:$0xff] %v8551
      %v8560 = vld [vmem:[#allocation3 + $0x8] sm:$0xff]
      %v8561 = vld [vmem:[#allocation3 + $0x10] sm:$0xff]
      %v8562 = vld [vmem:[#allocation3 + $0x18] sm:$0xff]
      %v8563 = vld [vmem:[#allocation3 + $0x20] sm:$0xff]
      %v8564 = vld [vmem:[#allocation3 + $0x28] sm:$0xff]
      %v8565 = vld [vmem:[#allocation3 + $0x38] sm:$0xff]
      %v8566 = vld [vmem:[#allocation3 + $0x40] sm:$0xff]
      %v8567 = vld [vmem:[#allocation3 + $0x48] sm:$0xff]
      %v8568 = vld [vmem:[#allocation3 + $0x50] sm:$0xff]
      %v8569 = vld [vmem:[#allocation3 + $0x58] sm:$0xff]
      %v8570 = vld [vmem:[%s2297] ss:$8 sm:$0xf]
      %v8572 = vlaneseq
      %v8573 = vshrl.u32 %v8572, 7
      %v8574 = vsub.s32 0, %v8573
      %v8575 = vrot.slane %v8570, %v8574
      %v8576 = vlaneseq
      %v8577 = vshrl.u32 %v8576, 7
      %v8578 = vsub.s32 1, %v8577
      %v8579 = vrot.slane %v8570, %v8578
      %v8580 = vlaneseq
      %v8581 = vshrl.u32 %v8580, 7
      %v8582 = vsub.s32 2, %v8581
      %v8583 = vrot.slane %v8570, %v8582
      %v8584 = vlaneseq
      %v8585 = vshrl.u32 %v8584, 7
      %v8586 = vsub.s32 3, %v8585
      %v8587 = vrot.slane %v8570, %v8586
      %8588 = vrot.lane.b32.xlu0 %v8575, 9
      %v8589 = vpop.permute.xlu0 %8588
      %8590 = vrot.lane.b32.xlu0 %v8579, 9
      %v8591 = vpop.permute.xlu0 %8590
      %8592 = vrot.lane.b32.xlu0 %v8583, 9
      %v8593 = vpop.permute.xlu0 %8592
      %8594 = vrot.lane.b32.xlu0 %v8587, 9
      %v8595 = vpop.permute.xlu0 %8594
      %v8596 = vsel %vm2324, %v8589, %v8591
      %v8597 = vsel %vm2324, %v8591, %v8593
      %v8598 = vsel %vm2324, %v8593, %v8595
      %v8604 = vmul.f32 %v8560, %v8589
      %v8605 = vmul.f32 %v8561, %v8596
      %v8606 = vmul.f32 %v8562, %v8597
      %v8607 = vmul.f32 %v8563, %v8598
      %v8608 = vmul.f32 %v8564, %v8595
      %v8609 = vmul.f32 %v8565, %v8589
      %v8610 = vmul.f32 %v8566, %v8596
      %v8611 = vmul.f32 %v8567, %v8597
      %v8612 = vmul.f32 %v8568, %v8598
      %v8613 = vmul.f32 %v8569, %v8595
      %v8614 = vpack.c.bf16 %v8609, %v8604
      %v8615 = vpack.c.bf16 %v8610, %v8605
      %v8616 = vpack.c.bf16 %v8611, %v8606
      %v8617 = vpack.c.bf16 %v8612, %v8607
      %v8618 = vpack.c.bf16 %v8613, %v8608
      %8624 = vrot.lane.b32.xlu0 %v8614, 119
      %v8625 = vpop.permute.xlu0 %8624
      %8626 = vrot.lane.b32.xlu0 %v8615, 119
      %v8627 = vpop.permute.xlu0 %8626
      %8628 = vrot.lane.b32.xlu0 %v8616, 119
      %v8629 = vpop.permute.xlu0 %8628
      %8630 = vrot.lane.b32.xlu0 %v8617, 119
      %v8631 = vpop.permute.xlu0 %8630
      %8632 = vrot.lane.b32.xlu0 %v8618, 119
      %v8633 = vpop.permute.xlu0 %8632
      %v8634 = vsel %vm2366, %v8625, %v8627
      %v8635 = vsel %vm2366, %v8627, %v8629
      %v8636 = vsel %vm2366, %v8629, %v8631
      %v8637 = vsel %vm2366, %v8631, %v8633
      %8642 = vst [vmem:[#allocation5 + $0x220] sm:$0xff] %v8634
      %8643 = vst [vmem:[#allocation5 + $0x228] sm:$0xff] %v8635
      %8644 = vst [vmem:[#allocation5 + $0x230] sm:$0xff] %v8636
      %8645 = vst [vmem:[#allocation5 + $0x238] sm:$0xff] %v8637
      %v8646 = vld [vmem:[#allocation3 + $0x8] sm:$0xff]
      %v8647 = vld [vmem:[#allocation3 + $0x10] sm:$0xff]
      %v8648 = vld [vmem:[#allocation3 + $0x18] sm:$0xff]
      %v8649 = vld [vmem:[#allocation3 + $0x20] sm:$0xff]
      %v8650 = vld [vmem:[#allocation3 + $0x28] sm:$0xff]
      %v8651 = vld [vmem:[#allocation3 + $0x38] sm:$0xff]
      %v8652 = vld [vmem:[#allocation3 + $0x40] sm:$0xff]
      %v8653 = vld [vmem:[#allocation3 + $0x48] sm:$0xff]
      %v8654 = vld [vmem:[#allocation3 + $0x50] sm:$0xff]
      %v8655 = vld [vmem:[#allocation3 + $0x58] sm:$0xff]
      %v8656 = vld [vmem:[%s2379] ss:$8 sm:$0xf]
      %v8658 = vlaneseq
      %v8659 = vshrl.u32 %v8658, 7
      %v8660 = vsub.s32 0, %v8659
      %v8661 = vrot.slane %v8656, %v8660
      %v8662 = vlaneseq
      %v8663 = vshrl.u32 %v8662, 7
      %v8664 = vsub.s32 1, %v8663
      %v8665 = vrot.slane %v8656, %v8664
      %v8666 = vlaneseq
      %v8667 = vshrl.u32 %v8666, 7
      %v8668 = vsub.s32 2, %v8667
      %v8669 = vrot.slane %v8656, %v8668
      %v8670 = vlaneseq
      %v8671 = vshrl.u32 %v8670, 7
      %v8672 = vsub.s32 3, %v8671
      %v8673 = vrot.slane %v8656, %v8672
      %8674 = vrot.lane.b32.xlu0 %v8661, 55
      %v8675 = vpop.permute.xlu0 %8674
      %8676 = vrot.lane.b32.xlu0 %v8665, 55
      %v8677 = vpop.permute.xlu0 %8676
      %8678 = vrot.lane.b32.xlu0 %v8669, 55
      %v8679 = vpop.permute.xlu0 %8678
      %8680 = vrot.lane.b32.xlu0 %v8673, 55
      %v8681 = vpop.permute.xlu0 %8680
      %v8682 = vsel %vm963, %v8675, %v8677
      %v8683 = vsel %vm963, %v8677, %v8679
      %v8684 = vsel %vm963, %v8679, %v8681
      %v8690 = vmul.f32 %v8646, %v8675
      %v8691 = vmul.f32 %v8647, %v8682
      %v8692 = vmul.f32 %v8648, %v8683
      %v8693 = vmul.f32 %v8649, %v8684
      %v8694 = vmul.f32 %v8650, %v8681
      %v8695 = vmul.f32 %v8651, %v8675
      %v8696 = vmul.f32 %v8652, %v8682
      %v8697 = vmul.f32 %v8653, %v8683
      %v8698 = vmul.f32 %v8654, %v8684
      %v8699 = vmul.f32 %v8655, %v8681
      %v8700 = vpack.c.bf16 %v8695, %v8690
      %v8701 = vpack.c.bf16 %v8696, %v8691
      %v8702 = vpack.c.bf16 %v8697, %v8692
      %v8703 = vpack.c.bf16 %v8698, %v8693
      %v8704 = vpack.c.bf16 %v8699, %v8694
      %8710 = vrot.lane.b32.xlu0 %v8700, 73
      %v8711 = vpop.permute.xlu0 %8710
      %8712 = vrot.lane.b32.xlu0 %v8701, 73
      %v8713 = vpop.permute.xlu0 %8712
      %8714 = vrot.lane.b32.xlu0 %v8702, 73
      %v8715 = vpop.permute.xlu0 %8714
      %8716 = vrot.lane.b32.xlu0 %v8703, 73
      %v8717 = vpop.permute.xlu0 %8716
      %8718 = vrot.lane.b32.xlu0 %v8704, 73
      %v8719 = vpop.permute.xlu0 %8718
      %v8720 = vsel %vm1006, %v8711, %v8713
      %v8721 = vsel %vm1006, %v8713, %v8715
      %v8722 = vsel %vm1006, %v8715, %v8717
      %v8723 = vsel %vm1006, %v8717, %v8719
      %8728 = vst [vmem:[#allocation5 + $0x240] sm:$0xff] %v8720
      %8729 = vst [vmem:[#allocation5 + $0x248] sm:$0xff] %v8721
      %8730 = vst [vmem:[#allocation5 + $0x250] sm:$0xff] %v8722
      %8731 = vst [vmem:[#allocation5 + $0x258] sm:$0xff] %v8723
      %v8732 = vld [vmem:[#allocation3 + $0x8] sm:$0xff]
      %v8733 = vld [vmem:[#allocation3 + $0x10] sm:$0xff]
      %v8734 = vld [vmem:[#allocation3 + $0x18] sm:$0xff]
      %v8735 = vld [vmem:[#allocation3 + $0x20] sm:$0xff]
      %v8736 = vld [vmem:[#allocation3 + $0x28] sm:$0xff]
      %v8737 = vld [vmem:[#allocation3 + $0x38] sm:$0xff]
      %v8738 = vld [vmem:[#allocation3 + $0x40] sm:$0xff]
      %v8739 = vld [vmem:[#allocation3 + $0x48] sm:$0xff]
      %v8740 = vld [vmem:[#allocation3 + $0x50] sm:$0xff]
      %v8741 = vld [vmem:[#allocation3 + $0x58] sm:$0xff]
      %v8742 = vld [vmem:[%s2459] ss:$8 sm:$0xf]
      %v8744 = vlaneseq
      %v8745 = vshrl.u32 %v8744, 7
      %v8746 = vsub.s32 0, %v8745
      %v8747 = vrot.slane %v8742, %v8746
      %v8748 = vlaneseq
      %v8749 = vshrl.u32 %v8748, 7
      %v8750 = vsub.s32 1, %v8749
      %v8751 = vrot.slane %v8742, %v8750
      %v8752 = vlaneseq
      %v8753 = vshrl.u32 %v8752, 7
      %v8754 = vsub.s32 2, %v8753
      %v8755 = vrot.slane %v8742, %v8754
      %v8756 = vlaneseq
      %v8757 = vshrl.u32 %v8756, 7
      %v8758 = vsub.s32 3, %v8757
      %v8759 = vrot.slane %v8742, %v8758
      %8760 = vrot.lane.b32.xlu0 %v8747, 56
      %v8761 = vpop.permute.xlu0 %8760
      %8762 = vrot.lane.b32.xlu0 %v8751, 56
      %v8763 = vpop.permute.xlu0 %8762
      %8764 = vrot.lane.b32.xlu0 %v8755, 56
      %v8765 = vpop.permute.xlu0 %8764
      %8766 = vrot.lane.b32.xlu0 %v8759, 56
      %v8767 = vpop.permute.xlu0 %8766
      %v8768 = vsel %vm1046, %v8761, %v8763
      %v8769 = vsel %vm1046, %v8763, %v8765
      %v8770 = vsel %vm1046, %v8765, %v8767
      %v8776 = vmul.f32 %v8732, %v8761
      %v8777 = vmul.f32 %v8733, %v8768
      %v8778 = vmul.f32 %v8734, %v8769
      %v8779 = vmul.f32 %v8735, %v8770
      %v8780 = vmul.f32 %v8736, %v8767
      %v8781 = vmul.f32 %v8737, %v8761
      %v8782 = vmul.f32 %v8738, %v8768
      %v8783 = vmul.f32 %v8739, %v8769
      %v8784 = vmul.f32 %v8740, %v8770
      %v8785 = vmul.f32 %v8741, %v8767
      %v8786 = vpack.c.bf16 %v8781, %v8776
      %v8787 = vpack.c.bf16 %v8782, %v8777
      %v8788 = vpack.c.bf16 %v8783, %v8778
      %v8789 = vpack.c.bf16 %v8784, %v8779
      %v8790 = vpack.c.bf16 %v8785, %v8780
      %8796 = vrot.lane.b32.xlu0 %v8786, 72
      %v8797 = vpop.permute.xlu0 %8796
      %8798 = vrot.lane.b32.xlu0 %v8787, 72
      %v8799 = vpop.permute.xlu0 %8798
      %8800 = vrot.lane.b32.xlu0 %v8788, 72
      %v8801 = vpop.permute.xlu0 %8800
      %8802 = vrot.lane.b32.xlu0 %v8789, 72
      %v8803 = vpop.permute.xlu0 %8802
      %8804 = vrot.lane.b32.xlu0 %v8790, 72
      %v8805 = vpop.permute.xlu0 %8804
      %v8806 = vsel %vm1088, %v8797, %v8799
      %v8807 = vsel %vm1088, %v8799, %v8801
      %v8808 = vsel %vm1088, %v8801, %v8803
      %v8809 = vsel %vm1088, %v8803, %v8805
      %8814 = vst [vmem:[#allocation5 + $0x260] sm:$0xff] %v8806
      %8815 = vst [vmem:[#allocation5 + $0x268] sm:$0xff] %v8807
      %8816 = vst [vmem:[#allocation5 + $0x270] sm:$0xff] %v8808
      %8817 = vst [vmem:[#allocation5 + $0x278] sm:$0xff] %v8809
      %v8818 = vld [vmem:[#allocation3 + $0x8] sm:$0xff]
      %v8819 = vld [vmem:[#allocation3 + $0x10] sm:$0xff]
      %v8820 = vld [vmem:[#allocation3 + $0x18] sm:$0xff]
      %v8821 = vld [vmem:[#allocation3 + $0x20] sm:$0xff]
      %v8822 = vld [vmem:[#allocation3 + $0x28] sm:$0xff]
      %v8823 = vld [vmem:[#allocation3 + $0x38] sm:$0xff]
      %v8824 = vld [vmem:[#allocation3 + $0x40] sm:$0xff]
      %v8825 = vld [vmem:[#allocation3 + $0x48] sm:$0xff]
      %v8826 = vld [vmem:[#allocation3 + $0x50] sm:$0xff]
      %v8827 = vld [vmem:[#allocation3 + $0x58] sm:$0xff]
      %v8828 = vld [vmem:[%s2539] ss:$8 sm:$0xf]
      %v8830 = vlaneseq
      %v8831 = vshrl.u32 %v8830, 7
      %v8832 = vsub.s32 0, %v8831
      %v8833 = vrot.slane %v8828, %v8832
      %v8834 = vlaneseq
      %v8835 = vshrl.u32 %v8834, 7
      %v8836 = vsub.s32 1, %v8835
      %v8837 = vrot.slane %v8828, %v8836
      %v8838 = vlaneseq
      %v8839 = vshrl.u32 %v8838, 7
      %v8840 = vsub.s32 2, %v8839
      %v8841 = vrot.slane %v8828, %v8840
      %v8842 = vlaneseq
      %v8843 = vshrl.u32 %v8842, 7
      %v8844 = vsub.s32 3, %v8843
      %v8845 = vrot.slane %v8828, %v8844
      %8846 = vrot.lane.b32.xlu0 %v8833, 57
      %v8847 = vpop.permute.xlu0 %8846
      %8848 = vrot.lane.b32.xlu0 %v8837, 57
      %v8849 = vpop.permute.xlu0 %8848
      %8850 = vrot.lane.b32.xlu0 %v8841, 57
      %v8851 = vpop.permute.xlu0 %8850
      %8852 = vrot.lane.b32.xlu0 %v8845, 57
      %v8853 = vpop.permute.xlu0 %8852
      %v8854 = vsel %vm1128, %v8847, %v8849
      %v8855 = vsel %vm1128, %v8849, %v8851
      %v8856 = vsel %vm1128, %v8851, %v8853
      %v8862 = vmul.f32 %v8818, %v8847
      %v8863 = vmul.f32 %v8819, %v8854
      %v8864 = vmul.f32 %v8820, %v8855
      %v8865 = vmul.f32 %v8821, %v8856
      %v8866 = vmul.f32 %v8822, %v8853
      %v8867 = vmul.f32 %v8823, %v8847
      %v8868 = vmul.f32 %v8824, %v8854
      %v8869 = vmul.f32 %v8825, %v8855
      %v8870 = vmul.f32 %v8826, %v8856
      %v8871 = vmul.f32 %v8827, %v8853
      %v8872 = vpack.c.bf16 %v8867, %v8862
      %v8873 = vpack.c.bf16 %v8868, %v8863
      %v8874 = vpack.c.bf16 %v8869, %v8864
      %v8875 = vpack.c.bf16 %v8870, %v8865
      %v8876 = vpack.c.bf16 %v8871, %v8866
      %8882 = vrot.lane.b32.xlu0 %v8872, 71
      %v8883 = vpop.permute.xlu0 %8882
      %8884 = vrot.lane.b32.xlu0 %v8873, 71
      %v8885 = vpop.permute.xlu0 %8884
      %8886 = vrot.lane.b32.xlu0 %v8874, 71
      %v8887 = vpop.permute.xlu0 %8886
      %8888 = vrot.lane.b32.xlu0 %v8875, 71
      %v8889 = vpop.permute.xlu0 %8888
      %8890 = vrot.lane.b32.xlu0 %v8876, 71
      %v8891 = vpop.permute.xlu0 %8890
      %v8892 = vsel %vm1170, %v8883, %v8885
      %v8893 = vsel %vm1170, %v8885, %v8887
      %v8894 = vsel %vm1170, %v8887, %v8889
      %v8895 = vsel %vm1170, %v8889, %v8891
      %8900 = vst [vmem:[#allocation5 + $0x280] sm:$0xff] %v8892
      %8901 = vst [vmem:[#allocation5 + $0x288] sm:$0xff] %v8893
      %8902 = vst [vmem:[#allocation5 + $0x290] sm:$0xff] %v8894
      %8903 = vst [vmem:[#allocation5 + $0x298] sm:$0xff] %v8895
      %v8904 = vld [vmem:[#allocation3 + $0x8] sm:$0xff]
      %v8905 = vld [vmem:[#allocation3 + $0x10] sm:$0xff]
      %v8906 = vld [vmem:[#allocation3 + $0x18] sm:$0xff]
      %v8907 = vld [vmem:[#allocation3 + $0x20] sm:$0xff]
      %v8908 = vld [vmem:[#allocation3 + $0x28] sm:$0xff]
      %v8909 = vld [vmem:[#allocation3 + $0x38] sm:$0xff]
      %v8910 = vld [vmem:[#allocation3 + $0x40] sm:$0xff]
      %v8911 = vld [vmem:[#allocation3 + $0x48] sm:$0xff]
      %v8912 = vld [vmem:[#allocation3 + $0x50] sm:$0xff]
      %v8913 = vld [vmem:[#allocation3 + $0x58] sm:$0xff]
      %v8914 = vld [vmem:[%s2619] ss:$8 sm:$0xf]
      %v8916 = vlaneseq
      %v8917 = vshrl.u32 %v8916, 7
      %v8918 = vsub.s32 0, %v8917
      %v8919 = vrot.slane %v8914, %v8918
      %v8920 = vlaneseq
      %v8921 = vshrl.u32 %v8920, 7
      %v8922 = vsub.s32 1, %v8921
      %v8923 = vrot.slane %v8914, %v8922
      %v8924 = vlaneseq
      %v8925 = vshrl.u32 %v8924, 7
      %v8926 = vsub.s32 2, %v8925
      %v8927 = vrot.slane %v8914, %v8926
      %v8928 = vlaneseq
      %v8929 = vshrl.u32 %v8928, 7
      %v8930 = vsub.s32 3, %v8929
      %v8931 = vrot.slane %v8914, %v8930
      %8932 = vrot.lane.b32.xlu0 %v8919, 63
      %v8933 = vpop.permute.xlu0 %8932
      %8934 = vrot.lane.b32.xlu0 %v8923, 63
      %v8935 = vpop.permute.xlu0 %8934
      %8936 = vrot.lane.b32.xlu0 %v8927, 63
      %v8937 = vpop.permute.xlu0 %8936
      %8938 = vrot.lane.b32.xlu0 %v8931, 63
      %v8939 = vpop.permute.xlu0 %8938
      %v8940 = vsel %vm1210, %v8933, %v8935
      %v8941 = vsel %vm1210, %v8935, %v8937
      %v8942 = vsel %vm1210, %v8937, %v8939
      %v8948 = vmul.f32 %v8904, %v8933
      %v8949 = vmul.f32 %v8905, %v8940
      %v8950 = vmul.f32 %v8906, %v8941
      %v8951 = vmul.f32 %v8907, %v8942
      %v8952 = vmul.f32 %v8908, %v8939
      %v8953 = vmul.f32 %v8909, %v8933
      %v8954 = vmul.f32 %v8910, %v8940
      %v8955 = vmul.f32 %v8911, %v8941
      %v8956 = vmul.f32 %v8912, %v8942
      %v8957 = vmul.f32 %v8913, %v8939
      %v8958 = vpack.c.bf16 %v8953, %v8948
      %v8959 = vpack.c.bf16 %v8954, %v8949
      %v8960 = vpack.c.bf16 %v8955, %v8950
      %v8961 = vpack.c.bf16 %v8956, %v8951
      %v8962 = vpack.c.bf16 %v8957, %v8952
      %8968 = vrot.lane.b32.xlu0 %v8958, 65
      %v8969 = vpop.permute.xlu0 %8968
      %8970 = vrot.lane.b32.xlu0 %v8959, 65
      %v8971 = vpop.permute.xlu0 %8970
      %8972 = vrot.lane.b32.xlu0 %v8960, 65
      %v8973 = vpop.permute.xlu0 %8972
      %8974 = vrot.lane.b32.xlu0 %v8961, 65
      %v8975 = vpop.permute.xlu0 %8974
      %8976 = vrot.lane.b32.xlu0 %v8962, 65
      %v8977 = vpop.permute.xlu0 %8976
      %v8978 = vsel %vm1252, %v8969, %v8971
      %v8979 = vsel %vm1252, %v8971, %v8973
      %v8980 = vsel %vm1252, %v8973, %v8975
      %v8981 = vsel %vm1252, %v8975, %v8977
      %8986 = vst [vmem:[#allocation5 + $0x2a0] sm:$0xff] %v8978
      %8987 = vst [vmem:[#allocation5 + $0x2a8] sm:$0xff] %v8979
      %8988 = vst [vmem:[#allocation5 + $0x2b0] sm:$0xff] %v8980
      %8989 = vst [vmem:[#allocation5 + $0x2b8] sm:$0xff] %v8981
      %v8990 = vld [vmem:[#allocation3 + $0x8] sm:$0xff]
      %v8991 = vld [vmem:[#allocation3 + $0x10] sm:$0xff]
      %v8992 = vld [vmem:[#allocation3 + $0x18] sm:$0xff]
      %v8993 = vld [vmem:[#allocation3 + $0x20] sm:$0xff]
      %v8994 = vld [vmem:[#allocation3 + $0x28] sm:$0xff]
      %v8995 = vld [vmem:[#allocation3 + $0x38] sm:$0xff]
      %v8996 = vld [vmem:[#allocation3 + $0x40] sm:$0xff]
      %v8997 = vld [vmem:[#allocation3 + $0x48] sm:$0xff]
      %v8998 = vld [vmem:[#allocation3 + $0x50] sm:$0xff]
      %v8999 = vld [vmem:[#allocation3 + $0x58] sm:$0xff]
      %v9000 = vld [vmem:[%s2699] ss:$8 sm:$0xf]
      %v9002 = vlaneseq
      %v9003 = vshrl.u32 %v9002, 7
      %v9004 = vsub.s32 0, %v9003
      %v9005 = vrot.slane %v9000, %v9004
      %v9006 = vlaneseq
      %v9007 = vshrl.u32 %v9006, 7
      %v9008 = vsub.s32 1, %v9007
      %v9009 = vrot.slane %v9000, %v9008
      %v9010 = vlaneseq
      %v9011 = vshrl.u32 %v9010, 7
      %v9012 = vsub.s32 2, %v9011
      %v9013 = vrot.slane %v9000, %v9012
      %v9014 = vlaneseq
      %v9015 = vshrl.u32 %v9014, 7
      %v9016 = vsub.s32 3, %v9015
      %v9017 = vrot.slane %v9000, %v9016
      %9018 = vrot.lane.b32.xlu0 %v9005, 64
      %v9019 = vpop.permute.xlu0 %9018
      %9020 = vrot.lane.b32.xlu0 %v9009, 64
      %v9021 = vpop.permute.xlu0 %9020
      %9022 = vrot.lane.b32.xlu0 %v9013, 64
      %v9023 = vpop.permute.xlu0 %9022
      %9024 = vrot.lane.b32.xlu0 %v9017, 64
      %v9025 = vpop.permute.xlu0 %9024
      %v9026 = vsel %vm1292, %v9019, %v9021
      %v9027 = vsel %vm1292, %v9021, %v9023
      %v9028 = vsel %vm1292, %v9023, %v9025
      %v9034 = vmul.f32 %v8990, %v9019
      %v9035 = vmul.f32 %v8991, %v9026
      %v9036 = vmul.f32 %v8992, %v9027
      %v9037 = vmul.f32 %v8993, %v9028
      %v9038 = vmul.f32 %v8994, %v9025
      %v9039 = vmul.f32 %v8995, %v9019
      %v9040 = vmul.f32 %v8996, %v9026
      %v9041 = vmul.f32 %v8997, %v9027
      %v9042 = vmul.f32 %v8998, %v9028
      %v9043 = vmul.f32 %v8999, %v9025
      %v9044 = vpack.c.bf16 %v9039, %v9034
      %v9045 = vpack.c.bf16 %v9040, %v9035
      %v9046 = vpack.c.bf16 %v9041, %v9036
      %v9047 = vpack.c.bf16 %v9042, %v9037
      %v9048 = vpack.c.bf16 %v9043, %v9038
      %9054 = vrot.lane.b32.xlu0 %v9044, 64
      %v9055 = vpop.permute.xlu0 %9054
      %9056 = vrot.lane.b32.xlu0 %v9045, 64
      %v9057 = vpop.permute.xlu0 %9056
      %9058 = vrot.lane.b32.xlu0 %v9046, 64
      %v9059 = vpop.permute.xlu0 %9058
      %9060 = vrot.lane.b32.xlu0 %v9047, 64
      %v9061 = vpop.permute.xlu0 %9060
      %9062 = vrot.lane.b32.xlu0 %v9048, 64
      %v9063 = vpop.permute.xlu0 %9062
      %v9064 = vsel %vm1334, %v9055, %v9057
      %v9065 = vsel %vm1334, %v9057, %v9059
      %v9066 = vsel %vm1334, %v9059, %v9061
      %v9067 = vsel %vm1334, %v9061, %v9063
      %9072 = vst [vmem:[#allocation5 + $0x2c0] sm:$0xff] %v9064
      %9073 = vst [vmem:[#allocation5 + $0x2c8] sm:$0xff] %v9065
      %9074 = vst [vmem:[#allocation5 + $0x2d0] sm:$0xff] %v9066
      %9075 = vst [vmem:[#allocation5 + $0x2d8] sm:$0xff] %v9067
      %v9076 = vld [vmem:[#allocation3 + $0x8] sm:$0xff]
      %v9077 = vld [vmem:[#allocation3 + $0x10] sm:$0xff]
      %v9078 = vld [vmem:[#allocation3 + $0x18] sm:$0xff]
      %v9079 = vld [vmem:[#allocation3 + $0x20] sm:$0xff]
      %v9080 = vld [vmem:[#allocation3 + $0x28] sm:$0xff]
      %v9081 = vld [vmem:[#allocation3 + $0x38] sm:$0xff]
      %v9082 = vld [vmem:[#allocation3 + $0x40] sm:$0xff]
      %v9083 = vld [vmem:[#allocation3 + $0x48] sm:$0xff]
      %v9084 = vld [vmem:[#allocation3 + $0x50] sm:$0xff]
      %v9085 = vld [vmem:[#allocation3 + $0x58] sm:$0xff]
      %v9086 = vld [vmem:[%s2779] ss:$8 sm:$0xf]
      %v9088 = vlaneseq
      %v9089 = vshrl.u32 %v9088, 7
      %v9090 = vsub.s32 0, %v9089
      %v9091 = vrot.slane %v9086, %v9090
      %v9092 = vlaneseq
      %v9093 = vshrl.u32 %v9092, 7
      %v9094 = vsub.s32 1, %v9093
      %v9095 = vrot.slane %v9086, %v9094
      %v9096 = vlaneseq
      %v9097 = vshrl.u32 %v9096, 7
      %v9098 = vsub.s32 2, %v9097
      %v9099 = vrot.slane %v9086, %v9098
      %v9100 = vlaneseq
      %v9101 = vshrl.u32 %v9100, 7
      %v9102 = vsub.s32 3, %v9101
      %v9103 = vrot.slane %v9086, %v9102
      %9104 = vrot.lane.b32.xlu0 %v9091, 65
      %v9105 = vpop.permute.xlu0 %9104
      %9106 = vrot.lane.b32.xlu0 %v9095, 65
      %v9107 = vpop.permute.xlu0 %9106
      %9108 = vrot.lane.b32.xlu0 %v9099, 65
      %v9109 = vpop.permute.xlu0 %9108
      %9110 = vrot.lane.b32.xlu0 %v9103, 65
      %v9111 = vpop.permute.xlu0 %9110
      %v9112 = vsel %vm1374, %v9105, %v9107
      %v9113 = vsel %vm1374, %v9107, %v9109
      %v9114 = vsel %vm1374, %v9109, %v9111
      %v9120 = vmul.f32 %v9076, %v9105
      %v9121 = vmul.f32 %v9077, %v9112
      %v9122 = vmul.f32 %v9078, %v9113
      %v9123 = vmul.f32 %v9079, %v9114
      %v9124 = vmul.f32 %v9080, %v9111
      %v9125 = vmul.f32 %v9081, %v9105
      %v9126 = vmul.f32 %v9082, %v9112
      %v9127 = vmul.f32 %v9083, %v9113
      %v9128 = vmul.f32 %v9084, %v9114
      %v9129 = vmul.f32 %v9085, %v9111
      %v9130 = vpack.c.bf16 %v9125, %v9120
      %v9131 = vpack.c.bf16 %v9126, %v9121
      %v9132 = vpack.c.bf16 %v9127, %v9122
      %v9133 = vpack.c.bf16 %v9128, %v9123
      %v9134 = vpack.c.bf16 %v9129, %v9124
      %9140 = vrot.lane.b32.xlu0 %v9130, 63
      %v9141 = vpop.permute.xlu0 %9140
      %9142 = vrot.lane.b32.xlu0 %v9131, 63
      %v9143 = vpop.permute.xlu0 %9142
      %9144 = vrot.lane.b32.xlu0 %v9132, 63
      %v9145 = vpop.permute.xlu0 %9144
      %9146 = vrot.lane.b32.xlu0 %v9133, 63
      %v9147 = vpop.permute.xlu0 %9146
      %9148 = vrot.lane.b32.xlu0 %v9134, 63
      %v9149 = vpop.permute.xlu0 %9148
      %v9150 = vsel %vm1416, %v9141, %v9143
      %v9151 = vsel %vm1416, %v9143, %v9145
      %v9152 = vsel %vm1416, %v9145, %v9147
      %v9153 = vsel %vm1416, %v9147, %v9149
      %9158 = vst [vmem:[#allocation5 + $0x2e0] sm:$0xff] %v9150
      %9159 = vst [vmem:[#allocation5 + $0x2e8] sm:$0xff] %v9151
      %9160 = vst [vmem:[#allocation5 + $0x2f0] sm:$0xff] %v9152
      %9161 = vst [vmem:[#allocation5 + $0x2f8] sm:$0xff] %v9153
      %v9162 = vld [vmem:[#allocation3 + $0x8] sm:$0xff]
      %v9163 = vld [vmem:[#allocation3 + $0x10] sm:$0xff]
      %v9164 = vld [vmem:[#allocation3 + $0x18] sm:$0xff]
      %v9165 = vld [vmem:[#allocation3 + $0x20] sm:$0xff]
      %v9166 = vld [vmem:[#allocation3 + $0x28] sm:$0xff]
      %v9167 = vld [vmem:[#allocation3 + $0x38] sm:$0xff]
      %v9168 = vld [vmem:[#allocation3 + $0x40] sm:$0xff]
      %v9169 = vld [vmem:[#allocation3 + $0x48] sm:$0xff]
      %v9170 = vld [vmem:[#allocation3 + $0x50] sm:$0xff]
      %v9171 = vld [vmem:[#allocation3 + $0x58] sm:$0xff]
      %v9172 = vld [vmem:[%s2859] ss:$8 sm:$0xf]
      %v9174 = vlaneseq
      %v9175 = vshrl.u32 %v9174, 7
      %v9176 = vsub.s32 0, %v9175
      %v9177 = vrot.slane %v9172, %v9176
      %v9178 = vlaneseq
      %v9179 = vshrl.u32 %v9178, 7
      %v9180 = vsub.s32 1, %v9179
      %v9181 = vrot.slane %v9172, %v9180
      %v9182 = vlaneseq
      %v9183 = vshrl.u32 %v9182, 7
      %v9184 = vsub.s32 2, %v9183
      %v9185 = vrot.slane %v9172, %v9184
      %v9186 = vlaneseq
      %v9187 = vshrl.u32 %v9186, 7
      %v9188 = vsub.s32 3, %v9187
      %v9189 = vrot.slane %v9172, %v9188
      %9190 = vrot.lane.b32.xlu0 %v9177, 71
      %v9191 = vpop.permute.xlu0 %9190
      %9192 = vrot.lane.b32.xlu0 %v9181, 71
      %v9193 = vpop.permute.xlu0 %9192
      %9194 = vrot.lane.b32.xlu0 %v9185, 71
      %v9195 = vpop.permute.xlu0 %9194
      %9196 = vrot.lane.b32.xlu0 %v9189, 71
      %v9197 = vpop.permute.xlu0 %9196
      %v9198 = vsel %vm1456, %v9191, %v9193
      %v9199 = vsel %vm1456, %v9193, %v9195
      %v9200 = vsel %vm1456, %v9195, %v9197
      %v9206 = vmul.f32 %v9162, %v9191
      %v9207 = vmul.f32 %v9163, %v9198
      %v9208 = vmul.f32 %v9164, %v9199
      %v9209 = vmul.f32 %v9165, %v9200
      %v9210 = vmul.f32 %v9166, %v9197
      %v9211 = vmul.f32 %v9167, %v9191
      %v9212 = vmul.f32 %v9168, %v9198
      %v9213 = vmul.f32 %v9169, %v9199
      %v9214 = vmul.f32 %v9170, %v9200
      %v9215 = vmul.f32 %v9171, %v9197
      %v9216 = vpack.c.bf16 %v9211, %v9206
      %v9217 = vpack.c.bf16 %v9212, %v9207
      %v9218 = vpack.c.bf16 %v9213, %v9208
      %v9219 = vpack.c.bf16 %v9214, %v9209
      %v9220 = vpack.c.bf16 %v9215, %v9210
      %9226 = vrot.lane.b32.xlu0 %v9216, 57
      %v9227 = vpop.permute.xlu0 %9226
      %9228 = vrot.lane.b32.xlu0 %v9217, 57
      %v9229 = vpop.permute.xlu0 %9228
      %9230 = vrot.lane.b32.xlu0 %v9218, 57
      %v9231 = vpop.permute.xlu0 %9230
      %9232 = vrot.lane.b32.xlu0 %v9219, 57
      %v9233 = vpop.permute.xlu0 %9232
      %9234 = vrot.lane.b32.xlu0 %v9220, 57
      %v9235 = vpop.permute.xlu0 %9234
      %v9236 = vsel %vm1498, %v9227, %v9229
      %v9237 = vsel %vm1498, %v9229, %v9231
      %v9238 = vsel %vm1498, %v9231, %v9233
      %v9239 = vsel %vm1498, %v9233, %v9235
      %9244 = vst [vmem:[#allocation5 + $0x300] sm:$0xff] %v9236
      %9245 = vst [vmem:[#allocation5 + $0x308] sm:$0xff] %v9237
      %9246 = vst [vmem:[#allocation5 + $0x310] sm:$0xff] %v9238
      %9247 = vst [vmem:[#allocation5 + $0x318] sm:$0xff] %v9239
      %v9248 = vld [vmem:[#allocation3 + $0x8] sm:$0xff]
      %v9249 = vld [vmem:[#allocation3 + $0x10] sm:$0xff]
      %v9250 = vld [vmem:[#allocation3 + $0x18] sm:$0xff]
      %v9251 = vld [vmem:[#allocation3 + $0x20] sm:$0xff]
      %v9252 = vld [vmem:[#allocation3 + $0x28] sm:$0xff]
      %v9253 = vld [vmem:[#allocation3 + $0x38] sm:$0xff]
      %v9254 = vld [vmem:[#allocation3 + $0x40] sm:$0xff]
      %v9255 = vld [vmem:[#allocation3 + $0x48] sm:$0xff]
      %v9256 = vld [vmem:[#allocation3 + $0x50] sm:$0xff]
      %v9257 = vld [vmem:[#allocation3 + $0x58] sm:$0xff]
      %v9258 = vld [vmem:[%s2939] ss:$8 sm:$0xf]
      %v9260 = vlaneseq
      %v9261 = vshrl.u32 %v9260, 7
      %v9262 = vsub.s32 0, %v9261
      %v9263 = vrot.slane %v9258, %v9262
      %v9264 = vlaneseq
      %v9265 = vshrl.u32 %v9264, 7
      %v9266 = vsub.s32 1, %v9265
      %v9267 = vrot.slane %v9258, %v9266
      %v9268 = vlaneseq
      %v9269 = vshrl.u32 %v9268, 7
      %v9270 = vsub.s32 2, %v9269
      %v9271 = vrot.slane %v9258, %v9270
      %v9272 = vlaneseq
      %v9273 = vshrl.u32 %v9272, 7
      %v9274 = vsub.s32 3, %v9273
      %v9275 = vrot.slane %v9258, %v9274
      %9276 = vrot.lane.b32.xlu0 %v9263, 72
      %v9277 = vpop.permute.xlu0 %9276
      %9278 = vrot.lane.b32.xlu0 %v9267, 72
      %v9279 = vpop.permute.xlu0 %9278
      %9280 = vrot.lane.b32.xlu0 %v9271, 72
      %v9281 = vpop.permute.xlu0 %9280
      %9282 = vrot.lane.b32.xlu0 %v9275, 72
      %v9283 = vpop.permute.xlu0 %9282
      %v9284 = vsel %vm1538, %v9277, %v9279
      %v9285 = vsel %vm1538, %v9279, %v9281
      %v9286 = vsel %vm1538, %v9281, %v9283
      %v9292 = vmul.f32 %v9248, %v9277
      %v9293 = vmul.f32 %v9249, %v9284
      %v9294 = vmul.f32 %v9250, %v9285
      %v9295 = vmul.f32 %v9251, %v9286
      %v9296 = vmul.f32 %v9252, %v9283
      %v9297 = vmul.f32 %v9253, %v9277
      %v9298 = vmul.f32 %v9254, %v9284
      %v9299 = vmul.f32 %v9255, %v9285
      %v9300 = vmul.f32 %v9256, %v9286
      %v9301 = vmul.f32 %v9257, %v9283
      %v9302 = vpack.c.bf16 %v9297, %v9292
      %v9303 = vpack.c.bf16 %v9298, %v9293
      %v9304 = vpack.c.bf16 %v9299, %v9294
      %v9305 = vpack.c.bf16 %v9300, %v9295
      %v9306 = vpack.c.bf16 %v9301, %v9296
      %9312 = vrot.lane.b32.xlu0 %v9302, 56
      %v9313 = vpop.permute.xlu0 %9312
      %9314 = vrot.lane.b32.xlu0 %v9303, 56
      %v9315 = vpop.permute.xlu0 %9314
      %9316 = vrot.lane.b32.xlu0 %v9304, 56
      %v9317 = vpop.permute.xlu0 %9316
      %9318 = vrot.lane.b32.xlu0 %v9305, 56
      %v9319 = vpop.permute.xlu0 %9318
      %9320 = vrot.lane.b32.xlu0 %v9306, 56
      %v9321 = vpop.permute.xlu0 %9320
      %v9322 = vsel %vm1580, %v9313, %v9315
      %v9323 = vsel %vm1580, %v9315, %v9317
      %v9324 = vsel %vm1580, %v9317, %v9319
      %v9325 = vsel %vm1580, %v9319, %v9321
      %9330 = vst [vmem:[#allocation5 + $0x320] sm:$0xff] %v9322
      %9331 = vst [vmem:[#allocation5 + $0x328] sm:$0xff] %v9323
      %9332 = vst [vmem:[#allocation5 + $0x330] sm:$0xff] %v9324
      %9333 = vst [vmem:[#allocation5 + $0x338] sm:$0xff] %v9325
      %v9334 = vld [vmem:[#allocation3 + $0x8] sm:$0xff]
      %v9335 = vld [vmem:[#allocation3 + $0x10] sm:$0xff]
      %v9336 = vld [vmem:[#allocation3 + $0x18] sm:$0xff]
      %v9337 = vld [vmem:[#allocation3 + $0x20] sm:$0xff]
      %v9338 = vld [vmem:[#allocation3 + $0x28] sm:$0xff]
      %v9339 = vld [vmem:[#allocation3 + $0x38] sm:$0xff]
      %v9340 = vld [vmem:[#allocation3 + $0x40] sm:$0xff]
      %v9341 = vld [vmem:[#allocation3 + $0x48] sm:$0xff]
      %v9342 = vld [vmem:[#allocation3 + $0x50] sm:$0xff]
      %v9343 = vld [vmem:[#allocation3 + $0x58] sm:$0xff]
      %v9344 = vld [vmem:[%s3019] ss:$8 sm:$0xf]
      %v9346 = vlaneseq
      %v9347 = vshrl.u32 %v9346, 7
      %v9348 = vsub.s32 0, %v9347
      %v9349 = vrot.slane %v9344, %v9348
      %v9350 = vlaneseq
      %v9351 = vshrl.u32 %v9350, 7
      %v9352 = vsub.s32 1, %v9351
      %v9353 = vrot.slane %v9344, %v9352
      %v9354 = vlaneseq
      %v9355 = vshrl.u32 %v9354, 7
      %v9356 = vsub.s32 2, %v9355
      %v9357 = vrot.slane %v9344, %v9356
      %v9358 = vlaneseq
      %v9359 = vshrl.u32 %v9358, 7
      %v9360 = vsub.s32 3, %v9359
      %v9361 = vrot.slane %v9344, %v9360
      %9362 = vrot.lane.b32.xlu0 %v9349, 73
      %v9363 = vpop.permute.xlu0 %9362
      %9364 = vrot.lane.b32.xlu0 %v9353, 73
      %v9365 = vpop.permute.xlu0 %9364
      %9366 = vrot.lane.b32.xlu0 %v9357, 73
      %v9367 = vpop.permute.xlu0 %9366
      %9368 = vrot.lane.b32.xlu0 %v9361, 73
      %v9369 = vpop.permute.xlu0 %9368
      %v9370 = vsel %vm1620, %v9363, %v9365
      %v9371 = vsel %vm1620, %v9365, %v9367
      %v9372 = vsel %vm1620, %v9367, %v9369
      %v9378 = vmul.f32 %v9334, %v9363
      %v9379 = vmul.f32 %v9335, %v9370
      %v9380 = vmul.f32 %v9336, %v9371
      %v9381 = vmul.f32 %v9337, %v9372
      %v9382 = vmul.f32 %v9338, %v9369
      %v9383 = vmul.f32 %v9339, %v9363
      %v9384 = vmul.f32 %v9340, %v9370
      %v9385 = vmul.f32 %v9341, %v9371
      %v9386 = vmul.f32 %v9342, %v9372
      %v9387 = vmul.f32 %v9343, %v9369
      %v9388 = vpack.c.bf16 %v9383, %v9378
      %v9389 = vpack.c.bf16 %v9384, %v9379
      %v9390 = vpack.c.bf16 %v9385, %v9380
      %v9391 = vpack.c.bf16 %v9386, %v9381
      %v9392 = vpack.c.bf16 %v9387, %v9382
      %9398 = vrot.lane.b32.xlu0 %v9388, 55
      %v9399 = vpop.permute.xlu0 %9398
      %9400 = vrot.lane.b32.xlu0 %v9389, 55
      %v9401 = vpop.permute.xlu0 %9400
      %9402 = vrot.lane.b32.xlu0 %v9390, 55
      %v9403 = vpop.permute.xlu0 %9402
      %9404 = vrot.lane.b32.xlu0 %v9391, 55
      %v9405 = vpop.permute.xlu0 %9404
      %9406 = vrot.lane.b32.xlu0 %v9392, 55
      %v9407 = vpop.permute.xlu0 %9406
      %v9408 = vsel %vm1662, %v9399, %v9401
      %v9409 = vsel %vm1662, %v9401, %v9403
      %v9410 = vsel %vm1662, %v9403, %v9405
      %v9411 = vsel %vm1662, %v9405, %v9407
      %9416 = vst [vmem:[#allocation5 + $0x340] sm:$0xff] %v9408
      %9417 = vst [vmem:[#allocation5 + $0x348] sm:$0xff] %v9409
      %9418 = vst [vmem:[#allocation5 + $0x350] sm:$0xff] %v9410
      %9419 = vst [vmem:[#allocation5 + $0x358] sm:$0xff] %v9411
      %v9420 = vld [vmem:[%s14] sm:$0xff]
      %v9421 = vld [vmem:[%s14 + $0x8] sm:$0xff]
      %v9422 = vld [vmem:[%s14 + $0x10] sm:$0xff]
      %v9423 = vld [vmem:[%s14 + $0x18] sm:$0xff]
      %v9424 = vld [vmem:[#allocation5] sm:$0xff]
      %v9425 = vld [vmem:[#allocation5 + $0x8] sm:$0xff]
      %v9426 = vld [vmem:[#allocation5 + $0x10] sm:$0xff]
      %v9427 = vld [vmem:[#allocation5 + $0x18] sm:$0xff]
      %v9428 = vld [vmem:[#allocation5 + $0x20] sm:$0xff]
      %v9429 = vld [vmem:[#allocation5 + $0x28] sm:$0xff]
      %v9430 = vld [vmem:[#allocation5 + $0x30] sm:$0xff]
      %v9431 = vld [vmem:[#allocation5 + $0x38] sm:$0xff]
      %v9432 = vld [vmem:[#allocation5 + $0x40] sm:$0xff]
      %v9433 = vld [vmem:[#allocation5 + $0x48] sm:$0xff]
      %v9434 = vld [vmem:[#allocation5 + $0x50] sm:$0xff]
      %v9435 = vld [vmem:[#allocation5 + $0x58] sm:$0xff]
      %v9436 = vld [vmem:[#allocation5 + $0x60] sm:$0xff]
      %v9437 = vld [vmem:[#allocation5 + $0x68] sm:$0xff]
      %v9438 = vld [vmem:[#allocation5 + $0x70] sm:$0xff]
      %v9439 = vld [vmem:[#allocation5 + $0x78] sm:$0xff]
      %v9440 = vld [vmem:[#allocation5 + $0x80] sm:$0xff]
      %v9441 = vld [vmem:[#allocation5 + $0x88] sm:$0xff]
      %v9442 = vld [vmem:[#allocation5 + $0x90] sm:$0xff]
      %v9443 = vld [vmem:[#allocation5 + $0x98] sm:$0xff]
      %v9444 = vld [vmem:[#allocation5 + $0xa0] sm:$0xff]
      %v9445 = vld [vmem:[#allocation5 + $0xa8] sm:$0xff]
      %v9446 = vld [vmem:[#allocation5 + $0xb0] sm:$0xff]
      %v9447 = vld [vmem:[#allocation5 + $0xb8] sm:$0xff]
      %v9448 = vld [vmem:[#allocation5 + $0xc0] sm:$0xff]
      %v9449 = vld [vmem:[#allocation5 + $0xc8] sm:$0xff]
      %v9450 = vld [vmem:[#allocation5 + $0xd0] sm:$0xff]
      %v9451 = vld [vmem:[#allocation5 + $0xd8] sm:$0xff]
      %v9452 = vld [vmem:[#allocation5 + $0xe0] sm:$0xff]
      %v9453 = vld [vmem:[#allocation5 + $0xe8] sm:$0xff]
      %v9454 = vld [vmem:[#allocation5 + $0xf0] sm:$0xff]
      %v9455 = vld [vmem:[#allocation5 + $0xf8] sm:$0xff]
      %v9456 = vld [vmem:[#allocation5 + $0x100] sm:$0xff]
      %v9457 = vld [vmem:[#allocation5 + $0x108] sm:$0xff]
      %v9458 = vld [vmem:[#allocation5 + $0x110] sm:$0xff]
      %v9459 = vld [vmem:[#allocation5 + $0x118] sm:$0xff]
      %v9460 = vld [vmem:[#allocation5 + $0x120] sm:$0xff]
      %v9461 = vld [vmem:[#allocation5 + $0x128] sm:$0xff]
      %v9462 = vld [vmem:[#allocation5 + $0x130] sm:$0xff]
      %v9463 = vld [vmem:[#allocation5 + $0x138] sm:$0xff]
      %v9464 = vld [vmem:[#allocation5 + $0x140] sm:$0xff]
      %v9465 = vld [vmem:[#allocation5 + $0x148] sm:$0xff]
      %v9466 = vld [vmem:[#allocation5 + $0x150] sm:$0xff]
      %v9467 = vld [vmem:[#allocation5 + $0x158] sm:$0xff]
      %v9468 = vld [vmem:[#allocation5 + $0x160] sm:$0xff]
      %v9469 = vld [vmem:[#allocation5 + $0x168] sm:$0xff]
      %v9470 = vld [vmem:[#allocation5 + $0x170] sm:$0xff]
      %v9471 = vld [vmem:[#allocation5 + $0x178] sm:$0xff]
      %v9472 = vld [vmem:[#allocation5 + $0x180] sm:$0xff]
      %v9473 = vld [vmem:[#allocation5 + $0x188] sm:$0xff]
      %v9474 = vld [vmem:[#allocation5 + $0x190] sm:$0xff]
      %v9475 = vld [vmem:[#allocation5 + $0x198] sm:$0xff]
      %v9476 = vld [vmem:[#allocation5 + $0x1a0] sm:$0xff]
      %v9477 = vld [vmem:[#allocation5 + $0x1a8] sm:$0xff]
      %v9478 = vld [vmem:[#allocation5 + $0x1b0] sm:$0xff]
      %v9479 = vld [vmem:[#allocation5 + $0x1b8] sm:$0xff]
      %v9480 = vld [vmem:[#allocation5 + $0x1c0] sm:$0xff]
      %v9481 = vld [vmem:[#allocation5 + $0x1c8] sm:$0xff]
      %v9482 = vld [vmem:[#allocation5 + $0x1d0] sm:$0xff]
      %v9483 = vld [vmem:[#allocation5 + $0x1d8] sm:$0xff]
      %v9484 = vld [vmem:[#allocation5 + $0x1e0] sm:$0xff]
      %v9485 = vld [vmem:[#allocation5 + $0x1e8] sm:$0xff]
      %v9486 = vld [vmem:[#allocation5 + $0x1f0] sm:$0xff]
      %v9487 = vld [vmem:[#allocation5 + $0x1f8] sm:$0xff]
      %v9488 = vld [vmem:[#allocation5 + $0x200] sm:$0xff]
      %v9489 = vld [vmem:[#allocation5 + $0x208] sm:$0xff]
      %v9490 = vld [vmem:[#allocation5 + $0x210] sm:$0xff]
      %v9491 = vld [vmem:[#allocation5 + $0x218] sm:$0xff]
      %v9492 = vld [vmem:[#allocation5 + $0x220] sm:$0xff]
      %v9493 = vld [vmem:[#allocation5 + $0x228] sm:$0xff]
      %v9494 = vld [vmem:[#allocation5 + $0x230] sm:$0xff]
      %v9495 = vld [vmem:[#allocation5 + $0x238] sm:$0xff]
      %v9496 = vld [vmem:[#allocation5 + $0x240] sm:$0xff]
      %v9497 = vld [vmem:[#allocation5 + $0x248] sm:$0xff]
      %v9498 = vld [vmem:[#allocation5 + $0x250] sm:$0xff]
      %v9499 = vld [vmem:[#allocation5 + $0x258] sm:$0xff]
      %v9500 = vld [vmem:[#allocation5 + $0x260] sm:$0xff]
      %v9501 = vld [vmem:[#allocation5 + $0x268] sm:$0xff]
      %v9502 = vld [vmem:[#allocation5 + $0x270] sm:$0xff]
      %v9503 = vld [vmem:[#allocation5 + $0x278] sm:$0xff]
      %v9504 = vld [vmem:[#allocation5 + $0x280] sm:$0xff]
      %v9505 = vld [vmem:[#allocation5 + $0x288] sm:$0xff]
      %v9506 = vld [vmem:[#allocation5 + $0x290] sm:$0xff]
      %v9507 = vld [vmem:[#allocation5 + $0x298] sm:$0xff]
      %v9508 = vld [vmem:[#allocation5 + $0x2a0] sm:$0xff]
      %v9509 = vld [vmem:[#allocation5 + $0x2a8] sm:$0xff]
      %v9510 = vld [vmem:[#allocation5 + $0x2b0] sm:$0xff]
      %v9511 = vld [vmem:[#allocation5 + $0x2b8] sm:$0xff]
      %v9512 = vld [vmem:[#allocation5 + $0x2c0] sm:$0xff]
      %v9513 = vld [vmem:[#allocation5 + $0x2c8] sm:$0xff]
      %v9514 = vld [vmem:[#allocation5 + $0x2d0] sm:$0xff]
      %v9515 = vld [vmem:[#allocation5 + $0x2d8] sm:$0xff]
      %v9516 = vld [vmem:[#allocation5 + $0x2e0] sm:$0xff]
      %v9517 = vld [vmem:[#allocation5 + $0x2e8] sm:$0xff]
      %v9518 = vld [vmem:[#allocation5 + $0x2f0] sm:$0xff]
      %v9519 = vld [vmem:[#allocation5 + $0x2f8] sm:$0xff]
      %v9520 = vld [vmem:[#allocation5 + $0x300] sm:$0xff]
      %v9521 = vld [vmem:[#allocation5 + $0x308] sm:$0xff]
      %v9522 = vld [vmem:[#allocation5 + $0x310] sm:$0xff]
      %v9523 = vld [vmem:[#allocation5 + $0x318] sm:$0xff]
      %v9524 = vld [vmem:[#allocation5 + $0x320] sm:$0xff]
      %v9525 = vld [vmem:[#allocation5 + $0x328] sm:$0xff]
      %v9526 = vld [vmem:[#allocation5 + $0x330] sm:$0xff]
      %v9527 = vld [vmem:[#allocation5 + $0x338] sm:$0xff]
      %v9528 = vld [vmem:[#allocation5 + $0x340] sm:$0xff]
      %v9529 = vld [vmem:[#allocation5 + $0x348] sm:$0xff]
      %v9530 = vld [vmem:[#allocation5 + $0x350] sm:$0xff]
      %v9531 = vld [vmem:[#allocation5 + $0x358] sm:$0xff]
      %v9536 = vunpack.c.l.b16 %v9420
      %v9537 = vunpack.c.h.b16 %v9420
      %v9538 = vunpack.c.l.b16 %v9421
      %v9539 = vunpack.c.h.b16 %v9421
      %v9540 = vunpack.c.l.b16 %v9422
      %v9541 = vunpack.c.h.b16 %v9422
      %v9542 = vunpack.c.l.b16 %v9423
      %v9543 = vunpack.c.h.b16 %v9423
      %v9544 = vpack.c.b16 %v9540, %v9536
      %v9545 = vpack.c.b16 %v9541, %v9537
      %v9546 = vpack.c.b16 %v9542, %v9538
      %v9547 = vpack.c.b16 %v9543, %v9539
      %vm9551 = vcmask 392192
      %v9553 = vsel %vm9551, %v9547, 0
      %9555 = vmatprep.subr.bf16.mxu0 %v9425
      %9556 = vmatpush1.bf16.msra.mxu0 %v9424
      %9557 = vmatprep.subr.bf16.mxu0 %v9429
      %9558 = vmatpush1.bf16.msra.mxu0 %v9428
      %9559 = vmatprep.subr.bf16.mxu0 %v9433
      %9560 = vmatpush1.bf16.msra.mxu0 %v9432
      %9561 = vmatprep.subr.bf16.mxu0 %v9437
      %9562 = vmatpush1.bf16.msra.mxu0 %v9436
      %9563 = vmatprep.subr.bf16.mxu0 %v9441
      %9564 = vmatpush1.bf16.msra.mxu0 %v9440
      %9565 = vmatprep.subr.bf16.mxu0 %v9445
      %9566 = vmatpush1.bf16.msra.mxu0 %v9444
      %9567 = vmatprep.subr.bf16.mxu0 %v9449
      %9568 = vmatpush1.bf16.msra.mxu0 %v9448
      %9569 = vmatprep.subr.bf16.mxu0 %v9453
      %9570 = vmatpush1.bf16.msra.mxu0 %v9452
      %9571 = vmatprep.subr.bf16.mxu0 %v9457
      %9572 = vmatpush1.bf16.msra.mxu0 %v9456
      %9573 = vmatprep.subr.bf16.mxu0 %v9461
      %9574 = vmatpush1.bf16.msra.mxu0 %v9460
      %9575 = vmatprep.subr.bf16.mxu0 %v9465
      %9576 = vmatpush1.bf16.msra.mxu0 %v9464
      %9577 = vmatprep.subr.bf16.mxu0 %v9469
      %9578 = vmatpush1.bf16.msra.mxu0 %v9468
      %9579 = vmatprep.subr.bf16.mxu0 %v9473
      %9580 = vmatpush1.bf16.msra.mxu0 %v9472
      %9581 = vmatprep.subr.bf16.mxu0 %v9477
      %9582 = vmatpush1.bf16.msra.mxu0 %v9476
      %9583 = vmatprep.subr.bf16.mxu0 %v9481
      %9584 = vmatpush1.bf16.msra.mxu0 %v9480
      %9585 = vmatprep.subr.bf16.mxu0 %v9485
      %9586 = vmatpush1.bf16.msra.mxu0 %v9484
      %9587 = vmatprep.mubr.bf16.mxu0 %v9545
      %9588 = vmatmul.mubr.bf16.gmra.mrb[0].mxu0 %v9544
      %v9589 = vpop.f32.mrb[0].mxu0
      %v9590 = vadd.f32 0.0, %v9589
      %v9591 = vpop.f32.mrb[0].mxu0
      %v9592 = vadd.f32 0.0, %v9591
      %v9593 = vpop.f32.mrb[0].mxu0
      %v9594 = vadd.f32 0.0, %v9593
      %v9595 = vpop.f32.mrb[0].mxu0
      %v9596 = vadd.f32 0.0, %v9595
      %9597 = vdwg.mxu0
      %9598 = vmatprep.subr.bf16.mxu0 %v9489
      %9599 = vmatpush1.bf16.msra.mxu0 %v9488
      %9600 = vmatprep.subr.bf16.mxu0 %v9493
      %9601 = vmatpush1.bf16.msra.mxu0 %v9492
      %9602 = vmatprep.subr.bf16.mxu0 %v9497
      %9603 = vmatpush1.bf16.msra.mxu0 %v9496
      %9604 = vmatprep.subr.bf16.mxu0 %v9501
      %9605 = vmatpush1.bf16.msra.mxu0 %v9500
      %9606 = vmatprep.subr.bf16.mxu0 %v9505
      %9607 = vmatpush1.bf16.msra.mxu0 %v9504
      %9608 = vmatprep.subr.bf16.mxu0 %v9509
      %9609 = vmatpush1.bf16.msra.mxu0 %v9508
      %9610 = vmatprep.subr.bf16.mxu0 %v9513
      %9611 = vmatpush1.bf16.msra.mxu0 %v9512
      %9612 = vmatprep.subr.bf16.mxu0 %v9517
      %9613 = vmatpush1.bf16.msra.mxu0 %v9516
      %9614 = vmatprep.subr.bf16.mxu0 %v9521
      %9615 = vmatpush1.bf16.msra.mxu0 %v9520
      %9616 = vmatprep.subr.bf16.mxu0 %v9525
      %9617 = vmatpush1.bf16.msra.mxu0 %v9524
      %9618 = vmatprep.subr.bf16.mxu0 %v9529
      %9619 = vmatpush1.bf16.msra.mxu0 %v9528
      %9620 = vmatprep.subr.bf16.mxu0 0
      %9621 = vmatpush1.bf16.msra.mxu0 0
      %9622 = vmatprep.subr.bf16.mxu0 0
      %9623 = vmatpush1.bf16.msra.mxu0 0
      %9624 = vmatprep.subr.bf16.mxu0 0
      %9625 = vmatpush1.bf16.msra.mxu0 0
      %9626 = vmatprep.subr.bf16.mxu0 0
      %9627 = vmatpush1.bf16.msra.mxu0 0
      %9628 = vmatprep.subr.bf16.mxu0 0
      %9629 = vmatpush1.bf16.msra.mxu0 0
      %9630 = vmatprep.mubr.bf16.mxu0 %v9553
      %9631 = vmatmul.mubr.bf16.gmra.mrb[0].mxu0 %v9546
      %v9632 = vpop.f32.mrb[0].mxu0
      %v9633 = vadd.f32 %v9590, %v9632
      %v9634 = vpop.f32.mrb[0].mxu0
      %v9635 = vadd.f32 %v9592, %v9634
      %v9636 = vpop.f32.mrb[0].mxu0
      %v9637 = vadd.f32 %v9594, %v9636
      %v9638 = vpop.f32.mrb[0].mxu0
      %v9639 = vadd.f32 %v9596, %v9638
      %9640 = vdwg.mxu0
      %9641 = vmatprep.subr.bf16.mxu0 %v9427
      %9642 = vmatpush1.bf16.msra.mxu0 %v9426
      %9643 = vmatprep.subr.bf16.mxu0 %v9431
      %9644 = vmatpush1.bf16.msra.mxu0 %v9430
      %9645 = vmatprep.subr.bf16.mxu0 %v9435
      %9646 = vmatpush1.bf16.msra.mxu0 %v9434
      %9647 = vmatprep.subr.bf16.mxu0 %v9439
      %9648 = vmatpush1.bf16.msra.mxu0 %v9438
      %9649 = vmatprep.subr.bf16.mxu0 %v9443
      %9650 = vmatpush1.bf16.msra.mxu0 %v9442
      %9651 = vmatprep.subr.bf16.mxu0 %v9447
      %9652 = vmatpush1.bf16.msra.mxu0 %v9446
      %9653 = vmatprep.subr.bf16.mxu0 %v9451
      %9654 = vmatpush1.bf16.msra.mxu0 %v9450
      %9655 = vmatprep.subr.bf16.mxu0 %v9455
      %9656 = vmatpush1.bf16.msra.mxu0 %v9454
      %9657 = vmatprep.subr.bf16.mxu0 %v9459
      %9658 = vmatpush1.bf16.msra.mxu0 %v9458
      %9659 = vmatprep.subr.bf16.mxu0 %v9463
      %9660 = vmatpush1.bf16.msra.mxu0 %v9462
      %9661 = vmatprep.subr.bf16.mxu0 %v9467
      %9662 = vmatpush1.bf16.msra.mxu0 %v9466
      %9663 = vmatprep.subr.bf16.mxu0 %v9471
      %9664 = vmatpush1.bf16.msra.mxu0 %v9470
      %9665 = vmatprep.subr.bf16.mxu0 %v9475
      %9666 = vmatpush1.bf16.msra.mxu0 %v9474
      %9667 = vmatprep.subr.bf16.mxu0 %v9479
      %9668 = vmatpush1.bf16.msra.mxu0 %v9478
      %9669 = vmatprep.subr.bf16.mxu0 %v9483
      %9670 = vmatpush1.bf16.msra.mxu0 %v9482
      %9671 = vmatprep.subr.bf16.mxu0 %v9487
      %9672 = vmatpush1.bf16.msra.mxu0 %v9486
      %9673 = vmatprep.mubr.bf16.mxu0 %v9545
      %9674 = vmatmul.mubr.bf16.gmra.mrb[0].mxu0 %v9544
      %v9675 = vpop.f32.mrb[0].mxu0
      %v9676 = vadd.f32 0.0, %v9675
      %v9677 = vpop.f32.mrb[0].mxu0
      %v9678 = vadd.f32 0.0, %v9677
      %v9679 = vpop.f32.mrb[0].mxu0
      %v9680 = vadd.f32 0.0, %v9679
      %v9681 = vpop.f32.mrb[0].mxu0
      %v9682 = vadd.f32 0.0, %v9681
      %9683 = vdwg.mxu0
      %9684 = vmatprep.subr.bf16.mxu0 %v9491
      %9685 = vmatpush1.bf16.msra.mxu0 %v9490
      %9686 = vmatprep.subr.bf16.mxu0 %v9495
      %9687 = vmatpush1.bf16.msra.mxu0 %v9494
      %9688 = vmatprep.subr.bf16.mxu0 %v9499
      %9689 = vmatpush1.bf16.msra.mxu0 %v9498
      %9690 = vmatprep.subr.bf16.mxu0 %v9503
      %9691 = vmatpush1.bf16.msra.mxu0 %v9502
      %9692 = vmatprep.subr.bf16.mxu0 %v9507
      %9693 = vmatpush1.bf16.msra.mxu0 %v9506
      %9694 = vmatprep.subr.bf16.mxu0 %v9511
      %9695 = vmatpush1.bf16.msra.mxu0 %v9510
      %9696 = vmatprep.subr.bf16.mxu0 %v9515
      %9697 = vmatpush1.bf16.msra.mxu0 %v9514
      %9698 = vmatprep.subr.bf16.mxu0 %v9519
      %9699 = vmatpush1.bf16.msra.mxu0 %v9518
      %9700 = vmatprep.subr.bf16.mxu0 %v9523
      %9701 = vmatpush1.bf16.msra.mxu0 %v9522
      %9702 = vmatprep.subr.bf16.mxu0 %v9527
      %9703 = vmatpush1.bf16.msra.mxu0 %v9526
      %9704 = vmatprep.subr.bf16.mxu0 %v9531
      %9705 = vmatpush1.bf16.msra.mxu0 %v9530
      %9706 = vmatprep.subr.bf16.mxu0 0
      %9707 = vmatpush1.bf16.msra.mxu0 0
      %9708 = vmatprep.subr.bf16.mxu0 0
      %9709 = vmatpush1.bf16.msra.mxu0 0
      %9710 = vmatprep.subr.bf16.mxu0 0
      %9711 = vmatpush1.bf16.msra.mxu0 0
      %9712 = vmatprep.subr.bf16.mxu0 0
      %9713 = vmatpush1.bf16.msra.mxu0 0
      %9714 = vmatprep.subr.bf16.mxu0 0
      %9715 = vmatpush1.bf16.msra.mxu0 0
      %9716 = vmatprep.mubr.bf16.mxu0 %v9553
      %9717 = vmatmul.mubr.bf16.gmra.mrb[0].mxu0 %v9546
      %v9718 = vpop.f32.mrb[0].mxu0
      %v9719 = vadd.f32 %v9676, %v9718
      %v9720 = vpop.f32.mrb[0].mxu0
      %v9721 = vadd.f32 %v9678, %v9720
      %v9722 = vpop.f32.mrb[0].mxu0
      %v9723 = vadd.f32 %v9680, %v9722
      %v9724 = vpop.f32.mrb[0].mxu0
      %v9725 = vadd.f32 %v9682, %v9724
      %9726 = vdwg.mxu0
      %9727 = vst [vmem:[%s581] sm:$0xff] %v9633
      %9728 = vst [vmem:[%s581 + $0x8] sm:$0xff] %v9635
      %9729 = vst [vmem:[%s581 + $0x10] sm:$0xff] %v9719
      %9730 = vst [vmem:[%s581 + $0x18] sm:$0xff] %v9721
      %9731 = vst [vmem:[%s581 + $0x20] sm:$0xff] %v9637
      %9732 = vst [vmem:[%s581 + $0x28] sm:$0xff] %v9639
      %9733 = vst [vmem:[%s581 + $0x30] sm:$0xff] %v9723
      %9734 = vst [vmem:[%s581 + $0x38] sm:$0xff] %v9725
      %v9735 = vld [vmem:[#allocation6] sm:$0xff]
      %v9736 = vld [vmem:[#allocation6 + $0x8] sm:$0xff]
      %v9737 = vld [vmem:[#allocation6 + $0x10] sm:$0xff]
      %v9738 = vld [vmem:[#allocation6 + $0x18] sm:$0xff]
      %v9739 = vld [vmem:[#allocation6 + $0x20] sm:$0xff]
      %v9740 = vld [vmem:[#allocation6 + $0x28] sm:$0xff]
      %v9741 = vld [vmem:[#allocation6 + $0x30] sm:$0xff]
      %v9742 = vld [vmem:[#allocation6 + $0x38] sm:$0xff]
      %v9743 = vxor.u32 %v9633, 2147483648
      %v9744 = vxor.u32 %v9635, 2147483648
      %v9745 = vxor.u32 %v9719, 2147483648
      %v9746 = vxor.u32 %v9721, 2147483648
      %v9747 = vxor.u32 %v9637, 2147483648
      %v9748 = vxor.u32 %v9639, 2147483648
      %v9749 = vxor.u32 %v9723, 2147483648
      %v9750 = vxor.u32 %v9725, 2147483648
      %v9751 = vmul.f32 %v9743, 1.442695
      %v9752 = vpow.pop %v9751
      %v9753 = vmul.f32 %v9744, 1.442695
      %v9754 = vpow.pop %v9753
      %v9755 = vmul.f32 %v9745, 1.442695
      %v9756 = vpow.pop %v9755
      %v9757 = vmul.f32 %v9746, 1.442695
      %v9758 = vpow.pop %v9757
      %v9759 = vmul.f32 %v9747, 1.442695
      %v9760 = vpow.pop %v9759
      %v9761 = vmul.f32 %v9748, 1.442695
      %v9762 = vpow.pop %v9761
      %v9763 = vmul.f32 %v9749, 1.442695
      %v9764 = vpow.pop %v9763
      %v9765 = vmul.f32 %v9750, 1.442695
      %v9766 = vpow.pop %v9765
      %v9767 = vadd.f32 %v9752, 1.0
      %v9768 = vadd.f32 %v9754, 1.0
      %v9769 = vadd.f32 %v9756, 1.0
      %v9770 = vadd.f32 %v9758, 1.0
      %v9771 = vadd.f32 %v9760, 1.0
      %v9772 = vadd.f32 %v9762, 1.0
      %v9773 = vadd.f32 %v9764, 1.0
      %v9774 = vadd.f32 %v9766, 1.0
      %v9775 = vrcp.pop %v9767
      %v9776 = vmul.f32 1.0, %v9775
      %v9777 = vrcp.pop %v9768
      %v9778 = vmul.f32 1.0, %v9777
      %v9779 = vrcp.pop %v9769
      %v9780 = vmul.f32 1.0, %v9779
      %v9781 = vrcp.pop %v9770
      %v9782 = vmul.f32 1.0, %v9781
      %v9783 = vrcp.pop %v9771
      %v9784 = vmul.f32 1.0, %v9783
      %v9785 = vrcp.pop %v9772
      %v9786 = vmul.f32 1.0, %v9785
      %v9787 = vrcp.pop %v9773
      %v9788 = vmul.f32 1.0, %v9787
      %v9789 = vrcp.pop %v9774
      %v9790 = vmul.f32 1.0, %v9789
      %v9791 = vadd.f32 %v9776, 1.0
      %v9792 = vadd.f32 %v9778, 1.0
      %v9793 = vadd.f32 %v9780, 1.0
      %v9794 = vadd.f32 %v9782, 1.0
      %v9795 = vadd.f32 %v9784, 1.0
      %v9796 = vadd.f32 %v9786, 1.0
      %v9797 = vadd.f32 %v9788, 1.0
      %v9798 = vadd.f32 %v9790, 1.0
      %v9799 = vmul.f32 %v9735, %v9791
      %v9800 = vmul.f32 %v9736, %v9792
      %v9801 = vmul.f32 %v9737, %v9793
      %v9802 = vmul.f32 %v9738, %v9794
      %v9803 = vmul.f32 %v9739, %v9795
      %v9804 = vmul.f32 %v9740, %v9796
      %v9805 = vmul.f32 %v9741, %v9797
      %v9806 = vmul.f32 %v9742, %v9798
      %9807 = vst [vmem:[%s576] sm:$0xff] %v9799
      %9808 = vst [vmem:[%s576 + $0x8] sm:$0xff] %v9800
      %9809 = vst [vmem:[%s576 + $0x10] sm:$0xff] %v9801
      %9810 = vst [vmem:[%s576 + $0x18] sm:$0xff] %v9802
      %9811 = vst [vmem:[%s576 + $0x20] sm:$0xff] %v9803
      %9812 = vst [vmem:[%s576 + $0x28] sm:$0xff] %v9804
      %9813 = vst [vmem:[%s576 + $0x30] sm:$0xff] %v9805
      %9814 = vst [vmem:[%s576 + $0x38] sm:$0xff] %v9806
      %p9815 = scmp.lt.s32.totalorder %s29, 1
      %s9816 = scalar_select %p9815, %s29, 1
      %s9817 = smul.addr %s9816, 8
      %s9818 = smul.addr %s9817, 8
      %s9819 = scalar_lea.vmem %s16, %s9818
      %p9820 = scmp.lt.s32.totalorder %s29, 1
      %s9821 = scalar_select %p9820, %s29, 1
      %s9822 = smul.addr %s9821, 8
      %s9823 = smul.addr %s9822, 8
      %s9824 = scalar_lea.vmem %s17, %s9823
      // Predicated region
      $region85: #{conresatt_forward.1} parent=83 // pred_check
        %p9825 = pneg %p393
      $region86: #{conresatt_forward.1} parent=83 // pred_check_branch
        %9827 = sbr.rel (%p9825) target = $region88
      $region87: #{conresatt_forward.1} parent=83 // pred_region
        _
      $region88: #{conresatt_forward.1} parent=83 // pred_fallthru
        _
      // Predicated region
      $region89: #{conresatt_forward.1} parent=83 // pred_check
        %p9828 = pneg %p419
      $region90: #{conresatt_forward.1} parent=83 // pred_check_branch
        %9830 = sbr.rel (%p9828) target = $region92
      $region91: #{conresatt_forward.1} parent=83 // pred_region
        _
      $region92: #{conresatt_forward.1} parent=83 // pred_fallthru
        _
    $region84: #{conresatt_forward.1} parent=5 // pred_fallthru
      _
    %p9831 = scmp.le.s32.totalorder 2, %s24
    // Predicated region
    $region93: #{conresatt_forward.1} parent=5 // pred_check
      %p9832 = pneg %p9831
    $region94: #{conresatt_forward.1} parent=5 // pred_check_branch
      %9834 = sbr.rel (%p9832) target = $region96
    $region95: #{conresatt_forward.1} parent=5 // pred_region
      %s9835 = ssub.s32 %s24, 2
      // Predicated region
      $region97: #{conresatt_forward.1} parent=95 // pred_check
        %p9836 = pneg %p399
      $region98: #{conresatt_forward.1} parent=95 // pred_check_branch
        %9838 = sbr.rel (%p9836) target = $region100
      $region99: #{conresatt_forward.1} parent=95 // pred_region
        %p9839 = scmp.lt.s32.totalorder %s30, 1
        %s9840 = scalar_select %p9839, %s30, 1
        %s9841 = smul.addr %s9840, 8
        %s9842 = smul.addr %s9841, 8
        %s9843 = scalar_lea.vmem %s16, %s9842
      $region100: #{conresatt_forward.1} parent=95 // pred_fallthru
        _
      // Predicated region
      $region101: #{conresatt_forward.1} parent=95 // pred_check
        %p9844 = pneg %p425
      $region102: #{conresatt_forward.1} parent=95 // pred_check_branch
        %9846 = sbr.rel (%p9844) target = $region104
      $region103: #{conresatt_forward.1} parent=95 // pred_region
        %p9847 = scmp.lt.s32.totalorder %s30, 1
        %s9848 = scalar_select %p9847, %s30, 1
        %s9849 = smul.addr %s9848, 8
        %s9850 = smul.addr %s9849, 8
        %s9851 = scalar_lea.vmem %s17, %s9850
      $region104: #{conresatt_forward.1} parent=95 // pred_fallthru
        _
    $region96: #{conresatt_forward.1} parent=5 // pred_fallthru
      _
  $region6: #{conresatt_forward.1} parent=0 // loop_footer
    %s28 = sadd.s32 1, %s24
  $region7: #{conresatt_forward.1} parent=0 // loop_footer_branch
    %23 = sbr.rel target = $region3
  $region8: #{conresatt_forward.1} parent=0 // loop_exit
    _

</llo_original>
